<compile_context>
chip_gen: v5e
topology: v5e:2x2
jax: 0.10.0
libtpu: 0.0.40
codegen_flags: <defaults>
</compile_context>

<pallas_src>
import jax
import jax.numpy as jnp
from jax.experimental import pallas as pl
from jax.experimental.pallas import tpu as pltpu

EPS = 1e-5


# --------------------------------------------------------------------------
# Fused BasicBlock Pallas kernel
# --------------------------------------------------------------------------
def _basic_block_kernel(x_ref, w1_ref, b1_ref, w2_ref, b2_ref, o_ref,
                        halo_ref, col_ref):
    """One block of B_blk batch elements per grid step.

    x_ref   : (B_blk, H, W, C)      f32  input tile (NHWC)
    w*_ref  : (9*C, C)              bf16 conv weights (BN scale folded in),
                                         row block k = dy*3 + dx
    b*_ref  : (1, C)                f32  folded BatchNorm bias
    o_ref   : (B_blk, H, W, C)      f32  output tile
    halo_ref: (B_blk, H+2, W+2, C)  f32  VMEM halo scratch (zero border)
    col_ref : (B_blk*H*W, 9*C)      bf16 VMEM im2col scratch
    """
    bb, h, w, c = x_ref.shape
    n = bb * h * w

    # Zero only the 1-wide halo border; the centre is always overwritten.
    # Done every step (scratch is per-core; a core may never run step 0).
    zrow = jnp.zeros((bb, 1, w + 2, c), jnp.float32)
    zcol = jnp.zeros((bb, h + 2, 1, c), jnp.float32)
    halo_ref[:, 0:1, :, :] = zrow
    halo_ref[:, h + 1:h + 2, :, :] = zrow
    halo_ref[:, :, 0:1, :] = zcol
    halo_ref[:, :, w + 1:w + 2, :] = zcol

    def conv3x3(w_ref):
        """3x3 'same' conv as ONE K=9*C MXU matmul over an im2col buffer."""
        for dy in range(3):
            for dx in range(3):
                k = dy * 3 + dx
                tap = halo_ref[:, dy:dy + h, dx:dx + w, :].reshape(n, c)
                # Cast to bf16 here (halo stays f32 so the sublane-shifted
                # slices above don't trigger bf16 repacking).
                col_ref[:, k * c:(k + 1) * c] = tap.astype(jnp.bfloat16)
        return jnp.dot(col_ref[...], w_ref[...],
                       preferred_element_type=jnp.float32)

    # conv1 (BN1 scale pre-folded into w1) -> +bias -> ReLU
    halo_ref[:, 1:h + 1, 1:w + 1, :] = x_ref[...]
    h1 = jnp.maximum(conv3x3(w1_ref) + b1_ref[...], 0.0)          # (n, c) f32

    # conv2 (BN2 scale pre-folded into w2) -> +bias -> +identity -> ReLU
    halo_ref[:, 1:h + 1, 1:w + 1, :] = h1.reshape(bb, h, w, c)
    h2 = conv3x3(w2_ref) + b2_ref[...]
    out = jnp.maximum(h2 + x_ref[...].reshape(n, c), 0.0)         # residual re-reads x_ref
    o_ref[...] = out.reshape(bb, h, w, c)


def basic_block_forward(x_nchw, params, *, b_blk=None):
    """BasicBlock forward. x_nchw: (B, C, H, W) f32 (PyTorch layout)."""
    b, c, h, w = x_nchw.shape
    x = jnp.transpose(x_nchw, (0, 2, 3, 1)).astype(jnp.float32)   # -> NHWC

    if b_blk is None:
        # Keep >= 2 grid steps so both v7x TensorCores get work; on v5e/v6e
        # b_blk=b would also be fine (VMEM is nowhere near a constraint).
        b_blk = b // 2 if (b % 2 == 0 and b >= 2) else b
    assert b % b_blk == 0
    steps = b // b_blk
    n = b_blk * h * w

    out = pl.pallas_call(
        _basic_block_kernel,
        out_shape=jax.ShapeDtypeStruct((b, h, w, c), jnp.float32),
        grid=(steps,),
        in_specs=[
            pl.BlockSpec((b_blk, h, w, c), lambda i: (i, 0, 0, 0)),   # x
            pl.BlockSpec((9 * c, c), lambda i: (0, 0)),               # w1 (scale folded)
            pl.BlockSpec((1, c), lambda i: (0, 0)),                   # bn1 bias
            pl.BlockSpec((9 * c, c), lambda i: (0, 0)),               # w2 (scale folded)
            pl.BlockSpec((1, c), lambda i: (0, 0)),                   # bn2 bias
        ],
        out_specs=pl.BlockSpec((b_blk, h, w, c), lambda i: (i, 0, 0, 0)),
        scratch_shapes=[
            pltpu.VMEM((b_blk, h + 2, w + 2, c), jnp.float32),        # halo
            pltpu.VMEM((n, 9 * c), jnp.bfloat16),                     # im2col
        ],
        compiler_params=pltpu.CompilerParams(
            dimension_semantics=("parallel",)),
    )(x, params["w1"], params["b1"], params["w2"], params["b2"])

    return jnp.transpose(out, (0, 3, 1, 2))                           # -> NCHW


# --------------------------------------------------------------------------
# Parameter construction (PyTorch layouts) + packing for the kernel
# --------------------------------------------------------------------------
def _bn_raw(key, c):
    k1, k2, k3, k4 = jax.random.split(key, 4)
    gamma = 1.0 + 0.1 * jax.random.normal(k1, (c,), jnp.float32)
    beta = 0.1 * jax.random.normal(k2, (c,), jnp.float32)
    mean = 0.1 * jax.random.normal(k3, (c,), jnp.float32)
    var = jnp.abs(jax.random.normal(k4, (c,), jnp.float32)) + 1.0
    return dict(gamma=gamma, beta=beta, mean=mean, var=var)


def init_torch_params(key, c):
    """Parameters in the PyTorch layouts: conv weight (Cout, Cin, 3, 3)."""
    k1, k2, k3, k4 = jax.random.split(key, 4)
    return dict(
        w1=0.1 * jax.random.normal(k1, (c, c, 3, 3), jnp.float32),
        bn1=_bn_raw(k2, c),
        w2=0.1 * jax.random.normal(k3, (c, c, 3, 3), jnp.float32),
        bn2=_bn_raw(k4, c),
    )


def _fold_bn(bn):
    scale = bn["gamma"] / jnp.sqrt(bn["var"] + EPS)   # (C,)
    bias = bn["beta"] - bn["mean"] * scale            # (C,)
    return scale, bias


def _pack_conv(w_oihw, scale):
    # (Cout, Cin, 3, 3) -> (3, 3, Cin, Cout) -> (9*Cin, Cout);
    # fold the BN scale (per Cout column) in f32, THEN cast to bf16 for the MXU.
    cout, cin = w_oihw.shape[0], w_oihw.shape[1]
    wk = jnp.transpose(w_oihw, (2, 3, 1, 0)).reshape(9 * cin, cout)
    return (wk * scale[None, :]).astype(jnp.bfloat16)


def pack_params(tp):
    s1, b1 = _fold_bn(tp["bn1"])
    s2, b2 = _fold_bn(tp["bn2"])
    return dict(w1=_pack_conv(tp["w1"], s1), b1=b1.reshape(1, -1),
                w2=_pack_conv(tp["w2"], s2), b2=b2.reshape(1, -1))


# --------------------------------------------------------------------------
# Pure-JAX reference (PyTorch semantics, f32) for a correctness check
# --------------------------------------------------------------------------
def reference_basic_block(x_nchw, tp):
    def conv(x, w):
        return jax.lax.conv_general_dilated(
            x, w, window_strides=(1, 1), padding=((1, 1), (1, 1)),
            dimension_numbers=("NCHW", "OIHW", "NCHW"))

    def bn(x, p):
        sh = (1, -1, 1, 1)
        return ((x - p["mean"].reshape(sh))
                / jnp.sqrt(p["var"].reshape(sh) + EPS)
                * p["gamma"].reshape(sh) + p["beta"].reshape(sh))

    out = jax.nn.relu(bn(conv(x_nchw, tp["w1"]), tp["bn1"]))
    out = bn(conv(out, tp["w2"]), tp["bn2"])
    return jax.nn.relu(out + x_nchw)


# --------------------------------------------------------------------------
if __name__ == "__main__":
    key = jax.random.PRNGKey(0)
    kx, kp = jax.random.split(key)

    B, C, H, W = 4, 32, 16, 16          # inplanes == planes (downsample=None)
    x = jax.random.normal(kx, (B, C, H, W), jnp.float32)

    torch_params = init_torch_params(kp, C)
    params = pack_params(torch_params)

    fwd = jax.jit(basic_block_forward)
    y = fwd(x, params)
    y = jax.block_until_ready(y)

    ref = reference_basic_block(x, torch_params)
    err = float(jnp.max(jnp.abs(y - ref)))

    assert y.shape == (B, C, H, W), y.shape
    assert bool(jnp.all(jnp.isfinite(y)))
    assert err < 0.2, f"max abs error vs reference: {err}"
    print("KERNEL_OK")
</pallas_src>

<mosaic_0001>
module attributes {stable_mosaic.version = 11 : i64} {
  func.func @_basic_block_kernel(%arg0: i32, %arg1: memref<2x16x16x32xf32, #tpu.memory_space<vmem>>, %arg2: memref<288x32xbf16, #tpu.memory_space<vmem>>, %arg3: memref<1x32xf32, #tpu.memory_space<vmem>>, %arg4: memref<288x32xbf16, #tpu.memory_space<vmem>>, %arg5: memref<1x32xf32, #tpu.memory_space<vmem>>, %arg6: memref<2x16x16x32xf32, #tpu.memory_space<vmem>>, %arg7: memref<2x18x18x32xf32, #tpu.memory_space<vmem>>, %arg8: memref<512x288xbf16, #tpu.memory_space<vmem>>) attributes {dimension_semantics = [#tpu.dimension_semantics<parallel>], iteration_bounds = array<i64: 2>, scalar_prefetch = 0 : i64, scratch_operands = 2 : i64, tpu.core_type = #tpu.core_type<tc>, window_params = [{transform_indices = @transform_0, window_bounds = array<i64: 2, 16, 16, 32>}, {pipeline_mode = #tpu.pipeline_mode<synchronous>, transform_indices = @transform_1, window_bounds = array<i64: 288, 32>}, {pipeline_mode = #tpu.pipeline_mode<synchronous>, transform_indices = @transform_2, window_bounds = array<i64: 1, 32>}, {pipeline_mode = #tpu.pipeline_mode<synchronous>, transform_indices = @transform_3, window_bounds = array<i64: 288, 32>}, {pipeline_mode = #tpu.pipeline_mode<synchronous>, transform_indices = @transform_4, window_bounds = array<i64: 1, 32>}, {transform_indices = @transform_5, window_bounds = array<i64: 2, 16, 16, 32>}]} {
    %cst = arith.constant 0.000000e+00 : f32
    %0 = vector.broadcast %cst : f32 to vector<2x1x18x32xf32>
    %cst_0 = arith.constant 0.000000e+00 : f32
    %1 = vector.broadcast %cst_0 : f32 to vector<2x18x1x32xf32>
    %c0 = arith.constant 0 : index
    %c0_1 = arith.constant 0 : index
    %c0_2 = arith.constant 0 : index
    %c0_3 = arith.constant 0 : index
    %2 = vector.load %arg7[%c0, %c0_1, %c0_2, %c0_3] : memref<2x18x18x32xf32, #tpu.memory_space<vmem>>, vector<2x1x18x32xf32>
    tpu.vector_store %arg7[%c0, %c0_1, %c0_2, %c0_3], %0 {strides = array<i32>} : memref<2x18x18x32xf32, #tpu.memory_space<vmem>>, vector<2x1x18x32xf32>,
    %c0_4 = arith.constant 0 : index
    %c17 = arith.constant 17 : index
    %c0_5 = arith.constant 0 : index
    %c0_6 = arith.constant 0 : index
    %3 = vector.load %arg7[%c0_4, %c17, %c0_5, %c0_6] : memref<2x18x18x32xf32, #tpu.memory_space<vmem>>, vector<2x1x18x32xf32>
    tpu.vector_store %arg7[%c0_4, %c17, %c0_5, %c0_6], %0 {strides = array<i32>} : memref<2x18x18x32xf32, #tpu.memory_space<vmem>>, vector<2x1x18x32xf32>,
    %c0_7 = arith.constant 0 : index
    %c0_8 = arith.constant 0 : index
    %c0_9 = arith.constant 0 : index
    %c0_10 = arith.constant 0 : index
    %4 = vector.load %arg7[%c0_7, %c0_8, %c0_9, %c0_10] : memref<2x18x18x32xf32, #tpu.memory_space<vmem>>, vector<2x18x1x32xf32>
    tpu.vector_store %arg7[%c0_7, %c0_8, %c0_9, %c0_10], %1 {strides = array<i32>} : memref<2x18x18x32xf32, #tpu.memory_space<vmem>>, vector<2x18x1x32xf32>,
    %c0_11 = arith.constant 0 : index
    %c0_12 = arith.constant 0 : index
    %c17_13 = arith.constant 17 : index
    %c0_14 = arith.constant 0 : index
    %5 = vector.load %arg7[%c0_11, %c0_12, %c17_13, %c0_14] : memref<2x18x18x32xf32, #tpu.memory_space<vmem>>, vector<2x18x1x32xf32>
    tpu.vector_store %arg7[%c0_11, %c0_12, %c17_13, %c0_14], %1 {strides = array<i32>} : memref<2x18x18x32xf32, #tpu.memory_space<vmem>>, vector<2x18x1x32xf32>,
    %c0_15 = arith.constant 0 : index
    %c0_16 = arith.constant 0 : index
    %c0_17 = arith.constant 0 : index
    %c0_18 = arith.constant 0 : index
    %6 = vector.load %arg1[%c0_15, %c0_16, %c0_17, %c0_18] : memref<2x16x16x32xf32, #tpu.memory_space<vmem>>, vector<2x16x16x32xf32>
    %c0_19 = arith.constant 0 : index
    %c1 = arith.constant 1 : index
    %c1_20 = arith.constant 1 : index
    %c0_21 = arith.constant 0 : index
    %7 = vector.load %arg7[%c0_19, %c1, %c1_20, %c0_21] : memref<2x18x18x32xf32, #tpu.memory_space<vmem>>, vector<2x16x16x32xf32>
    tpu.vector_store %arg7[%c0_19, %c1, %c1_20, %c0_21], %6 {strides = array<i32>} : memref<2x18x18x32xf32, #tpu.memory_space<vmem>>, vector<2x16x16x32xf32>,
    %c0_22 = arith.constant 0 : index
    %c0_23 = arith.constant 0 : index
    %c0_24 = arith.constant 0 : index
    %c0_25 = arith.constant 0 : index
    %8 = vector.load %arg7[%c0_22, %c0_23, %c0_24, %c0_25] : memref<2x18x18x32xf32, #tpu.memory_space<vmem>>, vector<2x16x16x32xf32>
    %9 = vector.shape_cast %8 : vector<2x16x16x32xf32> to vector<512x32xf32>
    %10 = arith.truncf %9 : vector<512x32xf32> to vector<512x32xbf16>
    %c0_26 = arith.constant 0 : index
    %c0_27 = arith.constant 0 : index
    %11 = vector.load %arg8[%c0_26, %c0_27] : memref<512x288xbf16, #tpu.memory_space<vmem>>, vector<512x32xbf16>
    tpu.vector_store %arg8[%c0_26, %c0_27], %10 {strides = array<i32>} : memref<512x288xbf16, #tpu.memory_space<vmem>>, vector<512x32xbf16>,
    %c0_28 = arith.constant 0 : index
    %c0_29 = arith.constant 0 : index
    %c1_30 = arith.constant 1 : index
    %c0_31 = arith.constant 0 : index
    %12 = vector.load %arg7[%c0_28, %c0_29, %c1_30, %c0_31] : memref<2x18x18x32xf32, #tpu.memory_space<vmem>>, vector<2x16x16x32xf32>
    %13 = vector.shape_cast %12 : vector<2x16x16x32xf32> to vector<512x32xf32>
    %14 = arith.truncf %13 : vector<512x32xf32> to vector<512x32xbf16>
    %c0_32 = arith.constant 0 : index
    %c32 = arith.constant 32 : index
    %15 = vector.load %arg8[%c0_32, %c32] : memref<512x288xbf16, #tpu.memory_space<vmem>>, vector<512x32xbf16>
    tpu.vector_store %arg8[%c0_32, %c32], %14 {strides = array<i32>} : memref<512x288xbf16, #tpu.memory_space<vmem>>, vector<512x32xbf16>,
    %c0_33 = arith.constant 0 : index
    %c0_34 = arith.constant 0 : index
    %c2 = arith.constant 2 : index
    %c0_35 = arith.constant 0 : index
    %16 = vector.load %arg7[%c0_33, %c0_34, %c2, %c0_35] : memref<2x18x18x32xf32, #tpu.memory_space<vmem>>, vector<2x16x16x32xf32>
    %17 = vector.shape_cast %16 : vector<2x16x16x32xf32> to vector<512x32xf32>
    %18 = arith.truncf %17 : vector<512x32xf32> to vector<512x32xbf16>
    %c0_36 = arith.constant 0 : index
    %c64 = arith.constant 64 : index
    %19 = vector.load %arg8[%c0_36, %c64] : memref<512x288xbf16, #tpu.memory_space<vmem>>, vector<512x32xbf16>
    tpu.vector_store %arg8[%c0_36, %c64], %18 {strides = array<i32>} : memref<512x288xbf16, #tpu.memory_space<vmem>>, vector<512x32xbf16>,
    %c0_37 = arith.constant 0 : index
    %c1_38 = arith.constant 1 : index
    %c0_39 = arith.constant 0 : index
    %c0_40 = arith.constant 0 : index
    %20 = vector.load %arg7[%c0_37, %c1_38, %c0_39, %c0_40] : memref<2x18x18x32xf32, #tpu.memory_space<vmem>>, vector<2x16x16x32xf32>
    %21 = vector.shape_cast %20 : vector<2x16x16x32xf32> to vector<512x32xf32>
    %22 = arith.truncf %21 : vector<512x32xf32> to vector<512x32xbf16>
    %c0_41 = arith.constant 0 : index
    %c96 = arith.constant 96 : index
    %23 = vector.load %arg8[%c0_41, %c96] : memref<512x288xbf16, #tpu.memory_space<vmem>>, vector<512x32xbf16>
    tpu.vector_store %arg8[%c0_41, %c96], %22 {strides = array<i32>} : memref<512x288xbf16, #tpu.memory_space<vmem>>, vector<512x32xbf16>,
    %c0_42 = arith.constant 0 : index
    %c1_43 = arith.constant 1 : index
    %c1_44 = arith.constant 1 : index
    %c0_45 = arith.constant 0 : index
    %24 = vector.load %arg7[%c0_42, %c1_43, %c1_44, %c0_45] : memref<2x18x18x32xf32, #tpu.memory_space<vmem>>, vector<2x16x16x32xf32>
    %25 = vector.shape_cast %24 : vector<2x16x16x32xf32> to vector<512x32xf32>
    %26 = arith.truncf %25 : vector<512x32xf32> to vector<512x32xbf16>
    %c0_46 = arith.constant 0 : index
    %c128 = arith.constant 128 : index
    %27 = vector.load %arg8[%c0_46, %c128] : memref<512x288xbf16, #tpu.memory_space<vmem>>, vector<512x32xbf16>
    tpu.vector_store %arg8[%c0_46, %c128], %26 {strides = array<i32>} : memref<512x288xbf16, #tpu.memory_space<vmem>>, vector<512x32xbf16>,
    %c0_47 = arith.constant 0 : index
    %c1_48 = arith.constant 1 : index
    %c2_49 = arith.constant 2 : index
    %c0_50 = arith.constant 0 : index
    %28 = vector.load %arg7[%c0_47, %c1_48, %c2_49, %c0_50] : memref<2x18x18x32xf32, #tpu.memory_space<vmem>>, vector<2x16x16x32xf32>
    %29 = vector.shape_cast %28 : vector<2x16x16x32xf32> to vector<512x32xf32>
    %30 = arith.truncf %29 : vector<512x32xf32> to vector<512x32xbf16>
    %c0_51 = arith.constant 0 : index
    %c160 = arith.constant 160 : index
    %31 = vector.load %arg8[%c0_51, %c160] : memref<512x288xbf16, #tpu.memory_space<vmem>>, vector<512x32xbf16>
    tpu.vector_store %arg8[%c0_51, %c160], %30 {strides = array<i32>} : memref<512x288xbf16, #tpu.memory_space<vmem>>, vector<512x32xbf16>,
    %c0_52 = arith.constant 0 : index
    %c2_53 = arith.constant 2 : index
    %c0_54 = arith.constant 0 : index
    %c0_55 = arith.constant 0 : index
    %32 = vector.load %arg7[%c0_52, %c2_53, %c0_54, %c0_55] : memref<2x18x18x32xf32, #tpu.memory_space<vmem>>, vector<2x16x16x32xf32>
    %33 = vector.shape_cast %32 : vector<2x16x16x32xf32> to vector<512x32xf32>
    %34 = arith.truncf %33 : vector<512x32xf32> to vector<512x32xbf16>
    %c0_56 = arith.constant 0 : index
    %c192 = arith.constant 192 : index
    %35 = vector.load %arg8[%c0_56, %c192] : memref<512x288xbf16, #tpu.memory_space<vmem>>, vector<512x32xbf16>
    tpu.vector_store %arg8[%c0_56, %c192], %34 {strides = array<i32>} : memref<512x288xbf16, #tpu.memory_space<vmem>>, vector<512x32xbf16>,
    %c0_57 = arith.constant 0 : index
    %c2_58 = arith.constant 2 : index
    %c1_59 = arith.constant 1 : index
    %c0_60 = arith.constant 0 : index
    %36 = vector.load %arg7[%c0_57, %c2_58, %c1_59, %c0_60] : memref<2x18x18x32xf32, #tpu.memory_space<vmem>>, vector<2x16x16x32xf32>
    %37 = vector.shape_cast %36 : vector<2x16x16x32xf32> to vector<512x32xf32>
    %38 = arith.truncf %37 : vector<512x32xf32> to vector<512x32xbf16>
    %c0_61 = arith.constant 0 : index
    %c224 = arith.constant 224 : index
    %39 = vector.load %arg8[%c0_61, %c224] : memref<512x288xbf16, #tpu.memory_space<vmem>>, vector<512x32xbf16>
    tpu.vector_store %arg8[%c0_61, %c224], %38 {strides = array<i32>} : memref<512x288xbf16, #tpu.memory_space<vmem>>, vector<512x32xbf16>,
    %c0_62 = arith.constant 0 : index
    %c2_63 = arith.constant 2 : index
    %c2_64 = arith.constant 2 : index
    %c0_65 = arith.constant 0 : index
    %40 = vector.load %arg7[%c0_62, %c2_63, %c2_64, %c0_65] : memref<2x18x18x32xf32, #tpu.memory_space<vmem>>, vector<2x16x16x32xf32>
    %41 = vector.shape_cast %40 : vector<2x16x16x32xf32> to vector<512x32xf32>
    %42 = arith.truncf %41 : vector<512x32xf32> to vector<512x32xbf16>
    %c0_66 = arith.constant 0 : index
    %c256 = arith.constant 256 : index
    %43 = vector.load %arg8[%c0_66, %c256] : memref<512x288xbf16, #tpu.memory_space<vmem>>, vector<512x32xbf16>
    tpu.vector_store %arg8[%c0_66, %c256], %42 {strides = array<i32>} : memref<512x288xbf16, #tpu.memory_space<vmem>>, vector<512x32xbf16>,
    %c0_67 = arith.constant 0 : index
    %c0_68 = arith.constant 0 : index
    %44 = vector.load %arg8[%c0_67, %c0_68] : memref<512x288xbf16, #tpu.memory_space<vmem>>, vector<512x288xbf16>
    %c0_69 = arith.constant 0 : index
    %c0_70 = arith.constant 0 : index
    %45 = vector.load %arg2[%c0_69, %c0_70] : memref<288x32xbf16, #tpu.memory_space<vmem>>, vector<288x32xbf16>
    %cst_71 = arith.constant dense<0.000000e+00> : vector<512x32xf32>
    %46 = tpu.matmul %44, %45, %cst_71 {dimension_numbers = #tpu.dot_dimension_numbers<[1], [0], [0], [1], [0, 0, 1, 1], [], []>} : vector<512x288xbf16>, vector<288x32xbf16>, vector<512x32xf32> -> vector<512x32xf32>
    %c0_72 = arith.constant 0 : index
    %c0_73 = arith.constant 0 : index
    %47 = vector.load %arg3[%c0_72, %c0_73] : memref<1x32xf32, #tpu.memory_space<vmem>>, vector<1x32xf32>
    %48 = vector.broadcast %47 : vector<1x32xf32> to vector<512x32xf32>
    %49 = arith.addf %46, %48 : vector<512x32xf32>
    %cst_74 = arith.constant 0.000000e+00 : f32
    %50 = vector.broadcast %cst_74 : f32 to vector<512x32xf32>
    %51 = arith.maximumf %49, %50 : vector<512x32xf32>
    %52 = vector.shape_cast %51 : vector<512x32xf32> to vector<2x16x16x32xf32>
    %c0_75 = arith.constant 0 : index
    %c1_76 = arith.constant 1 : index
    %c1_77 = arith.constant 1 : index
    %c0_78 = arith.constant 0 : index
    %53 = vector.load %arg7[%c0_75, %c1_76, %c1_77, %c0_78] : memref<2x18x18x32xf32, #tpu.memory_space<vmem>>, vector<2x16x16x32xf32>
    tpu.vector_store %arg7[%c0_75, %c1_76, %c1_77, %c0_78], %52 {strides = array<i32>} : memref<2x18x18x32xf32, #tpu.memory_space<vmem>>, vector<2x16x16x32xf32>,
    %c0_79 = arith.constant 0 : index
    %c0_80 = arith.constant 0 : index
    %c0_81 = arith.constant 0 : index
    %c0_82 = arith.constant 0 : index
    %54 = vector.load %arg7[%c0_79, %c0_80, %c0_81, %c0_82] : memref<2x18x18x32xf32, #tpu.memory_space<vmem>>, vector<2x16x16x32xf32>
    %55 = vector.shape_cast %54 : vector<2x16x16x32xf32> to vector<512x32xf32>
    %56 = arith.truncf %55 : vector<512x32xf32> to vector<512x32xbf16>
    %c0_83 = arith.constant 0 : index
    %c0_84 = arith.constant 0 : index
    %57 = vector.load %arg8[%c0_83, %c0_84] : memref<512x288xbf16, #tpu.memory_space<vmem>>, vector<512x32xbf16>
    tpu.vector_store %arg8[%c0_83, %c0_84], %56 {strides = array<i32>} : memref<512x288xbf16, #tpu.memory_space<vmem>>, vector<512x32xbf16>,
    %c0_85 = arith.constant 0 : index
    %c0_86 = arith.constant 0 : index
    %c1_87 = arith.constant 1 : index
    %c0_88 = arith.constant 0 : index
    %58 = vector.load %arg7[%c0_85, %c0_86, %c1_87, %c0_88] : memref<2x18x18x32xf32, #tpu.memory_space<vmem>>, vector<2x16x16x32xf32>
    %59 = vector.shape_cast %58 : vector<2x16x16x32xf32> to vector<512x32xf32>
    %60 = arith.truncf %59 : vector<512x32xf32> to vector<512x32xbf16>
    %c0_89 = arith.constant 0 : index
    %c32_90 = arith.constant 32 : index
    %61 = vector.load %arg8[%c0_89, %c32_90] : memref<512x288xbf16, #tpu.memory_space<vmem>>, vector<512x32xbf16>
    tpu.vector_store %arg8[%c0_89, %c32_90], %60 {strides = array<i32>} : memref<512x288xbf16, #tpu.memory_space<vmem>>, vector<512x32xbf16>,
    %c0_91 = arith.constant 0 : index
    %c0_92 = arith.constant 0 : index
    %c2_93 = arith.constant 2 : index
    %c0_94 = arith.constant 0 : index
    %62 = vector.load %arg7[%c0_91, %c0_92, %c2_93, %c0_94] : memref<2x18x18x32xf32, #tpu.memory_space<vmem>>, vector<2x16x16x32xf32>
    %63 = vector.shape_cast %62 : vector<2x16x16x32xf32> to vector<512x32xf32>
    %64 = arith.truncf %63 : vector<512x32xf32> to vector<512x32xbf16>
    %c0_95 = arith.constant 0 : index
    %c64_96 = arith.constant 64 : index
    %65 = vector.load %arg8[%c0_95, %c64_96] : memref<512x288xbf16, #tpu.memory_space<vmem>>, vector<512x32xbf16>
    tpu.vector_store %arg8[%c0_95, %c64_96], %64 {strides = array<i32>} : memref<512x288xbf16, #tpu.memory_space<vmem>>, vector<512x32xbf16>,
    %c0_97 = arith.constant 0 : index
    %c1_98 = arith.constant 1 : index
    %c0_99 = arith.constant 0 : index
    %c0_100 = arith.constant 0 : index
    %66 = vector.load %arg7[%c0_97, %c1_98, %c0_99, %c0_100] : memref<2x18x18x32xf32, #tpu.memory_space<vmem>>, vector<2x16x16x32xf32>
    %67 = vector.shape_cast %66 : vector<2x16x16x32xf32> to vector<512x32xf32>
    %68 = arith.truncf %67 : vector<512x32xf32> to vector<512x32xbf16>
    %c0_101 = arith.constant 0 : index
    %c96_102 = arith.constant 96 : index
    %69 = vector.load %arg8[%c0_101, %c96_102] : memref<512x288xbf16, #tpu.memory_space<vmem>>, vector<512x32xbf16>
    tpu.vector_store %arg8[%c0_101, %c96_102], %68 {strides = array<i32>} : memref<512x288xbf16, #tpu.memory_space<vmem>>, vector<512x32xbf16>,
    %c0_103 = arith.constant 0 : index
    %c1_104 = arith.constant 1 : index
    %c1_105 = arith.constant 1 : index
    %c0_106 = arith.constant 0 : index
    %70 = vector.load %arg7[%c0_103, %c1_104, %c1_105, %c0_106] : memref<2x18x18x32xf32, #tpu.memory_space<vmem>>, vector<2x16x16x32xf32>
    %71 = vector.shape_cast %70 : vector<2x16x16x32xf32> to vector<512x32xf32>
    %72 = arith.truncf %71 : vector<512x32xf32> to vector<512x32xbf16>
    %c0_107 = arith.constant 0 : index
    %c128_108 = arith.constant 128 : index
    %73 = vector.load %arg8[%c0_107, %c128_108] : memref<512x288xbf16, #tpu.memory_space<vmem>>, vector<512x32xbf16>
    tpu.vector_store %arg8[%c0_107, %c128_108], %72 {strides = array<i32>} : memref<512x288xbf16, #tpu.memory_space<vmem>>, vector<512x32xbf16>,
    %c0_109 = arith.constant 0 : index
    %c1_110 = arith.constant 1 : index
    %c2_111 = arith.constant 2 : index
    %c0_112 = arith.constant 0 : index
    %74 = vector.load %arg7[%c0_109, %c1_110, %c2_111, %c0_112] : memref<2x18x18x32xf32, #tpu.memory_space<vmem>>, vector<2x16x16x32xf32>
    %75 = vector.shape_cast %74 : vector<2x16x16x32xf32> to vector<512x32xf32>
    %76 = arith.truncf %75 : vector<512x32xf32> to vector<512x32xbf16>
    %c0_113 = arith.constant 0 : index
    %c160_114 = arith.constant 160 : index
    %77 = vector.load %arg8[%c0_113, %c160_114] : memref<512x288xbf16, #tpu.memory_space<vmem>>, vector<512x32xbf16>
    tpu.vector_store %arg8[%c0_113, %c160_114], %76 {strides = array<i32>} : memref<512x288xbf16, #tpu.memory_space<vmem>>, vector<512x32xbf16>,
    %c0_115 = arith.constant 0 : index
    %c2_116 = arith.constant 2 : index
    %c0_117 = arith.constant 0 : index
    %c0_118 = arith.constant 0 : index
    %78 = vector.load %arg7[%c0_115, %c2_116, %c0_117, %c0_118] : memref<2x18x18x32xf32, #tpu.memory_space<vmem>>, vector<2x16x16x32xf32>
    %79 = vector.shape_cast %78 : vector<2x16x16x32xf32> to vector<512x32xf32>
    %80 = arith.truncf %79 : vector<512x32xf32> to vector<512x32xbf16>
    %c0_119 = arith.constant 0 : index
    %c192_120 = arith.constant 192 : index
    %81 = vector.load %arg8[%c0_119, %c192_120] : memref<512x288xbf16, #tpu.memory_space<vmem>>, vector<512x32xbf16>
    tpu.vector_store %arg8[%c0_119, %c192_120], %80 {strides = array<i32>} : memref<512x288xbf16, #tpu.memory_space<vmem>>, vector<512x32xbf16>,
    %c0_121 = arith.constant 0 : index
    %c2_122 = arith.constant 2 : index
    %c1_123 = arith.constant 1 : index
    %c0_124 = arith.constant 0 : index
    %82 = vector.load %arg7[%c0_121, %c2_122, %c1_123, %c0_124] : memref<2x18x18x32xf32, #tpu.memory_space<vmem>>, vector<2x16x16x32xf32>
    %83 = vector.shape_cast %82 : vector<2x16x16x32xf32> to vector<512x32xf32>
    %84 = arith.truncf %83 : vector<512x32xf32> to vector<512x32xbf16>
    %c0_125 = arith.constant 0 : index
    %c224_126 = arith.constant 224 : index
    %85 = vector.load %arg8[%c0_125, %c224_126] : memref<512x288xbf16, #tpu.memory_space<vmem>>, vector<512x32xbf16>
    tpu.vector_store %arg8[%c0_125, %c224_126], %84 {strides = array<i32>} : memref<512x288xbf16, #tpu.memory_space<vmem>>, vector<512x32xbf16>,
    %c0_127 = arith.constant 0 : index
    %c2_128 = arith.constant 2 : index
    %c2_129 = arith.constant 2 : index
    %c0_130 = arith.constant 0 : index
    %86 = vector.load %arg7[%c0_127, %c2_128, %c2_129, %c0_130] : memref<2x18x18x32xf32, #tpu.memory_space<vmem>>, vector<2x16x16x32xf32>
    %87 = vector.shape_cast %86 : vector<2x16x16x32xf32> to vector<512x32xf32>
    %88 = arith.truncf %87 : vector<512x32xf32> to vector<512x32xbf16>
    %c0_131 = arith.constant 0 : index
    %c256_132 = arith.constant 256 : index
    %89 = vector.load %arg8[%c0_131, %c256_132] : memref<512x288xbf16, #tpu.memory_space<vmem>>, vector<512x32xbf16>
    tpu.vector_store %arg8[%c0_131, %c256_132], %88 {strides = array<i32>} : memref<512x288xbf16, #tpu.memory_space<vmem>>, vector<512x32xbf16>,
    %c0_133 = arith.constant 0 : index
    %c0_134 = arith.constant 0 : index
    %90 = vector.load %arg8[%c0_133, %c0_134] : memref<512x288xbf16, #tpu.memory_space<vmem>>, vector<512x288xbf16>
    %c0_135 = arith.constant 0 : index
    %c0_136 = arith.constant 0 : index
    %91 = vector.load %arg4[%c0_135, %c0_136] : memref<288x32xbf16, #tpu.memory_space<vmem>>, vector<288x32xbf16>
    %cst_137 = arith.constant dense<0.000000e+00> : vector<512x32xf32>
    %92 = tpu.matmul %90, %91, %cst_137 {dimension_numbers = #tpu.dot_dimension_numbers<[1], [0], [0], [1], [0, 0, 1, 1], [], []>} : vector<512x288xbf16>, vector<288x32xbf16>, vector<512x32xf32> -> vector<512x32xf32>
    %c0_138 = arith.constant 0 : index
    %c0_139 = arith.constant 0 : index
    %93 = vector.load %arg5[%c0_138, %c0_139] : memref<1x32xf32, #tpu.memory_space<vmem>>, vector<1x32xf32>
    %94 = vector.broadcast %93 : vector<1x32xf32> to vector<512x32xf32>
    %95 = arith.addf %92, %94 : vector<512x32xf32>
    %c0_140 = arith.constant 0 : index
    %c0_141 = arith.constant 0 : index
    %c0_142 = arith.constant 0 : index
    %c0_143 = arith.constant 0 : index
    %96 = vector.load %arg1[%c0_140, %c0_141, %c0_142, %c0_143] : memref<2x16x16x32xf32, #tpu.memory_space<vmem>>, vector<2x16x16x32xf32>
    %97 = vector.shape_cast %96 : vector<2x16x16x32xf32> to vector<512x32xf32>
    %98 = arith.addf %95, %97 : vector<512x32xf32>
    %cst_144 = arith.constant 0.000000e+00 : f32
    %99 = vector.broadcast %cst_144 : f32 to vector<512x32xf32>
    %100 = arith.maximumf %98, %99 : vector<512x32xf32>
    %101 = vector.shape_cast %100 : vector<512x32xf32> to vector<2x16x16x32xf32>
    %c0_145 = arith.constant 0 : index
    %c0_146 = arith.constant 0 : index
    %c0_147 = arith.constant 0 : index
    %c0_148 = arith.constant 0 : index
    %102 = vector.load %arg6[%c0_145, %c0_146, %c0_147, %c0_148] : memref<2x16x16x32xf32, #tpu.memory_space<vmem>>, vector<2x16x16x32xf32>
    tpu.vector_store %arg6[%c0_145, %c0_146, %c0_147, %c0_148], %101 {strides = array<i32>} : memref<2x16x16x32xf32, #tpu.memory_space<vmem>>, vector<2x16x16x32xf32>,
    return
  }
  func.func @transform_0(%arg0: i32) -> (i32, i32, i32, i32) {
    %c0_i32 = arith.constant 0 : i32
    %c0_i32_0 = arith.constant 0 : i32
    %c0_i32_1 = arith.constant 0 : i32
    %c0_i32_2 = arith.constant 0 : i32
    return %arg0, %c0_i32, %c0_i32_0, %c0_i32_1 : i32, i32, i32, i32
  }
  func.func @transform_1(%arg0: i32) -> (i32, i32) {
    %c0_i32 = arith.constant 0 : i32
    %c0_i32_0 = arith.constant 0 : i32
    %c0_i32_1 = arith.constant 0 : i32
    return %c0_i32, %c0_i32_0 : i32, i32
  }
  func.func @transform_2(%arg0: i32) -> (i32, i32) {
    %c0_i32 = arith.constant 0 : i32
    %c0_i32_0 = arith.constant 0 : i32
    %c0_i32_1 = arith.constant 0 : i32
    return %c0_i32, %c0_i32_0 : i32, i32
  }
  func.func @transform_3(%arg0: i32) -> (i32, i32) {
    %c0_i32 = arith.constant 0 : i32
    %c0_i32_0 = arith.constant 0 : i32
    %c0_i32_1 = arith.constant 0 : i32
    return %c0_i32, %c0_i32_0 : i32, i32
  }
  func.func @transform_4(%arg0: i32) -> (i32, i32) {
    %c0_i32 = arith.constant 0 : i32
    %c0_i32_0 = arith.constant 0 : i32
    %c0_i32_1 = arith.constant 0 : i32
    return %c0_i32, %c0_i32_0 : i32, i32
  }
  func.func @transform_5(%arg0: i32) -> (i32, i32, i32, i32) {
    %c0_i32 = arith.constant 0 : i32
    %c0_i32_0 = arith.constant 0 : i32
    %c0_i32_1 = arith.constant 0 : i32
    %c0_i32_2 = arith.constant 0 : i32
    return %arg0, %c0_i32, %c0_i32_0, %c0_i32_1 : i32, i32, i32, i32
  }
}

</mosaic_0001>

<llo_original>
// kernel: basic_block_forward.1
$region0: #{basic_block_forward.1}
  #allocation0 [shape = 'u32[]', space=smem, size = 0x4, offset = 0x4, fixed_abs, tag = 'smem constant byte address 0x4 - core index']
  #allocation1 [shape = 'u32[72,128]{1,0:T(1,128)}', space=vmem, size = 0x9000, scoped, tag = 'internal scratch']
  #allocation2 [shape = 'f32[2,18,18,32]{3,2,1,0:T(8,128)}', space=vmem, size = 0x6c000, scoped, tag = 'scratch operand']
  #allocation3 [shape = 'bf16[512,288]{1,0:T(8,128)(2,1)}', space=vmem, size = 0x60000, scoped, tag = 'scratch operand']
  %s0 = inlined_call_operand.hbm [shape: f32[4,16,16,32], index: 0, kind: input, shape index: {}]
  %s1 = inlined_call_operand.vmem [shape: bf16[288,32], index: 1, kind: input, shape index: {}]
  %s2 = inlined_call_operand.vmem [shape: f32[1,32], index: 2, kind: input, shape index: {}]
  %s3 = inlined_call_operand.vmem [shape: bf16[288,32], index: 3, kind: input, shape index: {}]
  %s4 = inlined_call_operand.vmem [shape: f32[1,32], index: 4, kind: input, shape index: {}]
  %s5 = inlined_call_operand.hbm [shape: f32[4,16,16,32], index: 5, kind: output, shape index: {}]
  %s6 = sld [smem:[#allocation0]]
  $region57: #{basic_block_forward.1} parent=0
    _
  %s8 = ssub.s32 1, %s6
  %s9 = scalar_select 0, %s8, %s6
  $region1: #{basic_block_forward.1} parent=0
    #allocation4 [shape = 'u8[524288]{0}', space=vmem, size = 0x80000, scoped, tag = 'input window, operand 0']
    #allocation5 [shape = 's32[2]{0}', space=sflag, size = 0x8, scoped, tag = 'scoped memory for basic_block_forward.1']
    #allocation6 [shape = 's32[2]{0}', space=sflag, size = 0x8, scoped, tag = 'scoped memory for basic_block_forward.1']
    #allocation7 [shape = 'u8[524288]{0}', space=vmem, size = 0x80000, scoped, tag = 'output window, operand 0']
    %10 = vsyncpa [#allocation5], 0
    %s11 = scalar_lea.sflag [#allocation5], 1
    %12 = vsyncpa %s11, 0
    %13 = vsyncpa [#allocation6], 0
    %s14 = scalar_lea.sflag [#allocation6], 1
    %15 = vsyncpa %s14, 0
    loop: start=0, step=1, limit=4
    $region2: #{basic_block_forward.1} parent=1 // loop_pre_header
      _
    $region3: #{basic_block_forward.1} parent=1 // loop_header
      %s17 = sphi 0, %s21
      %p18 = scmp.ge.s32.totalorder %s17, 4
      %s27 = sphi 0, %s29
      %s30 = sphi 0, %s27
      %s31 = sphi 0, %s30
      %s47 = sphi 0, %s31
      %s51 = sphi 0, %s51
      %s53 = sphi 0, %s51
      %s54 = sphi 0, %s53
      %s68 = sphi 0, %s54
      %s72 = sphi 0, %s72
      %s74 = sphi 0, %s72
      %s75 = sphi 0, %s74
      %s89 = sphi 0, %s75
      %s93 = sphi 0, %s93
      %s95 = sphi 0, %s93
      %s96 = sphi 0, %s95
      %s110 = sphi 0, %s96
      %s114 = sphi 0, %s114
      %s116 = sphi 0, %s114
      %s117 = sphi 0, %s116
      %s131 = sphi 0, %s117
      %s137 = sphi 0, %s139
      %s140 = sphi 0, %s137
      %s141 = sphi 0, %s140
      %s157 = sphi 0, %s141
    $region4: #{basic_block_forward.1} parent=1 // loop_header_branch
      %20 = sbr.rel (%p18) target = $region8
    $region5: #{basic_block_forward.1} parent=1 // loop_body
      %s22 = ssub.s32 %s17, 1
      %s23 = ssub.s32 %s17, 2
      %s24 = sadd.s32 %s17, 1
      %s25 = ssub.s32 %s17, %s24
      %p26 = scmp.eq.s32.totalorder %s25, 0
      %s28 = sadd.s32 %s27, 1
      %s29 = scalar_select %p26, %s27, %s28
      %p32 = pneg %p26
      %p33 = scmp.eq.s32.totalorder %s17, 1
      %p34 = por %p32, %p33
      %p35 = scmp.ne.s32.totalorder %s27, %s30
      %p36 = scmp.eq.s32.totalorder %s17, 0
      %p37 = por %p35, %p36
      %p38 = scmp.ne.s32.totalorder %s27, %s30
      %p39 = scmp.eq.s32.totalorder %s22, 1
      %p40 = por %p38, %p39
      %p41 = scmp.ne.s32.totalorder %s30, %s31
      %p42 = scmp.eq.s32.totalorder %s22, 0
      %p43 = por %p41, %p42
      %p44 = scmp.ne.s32.totalorder %s30, %s31
      %p45 = scmp.eq.s32.totalorder %s23, 1
      %p46 = por %p44, %p45
      %p48 = scmp.ne.s32.totalorder %s31, %s47
      %p49 = scmp.eq.s32.totalorder %s23, 0
      %p50 = por %p48, %p49
      %s52 = sadd.s32 %s51, 1
      %p55 = scmp.eq.s32.totalorder %s17, 1
      %p56 = scmp.ne.s32.totalorder %s51, %s53
      %p57 = scmp.eq.s32.totalorder %s17, 0
      %p58 = por %p56, %p57
      %p59 = scmp.ne.s32.totalorder %s51, %s53
      %p60 = scmp.eq.s32.totalorder %s22, 1
      %p61 = por %p59, %p60
      %p62 = scmp.ne.s32.totalorder %s53, %s54
      %p63 = scmp.eq.s32.totalorder %s22, 0
      %p64 = por %p62, %p63
      %p65 = scmp.ne.s32.totalorder %s53, %s54
      %p66 = scmp.eq.s32.totalorder %s23, 1
      %p67 = por %p65, %p66
      %p69 = scmp.ne.s32.totalorder %s54, %s68
      %p70 = scmp.eq.s32.totalorder %s23, 0
      %p71 = por %p69, %p70
      %s73 = sadd.s32 %s72, 1
      %p76 = scmp.eq.s32.totalorder %s17, 1
      %p77 = scmp.ne.s32.totalorder %s72, %s74
      %p78 = scmp.eq.s32.totalorder %s17, 0
      %p79 = por %p77, %p78
      %p80 = scmp.ne.s32.totalorder %s72, %s74
      %p81 = scmp.eq.s32.totalorder %s22, 1
      %p82 = por %p80, %p81
      %p83 = scmp.ne.s32.totalorder %s74, %s75
      %p84 = scmp.eq.s32.totalorder %s22, 0
      %p85 = por %p83, %p84
      %p86 = scmp.ne.s32.totalorder %s74, %s75
      %p87 = scmp.eq.s32.totalorder %s23, 1
      %p88 = por %p86, %p87
      %p90 = scmp.ne.s32.totalorder %s75, %s89
      %p91 = scmp.eq.s32.totalorder %s23, 0
      %p92 = por %p90, %p91
      %s94 = sadd.s32 %s93, 1
      %p97 = scmp.eq.s32.totalorder %s17, 1
      %p98 = scmp.ne.s32.totalorder %s93, %s95
      %p99 = scmp.eq.s32.totalorder %s17, 0
      %p100 = por %p98, %p99
      %p101 = scmp.ne.s32.totalorder %s93, %s95
      %p102 = scmp.eq.s32.totalorder %s22, 1
      %p103 = por %p101, %p102
      %p104 = scmp.ne.s32.totalorder %s95, %s96
      %p105 = scmp.eq.s32.totalorder %s22, 0
      %p106 = por %p104, %p105
      %p107 = scmp.ne.s32.totalorder %s95, %s96
      %p108 = scmp.eq.s32.totalorder %s23, 1
      %p109 = por %p107, %p108
      %p111 = scmp.ne.s32.totalorder %s96, %s110
      %p112 = scmp.eq.s32.totalorder %s23, 0
      %p113 = por %p111, %p112
      %s115 = sadd.s32 %s114, 1
      %p118 = scmp.eq.s32.totalorder %s17, 1
      %p119 = scmp.ne.s32.totalorder %s114, %s116
      %p120 = scmp.eq.s32.totalorder %s17, 0
      %p121 = por %p119, %p120
      %p122 = scmp.ne.s32.totalorder %s114, %s116
      %p123 = scmp.eq.s32.totalorder %s22, 1
      %p124 = por %p122, %p123
      %p125 = scmp.ne.s32.totalorder %s116, %s117
      %p126 = scmp.eq.s32.totalorder %s22, 0
      %p127 = por %p125, %p126
      %p128 = scmp.ne.s32.totalorder %s116, %s117
      %p129 = scmp.eq.s32.totalorder %s23, 1
      %p130 = por %p128, %p129
      %p132 = scmp.ne.s32.totalorder %s117, %s131
      %p133 = scmp.eq.s32.totalorder %s23, 0
      %p134 = por %p132, %p133
      %s135 = ssub.s32 %s17, %s24
      %p136 = scmp.eq.s32.totalorder %s135, 0
      %s138 = sadd.s32 %s137, 1
      %s139 = scalar_select %p136, %s137, %s138
      %p142 = pneg %p136
      %p143 = scmp.eq.s32.totalorder %s17, 1
      %p144 = por %p142, %p143
      %p145 = scmp.ne.s32.totalorder %s137, %s140
      %p146 = scmp.eq.s32.totalorder %s17, 0
      %p147 = por %p145, %p146
      %p148 = scmp.ne.s32.totalorder %s137, %s140
      %p149 = scmp.eq.s32.totalorder %s22, 1
      %p150 = por %p148, %p149
      %p151 = scmp.ne.s32.totalorder %s140, %s141
      %p152 = scmp.eq.s32.totalorder %s22, 0
      %p153 = por %p151, %p152
      %p154 = scmp.ne.s32.totalorder %s140, %s141
      %p155 = scmp.eq.s32.totalorder %s23, 1
      %p156 = por %p154, %p155
      %p158 = scmp.ne.s32.totalorder %s141, %s157
      %p159 = scmp.eq.s32.totalorder %s23, 0
      %p160 = por %p158, %p159
      %p161 = scmp.le.s32.totalorder 1, %s17
      %p162 = scmp.lt.s32.totalorder %s17, 3
      %p163 = pnand %p161, %p162
      %p164 = pneg %p163
      // Predicated region
      $region9: #{basic_block_forward.1} parent=5 // pred_check
        _
      $region10: #{basic_block_forward.1} parent=5 // pred_check_branch
        %166 = sbr.rel (%p163) target = $region12
      $region11: #{basic_block_forward.1} parent=5 // pred_region
        %s167 = ssub.s32 %s17, 1
        // Predicated region
        $region13: #{basic_block_forward.1} parent=11 // pred_check
          %p168 = pneg %p64
        $region14: #{basic_block_forward.1} parent=11 // pred_check_branch
          %170 = sbr.rel (%p168) target = $region16
        $region15: #{basic_block_forward.1} parent=11 // pred_region
          _
        $region16: #{basic_block_forward.1} parent=11 // pred_fallthru
          _
        // Predicated region
        $region17: #{basic_block_forward.1} parent=11 // pred_check
          %p171 = pneg %p85
        $region18: #{basic_block_forward.1} parent=11 // pred_check_branch
          %173 = sbr.rel (%p171) target = $region20
        $region19: #{basic_block_forward.1} parent=11 // pred_region
          _
        $region20: #{basic_block_forward.1} parent=11 // pred_fallthru
          _
        // Predicated region
        $region21: #{basic_block_forward.1} parent=11 // pred_check
          %p174 = pneg %p106
        $region22: #{basic_block_forward.1} parent=11 // pred_check_branch
          %176 = sbr.rel (%p174) target = $region24
        $region23: #{basic_block_forward.1} parent=11 // pred_region
          _
        $region24: #{basic_block_forward.1} parent=11 // pred_fallthru
          _
        // Predicated region
        $region25: #{basic_block_forward.1} parent=11 // pred_check
          %p177 = pneg %p127
        $region26: #{basic_block_forward.1} parent=11 // pred_check_branch
          %179 = sbr.rel (%p177) target = $region28
        $region27: #{basic_block_forward.1} parent=11 // pred_region
          _
        $region28: #{basic_block_forward.1} parent=11 // pred_fallthru
          _
      $region12: #{basic_block_forward.1} parent=5 // pred_fallthru
        _
      %p180 = scmp.lt.s32.totalorder %s17, 2
      // Predicated region
      $region29: #{basic_block_forward.1} parent=5 // pred_check
        %p181 = pneg %p180
      $region30: #{basic_block_forward.1} parent=5 // pred_check_branch
        %183 = sbr.rel (%p181) target = $region32
      $region31: #{basic_block_forward.1} parent=5 // pred_region
        // Predicated region
        $region33: #{basic_block_forward.1} parent=31 // pred_check
          %p184 = pneg %p37
        $region34: #{basic_block_forward.1} parent=31 // pred_check_branch
          %186 = sbr.rel (%p184) target = $region36
        $region35: #{basic_block_forward.1} parent=31 // pred_region
          %s187 = sand.u32 %s27, 1
          %s188 = scalar_lea.sflag [#allocation5], %s187
          %s189 = sand.u32 %s27, 1
          %s190 = smul.addr %s189, 512
          %s191 = scalar_lea.vmem [#allocation4], %s190
          %s192 = smul.u32 2, %s17
          %194 = vsyncadd %s188, 0
          %s195 = smul.addr %s192, 32
          %s196 = smul.addr %s195, 8
          %s197 = scalar_lea.hbm %s0, %s196
          %s198 = sshll.u32 %s197, 4
          %s199 = int_to_ptr.hbm [resolvable:$true] %s198
          %s200 = sshll.u32 %s191, 4
          %s201 = int_to_ptr.vmem [resolvable:$true] %s200
          %206 = dma.hbm_to_vmem [thread:$0]  %s199, 8192, %s201, %s188, 128, 128, 8
        $region36: #{basic_block_forward.1} parent=31 // pred_fallthru
          _
      $region32: #{basic_block_forward.1} parent=5 // pred_fallthru
        _
      %p207 = scmp.le.s32.totalorder 1, %s17
      %p208 = scmp.lt.s32.totalorder %s17, 3
      %p209 = pnand %p207, %p208
      %p210 = pneg %p209
      // Predicated region
      $region37: #{basic_block_forward.1} parent=5 // pred_check
        _
      $region38: #{basic_block_forward.1} parent=5 // pred_check_branch
        %212 = sbr.rel (%p209) target = $region40
      $region39: #{basic_block_forward.1} parent=5 // pred_region
        %s213 = ssub.s32 %s17, 1
        %s214 = sand.u32 %s30, 1
        %s215 = scalar_lea.sflag [#allocation5], %s214
        %s216 = sand.u32 %s30, 1
        %s217 = smul.addr %s216, 512
        %s218 = scalar_lea.vmem [#allocation4], %s217
        // Predicated region
        $region41: #{basic_block_forward.1} parent=39 // pred_check
          %p219 = pneg %p43
        $region42: #{basic_block_forward.1} parent=39 // pred_check_branch
          %221 = sbr.rel (%p219) target = $region44
        $region43: #{basic_block_forward.1} parent=39 // pred_region
          %223 = dma.done %s215, 8192
        $region44: #{basic_block_forward.1} parent=39 // pred_fallthru
          _
        %s224 = sand.u32 %s30, 1
        %s225 = scalar_lea.sflag [#allocation5], %s224
        %s226 = sand.u32 %s30, 1
        %s227 = smul.addr %s226, 512
        %s228 = scalar_lea.vmem [#allocation4], %s227
        %p229 = pneg %p43
        %p230 = pneg %p40
        %p231 = pneg %p64
        %p232 = pneg %p61
        %p233 = pneg %p85
        %p234 = pneg %p82
        %p235 = pneg %p106
        %p236 = pneg %p103
        %p237 = pneg %p127
        %p238 = pneg %p124
        %p239 = pneg %p153
        %p240 = pneg %p150
        %s241 = sand.u32 %s140, 1
        %s242 = scalar_lea.sflag [#allocation6], %s241
        %s243 = sand.u32 %s140, 1
        %s244 = smul.addr %s243, 512
        %s245 = scalar_lea.vmem [#allocation7], %s244
        %s246 = smul.u32 2, %s22
        %s247 = smul.u32 2, %s22
        %vm249 = vcmask 261120
        %250 = vst.msk [vmem:[#allocation2] sm:$0xff] %vm249, 0.0
        %251 = vst.msk [vmem:[#allocation2 + $0x8] sm:$0xff] %vm249, 0.0
        %vm252 = vcmask 254976
        %253 = vst.msk [vmem:[#allocation2 + $0x10] sm:$0x3] %vm252, 0.0
        %254 = vst.msk [vmem:[#allocation2 + $0x1b0] sm:$0xff] %vm249, 0.0
        %255 = vst.msk [vmem:[#allocation2 + $0x1b8] sm:$0xff] %vm249, 0.0
        %256 = vst.msk [vmem:[#allocation2 + $0x1c0] sm:$0x3] %vm252, 0.0
        %s257 = scalar_lea.vmem [#allocation2], 408
        %258 = vst.msk [vmem:[%s257] sm:$0xff] %vm249, 0.0
        %259 = vst.msk [vmem:[%s257 + $0x8] sm:$0xff] %vm249, 0.0
        %260 = vst.msk [vmem:[%s257 + $0x10] sm:$0x3] %vm252, 0.0
        %261 = vst.msk [vmem:[%s257 + $0x1b0] sm:$0xff] %vm249, 0.0
        %262 = vst.msk [vmem:[%s257 + $0x1b8] sm:$0xff] %vm249, 0.0
        %263 = vst.msk [vmem:[%s257 + $0x1c0] sm:$0x3] %vm252, 0.0
        %vm264 = vcmask 253952
        %265 = vst.msk [vmem:[#allocation2] sm:$0x1] %vm264, 0.0
        %266 = vst.msk [vmem:[#allocation2 + $0x18] sm:$0x1] %vm264, 0.0
        %267 = vst.msk [vmem:[#allocation2 + $0x30] sm:$0x1] %vm264, 0.0
        %268 = vst.msk [vmem:[#allocation2 + $0x48] sm:$0x1] %vm264, 0.0
        %269 = vst.msk [vmem:[#allocation2 + $0x60] sm:$0x1] %vm264, 0.0
        %270 = vst.msk [vmem:[#allocation2 + $0x78] sm:$0x1] %vm264, 0.0
        %271 = vst.msk [vmem:[#allocation2 + $0x90] sm:$0x1] %vm264, 0.0
        %272 = vst.msk [vmem:[#allocation2 + $0xa8] sm:$0x1] %vm264, 0.0
        %273 = vst.msk [vmem:[#allocation2 + $0xc0] sm:$0x1] %vm264, 0.0
        %274 = vst.msk [vmem:[#allocation2 + $0xd8] sm:$0x1] %vm264, 0.0
        %275 = vst.msk [vmem:[#allocation2 + $0xf0] sm:$0x1] %vm264, 0.0
        %276 = vst.msk [vmem:[#allocation2 + $0x108] sm:$0x1] %vm264, 0.0
        %277 = vst.msk [vmem:[#allocation2 + $0x120] sm:$0x1] %vm264, 0.0
        %278 = vst.msk [vmem:[#allocation2 + $0x138] sm:$0x1] %vm264, 0.0
        %279 = vst.msk [vmem:[#allocation2 + $0x150] sm:$0x1] %vm264, 0.0
        %280 = vst.msk [vmem:[#allocation2 + $0x168] sm:$0x1] %vm264, 0.0
        %281 = vst.msk [vmem:[#allocation2 + $0x180] sm:$0x1] %vm264, 0.0
        %282 = vst.msk [vmem:[#allocation2 + $0x198] sm:$0x1] %vm264, 0.0
        %283 = vst.msk [vmem:[#allocation2 + $0x1b0] sm:$0x1] %vm264, 0.0
        %284 = vst.msk [vmem:[#allocation2 + $0x1c8] sm:$0x1] %vm264, 0.0
        %285 = vst.msk [vmem:[#allocation2 + $0x1e0] sm:$0x1] %vm264, 0.0
        %286 = vst.msk [vmem:[#allocation2 + $0x1f8] sm:$0x1] %vm264, 0.0
        %287 = vst.msk [vmem:[#allocation2 + $0x210] sm:$0x1] %vm264, 0.0
        %288 = vst.msk [vmem:[#allocation2 + $0x228] sm:$0x1] %vm264, 0.0
        %289 = vst.msk [vmem:[#allocation2 + $0x240] sm:$0x1] %vm264, 0.0
        %290 = vst.msk [vmem:[#allocation2 + $0x258] sm:$0x1] %vm264, 0.0
        %291 = vst.msk [vmem:[#allocation2 + $0x270] sm:$0x1] %vm264, 0.0
        %292 = vst.msk [vmem:[#allocation2 + $0x288] sm:$0x1] %vm264, 0.0
        %293 = vst.msk [vmem:[#allocation2 + $0x2a0] sm:$0x1] %vm264, 0.0
        %294 = vst.msk [vmem:[#allocation2 + $0x2b8] sm:$0x1] %vm264, 0.0
        %295 = vst.msk [vmem:[#allocation2 + $0x2d0] sm:$0x1] %vm264, 0.0
        %296 = vst.msk [vmem:[#allocation2 + $0x2e8] sm:$0x1] %vm264, 0.0
        %297 = vst.msk [vmem:[#allocation2 + $0x300] sm:$0x1] %vm264, 0.0
        %298 = vst.msk [vmem:[#allocation2 + $0x318] sm:$0x1] %vm264, 0.0
        %299 = vst.msk [vmem:[#allocation2 + $0x330] sm:$0x1] %vm264, 0.0
        %300 = vst.msk [vmem:[#allocation2 + $0x348] sm:$0x1] %vm264, 0.0
        %301 = vst.msk [vmem:[#allocation2 + $0x11] sm:$0x1] %vm264, 0.0
        %302 = vst.msk [vmem:[#allocation2 + $0x29] sm:$0x1] %vm264, 0.0
        %303 = vst.msk [vmem:[#allocation2 + $0x41] sm:$0x1] %vm264, 0.0
        %304 = vst.msk [vmem:[#allocation2 + $0x59] sm:$0x1] %vm264, 0.0
        %305 = vst.msk [vmem:[#allocation2 + $0x71] sm:$0x1] %vm264, 0.0
        %306 = vst.msk [vmem:[#allocation2 + $0x89] sm:$0x1] %vm264, 0.0
        %307 = vst.msk [vmem:[#allocation2 + $0xa1] sm:$0x1] %vm264, 0.0
        %308 = vst.msk [vmem:[#allocation2 + $0xb9] sm:$0x1] %vm264, 0.0
        %309 = vst.msk [vmem:[#allocation2 + $0xd1] sm:$0x1] %vm264, 0.0
        %310 = vst.msk [vmem:[#allocation2 + $0xe9] sm:$0x1] %vm264, 0.0
        %311 = vst.msk [vmem:[#allocation2 + $0x101] sm:$0x1] %vm264, 0.0
        %312 = vst.msk [vmem:[#allocation2 + $0x119] sm:$0x1] %vm264, 0.0
        %313 = vst.msk [vmem:[#allocation2 + $0x131] sm:$0x1] %vm264, 0.0
        %314 = vst.msk [vmem:[#allocation2 + $0x149] sm:$0x1] %vm264, 0.0
        %315 = vst.msk [vmem:[#allocation2 + $0x161] sm:$0x1] %vm264, 0.0
        %316 = vst.msk [vmem:[#allocation2 + $0x179] sm:$0x1] %vm264, 0.0
        %317 = vst.msk [vmem:[#allocation2 + $0x191] sm:$0x1] %vm264, 0.0
        %318 = vst.msk [vmem:[#allocation2 + $0x1a9] sm:$0x1] %vm264, 0.0
        %319 = vst.msk [vmem:[#allocation2 + $0x1c1] sm:$0x1] %vm264, 0.0
        %320 = vst.msk [vmem:[#allocation2 + $0x1d9] sm:$0x1] %vm264, 0.0
        %321 = vst.msk [vmem:[#allocation2 + $0x1f1] sm:$0x1] %vm264, 0.0
        %322 = vst.msk [vmem:[#allocation2 + $0x209] sm:$0x1] %vm264, 0.0
        %323 = vst.msk [vmem:[#allocation2 + $0x221] sm:$0x1] %vm264, 0.0
        %324 = vst.msk [vmem:[#allocation2 + $0x239] sm:$0x1] %vm264, 0.0
        %325 = vst.msk [vmem:[#allocation2 + $0x251] sm:$0x1] %vm264, 0.0
        %326 = vst.msk [vmem:[#allocation2 + $0x269] sm:$0x1] %vm264, 0.0
        %327 = vst.msk [vmem:[#allocation2 + $0x281] sm:$0x1] %vm264, 0.0
        %328 = vst.msk [vmem:[#allocation2 + $0x299] sm:$0x1] %vm264, 0.0
        %329 = vst.msk [vmem:[#allocation2 + $0x2b1] sm:$0x1] %vm264, 0.0
        %330 = vst.msk [vmem:[#allocation2 + $0x2c9] sm:$0x1] %vm264, 0.0
        %331 = vst.msk [vmem:[#allocation2 + $0x2e1] sm:$0x1] %vm264, 0.0
        %332 = vst.msk [vmem:[#allocation2 + $0x2f9] sm:$0x1] %vm264, 0.0
        %333 = vst.msk [vmem:[#allocation2 + $0x311] sm:$0x1] %vm264, 0.0
        %334 = vst.msk [vmem:[#allocation2 + $0x329] sm:$0x1] %vm264, 0.0
        %335 = vst.msk [vmem:[#allocation2 + $0x341] sm:$0x1] %vm264, 0.0
        %336 = vst.msk [vmem:[#allocation2 + $0x359] sm:$0x1] %vm264, 0.0
        %v337 = vld [vmem:[%s218] sm:$0xff]
        %v338 = vld [vmem:[%s218 + $0x8] sm:$0xff]
        %v339 = vld [vmem:[%s218 + $0x10] sm:$0xff]
        %v340 = vld [vmem:[%s218 + $0x18] sm:$0xff]
        %v341 = vld [vmem:[%s218 + $0x20] sm:$0xff]
        %v342 = vld [vmem:[%s218 + $0x28] sm:$0xff]
        %v343 = vld [vmem:[%s218 + $0x30] sm:$0xff]
        %v344 = vld [vmem:[%s218 + $0x38] sm:$0xff]
        %v345 = vld [vmem:[%s218 + $0x40] sm:$0xff]
        %v346 = vld [vmem:[%s218 + $0x48] sm:$0xff]
        %v347 = vld [vmem:[%s218 + $0x50] sm:$0xff]
        %v348 = vld [vmem:[%s218 + $0x58] sm:$0xff]
        %v349 = vld [vmem:[%s218 + $0x60] sm:$0xff]
        %v350 = vld [vmem:[%s218 + $0x68] sm:$0xff]
        %v351 = vld [vmem:[%s218 + $0x70] sm:$0xff]
        %v352 = vld [vmem:[%s218 + $0x78] sm:$0xff]
        %v353 = vld [vmem:[%s218 + $0x80] sm:$0xff]
        %v354 = vld [vmem:[%s218 + $0x88] sm:$0xff]
        %v355 = vld [vmem:[%s218 + $0x90] sm:$0xff]
        %v356 = vld [vmem:[%s218 + $0x98] sm:$0xff]
        %v357 = vld [vmem:[%s218 + $0xa0] sm:$0xff]
        %v358 = vld [vmem:[%s218 + $0xa8] sm:$0xff]
        %v359 = vld [vmem:[%s218 + $0xb0] sm:$0xff]
        %v360 = vld [vmem:[%s218 + $0xb8] sm:$0xff]
        %v361 = vld [vmem:[%s218 + $0xc0] sm:$0xff]
        %v362 = vld [vmem:[%s218 + $0xc8] sm:$0xff]
        %v363 = vld [vmem:[%s218 + $0xd0] sm:$0xff]
        %v364 = vld [vmem:[%s218 + $0xd8] sm:$0xff]
        %v365 = vld [vmem:[%s218 + $0xe0] sm:$0xff]
        %v366 = vld [vmem:[%s218 + $0xe8] sm:$0xff]
        %v367 = vld [vmem:[%s218 + $0xf0] sm:$0xff]
        %v368 = vld [vmem:[%s218 + $0xf8] sm:$0xff]
        %v369 = vld [vmem:[%s218 + $0x100] sm:$0xff]
        %v370 = vld [vmem:[%s218 + $0x108] sm:$0xff]
        %v371 = vld [vmem:[%s218 + $0x110] sm:$0xff]
        %v372 = vld [vmem:[%s218 + $0x118] sm:$0xff]
        %v373 = vld [vmem:[%s218 + $0x120] sm:$0xff]
        %v374 = vld [vmem:[%s218 + $0x128] sm:$0xff]
        %v375 = vld [vmem:[%s218 + $0x130] sm:$0xff]
        %v376 = vld [vmem:[%s218 + $0x138] sm:$0xff]
        %v377 = vld [vmem:[%s218 + $0x140] sm:$0xff]
        %v378 = vld [vmem:[%s218 + $0x148] sm:$0xff]
        %v379 = vld [vmem:[%s218 + $0x150] sm:$0xff]
        %v380 = vld [vmem:[%s218 + $0x158] sm:$0xff]
        %v381 = vld [vmem:[%s218 + $0x160] sm:$0xff]
        %v382 = vld [vmem:[%s218 + $0x168] sm:$0xff]
        %v383 = vld [vmem:[%s218 + $0x170] sm:$0xff]
        %v384 = vld [vmem:[%s218 + $0x178] sm:$0xff]
        %v385 = vld [vmem:[%s218 + $0x180] sm:$0xff]
        %v386 = vld [vmem:[%s218 + $0x188] sm:$0xff]
        %v387 = vld [vmem:[%s218 + $0x190] sm:$0xff]
        %v388 = vld [vmem:[%s218 + $0x198] sm:$0xff]
        %v389 = vld [vmem:[%s218 + $0x1a0] sm:$0xff]
        %v390 = vld [vmem:[%s218 + $0x1a8] sm:$0xff]
        %v391 = vld [vmem:[%s218 + $0x1b0] sm:$0xff]
        %v392 = vld [vmem:[%s218 + $0x1b8] sm:$0xff]
        %v393 = vld [vmem:[%s218 + $0x1c0] sm:$0xff]
        %v394 = vld [vmem:[%s218 + $0x1c8] sm:$0xff]
        %v395 = vld [vmem:[%s218 + $0x1d0] sm:$0xff]
        %v396 = vld [vmem:[%s218 + $0x1d8] sm:$0xff]
        %v397 = vld [vmem:[%s218 + $0x1e0] sm:$0xff]
        %v398 = vld [vmem:[%s218 + $0x1e8] sm:$0xff]
        %v399 = vld [vmem:[%s218 + $0x1f0] sm:$0xff]
        %v400 = vld [vmem:[%s218 + $0x1f8] sm:$0xff]
        %s401 = scalar_lea.vmem [#allocation2], 24
        %402 = vst.msk [vmem:[%s401 + $0x1] sm:$0xff] %vm249, %v337
        %403 = vst.msk [vmem:[%s401 + $0x9] sm:$0xff] %vm249, %v338
        %404 = vst.msk [vmem:[%s401 + $0x19] sm:$0xff] %vm249, %v339
        %405 = vst.msk [vmem:[%s401 + $0x21] sm:$0xff] %vm249, %v340
        %406 = vst.msk [vmem:[%s401 + $0x31] sm:$0xff] %vm249, %v341
        %407 = vst.msk [vmem:[%s401 + $0x39] sm:$0xff] %vm249, %v342
        %408 = vst.msk [vmem:[%s401 + $0x49] sm:$0xff] %vm249, %v343
        %409 = vst.msk [vmem:[%s401 + $0x51] sm:$0xff] %vm249, %v344
        %410 = vst.msk [vmem:[%s401 + $0x61] sm:$0xff] %vm249, %v345
        %411 = vst.msk [vmem:[%s401 + $0x69] sm:$0xff] %vm249, %v346
        %412 = vst.msk [vmem:[%s401 + $0x79] sm:$0xff] %vm249, %v347
        %413 = vst.msk [vmem:[%s401 + $0x81] sm:$0xff] %vm249, %v348
        %414 = vst.msk [vmem:[%s401 + $0x91] sm:$0xff] %vm249, %v349
        %415 = vst.msk [vmem:[%s401 + $0x99] sm:$0xff] %vm249, %v350
        %416 = vst.msk [vmem:[%s401 + $0xa9] sm:$0xff] %vm249, %v351
        %417 = vst.msk [vmem:[%s401 + $0xb1] sm:$0xff] %vm249, %v352
        %418 = vst.msk [vmem:[%s401 + $0xc1] sm:$0xff] %vm249, %v353
        %419 = vst.msk [vmem:[%s401 + $0xc9] sm:$0xff] %vm249, %v354
        %420 = vst.msk [vmem:[%s401 + $0xd9] sm:$0xff] %vm249, %v355
        %421 = vst.msk [vmem:[%s401 + $0xe1] sm:$0xff] %vm249, %v356
        %422 = vst.msk [vmem:[%s401 + $0xf1] sm:$0xff] %vm249, %v357
        %423 = vst.msk [vmem:[%s401 + $0xf9] sm:$0xff] %vm249, %v358
        %424 = vst.msk [vmem:[%s401 + $0x109] sm:$0xff] %vm249, %v359
        %425 = vst.msk [vmem:[%s401 + $0x111] sm:$0xff] %vm249, %v360
        %426 = vst.msk [vmem:[%s401 + $0x121] sm:$0xff] %vm249, %v361
        %427 = vst.msk [vmem:[%s401 + $0x129] sm:$0xff] %vm249, %v362
        %428 = vst.msk [vmem:[%s401 + $0x139] sm:$0xff] %vm249, %v363
        %429 = vst.msk [vmem:[%s401 + $0x141] sm:$0xff] %vm249, %v364
        %430 = vst.msk [vmem:[%s401 + $0x151] sm:$0xff] %vm249, %v365
        %431 = vst.msk [vmem:[%s401 + $0x159] sm:$0xff] %vm249, %v366
        %432 = vst.msk [vmem:[%s401 + $0x169] sm:$0xff] %vm249, %v367
        %433 = vst.msk [vmem:[%s401 + $0x171] sm:$0xff] %vm249, %v368
        %434 = vst.msk [vmem:[%s401 + $0x1b1] sm:$0xff] %vm249, %v369
        %435 = vst.msk [vmem:[%s401 + $0x1b9] sm:$0xff] %vm249, %v370
        %436 = vst.msk [vmem:[%s401 + $0x1c9] sm:$0xff] %vm249, %v371
        %437 = vst.msk [vmem:[%s401 + $0x1d1] sm:$0xff] %vm249, %v372
        %438 = vst.msk [vmem:[%s401 + $0x1e1] sm:$0xff] %vm249, %v373
        %439 = vst.msk [vmem:[%s401 + $0x1e9] sm:$0xff] %vm249, %v374
        %440 = vst.msk [vmem:[%s401 + $0x1f9] sm:$0xff] %vm249, %v375
        %441 = vst.msk [vmem:[%s401 + $0x201] sm:$0xff] %vm249, %v376
        %442 = vst.msk [vmem:[%s401 + $0x211] sm:$0xff] %vm249, %v377
        %443 = vst.msk [vmem:[%s401 + $0x219] sm:$0xff] %vm249, %v378
        %444 = vst.msk [vmem:[%s401 + $0x229] sm:$0xff] %vm249, %v379
        %445 = vst.msk [vmem:[%s401 + $0x231] sm:$0xff] %vm249, %v380
        %446 = vst.msk [vmem:[%s401 + $0x241] sm:$0xff] %vm249, %v381
        %447 = vst.msk [vmem:[%s401 + $0x249] sm:$0xff] %vm249, %v382
        %448 = vst.msk [vmem:[%s401 + $0x259] sm:$0xff] %vm249, %v383
        %449 = vst.msk [vmem:[%s401 + $0x261] sm:$0xff] %vm249, %v384
        %450 = vst.msk [vmem:[%s401 + $0x271] sm:$0xff] %vm249, %v385
        %451 = vst.msk [vmem:[%s401 + $0x279] sm:$0xff] %vm249, %v386
        %452 = vst.msk [vmem:[%s401 + $0x289] sm:$0xff] %vm249, %v387
        %453 = vst.msk [vmem:[%s401 + $0x291] sm:$0xff] %vm249, %v388
        %454 = vst.msk [vmem:[%s401 + $0x2a1] sm:$0xff] %vm249, %v389
        %455 = vst.msk [vmem:[%s401 + $0x2a9] sm:$0xff] %vm249, %v390
        %456 = vst.msk [vmem:[%s401 + $0x2b9] sm:$0xff] %vm249, %v391
        %457 = vst.msk [vmem:[%s401 + $0x2c1] sm:$0xff] %vm249, %v392
        %458 = vst.msk [vmem:[%s401 + $0x2d1] sm:$0xff] %vm249, %v393
        %459 = vst.msk [vmem:[%s401 + $0x2d9] sm:$0xff] %vm249, %v394
        %460 = vst.msk [vmem:[%s401 + $0x2e9] sm:$0xff] %vm249, %v395
        %461 = vst.msk [vmem:[%s401 + $0x2f1] sm:$0xff] %vm249, %v396
        %462 = vst.msk [vmem:[%s401 + $0x301] sm:$0xff] %vm249, %v397
        %463 = vst.msk [vmem:[%s401 + $0x309] sm:$0xff] %vm249, %v398
        %464 = vst.msk [vmem:[%s401 + $0x319] sm:$0xff] %vm249, %v399
        %465 = vst.msk [vmem:[%s401 + $0x321] sm:$0xff] %vm249, %v400
        %v466 = vld [vmem:[#allocation2] sm:$0xff]
        %v467 = vld [vmem:[#allocation2 + $0x8] sm:$0xff]
        %v468 = vld [vmem:[#allocation2 + $0x18] sm:$0xff]
        %v469 = vld [vmem:[#allocation2 + $0x20] sm:$0xff]
        %v470 = vld [vmem:[#allocation2 + $0x30] sm:$0xff]
        %v471 = vld [vmem:[#allocation2 + $0x38] sm:$0xff]
        %v472 = vld [vmem:[#allocation2 + $0x48] sm:$0xff]
        %v473 = vld [vmem:[#allocation2 + $0x50] sm:$0xff]
        %v474 = vld [vmem:[#allocation2 + $0x60] sm:$0xff]
        %v475 = vld [vmem:[#allocation2 + $0x68] sm:$0xff]
        %v476 = vld [vmem:[#allocation2 + $0x78] sm:$0xff]
        %v477 = vld [vmem:[#allocation2 + $0x80] sm:$0xff]
        %v478 = vld [vmem:[#allocation2 + $0x90] sm:$0xff]
        %v479 = vld [vmem:[#allocation2 + $0x98] sm:$0xff]
        %v480 = vld [vmem:[#allocation2 + $0xa8] sm:$0xff]
        %v481 = vld [vmem:[#allocation2 + $0xb0] sm:$0xff]
        %v482 = vld [vmem:[#allocation2 + $0xc0] sm:$0xff]
        %v483 = vld [vmem:[#allocation2 + $0xc8] sm:$0xff]
        %v484 = vld [vmem:[#allocation2 + $0xd8] sm:$0xff]
        %v485 = vld [vmem:[#allocation2 + $0xe0] sm:$0xff]
        %v486 = vld [vmem:[#allocation2 + $0xf0] sm:$0xff]
        %v487 = vld [vmem:[#allocation2 + $0xf8] sm:$0xff]
        %v488 = vld [vmem:[#allocation2 + $0x108] sm:$0xff]
        %v489 = vld [vmem:[#allocation2 + $0x110] sm:$0xff]
        %v490 = vld [vmem:[#allocation2 + $0x120] sm:$0xff]
        %v491 = vld [vmem:[#allocation2 + $0x128] sm:$0xff]
        %v492 = vld [vmem:[#allocation2 + $0x138] sm:$0xff]
        %v493 = vld [vmem:[#allocation2 + $0x140] sm:$0xff]
        %v494 = vld [vmem:[#allocation2 + $0x150] sm:$0xff]
        %v495 = vld [vmem:[#allocation2 + $0x158] sm:$0xff]
        %v496 = vld [vmem:[#allocation2 + $0x168] sm:$0xff]
        %v497 = vld [vmem:[#allocation2 + $0x170] sm:$0xff]
        %v498 = vld [vmem:[#allocation2 + $0x1b0] sm:$0xff]
        %v499 = vld [vmem:[#allocation2 + $0x1b8] sm:$0xff]
        %v500 = vld [vmem:[#allocation2 + $0x1c8] sm:$0xff]
        %v501 = vld [vmem:[#allocation2 + $0x1d0] sm:$0xff]
        %v502 = vld [vmem:[#allocation2 + $0x1e0] sm:$0xff]
        %v503 = vld [vmem:[#allocation2 + $0x1e8] sm:$0xff]
        %v504 = vld [vmem:[#allocation2 + $0x1f8] sm:$0xff]
        %v505 = vld [vmem:[#allocation2 + $0x200] sm:$0xff]
        %v506 = vld [vmem:[#allocation2 + $0x210] sm:$0xff]
        %v507 = vld [vmem:[#allocation2 + $0x218] sm:$0xff]
        %v508 = vld [vmem:[#allocation2 + $0x228] sm:$0xff]
        %v509 = vld [vmem:[#allocation2 + $0x230] sm:$0xff]
        %v510 = vld [vmem:[#allocation2 + $0x240] sm:$0xff]
        %v511 = vld [vmem:[#allocation2 + $0x248] sm:$0xff]
        %v512 = vld [vmem:[#allocation2 + $0x258] sm:$0xff]
        %v513 = vld [vmem:[#allocation2 + $0x260] sm:$0xff]
        %v514 = vld [vmem:[#allocation2 + $0x270] sm:$0xff]
        %v515 = vld [vmem:[#allocation2 + $0x278] sm:$0xff]
        %v516 = vld [vmem:[#allocation2 + $0x288] sm:$0xff]
        %v517 = vld [vmem:[#allocation2 + $0x290] sm:$0xff]
        %v518 = vld [vmem:[#allocation2 + $0x2a0] sm:$0xff]
        %v519 = vld [vmem:[#allocation2 + $0x2a8] sm:$0xff]
        %v520 = vld [vmem:[#allocation2 + $0x2b8] sm:$0xff]
        %v521 = vld [vmem:[#allocation2 + $0x2c0] sm:$0xff]
        %v522 = vld [vmem:[#allocation2 + $0x2d0] sm:$0xff]
        %v523 = vld [vmem:[#allocation2 + $0x2d8] sm:$0xff]
        %v524 = vld [vmem:[#allocation2 + $0x2e8] sm:$0xff]
        %v525 = vld [vmem:[#allocation2 + $0x2f0] sm:$0xff]
        %v526 = vld [vmem:[#allocation2 + $0x300] sm:$0xff]
        %v527 = vld [vmem:[#allocation2 + $0x308] sm:$0xff]
        %v528 = vld [vmem:[#allocation2 + $0x318] sm:$0xff]
        %v529 = vld [vmem:[#allocation2 + $0x320] sm:$0xff]
        %v530 = vpack.c.bf16 %v466, %v466
        %v531 = vpack.c.bf16 %v467, %v467
        %v532 = vpack.c.bf16 %v468, %v468
        %v533 = vpack.c.bf16 %v469, %v469
        %v534 = vpack.c.bf16 %v470, %v470
        %v535 = vpack.c.bf16 %v471, %v471
        %v536 = vpack.c.bf16 %v472, %v472
        %v537 = vpack.c.bf16 %v473, %v473
        %v538 = vpack.c.bf16 %v474, %v474
        %v539 = vpack.c.bf16 %v475, %v475
        %v540 = vpack.c.bf16 %v476, %v476
        %v541 = vpack.c.bf16 %v477, %v477
        %v542 = vpack.c.bf16 %v478, %v478
        %v543 = vpack.c.bf16 %v479, %v479
        %v544 = vpack.c.bf16 %v480, %v480
        %v545 = vpack.c.bf16 %v481, %v481
        %v546 = vpack.c.bf16 %v482, %v482
        %v547 = vpack.c.bf16 %v483, %v483
        %v548 = vpack.c.bf16 %v484, %v484
        %v549 = vpack.c.bf16 %v485, %v485
        %v550 = vpack.c.bf16 %v486, %v486
        %v551 = vpack.c.bf16 %v487, %v487
        %v552 = vpack.c.bf16 %v488, %v488
        %v553 = vpack.c.bf16 %v489, %v489
        %v554 = vpack.c.bf16 %v490, %v490
        %v555 = vpack.c.bf16 %v491, %v491
        %v556 = vpack.c.bf16 %v492, %v492
        %v557 = vpack.c.bf16 %v493, %v493
        %v558 = vpack.c.bf16 %v494, %v494
        %v559 = vpack.c.bf16 %v495, %v495
        %v560 = vpack.c.bf16 %v496, %v496
        %v561 = vpack.c.bf16 %v497, %v497
        %v562 = vpack.c.bf16 %v498, %v498
        %v563 = vpack.c.bf16 %v499, %v499
        %v564 = vpack.c.bf16 %v500, %v500
        %v565 = vpack.c.bf16 %v501, %v501
        %v566 = vpack.c.bf16 %v502, %v502
        %v567 = vpack.c.bf16 %v503, %v503
        %v568 = vpack.c.bf16 %v504, %v504
        %v569 = vpack.c.bf16 %v505, %v505
        %v570 = vpack.c.bf16 %v506, %v506
        %v571 = vpack.c.bf16 %v507, %v507
        %v572 = vpack.c.bf16 %v508, %v508
        %v573 = vpack.c.bf16 %v509, %v509
        %v574 = vpack.c.bf16 %v510, %v510
        %v575 = vpack.c.bf16 %v511, %v511
        %v576 = vpack.c.bf16 %v512, %v512
        %v577 = vpack.c.bf16 %v513, %v513
        %v578 = vpack.c.bf16 %v514, %v514
        %v579 = vpack.c.bf16 %v515, %v515
        %v580 = vpack.c.bf16 %v516, %v516
        %v581 = vpack.c.bf16 %v517, %v517
        %v582 = vpack.c.bf16 %v518, %v518
        %v583 = vpack.c.bf16 %v519, %v519
        %v584 = vpack.c.bf16 %v520, %v520
        %v585 = vpack.c.bf16 %v521, %v521
        %v586 = vpack.c.bf16 %v522, %v522
        %v587 = vpack.c.bf16 %v523, %v523
        %v588 = vpack.c.bf16 %v524, %v524
        %v589 = vpack.c.bf16 %v525, %v525
        %v590 = vpack.c.bf16 %v526, %v526
        %v591 = vpack.c.bf16 %v527, %v527
        %v592 = vpack.c.bf16 %v528, %v528
        %v593 = vpack.c.bf16 %v529, %v529
        %vm594 = vcmask 257024
        %595 = vst.msk [vmem:[#allocation3] sm:$0xf] %vm594, %v530
        %596 = vst.msk [vmem:[#allocation3 + $0xc] sm:$0xf] %vm594, %v531
        %597 = vst.msk [vmem:[#allocation3 + $0x18] sm:$0xf] %vm594, %v532
        %598 = vst.msk [vmem:[#allocation3 + $0x24] sm:$0xf] %vm594, %v533
        %599 = vst.msk [vmem:[#allocation3 + $0x30] sm:$0xf] %vm594, %v534
        %600 = vst.msk [vmem:[#allocation3 + $0x3c] sm:$0xf] %vm594, %v535
        %601 = vst.msk [vmem:[#allocation3 + $0x48] sm:$0xf] %vm594, %v536
        %602 = vst.msk [vmem:[#allocation3 + $0x54] sm:$0xf] %vm594, %v537
        %603 = vst.msk [vmem:[#allocation3 + $0x60] sm:$0xf] %vm594, %v538
        %604 = vst.msk [vmem:[#allocation3 + $0x6c] sm:$0xf] %vm594, %v539
        %605 = vst.msk [vmem:[#allocation3 + $0x78] sm:$0xf] %vm594, %v540
        %606 = vst.msk [vmem:[#allocation3 + $0x84] sm:$0xf] %vm594, %v541
        %607 = vst.msk [vmem:[#allocation3 + $0x90] sm:$0xf] %vm594, %v542
        %608 = vst.msk [vmem:[#allocation3 + $0x9c] sm:$0xf] %vm594, %v543
        %609 = vst.msk [vmem:[#allocation3 + $0xa8] sm:$0xf] %vm594, %v544
        %610 = vst.msk [vmem:[#allocation3 + $0xb4] sm:$0xf] %vm594, %v545
        %611 = vst.msk [vmem:[#allocation3 + $0xc0] sm:$0xf] %vm594, %v546
        %612 = vst.msk [vmem:[#allocation3 + $0xcc] sm:$0xf] %vm594, %v547
        %613 = vst.msk [vmem:[#allocation3 + $0xd8] sm:$0xf] %vm594, %v548
        %614 = vst.msk [vmem:[#allocation3 + $0xe4] sm:$0xf] %vm594, %v549
        %615 = vst.msk [vmem:[#allocation3 + $0xf0] sm:$0xf] %vm594, %v550
        %616 = vst.msk [vmem:[#allocation3 + $0xfc] sm:$0xf] %vm594, %v551
        %617 = vst.msk [vmem:[#allocation3 + $0x108] sm:$0xf] %vm594, %v552
        %618 = vst.msk [vmem:[#allocation3 + $0x114] sm:$0xf] %vm594, %v553
        %619 = vst.msk [vmem:[#allocation3 + $0x120] sm:$0xf] %vm594, %v554
        %620 = vst.msk [vmem:[#allocation3 + $0x12c] sm:$0xf] %vm594, %v555
        %621 = vst.msk [vmem:[#allocation3 + $0x138] sm:$0xf] %vm594, %v556
        %622 = vst.msk [vmem:[#allocation3 + $0x144] sm:$0xf] %vm594, %v557
        %623 = vst.msk [vmem:[#allocation3 + $0x150] sm:$0xf] %vm594, %v558
        %624 = vst.msk [vmem:[#allocation3 + $0x15c] sm:$0xf] %vm594, %v559
        %625 = vst.msk [vmem:[#allocation3 + $0x168] sm:$0xf] %vm594, %v560
        %626 = vst.msk [vmem:[#allocation3 + $0x174] sm:$0xf] %vm594, %v561
        %627 = vst.msk [vmem:[#allocation3 + $0x180] sm:$0xf] %vm594, %v562
        %628 = vst.msk [vmem:[#allocation3 + $0x18c] sm:$0xf] %vm594, %v563
        %629 = vst.msk [vmem:[#allocation3 + $0x198] sm:$0xf] %vm594, %v564
        %630 = vst.msk [vmem:[#allocation3 + $0x1a4] sm:$0xf] %vm594, %v565
        %631 = vst.msk [vmem:[#allocation3 + $0x1b0] sm:$0xf] %vm594, %v566
        %632 = vst.msk [vmem:[#allocation3 + $0x1bc] sm:$0xf] %vm594, %v567
        %633 = vst.msk [vmem:[#allocation3 + $0x1c8] sm:$0xf] %vm594, %v568
        %634 = vst.msk [vmem:[#allocation3 + $0x1d4] sm:$0xf] %vm594, %v569
        %635 = vst.msk [vmem:[#allocation3 + $0x1e0] sm:$0xf] %vm594, %v570
        %636 = vst.msk [vmem:[#allocation3 + $0x1ec] sm:$0xf] %vm594, %v571
        %637 = vst.msk [vmem:[#allocation3 + $0x1f8] sm:$0xf] %vm594, %v572
        %638 = vst.msk [vmem:[#allocation3 + $0x204] sm:$0xf] %vm594, %v573
        %639 = vst.msk [vmem:[#allocation3 + $0x210] sm:$0xf] %vm594, %v574
        %640 = vst.msk [vmem:[#allocation3 + $0x21c] sm:$0xf] %vm594, %v575
        %641 = vst.msk [vmem:[#allocation3 + $0x228] sm:$0xf] %vm594, %v576
        %642 = vst.msk [vmem:[#allocation3 + $0x234] sm:$0xf] %vm594, %v577
        %643 = vst.msk [vmem:[#allocation3 + $0x240] sm:$0xf] %vm594, %v578
        %644 = vst.msk [vmem:[#allocation3 + $0x24c] sm:$0xf] %vm594, %v579
        %645 = vst.msk [vmem:[#allocation3 + $0x258] sm:$0xf] %vm594, %v580
        %646 = vst.msk [vmem:[#allocation3 + $0x264] sm:$0xf] %vm594, %v581
        %647 = vst.msk [vmem:[#allocation3 + $0x270] sm:$0xf] %vm594, %v582
        %648 = vst.msk [vmem:[#allocation3 + $0x27c] sm:$0xf] %vm594, %v583
        %649 = vst.msk [vmem:[#allocation3 + $0x288] sm:$0xf] %vm594, %v584
        %650 = vst.msk [vmem:[#allocation3 + $0x294] sm:$0xf] %vm594, %v585
        %651 = vst.msk [vmem:[#allocation3 + $0x2a0] sm:$0xf] %vm594, %v586
        %652 = vst.msk [vmem:[#allocation3 + $0x2ac] sm:$0xf] %vm594, %v587
        %653 = vst.msk [vmem:[#allocation3 + $0x2b8] sm:$0xf] %vm594, %v588
        %654 = vst.msk [vmem:[#allocation3 + $0x2c4] sm:$0xf] %vm594, %v589
        %655 = vst.msk [vmem:[#allocation3 + $0x2d0] sm:$0xf] %vm594, %v590
        %656 = vst.msk [vmem:[#allocation3 + $0x2dc] sm:$0xf] %vm594, %v591
        %657 = vst.msk [vmem:[#allocation3 + $0x2e8] sm:$0xf] %vm594, %v592
        %658 = vst.msk [vmem:[#allocation3 + $0x2f4] sm:$0xf] %vm594, %v593
        %v659 = vld [vmem:[#allocation2 + $0x1] sm:$0xff]
        %v660 = vld [vmem:[#allocation2 + $0x9] sm:$0xff]
        %v661 = vld [vmem:[#allocation2 + $0x19] sm:$0xff]
        %v662 = vld [vmem:[#allocation2 + $0x21] sm:$0xff]
        %v663 = vld [vmem:[#allocation2 + $0x31] sm:$0xff]
        %v664 = vld [vmem:[#allocation2 + $0x39] sm:$0xff]
        %v665 = vld [vmem:[#allocation2 + $0x49] sm:$0xff]
        %v666 = vld [vmem:[#allocation2 + $0x51] sm:$0xff]
        %v667 = vld [vmem:[#allocation2 + $0x61] sm:$0xff]
        %v668 = vld [vmem:[#allocation2 + $0x69] sm:$0xff]
        %v669 = vld [vmem:[#allocation2 + $0x79] sm:$0xff]
        %v670 = vld [vmem:[#allocation2 + $0x81] sm:$0xff]
        %v671 = vld [vmem:[#allocation2 + $0x91] sm:$0xff]
        %v672 = vld [vmem:[#allocation2 + $0x99] sm:$0xff]
        %v673 = vld [vmem:[#allocation2 + $0xa9] sm:$0xff]
        %v674 = vld [vmem:[#allocation2 + $0xb1] sm:$0xff]
        %v675 = vld [vmem:[#allocation2 + $0xc1] sm:$0xff]
        %v676 = vld [vmem:[#allocation2 + $0xc9] sm:$0xff]
        %v677 = vld [vmem:[#allocation2 + $0xd9] sm:$0xff]
        %v678 = vld [vmem:[#allocation2 + $0xe1] sm:$0xff]
        %v679 = vld [vmem:[#allocation2 + $0xf1] sm:$0xff]
        %v680 = vld [vmem:[#allocation2 + $0xf9] sm:$0xff]
        %v681 = vld [vmem:[#allocation2 + $0x109] sm:$0xff]
        %v682 = vld [vmem:[#allocation2 + $0x111] sm:$0xff]
        %v683 = vld [vmem:[#allocation2 + $0x121] sm:$0xff]
        %v684 = vld [vmem:[#allocation2 + $0x129] sm:$0xff]
        %v685 = vld [vmem:[#allocation2 + $0x139] sm:$0xff]
        %v686 = vld [vmem:[#allocation2 + $0x141] sm:$0xff]
        %v687 = vld [vmem:[#allocation2 + $0x151] sm:$0xff]
        %v688 = vld [vmem:[#allocation2 + $0x159] sm:$0xff]
        %v689 = vld [vmem:[#allocation2 + $0x169] sm:$0xff]
        %v690 = vld [vmem:[#allocation2 + $0x171] sm:$0xff]
        %v691 = vld [vmem:[#allocation2 + $0x1b1] sm:$0xff]
        %v692 = vld [vmem:[#allocation2 + $0x1b9] sm:$0xff]
        %v693 = vld [vmem:[#allocation2 + $0x1c9] sm:$0xff]
        %v694 = vld [vmem:[#allocation2 + $0x1d1] sm:$0xff]
        %v695 = vld [vmem:[#allocation2 + $0x1e1] sm:$0xff]
        %v696 = vld [vmem:[#allocation2 + $0x1e9] sm:$0xff]
        %v697 = vld [vmem:[#allocation2 + $0x1f9] sm:$0xff]
        %v698 = vld [vmem:[#allocation2 + $0x201] sm:$0xff]
        %v699 = vld [vmem:[#allocation2 + $0x211] sm:$0xff]
        %v700 = vld [vmem:[#allocation2 + $0x219] sm:$0xff]
        %v701 = vld [vmem:[#allocation2 + $0x229] sm:$0xff]
        %v702 = vld [vmem:[#allocation2 + $0x231] sm:$0xff]
        %v703 = vld [vmem:[#allocation2 + $0x241] sm:$0xff]
        %v704 = vld [vmem:[#allocation2 + $0x249] sm:$0xff]
        %v705 = vld [vmem:[#allocation2 + $0x259] sm:$0xff]
        %v706 = vld [vmem:[#allocation2 + $0x261] sm:$0xff]
        %v707 = vld [vmem:[#allocation2 + $0x271] sm:$0xff]
        %v708 = vld [vmem:[#allocation2 + $0x279] sm:$0xff]
        %v709 = vld [vmem:[#allocation2 + $0x289] sm:$0xff]
        %v710 = vld [vmem:[#allocation2 + $0x291] sm:$0xff]
        %v711 = vld [vmem:[#allocation2 + $0x2a1] sm:$0xff]
        %v712 = vld [vmem:[#allocation2 + $0x2a9] sm:$0xff]
        %v713 = vld [vmem:[#allocation2 + $0x2b9] sm:$0xff]
        %v714 = vld [vmem:[#allocation2 + $0x2c1] sm:$0xff]
        %v715 = vld [vmem:[#allocation2 + $0x2d1] sm:$0xff]
        %v716 = vld [vmem:[#allocation2 + $0x2d9] sm:$0xff]
        %v717 = vld [vmem:[#allocation2 + $0x2e9] sm:$0xff]
        %v718 = vld [vmem:[#allocation2 + $0x2f1] sm:$0xff]
        %v719 = vld [vmem:[#allocation2 + $0x301] sm:$0xff]
        %v720 = vld [vmem:[#allocation2 + $0x309] sm:$0xff]
        %v721 = vld [vmem:[#allocation2 + $0x319] sm:$0xff]
        %v722 = vld [vmem:[#allocation2 + $0x321] sm:$0xff]
        %v723 = vpack.c.bf16 %v659, %v659
        %v724 = vpack.c.bf16 %v660, %v660
        %v725 = vpack.c.bf16 %v661, %v661
        %v726 = vpack.c.bf16 %v662, %v662
        %v727 = vpack.c.bf16 %v663, %v663
        %v728 = vpack.c.bf16 %v664, %v664
        %v729 = vpack.c.bf16 %v665, %v665
        %v730 = vpack.c.bf16 %v666, %v666
        %v731 = vpack.c.bf16 %v667, %v667
        %v732 = vpack.c.bf16 %v668, %v668
        %v733 = vpack.c.bf16 %v669, %v669
        %v734 = vpack.c.bf16 %v670, %v670
        %v735 = vpack.c.bf16 %v671, %v671
        %v736 = vpack.c.bf16 %v672, %v672
        %v737 = vpack.c.bf16 %v673, %v673
        %v738 = vpack.c.bf16 %v674, %v674
        %v739 = vpack.c.bf16 %v675, %v675
        %v740 = vpack.c.bf16 %v676, %v676
        %v741 = vpack.c.bf16 %v677, %v677
        %v742 = vpack.c.bf16 %v678, %v678
        %v743 = vpack.c.bf16 %v679, %v679
        %v744 = vpack.c.bf16 %v680, %v680
        %v745 = vpack.c.bf16 %v681, %v681
        %v746 = vpack.c.bf16 %v682, %v682
        %v747 = vpack.c.bf16 %v683, %v683
        %v748 = vpack.c.bf16 %v684, %v684
        %v749 = vpack.c.bf16 %v685, %v685
        %v750 = vpack.c.bf16 %v686, %v686
        %v751 = vpack.c.bf16 %v687, %v687
        %v752 = vpack.c.bf16 %v688, %v688
        %v753 = vpack.c.bf16 %v689, %v689
        %v754 = vpack.c.bf16 %v690, %v690
        %v755 = vpack.c.bf16 %v691, %v691
        %v756 = vpack.c.bf16 %v692, %v692
        %v757 = vpack.c.bf16 %v693, %v693
        %v758 = vpack.c.bf16 %v694, %v694
        %v759 = vpack.c.bf16 %v695, %v695
        %v760 = vpack.c.bf16 %v696, %v696
        %v761 = vpack.c.bf16 %v697, %v697
        %v762 = vpack.c.bf16 %v698, %v698
        %v763 = vpack.c.bf16 %v699, %v699
        %v764 = vpack.c.bf16 %v700, %v700
        %v765 = vpack.c.bf16 %v701, %v701
        %v766 = vpack.c.bf16 %v702, %v702
        %v767 = vpack.c.bf16 %v703, %v703
        %v768 = vpack.c.bf16 %v704, %v704
        %v769 = vpack.c.bf16 %v705, %v705
        %v770 = vpack.c.bf16 %v706, %v706
        %v771 = vpack.c.bf16 %v707, %v707
        %v772 = vpack.c.bf16 %v708, %v708
        %v773 = vpack.c.bf16 %v709, %v709
        %v774 = vpack.c.bf16 %v710, %v710
        %v775 = vpack.c.bf16 %v711, %v711
        %v776 = vpack.c.bf16 %v712, %v712
        %v777 = vpack.c.bf16 %v713, %v713
        %v778 = vpack.c.bf16 %v714, %v714
        %v779 = vpack.c.bf16 %v715, %v715
        %v780 = vpack.c.bf16 %v716, %v716
        %v781 = vpack.c.bf16 %v717, %v717
        %v782 = vpack.c.bf16 %v718, %v718
        %v783 = vpack.c.bf16 %v719, %v719
        %v784 = vpack.c.bf16 %v720, %v720
        %v785 = vpack.c.bf16 %v721, %v721
        %v786 = vpack.c.bf16 %v722, %v722
        %851 = vrot.lane.b32.xlu0 %v723, 32
        %v852 = vpop.permute.xlu0 %851
        %853 = vrot.lane.b32.xlu0 %v724, 32
        %v854 = vpop.permute.xlu0 %853
        %855 = vrot.lane.b32.xlu0 %v725, 32
        %v856 = vpop.permute.xlu0 %855
        %857 = vrot.lane.b32.xlu0 %v726, 32
        %v858 = vpop.permute.xlu0 %857
        %859 = vrot.lane.b32.xlu0 %v727, 32
        %v860 = vpop.permute.xlu0 %859
        %861 = vrot.lane.b32.xlu0 %v728, 32
        %v862 = vpop.permute.xlu0 %861
        %863 = vrot.lane.b32.xlu0 %v729, 32
        %v864 = vpop.permute.xlu0 %863
        %865 = vrot.lane.b32.xlu0 %v730, 32
        %v866 = vpop.permute.xlu0 %865
        %867 = vrot.lane.b32.xlu0 %v731, 32
        %v868 = vpop.permute.xlu0 %867
        %869 = vrot.lane.b32.xlu0 %v732, 32
        %v870 = vpop.permute.xlu0 %869
        %871 = vrot.lane.b32.xlu0 %v733, 32
        %v872 = vpop.permute.xlu0 %871
        %873 = vrot.lane.b32.xlu0 %v734, 32
        %v874 = vpop.permute.xlu0 %873
        %875 = vrot.lane.b32.xlu0 %v735, 32
        %v876 = vpop.permute.xlu0 %875
        %877 = vrot.lane.b32.xlu0 %v736, 32
        %v878 = vpop.permute.xlu0 %877
        %879 = vrot.lane.b32.xlu0 %v737, 32
        %v880 = vpop.permute.xlu0 %879
        %881 = vrot.lane.b32.xlu0 %v738, 32
        %v882 = vpop.permute.xlu0 %881
        %883 = vrot.lane.b32.xlu0 %v739, 32
        %v884 = vpop.permute.xlu0 %883
        %885 = vrot.lane.b32.xlu0 %v740, 32
        %v886 = vpop.permute.xlu0 %885
        %887 = vrot.lane.b32.xlu0 %v741, 32
        %v888 = vpop.permute.xlu0 %887
        %889 = vrot.lane.b32.xlu0 %v742, 32
        %v890 = vpop.permute.xlu0 %889
        %891 = vrot.lane.b32.xlu0 %v743, 32
        %v892 = vpop.permute.xlu0 %891
        %893 = vrot.lane.b32.xlu0 %v744, 32
        %v894 = vpop.permute.xlu0 %893
        %895 = vrot.lane.b32.xlu0 %v745, 32
        %v896 = vpop.permute.xlu0 %895
        %897 = vrot.lane.b32.xlu0 %v746, 32
        %v898 = vpop.permute.xlu0 %897
        %899 = vrot.lane.b32.xlu0 %v747, 32
        %v900 = vpop.permute.xlu0 %899
        %901 = vrot.lane.b32.xlu0 %v748, 32
        %v902 = vpop.permute.xlu0 %901
        %903 = vrot.lane.b32.xlu0 %v749, 32
        %v904 = vpop.permute.xlu0 %903
        %905 = vrot.lane.b32.xlu0 %v750, 32
        %v906 = vpop.permute.xlu0 %905
        %907 = vrot.lane.b32.xlu0 %v751, 32
        %v908 = vpop.permute.xlu0 %907
        %909 = vrot.lane.b32.xlu0 %v752, 32
        %v910 = vpop.permute.xlu0 %909
        %911 = vrot.lane.b32.xlu0 %v753, 32
        %v912 = vpop.permute.xlu0 %911
        %913 = vrot.lane.b32.xlu0 %v754, 32
        %v914 = vpop.permute.xlu0 %913
        %915 = vrot.lane.b32.xlu0 %v755, 32
        %v916 = vpop.permute.xlu0 %915
        %917 = vrot.lane.b32.xlu0 %v756, 32
        %v918 = vpop.permute.xlu0 %917
        %919 = vrot.lane.b32.xlu0 %v757, 32
        %v920 = vpop.permute.xlu0 %919
        %921 = vrot.lane.b32.xlu0 %v758, 32
        %v922 = vpop.permute.xlu0 %921
        %923 = vrot.lane.b32.xlu0 %v759, 32
        %v924 = vpop.permute.xlu0 %923
        %925 = vrot.lane.b32.xlu0 %v760, 32
        %v926 = vpop.permute.xlu0 %925
        %927 = vrot.lane.b32.xlu0 %v761, 32
        %v928 = vpop.permute.xlu0 %927
        %929 = vrot.lane.b32.xlu0 %v762, 32
        %v930 = vpop.permute.xlu0 %929
        %931 = vrot.lane.b32.xlu0 %v763, 32
        %v932 = vpop.permute.xlu0 %931
        %933 = vrot.lane.b32.xlu0 %v764, 32
        %v934 = vpop.permute.xlu0 %933
        %935 = vrot.lane.b32.xlu0 %v765, 32
        %v936 = vpop.permute.xlu0 %935
        %937 = vrot.lane.b32.xlu0 %v766, 32
        %v938 = vpop.permute.xlu0 %937
        %939 = vrot.lane.b32.xlu0 %v767, 32
        %v940 = vpop.permute.xlu0 %939
        %941 = vrot.lane.b32.xlu0 %v768, 32
        %v942 = vpop.permute.xlu0 %941
        %943 = vrot.lane.b32.xlu0 %v769, 32
        %v944 = vpop.permute.xlu0 %943
        %945 = vrot.lane.b32.xlu0 %v770, 32
        %v946 = vpop.permute.xlu0 %945
        %947 = vrot.lane.b32.xlu0 %v771, 32
        %v948 = vpop.permute.xlu0 %947
        %949 = vrot.lane.b32.xlu0 %v772, 32
        %v950 = vpop.permute.xlu0 %949
        %951 = vrot.lane.b32.xlu0 %v773, 32
        %v952 = vpop.permute.xlu0 %951
        %953 = vrot.lane.b32.xlu0 %v774, 32
        %v954 = vpop.permute.xlu0 %953
        %955 = vrot.lane.b32.xlu0 %v775, 32
        %v956 = vpop.permute.xlu0 %955
        %957 = vrot.lane.b32.xlu0 %v776, 32
        %v958 = vpop.permute.xlu0 %957
        %959 = vrot.lane.b32.xlu0 %v777, 32
        %v960 = vpop.permute.xlu0 %959
        %961 = vrot.lane.b32.xlu0 %v778, 32
        %v962 = vpop.permute.xlu0 %961
        %963 = vrot.lane.b32.xlu0 %v779, 32
        %v964 = vpop.permute.xlu0 %963
        %965 = vrot.lane.b32.xlu0 %v780, 32
        %v966 = vpop.permute.xlu0 %965
        %967 = vrot.lane.b32.xlu0 %v781, 32
        %v968 = vpop.permute.xlu0 %967
        %969 = vrot.lane.b32.xlu0 %v782, 32
        %v970 = vpop.permute.xlu0 %969
        %971 = vrot.lane.b32.xlu0 %v783, 32
        %v972 = vpop.permute.xlu0 %971
        %973 = vrot.lane.b32.xlu0 %v784, 32
        %v974 = vpop.permute.xlu0 %973
        %975 = vrot.lane.b32.xlu0 %v785, 32
        %v976 = vpop.permute.xlu0 %975
        %977 = vrot.lane.b32.xlu0 %v786, 32
        %v978 = vpop.permute.xlu0 %977
        %vm1043 = vcmask 519424
        %1044 = vst.msk [vmem:[#allocation3] sm:$0xf] %vm1043, %v852
        %1045 = vst.msk [vmem:[#allocation3 + $0xc] sm:$0xf] %vm1043, %v854
        %1046 = vst.msk [vmem:[#allocation3 + $0x18] sm:$0xf] %vm1043, %v856
        %1047 = vst.msk [vmem:[#allocation3 + $0x24] sm:$0xf] %vm1043, %v858
        %1048 = vst.msk [vmem:[#allocation3 + $0x30] sm:$0xf] %vm1043, %v860
        %1049 = vst.msk [vmem:[#allocation3 + $0x3c] sm:$0xf] %vm1043, %v862
        %1050 = vst.msk [vmem:[#allocation3 + $0x48] sm:$0xf] %vm1043, %v864
        %1051 = vst.msk [vmem:[#allocation3 + $0x54] sm:$0xf] %vm1043, %v866
        %1052 = vst.msk [vmem:[#allocation3 + $0x60] sm:$0xf] %vm1043, %v868
        %1053 = vst.msk [vmem:[#allocation3 + $0x6c] sm:$0xf] %vm1043, %v870
        %1054 = vst.msk [vmem:[#allocation3 + $0x78] sm:$0xf] %vm1043, %v872
        %1055 = vst.msk [vmem:[#allocation3 + $0x84] sm:$0xf] %vm1043, %v874
        %1056 = vst.msk [vmem:[#allocation3 + $0x90] sm:$0xf] %vm1043, %v876
        %1057 = vst.msk [vmem:[#allocation3 + $0x9c] sm:$0xf] %vm1043, %v878
        %1058 = vst.msk [vmem:[#allocation3 + $0xa8] sm:$0xf] %vm1043, %v880
        %1059 = vst.msk [vmem:[#allocation3 + $0xb4] sm:$0xf] %vm1043, %v882
        %1060 = vst.msk [vmem:[#allocation3 + $0xc0] sm:$0xf] %vm1043, %v884
        %1061 = vst.msk [vmem:[#allocation3 + $0xcc] sm:$0xf] %vm1043, %v886
        %1062 = vst.msk [vmem:[#allocation3 + $0xd8] sm:$0xf] %vm1043, %v888
        %1063 = vst.msk [vmem:[#allocation3 + $0xe4] sm:$0xf] %vm1043, %v890
        %1064 = vst.msk [vmem:[#allocation3 + $0xf0] sm:$0xf] %vm1043, %v892
        %1065 = vst.msk [vmem:[#allocation3 + $0xfc] sm:$0xf] %vm1043, %v894
        %1066 = vst.msk [vmem:[#allocation3 + $0x108] sm:$0xf] %vm1043, %v896
        %1067 = vst.msk [vmem:[#allocation3 + $0x114] sm:$0xf] %vm1043, %v898
        %1068 = vst.msk [vmem:[#allocation3 + $0x120] sm:$0xf] %vm1043, %v900
        %1069 = vst.msk [vmem:[#allocation3 + $0x12c] sm:$0xf] %vm1043, %v902
        %1070 = vst.msk [vmem:[#allocation3 + $0x138] sm:$0xf] %vm1043, %v904
        %1071 = vst.msk [vmem:[#allocation3 + $0x144] sm:$0xf] %vm1043, %v906
        %1072 = vst.msk [vmem:[#allocation3 + $0x150] sm:$0xf] %vm1043, %v908
        %1073 = vst.msk [vmem:[#allocation3 + $0x15c] sm:$0xf] %vm1043, %v910
        %1074 = vst.msk [vmem:[#allocation3 + $0x168] sm:$0xf] %vm1043, %v912
        %1075 = vst.msk [vmem:[#allocation3 + $0x174] sm:$0xf] %vm1043, %v914
        %1076 = vst.msk [vmem:[#allocation3 + $0x180] sm:$0xf] %vm1043, %v916
        %1077 = vst.msk [vmem:[#allocation3 + $0x18c] sm:$0xf] %vm1043, %v918
        %1078 = vst.msk [vmem:[#allocation3 + $0x198] sm:$0xf] %vm1043, %v920
        %1079 = vst.msk [vmem:[#allocation3 + $0x1a4] sm:$0xf] %vm1043, %v922
        %1080 = vst.msk [vmem:[#allocation3 + $0x1b0] sm:$0xf] %vm1043, %v924
        %1081 = vst.msk [vmem:[#allocation3 + $0x1bc] sm:$0xf] %vm1043, %v926
        %1082 = vst.msk [vmem:[#allocation3 + $0x1c8] sm:$0xf] %vm1043, %v928
        %1083 = vst.msk [vmem:[#allocation3 + $0x1d4] sm:$0xf] %vm1043, %v930
        %1084 = vst.msk [vmem:[#allocation3 + $0x1e0] sm:$0xf] %vm1043, %v932
        %1085 = vst.msk [vmem:[#allocation3 + $0x1ec] sm:$0xf] %vm1043, %v934
        %1086 = vst.msk [vmem:[#allocation3 + $0x1f8] sm:$0xf] %vm1043, %v936
        %1087 = vst.msk [vmem:[#allocation3 + $0x204] sm:$0xf] %vm1043, %v938
        %1088 = vst.msk [vmem:[#allocation3 + $0x210] sm:$0xf] %vm1043, %v940
        %1089 = vst.msk [vmem:[#allocation3 + $0x21c] sm:$0xf] %vm1043, %v942
        %1090 = vst.msk [vmem:[#allocation3 + $0x228] sm:$0xf] %vm1043, %v944
        %1091 = vst.msk [vmem:[#allocation3 + $0x234] sm:$0xf] %vm1043, %v946
        %1092 = vst.msk [vmem:[#allocation3 + $0x240] sm:$0xf] %vm1043, %v948
        %1093 = vst.msk [vmem:[#allocation3 + $0x24c] sm:$0xf] %vm1043, %v950
        %1094 = vst.msk [vmem:[#allocation3 + $0x258] sm:$0xf] %vm1043, %v952
        %1095 = vst.msk [vmem:[#allocation3 + $0x264] sm:$0xf] %vm1043, %v954
        %1096 = vst.msk [vmem:[#allocation3 + $0x270] sm:$0xf] %vm1043, %v956
        %1097 = vst.msk [vmem:[#allocation3 + $0x27c] sm:$0xf] %vm1043, %v958
        %1098 = vst.msk [vmem:[#allocation3 + $0x288] sm:$0xf] %vm1043, %v960
        %1099 = vst.msk [vmem:[#allocation3 + $0x294] sm:$0xf] %vm1043, %v962
        %1100 = vst.msk [vmem:[#allocation3 + $0x2a0] sm:$0xf] %vm1043, %v964
        %1101 = vst.msk [vmem:[#allocation3 + $0x2ac] sm:$0xf] %vm1043, %v966
        %1102 = vst.msk [vmem:[#allocation3 + $0x2b8] sm:$0xf] %vm1043, %v968
        %1103 = vst.msk [vmem:[#allocation3 + $0x2c4] sm:$0xf] %vm1043, %v970
        %1104 = vst.msk [vmem:[#allocation3 + $0x2d0] sm:$0xf] %vm1043, %v972
        %1105 = vst.msk [vmem:[#allocation3 + $0x2dc] sm:$0xf] %vm1043, %v974
        %1106 = vst.msk [vmem:[#allocation3 + $0x2e8] sm:$0xf] %vm1043, %v976
        %1107 = vst.msk [vmem:[#allocation3 + $0x2f4] sm:$0xf] %vm1043, %v978
        %v1108 = vld [vmem:[#allocation2 + $0x2] sm:$0xff]
        %v1109 = vld [vmem:[#allocation2 + $0xa] sm:$0xff]
        %v1110 = vld [vmem:[#allocation2 + $0x1a] sm:$0xff]
        %v1111 = vld [vmem:[#allocation2 + $0x22] sm:$0xff]
        %v1112 = vld [vmem:[#allocation2 + $0x32] sm:$0xff]
        %v1113 = vld [vmem:[#allocation2 + $0x3a] sm:$0xff]
        %v1114 = vld [vmem:[#allocation2 + $0x4a] sm:$0xff]
        %v1115 = vld [vmem:[#allocation2 + $0x52] sm:$0xff]
        %v1116 = vld [vmem:[#allocation2 + $0x62] sm:$0xff]
        %v1117 = vld [vmem:[#allocation2 + $0x6a] sm:$0xff]
        %v1118 = vld [vmem:[#allocation2 + $0x7a] sm:$0xff]
        %v1119 = vld [vmem:[#allocation2 + $0x82] sm:$0xff]
        %v1120 = vld [vmem:[#allocation2 + $0x92] sm:$0xff]
        %v1121 = vld [vmem:[#allocation2 + $0x9a] sm:$0xff]
        %v1122 = vld [vmem:[#allocation2 + $0xaa] sm:$0xff]
        %v1123 = vld [vmem:[#allocation2 + $0xb2] sm:$0xff]
        %v1124 = vld [vmem:[#allocation2 + $0xc2] sm:$0xff]
        %v1125 = vld [vmem:[#allocation2 + $0xca] sm:$0xff]
        %v1126 = vld [vmem:[#allocation2 + $0xda] sm:$0xff]
        %v1127 = vld [vmem:[#allocation2 + $0xe2] sm:$0xff]
        %v1128 = vld [vmem:[#allocation2 + $0xf2] sm:$0xff]
        %v1129 = vld [vmem:[#allocation2 + $0xfa] sm:$0xff]
        %v1130 = vld [vmem:[#allocation2 + $0x10a] sm:$0xff]
        %v1131 = vld [vmem:[#allocation2 + $0x112] sm:$0xff]
        %v1132 = vld [vmem:[#allocation2 + $0x122] sm:$0xff]
        %v1133 = vld [vmem:[#allocation2 + $0x12a] sm:$0xff]
        %v1134 = vld [vmem:[#allocation2 + $0x13a] sm:$0xff]
        %v1135 = vld [vmem:[#allocation2 + $0x142] sm:$0xff]
        %v1136 = vld [vmem:[#allocation2 + $0x152] sm:$0xff]
        %v1137 = vld [vmem:[#allocation2 + $0x15a] sm:$0xff]
        %v1138 = vld [vmem:[#allocation2 + $0x16a] sm:$0xff]
        %v1139 = vld [vmem:[#allocation2 + $0x172] sm:$0xff]
        %v1140 = vld [vmem:[#allocation2 + $0x1b2] sm:$0xff]
        %v1141 = vld [vmem:[#allocation2 + $0x1ba] sm:$0xff]
        %v1142 = vld [vmem:[#allocation2 + $0x1ca] sm:$0xff]
        %v1143 = vld [vmem:[#allocation2 + $0x1d2] sm:$0xff]
        %v1144 = vld [vmem:[#allocation2 + $0x1e2] sm:$0xff]
        %v1145 = vld [vmem:[#allocation2 + $0x1ea] sm:$0xff]
        %v1146 = vld [vmem:[#allocation2 + $0x1fa] sm:$0xff]
        %v1147 = vld [vmem:[#allocation2 + $0x202] sm:$0xff]
        %v1148 = vld [vmem:[#allocation2 + $0x212] sm:$0xff]
        %v1149 = vld [vmem:[#allocation2 + $0x21a] sm:$0xff]
        %v1150 = vld [vmem:[#allocation2 + $0x22a] sm:$0xff]
        %v1151 = vld [vmem:[#allocation2 + $0x232] sm:$0xff]
        %v1152 = vld [vmem:[#allocation2 + $0x242] sm:$0xff]
        %v1153 = vld [vmem:[#allocation2 + $0x24a] sm:$0xff]
        %v1154 = vld [vmem:[#allocation2 + $0x25a] sm:$0xff]
        %v1155 = vld [vmem:[#allocation2 + $0x262] sm:$0xff]
        %v1156 = vld [vmem:[#allocation2 + $0x272] sm:$0xff]
        %v1157 = vld [vmem:[#allocation2 + $0x27a] sm:$0xff]
        %v1158 = vld [vmem:[#allocation2 + $0x28a] sm:$0xff]
        %v1159 = vld [vmem:[#allocation2 + $0x292] sm:$0xff]
        %v1160 = vld [vmem:[#allocation2 + $0x2a2] sm:$0xff]
        %v1161 = vld [vmem:[#allocation2 + $0x2aa] sm:$0xff]
        %v1162 = vld [vmem:[#allocation2 + $0x2ba] sm:$0xff]
        %v1163 = vld [vmem:[#allocation2 + $0x2c2] sm:$0xff]
        %v1164 = vld [vmem:[#allocation2 + $0x2d2] sm:$0xff]
        %v1165 = vld [vmem:[#allocation2 + $0x2da] sm:$0xff]
        %v1166 = vld [vmem:[#allocation2 + $0x2ea] sm:$0xff]
        %v1167 = vld [vmem:[#allocation2 + $0x2f2] sm:$0xff]
        %v1168 = vld [vmem:[#allocation2 + $0x302] sm:$0xff]
        %v1169 = vld [vmem:[#allocation2 + $0x30a] sm:$0xff]
        %v1170 = vld [vmem:[#allocation2 + $0x31a] sm:$0xff]
        %v1171 = vld [vmem:[#allocation2 + $0x322] sm:$0xff]
        %v1172 = vpack.c.bf16 %v1108, %v1108
        %v1173 = vpack.c.bf16 %v1109, %v1109
        %v1174 = vpack.c.bf16 %v1110, %v1110
        %v1175 = vpack.c.bf16 %v1111, %v1111
        %v1176 = vpack.c.bf16 %v1112, %v1112
        %v1177 = vpack.c.bf16 %v1113, %v1113
        %v1178 = vpack.c.bf16 %v1114, %v1114
        %v1179 = vpack.c.bf16 %v1115, %v1115
        %v1180 = vpack.c.bf16 %v1116, %v1116
        %v1181 = vpack.c.bf16 %v1117, %v1117
        %v1182 = vpack.c.bf16 %v1118, %v1118
        %v1183 = vpack.c.bf16 %v1119, %v1119
        %v1184 = vpack.c.bf16 %v1120, %v1120
        %v1185 = vpack.c.bf16 %v1121, %v1121
        %v1186 = vpack.c.bf16 %v1122, %v1122
        %v1187 = vpack.c.bf16 %v1123, %v1123
        %v1188 = vpack.c.bf16 %v1124, %v1124
        %v1189 = vpack.c.bf16 %v1125, %v1125
        %v1190 = vpack.c.bf16 %v1126, %v1126
        %v1191 = vpack.c.bf16 %v1127, %v1127
        %v1192 = vpack.c.bf16 %v1128, %v1128
        %v1193 = vpack.c.bf16 %v1129, %v1129
        %v1194 = vpack.c.bf16 %v1130, %v1130
        %v1195 = vpack.c.bf16 %v1131, %v1131
        %v1196 = vpack.c.bf16 %v1132, %v1132
        %v1197 = vpack.c.bf16 %v1133, %v1133
        %v1198 = vpack.c.bf16 %v1134, %v1134
        %v1199 = vpack.c.bf16 %v1135, %v1135
        %v1200 = vpack.c.bf16 %v1136, %v1136
        %v1201 = vpack.c.bf16 %v1137, %v1137
        %v1202 = vpack.c.bf16 %v1138, %v1138
        %v1203 = vpack.c.bf16 %v1139, %v1139
        %v1204 = vpack.c.bf16 %v1140, %v1140
        %v1205 = vpack.c.bf16 %v1141, %v1141
        %v1206 = vpack.c.bf16 %v1142, %v1142
        %v1207 = vpack.c.bf16 %v1143, %v1143
        %v1208 = vpack.c.bf16 %v1144, %v1144
        %v1209 = vpack.c.bf16 %v1145, %v1145
        %v1210 = vpack.c.bf16 %v1146, %v1146
        %v1211 = vpack.c.bf16 %v1147, %v1147
        %v1212 = vpack.c.bf16 %v1148, %v1148
        %v1213 = vpack.c.bf16 %v1149, %v1149
        %v1214 = vpack.c.bf16 %v1150, %v1150
        %v1215 = vpack.c.bf16 %v1151, %v1151
        %v1216 = vpack.c.bf16 %v1152, %v1152
        %v1217 = vpack.c.bf16 %v1153, %v1153
        %v1218 = vpack.c.bf16 %v1154, %v1154
        %v1219 = vpack.c.bf16 %v1155, %v1155
        %v1220 = vpack.c.bf16 %v1156, %v1156
        %v1221 = vpack.c.bf16 %v1157, %v1157
        %v1222 = vpack.c.bf16 %v1158, %v1158
        %v1223 = vpack.c.bf16 %v1159, %v1159
        %v1224 = vpack.c.bf16 %v1160, %v1160
        %v1225 = vpack.c.bf16 %v1161, %v1161
        %v1226 = vpack.c.bf16 %v1162, %v1162
        %v1227 = vpack.c.bf16 %v1163, %v1163
        %v1228 = vpack.c.bf16 %v1164, %v1164
        %v1229 = vpack.c.bf16 %v1165, %v1165
        %v1230 = vpack.c.bf16 %v1166, %v1166
        %v1231 = vpack.c.bf16 %v1167, %v1167
        %v1232 = vpack.c.bf16 %v1168, %v1168
        %v1233 = vpack.c.bf16 %v1169, %v1169
        %v1234 = vpack.c.bf16 %v1170, %v1170
        %v1235 = vpack.c.bf16 %v1171, %v1171
        %1300 = vrot.lane.b32.xlu0 %v1172, 64
        %v1301 = vpop.permute.xlu0 %1300
        %1302 = vrot.lane.b32.xlu0 %v1173, 64
        %v1303 = vpop.permute.xlu0 %1302
        %1304 = vrot.lane.b32.xlu0 %v1174, 64
        %v1305 = vpop.permute.xlu0 %1304
        %1306 = vrot.lane.b32.xlu0 %v1175, 64
        %v1307 = vpop.permute.xlu0 %1306
        %1308 = vrot.lane.b32.xlu0 %v1176, 64
        %v1309 = vpop.permute.xlu0 %1308
        %1310 = vrot.lane.b32.xlu0 %v1177, 64
        %v1311 = vpop.permute.xlu0 %1310
        %1312 = vrot.lane.b32.xlu0 %v1178, 64
        %v1313 = vpop.permute.xlu0 %1312
        %1314 = vrot.lane.b32.xlu0 %v1179, 64
        %v1315 = vpop.permute.xlu0 %1314
        %1316 = vrot.lane.b32.xlu0 %v1180, 64
        %v1317 = vpop.permute.xlu0 %1316
        %1318 = vrot.lane.b32.xlu0 %v1181, 64
        %v1319 = vpop.permute.xlu0 %1318
        %1320 = vrot.lane.b32.xlu0 %v1182, 64
        %v1321 = vpop.permute.xlu0 %1320
        %1322 = vrot.lane.b32.xlu0 %v1183, 64
        %v1323 = vpop.permute.xlu0 %1322
        %1324 = vrot.lane.b32.xlu0 %v1184, 64
        %v1325 = vpop.permute.xlu0 %1324
        %1326 = vrot.lane.b32.xlu0 %v1185, 64
        %v1327 = vpop.permute.xlu0 %1326
        %1328 = vrot.lane.b32.xlu0 %v1186, 64
        %v1329 = vpop.permute.xlu0 %1328
        %1330 = vrot.lane.b32.xlu0 %v1187, 64
        %v1331 = vpop.permute.xlu0 %1330
        %1332 = vrot.lane.b32.xlu0 %v1188, 64
        %v1333 = vpop.permute.xlu0 %1332
        %1334 = vrot.lane.b32.xlu0 %v1189, 64
        %v1335 = vpop.permute.xlu0 %1334
        %1336 = vrot.lane.b32.xlu0 %v1190, 64
        %v1337 = vpop.permute.xlu0 %1336
        %1338 = vrot.lane.b32.xlu0 %v1191, 64
        %v1339 = vpop.permute.xlu0 %1338
        %1340 = vrot.lane.b32.xlu0 %v1192, 64
        %v1341 = vpop.permute.xlu0 %1340
        %1342 = vrot.lane.b32.xlu0 %v1193, 64
        %v1343 = vpop.permute.xlu0 %1342
        %1344 = vrot.lane.b32.xlu0 %v1194, 64
        %v1345 = vpop.permute.xlu0 %1344
        %1346 = vrot.lane.b32.xlu0 %v1195, 64
        %v1347 = vpop.permute.xlu0 %1346
        %1348 = vrot.lane.b32.xlu0 %v1196, 64
        %v1349 = vpop.permute.xlu0 %1348
        %1350 = vrot.lane.b32.xlu0 %v1197, 64
        %v1351 = vpop.permute.xlu0 %1350
        %1352 = vrot.lane.b32.xlu0 %v1198, 64
        %v1353 = vpop.permute.xlu0 %1352
        %1354 = vrot.lane.b32.xlu0 %v1199, 64
        %v1355 = vpop.permute.xlu0 %1354
        %1356 = vrot.lane.b32.xlu0 %v1200, 64
        %v1357 = vpop.permute.xlu0 %1356
        %1358 = vrot.lane.b32.xlu0 %v1201, 64
        %v1359 = vpop.permute.xlu0 %1358
        %1360 = vrot.lane.b32.xlu0 %v1202, 64
        %v1361 = vpop.permute.xlu0 %1360
        %1362 = vrot.lane.b32.xlu0 %v1203, 64
        %v1363 = vpop.permute.xlu0 %1362
        %1364 = vrot.lane.b32.xlu0 %v1204, 64
        %v1365 = vpop.permute.xlu0 %1364
        %1366 = vrot.lane.b32.xlu0 %v1205, 64
        %v1367 = vpop.permute.xlu0 %1366
        %1368 = vrot.lane.b32.xlu0 %v1206, 64
        %v1369 = vpop.permute.xlu0 %1368
        %1370 = vrot.lane.b32.xlu0 %v1207, 64
        %v1371 = vpop.permute.xlu0 %1370
        %1372 = vrot.lane.b32.xlu0 %v1208, 64
        %v1373 = vpop.permute.xlu0 %1372
        %1374 = vrot.lane.b32.xlu0 %v1209, 64
        %v1375 = vpop.permute.xlu0 %1374
        %1376 = vrot.lane.b32.xlu0 %v1210, 64
        %v1377 = vpop.permute.xlu0 %1376
        %1378 = vrot.lane.b32.xlu0 %v1211, 64
        %v1379 = vpop.permute.xlu0 %1378
        %1380 = vrot.lane.b32.xlu0 %v1212, 64
        %v1381 = vpop.permute.xlu0 %1380
        %1382 = vrot.lane.b32.xlu0 %v1213, 64
        %v1383 = vpop.permute.xlu0 %1382
        %1384 = vrot.lane.b32.xlu0 %v1214, 64
        %v1385 = vpop.permute.xlu0 %1384
        %1386 = vrot.lane.b32.xlu0 %v1215, 64
        %v1387 = vpop.permute.xlu0 %1386
        %1388 = vrot.lane.b32.xlu0 %v1216, 64
        %v1389 = vpop.permute.xlu0 %1388
        %1390 = vrot.lane.b32.xlu0 %v1217, 64
        %v1391 = vpop.permute.xlu0 %1390
        %1392 = vrot.lane.b32.xlu0 %v1218, 64
        %v1393 = vpop.permute.xlu0 %1392
        %1394 = vrot.lane.b32.xlu0 %v1219, 64
        %v1395 = vpop.permute.xlu0 %1394
        %1396 = vrot.lane.b32.xlu0 %v1220, 64
        %v1397 = vpop.permute.xlu0 %1396
        %1398 = vrot.lane.b32.xlu0 %v1221, 64
        %v1399 = vpop.permute.xlu0 %1398
        %1400 = vrot.lane.b32.xlu0 %v1222, 64
        %v1401 = vpop.permute.xlu0 %1400
        %1402 = vrot.lane.b32.xlu0 %v1223, 64
        %v1403 = vpop.permute.xlu0 %1402
        %1404 = vrot.lane.b32.xlu0 %v1224, 64
        %v1405 = vpop.permute.xlu0 %1404
        %1406 = vrot.lane.b32.xlu0 %v1225, 64
        %v1407 = vpop.permute.xlu0 %1406
        %1408 = vrot.lane.b32.xlu0 %v1226, 64
        %v1409 = vpop.permute.xlu0 %1408
        %1410 = vrot.lane.b32.xlu0 %v1227, 64
        %v1411 = vpop.permute.xlu0 %1410
        %1412 = vrot.lane.b32.xlu0 %v1228, 64
        %v1413 = vpop.permute.xlu0 %1412
        %1414 = vrot.lane.b32.xlu0 %v1229, 64
        %v1415 = vpop.permute.xlu0 %1414
        %1416 = vrot.lane.b32.xlu0 %v1230, 64
        %v1417 = vpop.permute.xlu0 %1416
        %1418 = vrot.lane.b32.xlu0 %v1231, 64
        %v1419 = vpop.permute.xlu0 %1418
        %1420 = vrot.lane.b32.xlu0 %v1232, 64
        %v1421 = vpop.permute.xlu0 %1420
        %1422 = vrot.lane.b32.xlu0 %v1233, 64
        %v1423 = vpop.permute.xlu0 %1422
        %1424 = vrot.lane.b32.xlu0 %v1234, 64
        %v1425 = vpop.permute.xlu0 %1424
        %1426 = vrot.lane.b32.xlu0 %v1235, 64
        %v1427 = vpop.permute.xlu0 %1426
        %vm1492 = vcmask 781824
        %1493 = vst.msk [vmem:[#allocation3] sm:$0xf] %vm1492, %v1301
        %1494 = vst.msk [vmem:[#allocation3 + $0xc] sm:$0xf] %vm1492, %v1303
        %1495 = vst.msk [vmem:[#allocation3 + $0x18] sm:$0xf] %vm1492, %v1305
        %1496 = vst.msk [vmem:[#allocation3 + $0x24] sm:$0xf] %vm1492, %v1307
        %1497 = vst.msk [vmem:[#allocation3 + $0x30] sm:$0xf] %vm1492, %v1309
        %1498 = vst.msk [vmem:[#allocation3 + $0x3c] sm:$0xf] %vm1492, %v1311
        %1499 = vst.msk [vmem:[#allocation3 + $0x48] sm:$0xf] %vm1492, %v1313
        %1500 = vst.msk [vmem:[#allocation3 + $0x54] sm:$0xf] %vm1492, %v1315
        %1501 = vst.msk [vmem:[#allocation3 + $0x60] sm:$0xf] %vm1492, %v1317
        %1502 = vst.msk [vmem:[#allocation3 + $0x6c] sm:$0xf] %vm1492, %v1319
        %1503 = vst.msk [vmem:[#allocation3 + $0x78] sm:$0xf] %vm1492, %v1321
        %1504 = vst.msk [vmem:[#allocation3 + $0x84] sm:$0xf] %vm1492, %v1323
        %1505 = vst.msk [vmem:[#allocation3 + $0x90] sm:$0xf] %vm1492, %v1325
        %1506 = vst.msk [vmem:[#allocation3 + $0x9c] sm:$0xf] %vm1492, %v1327
        %1507 = vst.msk [vmem:[#allocation3 + $0xa8] sm:$0xf] %vm1492, %v1329
        %1508 = vst.msk [vmem:[#allocation3 + $0xb4] sm:$0xf] %vm1492, %v1331
        %1509 = vst.msk [vmem:[#allocation3 + $0xc0] sm:$0xf] %vm1492, %v1333
        %1510 = vst.msk [vmem:[#allocation3 + $0xcc] sm:$0xf] %vm1492, %v1335
        %1511 = vst.msk [vmem:[#allocation3 + $0xd8] sm:$0xf] %vm1492, %v1337
        %1512 = vst.msk [vmem:[#allocation3 + $0xe4] sm:$0xf] %vm1492, %v1339
        %1513 = vst.msk [vmem:[#allocation3 + $0xf0] sm:$0xf] %vm1492, %v1341
        %1514 = vst.msk [vmem:[#allocation3 + $0xfc] sm:$0xf] %vm1492, %v1343
        %1515 = vst.msk [vmem:[#allocation3 + $0x108] sm:$0xf] %vm1492, %v1345
        %1516 = vst.msk [vmem:[#allocation3 + $0x114] sm:$0xf] %vm1492, %v1347
        %1517 = vst.msk [vmem:[#allocation3 + $0x120] sm:$0xf] %vm1492, %v1349
        %1518 = vst.msk [vmem:[#allocation3 + $0x12c] sm:$0xf] %vm1492, %v1351
        %1519 = vst.msk [vmem:[#allocation3 + $0x138] sm:$0xf] %vm1492, %v1353
        %1520 = vst.msk [vmem:[#allocation3 + $0x144] sm:$0xf] %vm1492, %v1355
        %1521 = vst.msk [vmem:[#allocation3 + $0x150] sm:$0xf] %vm1492, %v1357
        %1522 = vst.msk [vmem:[#allocation3 + $0x15c] sm:$0xf] %vm1492, %v1359
        %1523 = vst.msk [vmem:[#allocation3 + $0x168] sm:$0xf] %vm1492, %v1361
        %1524 = vst.msk [vmem:[#allocation3 + $0x174] sm:$0xf] %vm1492, %v1363
        %1525 = vst.msk [vmem:[#allocation3 + $0x180] sm:$0xf] %vm1492, %v1365
        %1526 = vst.msk [vmem:[#allocation3 + $0x18c] sm:$0xf] %vm1492, %v1367
        %1527 = vst.msk [vmem:[#allocation3 + $0x198] sm:$0xf] %vm1492, %v1369
        %1528 = vst.msk [vmem:[#allocation3 + $0x1a4] sm:$0xf] %vm1492, %v1371
        %1529 = vst.msk [vmem:[#allocation3 + $0x1b0] sm:$0xf] %vm1492, %v1373
        %1530 = vst.msk [vmem:[#allocation3 + $0x1bc] sm:$0xf] %vm1492, %v1375
        %1531 = vst.msk [vmem:[#allocation3 + $0x1c8] sm:$0xf] %vm1492, %v1377
        %1532 = vst.msk [vmem:[#allocation3 + $0x1d4] sm:$0xf] %vm1492, %v1379
        %1533 = vst.msk [vmem:[#allocation3 + $0x1e0] sm:$0xf] %vm1492, %v1381
        %1534 = vst.msk [vmem:[#allocation3 + $0x1ec] sm:$0xf] %vm1492, %v1383
        %1535 = vst.msk [vmem:[#allocation3 + $0x1f8] sm:$0xf] %vm1492, %v1385
        %1536 = vst.msk [vmem:[#allocation3 + $0x204] sm:$0xf] %vm1492, %v1387
        %1537 = vst.msk [vmem:[#allocation3 + $0x210] sm:$0xf] %vm1492, %v1389
        %1538 = vst.msk [vmem:[#allocation3 + $0x21c] sm:$0xf] %vm1492, %v1391
        %1539 = vst.msk [vmem:[#allocation3 + $0x228] sm:$0xf] %vm1492, %v1393
        %1540 = vst.msk [vmem:[#allocation3 + $0x234] sm:$0xf] %vm1492, %v1395
        %1541 = vst.msk [vmem:[#allocation3 + $0x240] sm:$0xf] %vm1492, %v1397
        %1542 = vst.msk [vmem:[#allocation3 + $0x24c] sm:$0xf] %vm1492, %v1399
        %1543 = vst.msk [vmem:[#allocation3 + $0x258] sm:$0xf] %vm1492, %v1401
        %1544 = vst.msk [vmem:[#allocation3 + $0x264] sm:$0xf] %vm1492, %v1403
        %1545 = vst.msk [vmem:[#allocation3 + $0x270] sm:$0xf] %vm1492, %v1405
        %1546 = vst.msk [vmem:[#allocation3 + $0x27c] sm:$0xf] %vm1492, %v1407
        %1547 = vst.msk [vmem:[#allocation3 + $0x288] sm:$0xf] %vm1492, %v1409
        %1548 = vst.msk [vmem:[#allocation3 + $0x294] sm:$0xf] %vm1492, %v1411
        %1549 = vst.msk [vmem:[#allocation3 + $0x2a0] sm:$0xf] %vm1492, %v1413
        %1550 = vst.msk [vmem:[#allocation3 + $0x2ac] sm:$0xf] %vm1492, %v1415
        %1551 = vst.msk [vmem:[#allocation3 + $0x2b8] sm:$0xf] %vm1492, %v1417
        %1552 = vst.msk [vmem:[#allocation3 + $0x2c4] sm:$0xf] %vm1492, %v1419
        %1553 = vst.msk [vmem:[#allocation3 + $0x2d0] sm:$0xf] %vm1492, %v1421
        %1554 = vst.msk [vmem:[#allocation3 + $0x2dc] sm:$0xf] %vm1492, %v1423
        %1555 = vst.msk [vmem:[#allocation3 + $0x2e8] sm:$0xf] %vm1492, %v1425
        %1556 = vst.msk [vmem:[#allocation3 + $0x2f4] sm:$0xf] %vm1492, %v1427
        %v1557 = vld [vmem:[%s401] sm:$0xff]
        %v1558 = vld [vmem:[%s401 + $0x8] sm:$0xff]
        %v1559 = vld [vmem:[%s401 + $0x18] sm:$0xff]
        %v1560 = vld [vmem:[%s401 + $0x20] sm:$0xff]
        %v1561 = vld [vmem:[%s401 + $0x30] sm:$0xff]
        %v1562 = vld [vmem:[%s401 + $0x38] sm:$0xff]
        %v1563 = vld [vmem:[%s401 + $0x48] sm:$0xff]
        %v1564 = vld [vmem:[%s401 + $0x50] sm:$0xff]
        %v1565 = vld [vmem:[%s401 + $0x60] sm:$0xff]
        %v1566 = vld [vmem:[%s401 + $0x68] sm:$0xff]
        %v1567 = vld [vmem:[%s401 + $0x78] sm:$0xff]
        %v1568 = vld [vmem:[%s401 + $0x80] sm:$0xff]
        %v1569 = vld [vmem:[%s401 + $0x90] sm:$0xff]
        %v1570 = vld [vmem:[%s401 + $0x98] sm:$0xff]
        %v1571 = vld [vmem:[%s401 + $0xa8] sm:$0xff]
        %v1572 = vld [vmem:[%s401 + $0xb0] sm:$0xff]
        %v1573 = vld [vmem:[%s401 + $0xc0] sm:$0xff]
        %v1574 = vld [vmem:[%s401 + $0xc8] sm:$0xff]
        %v1575 = vld [vmem:[%s401 + $0xd8] sm:$0xff]
        %v1576 = vld [vmem:[%s401 + $0xe0] sm:$0xff]
        %v1577 = vld [vmem:[%s401 + $0xf0] sm:$0xff]
        %v1578 = vld [vmem:[%s401 + $0xf8] sm:$0xff]
        %v1579 = vld [vmem:[%s401 + $0x108] sm:$0xff]
        %v1580 = vld [vmem:[%s401 + $0x110] sm:$0xff]
        %v1581 = vld [vmem:[%s401 + $0x120] sm:$0xff]
        %v1582 = vld [vmem:[%s401 + $0x128] sm:$0xff]
        %v1583 = vld [vmem:[%s401 + $0x138] sm:$0xff]
        %v1584 = vld [vmem:[%s401 + $0x140] sm:$0xff]
        %v1585 = vld [vmem:[%s401 + $0x150] sm:$0xff]
        %v1586 = vld [vmem:[%s401 + $0x158] sm:$0xff]
        %v1587 = vld [vmem:[%s401 + $0x168] sm:$0xff]
        %v1588 = vld [vmem:[%s401 + $0x170] sm:$0xff]
        %v1589 = vld [vmem:[%s401 + $0x1b0] sm:$0xff]
        %v1590 = vld [vmem:[%s401 + $0x1b8] sm:$0xff]
        %v1591 = vld [vmem:[%s401 + $0x1c8] sm:$0xff]
        %v1592 = vld [vmem:[%s401 + $0x1d0] sm:$0xff]
        %v1593 = vld [vmem:[%s401 + $0x1e0] sm:$0xff]
        %v1594 = vld [vmem:[%s401 + $0x1e8] sm:$0xff]
        %v1595 = vld [vmem:[%s401 + $0x1f8] sm:$0xff]
        %v1596 = vld [vmem:[%s401 + $0x200] sm:$0xff]
        %v1597 = vld [vmem:[%s401 + $0x210] sm:$0xff]
        %v1598 = vld [vmem:[%s401 + $0x218] sm:$0xff]
        %v1599 = vld [vmem:[%s401 + $0x228] sm:$0xff]
        %v1600 = vld [vmem:[%s401 + $0x230] sm:$0xff]
        %v1601 = vld [vmem:[%s401 + $0x240] sm:$0xff]
        %v1602 = vld [vmem:[%s401 + $0x248] sm:$0xff]
        %v1603 = vld [vmem:[%s401 + $0x258] sm:$0xff]
        %v1604 = vld [vmem:[%s401 + $0x260] sm:$0xff]
        %v1605 = vld [vmem:[%s401 + $0x270] sm:$0xff]
        %v1606 = vld [vmem:[%s401 + $0x278] sm:$0xff]
        %v1607 = vld [vmem:[%s401 + $0x288] sm:$0xff]
        %v1608 = vld [vmem:[%s401 + $0x290] sm:$0xff]
        %v1609 = vld [vmem:[%s401 + $0x2a0] sm:$0xff]
        %v1610 = vld [vmem:[%s401 + $0x2a8] sm:$0xff]
        %v1611 = vld [vmem:[%s401 + $0x2b8] sm:$0xff]
        %v1612 = vld [vmem:[%s401 + $0x2c0] sm:$0xff]
        %v1613 = vld [vmem:[%s401 + $0x2d0] sm:$0xff]
        %v1614 = vld [vmem:[%s401 + $0x2d8] sm:$0xff]
        %v1615 = vld [vmem:[%s401 + $0x2e8] sm:$0xff]
        %v1616 = vld [vmem:[%s401 + $0x2f0] sm:$0xff]
        %v1617 = vld [vmem:[%s401 + $0x300] sm:$0xff]
        %v1618 = vld [vmem:[%s401 + $0x308] sm:$0xff]
        %v1619 = vld [vmem:[%s401 + $0x318] sm:$0xff]
        %v1620 = vld [vmem:[%s401 + $0x320] sm:$0xff]
        %v1621 = vpack.c.bf16 %v1557, %v1557
        %v1622 = vpack.c.bf16 %v1558, %v1558
        %v1623 = vpack.c.bf16 %v1559, %v1559
        %v1624 = vpack.c.bf16 %v1560, %v1560
        %v1625 = vpack.c.bf16 %v1561, %v1561
        %v1626 = vpack.c.bf16 %v1562, %v1562
        %v1627 = vpack.c.bf16 %v1563, %v1563
        %v1628 = vpack.c.bf16 %v1564, %v1564
        %v1629 = vpack.c.bf16 %v1565, %v1565
        %v1630 = vpack.c.bf16 %v1566, %v1566
        %v1631 = vpack.c.bf16 %v1567, %v1567
        %v1632 = vpack.c.bf16 %v1568, %v1568
        %v1633 = vpack.c.bf16 %v1569, %v1569
        %v1634 = vpack.c.bf16 %v1570, %v1570
        %v1635 = vpack.c.bf16 %v1571, %v1571
        %v1636 = vpack.c.bf16 %v1572, %v1572
        %v1637 = vpack.c.bf16 %v1573, %v1573
        %v1638 = vpack.c.bf16 %v1574, %v1574
        %v1639 = vpack.c.bf16 %v1575, %v1575
        %v1640 = vpack.c.bf16 %v1576, %v1576
        %v1641 = vpack.c.bf16 %v1577, %v1577
        %v1642 = vpack.c.bf16 %v1578, %v1578
        %v1643 = vpack.c.bf16 %v1579, %v1579
        %v1644 = vpack.c.bf16 %v1580, %v1580
        %v1645 = vpack.c.bf16 %v1581, %v1581
        %v1646 = vpack.c.bf16 %v1582, %v1582
        %v1647 = vpack.c.bf16 %v1583, %v1583
        %v1648 = vpack.c.bf16 %v1584, %v1584
        %v1649 = vpack.c.bf16 %v1585, %v1585
        %v1650 = vpack.c.bf16 %v1586, %v1586
        %v1651 = vpack.c.bf16 %v1587, %v1587
        %v1652 = vpack.c.bf16 %v1588, %v1588
        %v1653 = vpack.c.bf16 %v1589, %v1589
        %v1654 = vpack.c.bf16 %v1590, %v1590
        %v1655 = vpack.c.bf16 %v1591, %v1591
        %v1656 = vpack.c.bf16 %v1592, %v1592
        %v1657 = vpack.c.bf16 %v1593, %v1593
        %v1658 = vpack.c.bf16 %v1594, %v1594
        %v1659 = vpack.c.bf16 %v1595, %v1595
        %v1660 = vpack.c.bf16 %v1596, %v1596
        %v1661 = vpack.c.bf16 %v1597, %v1597
        %v1662 = vpack.c.bf16 %v1598, %v1598
        %v1663 = vpack.c.bf16 %v1599, %v1599
        %v1664 = vpack.c.bf16 %v1600, %v1600
        %v1665 = vpack.c.bf16 %v1601, %v1601
        %v1666 = vpack.c.bf16 %v1602, %v1602
        %v1667 = vpack.c.bf16 %v1603, %v1603
        %v1668 = vpack.c.bf16 %v1604, %v1604
        %v1669 = vpack.c.bf16 %v1605, %v1605
        %v1670 = vpack.c.bf16 %v1606, %v1606
        %v1671 = vpack.c.bf16 %v1607, %v1607
        %v1672 = vpack.c.bf16 %v1608, %v1608
        %v1673 = vpack.c.bf16 %v1609, %v1609
        %v1674 = vpack.c.bf16 %v1610, %v1610
        %v1675 = vpack.c.bf16 %v1611, %v1611
        %v1676 = vpack.c.bf16 %v1612, %v1612
        %v1677 = vpack.c.bf16 %v1613, %v1613
        %v1678 = vpack.c.bf16 %v1614, %v1614
        %v1679 = vpack.c.bf16 %v1615, %v1615
        %v1680 = vpack.c.bf16 %v1616, %v1616
        %v1681 = vpack.c.bf16 %v1617, %v1617
        %v1682 = vpack.c.bf16 %v1618, %v1618
        %v1683 = vpack.c.bf16 %v1619, %v1619
        %v1684 = vpack.c.bf16 %v1620, %v1620
        %1749 = vrot.lane.b32.xlu0 %v1621, 96
        %v1750 = vpop.permute.xlu0 %1749
        %1751 = vrot.lane.b32.xlu0 %v1622, 96
        %v1752 = vpop.permute.xlu0 %1751
        %1753 = vrot.lane.b32.xlu0 %v1623, 96
        %v1754 = vpop.permute.xlu0 %1753
        %1755 = vrot.lane.b32.xlu0 %v1624, 96
        %v1756 = vpop.permute.xlu0 %1755
        %1757 = vrot.lane.b32.xlu0 %v1625, 96
        %v1758 = vpop.permute.xlu0 %1757
        %1759 = vrot.lane.b32.xlu0 %v1626, 96
        %v1760 = vpop.permute.xlu0 %1759
        %1761 = vrot.lane.b32.xlu0 %v1627, 96
        %v1762 = vpop.permute.xlu0 %1761
        %1763 = vrot.lane.b32.xlu0 %v1628, 96
        %v1764 = vpop.permute.xlu0 %1763
        %1765 = vrot.lane.b32.xlu0 %v1629, 96
        %v1766 = vpop.permute.xlu0 %1765
        %1767 = vrot.lane.b32.xlu0 %v1630, 96
        %v1768 = vpop.permute.xlu0 %1767
        %1769 = vrot.lane.b32.xlu0 %v1631, 96
        %v1770 = vpop.permute.xlu0 %1769
        %1771 = vrot.lane.b32.xlu0 %v1632, 96
        %v1772 = vpop.permute.xlu0 %1771
        %1773 = vrot.lane.b32.xlu0 %v1633, 96
        %v1774 = vpop.permute.xlu0 %1773
        %1775 = vrot.lane.b32.xlu0 %v1634, 96
        %v1776 = vpop.permute.xlu0 %1775
        %1777 = vrot.lane.b32.xlu0 %v1635, 96
        %v1778 = vpop.permute.xlu0 %1777
        %1779 = vrot.lane.b32.xlu0 %v1636, 96
        %v1780 = vpop.permute.xlu0 %1779
        %1781 = vrot.lane.b32.xlu0 %v1637, 96
        %v1782 = vpop.permute.xlu0 %1781
        %1783 = vrot.lane.b32.xlu0 %v1638, 96
        %v1784 = vpop.permute.xlu0 %1783
        %1785 = vrot.lane.b32.xlu0 %v1639, 96
        %v1786 = vpop.permute.xlu0 %1785
        %1787 = vrot.lane.b32.xlu0 %v1640, 96
        %v1788 = vpop.permute.xlu0 %1787
        %1789 = vrot.lane.b32.xlu0 %v1641, 96
        %v1790 = vpop.permute.xlu0 %1789
        %1791 = vrot.lane.b32.xlu0 %v1642, 96
        %v1792 = vpop.permute.xlu0 %1791
        %1793 = vrot.lane.b32.xlu0 %v1643, 96
        %v1794 = vpop.permute.xlu0 %1793
        %1795 = vrot.lane.b32.xlu0 %v1644, 96
        %v1796 = vpop.permute.xlu0 %1795
        %1797 = vrot.lane.b32.xlu0 %v1645, 96
        %v1798 = vpop.permute.xlu0 %1797
        %1799 = vrot.lane.b32.xlu0 %v1646, 96
        %v1800 = vpop.permute.xlu0 %1799
        %1801 = vrot.lane.b32.xlu0 %v1647, 96
        %v1802 = vpop.permute.xlu0 %1801
        %1803 = vrot.lane.b32.xlu0 %v1648, 96
        %v1804 = vpop.permute.xlu0 %1803
        %1805 = vrot.lane.b32.xlu0 %v1649, 96
        %v1806 = vpop.permute.xlu0 %1805
        %1807 = vrot.lane.b32.xlu0 %v1650, 96
        %v1808 = vpop.permute.xlu0 %1807
        %1809 = vrot.lane.b32.xlu0 %v1651, 96
        %v1810 = vpop.permute.xlu0 %1809
        %1811 = vrot.lane.b32.xlu0 %v1652, 96
        %v1812 = vpop.permute.xlu0 %1811
        %1813 = vrot.lane.b32.xlu0 %v1653, 96
        %v1814 = vpop.permute.xlu0 %1813
        %1815 = vrot.lane.b32.xlu0 %v1654, 96
        %v1816 = vpop.permute.xlu0 %1815
        %1817 = vrot.lane.b32.xlu0 %v1655, 96
        %v1818 = vpop.permute.xlu0 %1817
        %1819 = vrot.lane.b32.xlu0 %v1656, 96
        %v1820 = vpop.permute.xlu0 %1819
        %1821 = vrot.lane.b32.xlu0 %v1657, 96
        %v1822 = vpop.permute.xlu0 %1821
        %1823 = vrot.lane.b32.xlu0 %v1658, 96
        %v1824 = vpop.permute.xlu0 %1823
        %1825 = vrot.lane.b32.xlu0 %v1659, 96
        %v1826 = vpop.permute.xlu0 %1825
        %1827 = vrot.lane.b32.xlu0 %v1660, 96
        %v1828 = vpop.permute.xlu0 %1827
        %1829 = vrot.lane.b32.xlu0 %v1661, 96
        %v1830 = vpop.permute.xlu0 %1829
        %1831 = vrot.lane.b32.xlu0 %v1662, 96
        %v1832 = vpop.permute.xlu0 %1831
        %1833 = vrot.lane.b32.xlu0 %v1663, 96
        %v1834 = vpop.permute.xlu0 %1833
        %1835 = vrot.lane.b32.xlu0 %v1664, 96
        %v1836 = vpop.permute.xlu0 %1835
        %1837 = vrot.lane.b32.xlu0 %v1665, 96
        %v1838 = vpop.permute.xlu0 %1837
        %1839 = vrot.lane.b32.xlu0 %v1666, 96
        %v1840 = vpop.permute.xlu0 %1839
        %1841 = vrot.lane.b32.xlu0 %v1667, 96
        %v1842 = vpop.permute.xlu0 %1841
        %1843 = vrot.lane.b32.xlu0 %v1668, 96
        %v1844 = vpop.permute.xlu0 %1843
        %1845 = vrot.lane.b32.xlu0 %v1669, 96
        %v1846 = vpop.permute.xlu0 %1845
        %1847 = vrot.lane.b32.xlu0 %v1670, 96
        %v1848 = vpop.permute.xlu0 %1847
        %1849 = vrot.lane.b32.xlu0 %v1671, 96
        %v1850 = vpop.permute.xlu0 %1849
        %1851 = vrot.lane.b32.xlu0 %v1672, 96
        %v1852 = vpop.permute.xlu0 %1851
        %1853 = vrot.lane.b32.xlu0 %v1673, 96
        %v1854 = vpop.permute.xlu0 %1853
        %1855 = vrot.lane.b32.xlu0 %v1674, 96
        %v1856 = vpop.permute.xlu0 %1855
        %1857 = vrot.lane.b32.xlu0 %v1675, 96
        %v1858 = vpop.permute.xlu0 %1857
        %1859 = vrot.lane.b32.xlu0 %v1676, 96
        %v1860 = vpop.permute.xlu0 %1859
        %1861 = vrot.lane.b32.xlu0 %v1677, 96
        %v1862 = vpop.permute.xlu0 %1861
        %1863 = vrot.lane.b32.xlu0 %v1678, 96
        %v1864 = vpop.permute.xlu0 %1863
        %1865 = vrot.lane.b32.xlu0 %v1679, 96
        %v1866 = vpop.permute.xlu0 %1865
        %1867 = vrot.lane.b32.xlu0 %v1680, 96
        %v1868 = vpop.permute.xlu0 %1867
        %1869 = vrot.lane.b32.xlu0 %v1681, 96
        %v1870 = vpop.permute.xlu0 %1869
        %1871 = vrot.lane.b32.xlu0 %v1682, 96
        %v1872 = vpop.permute.xlu0 %1871
        %1873 = vrot.lane.b32.xlu0 %v1683, 96
        %v1874 = vpop.permute.xlu0 %1873
        %1875 = vrot.lane.b32.xlu0 %v1684, 96
        %v1876 = vpop.permute.xlu0 %1875
        %vm1941 = vcmask 1044224
        %1942 = vst.msk [vmem:[#allocation3] sm:$0xf] %vm1941, %v1750
        %1943 = vst.msk [vmem:[#allocation3 + $0xc] sm:$0xf] %vm1941, %v1752
        %1944 = vst.msk [vmem:[#allocation3 + $0x18] sm:$0xf] %vm1941, %v1754
        %1945 = vst.msk [vmem:[#allocation3 + $0x24] sm:$0xf] %vm1941, %v1756
        %1946 = vst.msk [vmem:[#allocation3 + $0x30] sm:$0xf] %vm1941, %v1758
        %1947 = vst.msk [vmem:[#allocation3 + $0x3c] sm:$0xf] %vm1941, %v1760
        %1948 = vst.msk [vmem:[#allocation3 + $0x48] sm:$0xf] %vm1941, %v1762
        %1949 = vst.msk [vmem:[#allocation3 + $0x54] sm:$0xf] %vm1941, %v1764
        %1950 = vst.msk [vmem:[#allocation3 + $0x60] sm:$0xf] %vm1941, %v1766
        %1951 = vst.msk [vmem:[#allocation3 + $0x6c] sm:$0xf] %vm1941, %v1768
        %1952 = vst.msk [vmem:[#allocation3 + $0x78] sm:$0xf] %vm1941, %v1770
        %1953 = vst.msk [vmem:[#allocation3 + $0x84] sm:$0xf] %vm1941, %v1772
        %1954 = vst.msk [vmem:[#allocation3 + $0x90] sm:$0xf] %vm1941, %v1774
        %1955 = vst.msk [vmem:[#allocation3 + $0x9c] sm:$0xf] %vm1941, %v1776
        %1956 = vst.msk [vmem:[#allocation3 + $0xa8] sm:$0xf] %vm1941, %v1778
        %1957 = vst.msk [vmem:[#allocation3 + $0xb4] sm:$0xf] %vm1941, %v1780
        %1958 = vst.msk [vmem:[#allocation3 + $0xc0] sm:$0xf] %vm1941, %v1782
        %1959 = vst.msk [vmem:[#allocation3 + $0xcc] sm:$0xf] %vm1941, %v1784
        %1960 = vst.msk [vmem:[#allocation3 + $0xd8] sm:$0xf] %vm1941, %v1786
        %1961 = vst.msk [vmem:[#allocation3 + $0xe4] sm:$0xf] %vm1941, %v1788
        %1962 = vst.msk [vmem:[#allocation3 + $0xf0] sm:$0xf] %vm1941, %v1790
        %1963 = vst.msk [vmem:[#allocation3 + $0xfc] sm:$0xf] %vm1941, %v1792
        %1964 = vst.msk [vmem:[#allocation3 + $0x108] sm:$0xf] %vm1941, %v1794
        %1965 = vst.msk [vmem:[#allocation3 + $0x114] sm:$0xf] %vm1941, %v1796
        %1966 = vst.msk [vmem:[#allocation3 + $0x120] sm:$0xf] %vm1941, %v1798
        %1967 = vst.msk [vmem:[#allocation3 + $0x12c] sm:$0xf] %vm1941, %v1800
        %1968 = vst.msk [vmem:[#allocation3 + $0x138] sm:$0xf] %vm1941, %v1802
        %1969 = vst.msk [vmem:[#allocation3 + $0x144] sm:$0xf] %vm1941, %v1804
        %1970 = vst.msk [vmem:[#allocation3 + $0x150] sm:$0xf] %vm1941, %v1806
        %1971 = vst.msk [vmem:[#allocation3 + $0x15c] sm:$0xf] %vm1941, %v1808
        %1972 = vst.msk [vmem:[#allocation3 + $0x168] sm:$0xf] %vm1941, %v1810
        %1973 = vst.msk [vmem:[#allocation3 + $0x174] sm:$0xf] %vm1941, %v1812
        %1974 = vst.msk [vmem:[#allocation3 + $0x180] sm:$0xf] %vm1941, %v1814
        %1975 = vst.msk [vmem:[#allocation3 + $0x18c] sm:$0xf] %vm1941, %v1816
        %1976 = vst.msk [vmem:[#allocation3 + $0x198] sm:$0xf] %vm1941, %v1818
        %1977 = vst.msk [vmem:[#allocation3 + $0x1a4] sm:$0xf] %vm1941, %v1820
        %1978 = vst.msk [vmem:[#allocation3 + $0x1b0] sm:$0xf] %vm1941, %v1822
        %1979 = vst.msk [vmem:[#allocation3 + $0x1bc] sm:$0xf] %vm1941, %v1824
        %1980 = vst.msk [vmem:[#allocation3 + $0x1c8] sm:$0xf] %vm1941, %v1826
        %1981 = vst.msk [vmem:[#allocation3 + $0x1d4] sm:$0xf] %vm1941, %v1828
        %1982 = vst.msk [vmem:[#allocation3 + $0x1e0] sm:$0xf] %vm1941, %v1830
        %1983 = vst.msk [vmem:[#allocation3 + $0x1ec] sm:$0xf] %vm1941, %v1832
        %1984 = vst.msk [vmem:[#allocation3 + $0x1f8] sm:$0xf] %vm1941, %v1834
        %1985 = vst.msk [vmem:[#allocation3 + $0x204] sm:$0xf] %vm1941, %v1836
        %1986 = vst.msk [vmem:[#allocation3 + $0x210] sm:$0xf] %vm1941, %v1838
        %1987 = vst.msk [vmem:[#allocation3 + $0x21c] sm:$0xf] %vm1941, %v1840
        %1988 = vst.msk [vmem:[#allocation3 + $0x228] sm:$0xf] %vm1941, %v1842
        %1989 = vst.msk [vmem:[#allocation3 + $0x234] sm:$0xf] %vm1941, %v1844
        %1990 = vst.msk [vmem:[#allocation3 + $0x240] sm:$0xf] %vm1941, %v1846
        %1991 = vst.msk [vmem:[#allocation3 + $0x24c] sm:$0xf] %vm1941, %v1848
        %1992 = vst.msk [vmem:[#allocation3 + $0x258] sm:$0xf] %vm1941, %v1850
        %1993 = vst.msk [vmem:[#allocation3 + $0x264] sm:$0xf] %vm1941, %v1852
        %1994 = vst.msk [vmem:[#allocation3 + $0x270] sm:$0xf] %vm1941, %v1854
        %1995 = vst.msk [vmem:[#allocation3 + $0x27c] sm:$0xf] %vm1941, %v1856
        %1996 = vst.msk [vmem:[#allocation3 + $0x288] sm:$0xf] %vm1941, %v1858
        %1997 = vst.msk [vmem:[#allocation3 + $0x294] sm:$0xf] %vm1941, %v1860
        %1998 = vst.msk [vmem:[#allocation3 + $0x2a0] sm:$0xf] %vm1941, %v1862
        %1999 = vst.msk [vmem:[#allocation3 + $0x2ac] sm:$0xf] %vm1941, %v1864
        %2000 = vst.msk [vmem:[#allocation3 + $0x2b8] sm:$0xf] %vm1941, %v1866
        %2001 = vst.msk [vmem:[#allocation3 + $0x2c4] sm:$0xf] %vm1941, %v1868
        %2002 = vst.msk [vmem:[#allocation3 + $0x2d0] sm:$0xf] %vm1941, %v1870
        %2003 = vst.msk [vmem:[#allocation3 + $0x2dc] sm:$0xf] %vm1941, %v1872
        %2004 = vst.msk [vmem:[#allocation3 + $0x2e8] sm:$0xf] %vm1941, %v1874
        %2005 = vst.msk [vmem:[#allocation3 + $0x2f4] sm:$0xf] %vm1941, %v1876
        %v2006 = vld [vmem:[%s401 + $0x1] sm:$0xff]
        %v2007 = vld [vmem:[%s401 + $0x9] sm:$0xff]
        %v2008 = vld [vmem:[%s401 + $0x19] sm:$0xff]
        %v2009 = vld [vmem:[%s401 + $0x21] sm:$0xff]
        %v2010 = vld [vmem:[%s401 + $0x31] sm:$0xff]
        %v2011 = vld [vmem:[%s401 + $0x39] sm:$0xff]
        %v2012 = vld [vmem:[%s401 + $0x49] sm:$0xff]
        %v2013 = vld [vmem:[%s401 + $0x51] sm:$0xff]
        %v2014 = vld [vmem:[%s401 + $0x61] sm:$0xff]
        %v2015 = vld [vmem:[%s401 + $0x69] sm:$0xff]
        %v2016 = vld [vmem:[%s401 + $0x79] sm:$0xff]
        %v2017 = vld [vmem:[%s401 + $0x81] sm:$0xff]
        %v2018 = vld [vmem:[%s401 + $0x91] sm:$0xff]
        %v2019 = vld [vmem:[%s401 + $0x99] sm:$0xff]
        %v2020 = vld [vmem:[%s401 + $0xa9] sm:$0xff]
        %v2021 = vld [vmem:[%s401 + $0xb1] sm:$0xff]
        %v2022 = vld [vmem:[%s401 + $0xc1] sm:$0xff]
        %v2023 = vld [vmem:[%s401 + $0xc9] sm:$0xff]
        %v2024 = vld [vmem:[%s401 + $0xd9] sm:$0xff]
        %v2025 = vld [vmem:[%s401 + $0xe1] sm:$0xff]
        %v2026 = vld [vmem:[%s401 + $0xf1] sm:$0xff]
        %v2027 = vld [vmem:[%s401 + $0xf9] sm:$0xff]
        %v2028 = vld [vmem:[%s401 + $0x109] sm:$0xff]
        %v2029 = vld [vmem:[%s401 + $0x111] sm:$0xff]
        %v2030 = vld [vmem:[%s401 + $0x121] sm:$0xff]
        %v2031 = vld [vmem:[%s401 + $0x129] sm:$0xff]
        %v2032 = vld [vmem:[%s401 + $0x139] sm:$0xff]
        %v2033 = vld [vmem:[%s401 + $0x141] sm:$0xff]
        %v2034 = vld [vmem:[%s401 + $0x151] sm:$0xff]
        %v2035 = vld [vmem:[%s401 + $0x159] sm:$0xff]
        %v2036 = vld [vmem:[%s401 + $0x169] sm:$0xff]
        %v2037 = vld [vmem:[%s401 + $0x171] sm:$0xff]
        %v2038 = vld [vmem:[%s401 + $0x1b1] sm:$0xff]
        %v2039 = vld [vmem:[%s401 + $0x1b9] sm:$0xff]
        %v2040 = vld [vmem:[%s401 + $0x1c9] sm:$0xff]
        %v2041 = vld [vmem:[%s401 + $0x1d1] sm:$0xff]
        %v2042 = vld [vmem:[%s401 + $0x1e1] sm:$0xff]
        %v2043 = vld [vmem:[%s401 + $0x1e9] sm:$0xff]
        %v2044 = vld [vmem:[%s401 + $0x1f9] sm:$0xff]
        %v2045 = vld [vmem:[%s401 + $0x201] sm:$0xff]
        %v2046 = vld [vmem:[%s401 + $0x211] sm:$0xff]
        %v2047 = vld [vmem:[%s401 + $0x219] sm:$0xff]
        %v2048 = vld [vmem:[%s401 + $0x229] sm:$0xff]
        %v2049 = vld [vmem:[%s401 + $0x231] sm:$0xff]
        %v2050 = vld [vmem:[%s401 + $0x241] sm:$0xff]
        %v2051 = vld [vmem:[%s401 + $0x249] sm:$0xff]
        %v2052 = vld [vmem:[%s401 + $0x259] sm:$0xff]
        %v2053 = vld [vmem:[%s401 + $0x261] sm:$0xff]
        %v2054 = vld [vmem:[%s401 + $0x271] sm:$0xff]
        %v2055 = vld [vmem:[%s401 + $0x279] sm:$0xff]
        %v2056 = vld [vmem:[%s401 + $0x289] sm:$0xff]
        %v2057 = vld [vmem:[%s401 + $0x291] sm:$0xff]
        %v2058 = vld [vmem:[%s401 + $0x2a1] sm:$0xff]
        %v2059 = vld [vmem:[%s401 + $0x2a9] sm:$0xff]
        %v2060 = vld [vmem:[%s401 + $0x2b9] sm:$0xff]
        %v2061 = vld [vmem:[%s401 + $0x2c1] sm:$0xff]
        %v2062 = vld [vmem:[%s401 + $0x2d1] sm:$0xff]
        %v2063 = vld [vmem:[%s401 + $0x2d9] sm:$0xff]
        %v2064 = vld [vmem:[%s401 + $0x2e9] sm:$0xff]
        %v2065 = vld [vmem:[%s401 + $0x2f1] sm:$0xff]
        %v2066 = vld [vmem:[%s401 + $0x301] sm:$0xff]
        %v2067 = vld [vmem:[%s401 + $0x309] sm:$0xff]
        %v2068 = vld [vmem:[%s401 + $0x319] sm:$0xff]
        %v2069 = vld [vmem:[%s401 + $0x321] sm:$0xff]
        %v2070 = vpack.c.bf16 %v2006, %v2006
        %v2071 = vpack.c.bf16 %v2007, %v2007
        %v2072 = vpack.c.bf16 %v2008, %v2008
        %v2073 = vpack.c.bf16 %v2009, %v2009
        %v2074 = vpack.c.bf16 %v2010, %v2010
        %v2075 = vpack.c.bf16 %v2011, %v2011
        %v2076 = vpack.c.bf16 %v2012, %v2012
        %v2077 = vpack.c.bf16 %v2013, %v2013
        %v2078 = vpack.c.bf16 %v2014, %v2014
        %v2079 = vpack.c.bf16 %v2015, %v2015
        %v2080 = vpack.c.bf16 %v2016, %v2016
        %v2081 = vpack.c.bf16 %v2017, %v2017
        %v2082 = vpack.c.bf16 %v2018, %v2018
        %v2083 = vpack.c.bf16 %v2019, %v2019
        %v2084 = vpack.c.bf16 %v2020, %v2020
        %v2085 = vpack.c.bf16 %v2021, %v2021
        %v2086 = vpack.c.bf16 %v2022, %v2022
        %v2087 = vpack.c.bf16 %v2023, %v2023
        %v2088 = vpack.c.bf16 %v2024, %v2024
        %v2089 = vpack.c.bf16 %v2025, %v2025
        %v2090 = vpack.c.bf16 %v2026, %v2026
        %v2091 = vpack.c.bf16 %v2027, %v2027
        %v2092 = vpack.c.bf16 %v2028, %v2028
        %v2093 = vpack.c.bf16 %v2029, %v2029
        %v2094 = vpack.c.bf16 %v2030, %v2030
        %v2095 = vpack.c.bf16 %v2031, %v2031
        %v2096 = vpack.c.bf16 %v2032, %v2032
        %v2097 = vpack.c.bf16 %v2033, %v2033
        %v2098 = vpack.c.bf16 %v2034, %v2034
        %v2099 = vpack.c.bf16 %v2035, %v2035
        %v2100 = vpack.c.bf16 %v2036, %v2036
        %v2101 = vpack.c.bf16 %v2037, %v2037
        %v2102 = vpack.c.bf16 %v2038, %v2038
        %v2103 = vpack.c.bf16 %v2039, %v2039
        %v2104 = vpack.c.bf16 %v2040, %v2040
        %v2105 = vpack.c.bf16 %v2041, %v2041
        %v2106 = vpack.c.bf16 %v2042, %v2042
        %v2107 = vpack.c.bf16 %v2043, %v2043
        %v2108 = vpack.c.bf16 %v2044, %v2044
        %v2109 = vpack.c.bf16 %v2045, %v2045
        %v2110 = vpack.c.bf16 %v2046, %v2046
        %v2111 = vpack.c.bf16 %v2047, %v2047
        %v2112 = vpack.c.bf16 %v2048, %v2048
        %v2113 = vpack.c.bf16 %v2049, %v2049
        %v2114 = vpack.c.bf16 %v2050, %v2050
        %v2115 = vpack.c.bf16 %v2051, %v2051
        %v2116 = vpack.c.bf16 %v2052, %v2052
        %v2117 = vpack.c.bf16 %v2053, %v2053
        %v2118 = vpack.c.bf16 %v2054, %v2054
        %v2119 = vpack.c.bf16 %v2055, %v2055
        %v2120 = vpack.c.bf16 %v2056, %v2056
        %v2121 = vpack.c.bf16 %v2057, %v2057
        %v2122 = vpack.c.bf16 %v2058, %v2058
        %v2123 = vpack.c.bf16 %v2059, %v2059
        %v2124 = vpack.c.bf16 %v2060, %v2060
        %v2125 = vpack.c.bf16 %v2061, %v2061
        %v2126 = vpack.c.bf16 %v2062, %v2062
        %v2127 = vpack.c.bf16 %v2063, %v2063
        %v2128 = vpack.c.bf16 %v2064, %v2064
        %v2129 = vpack.c.bf16 %v2065, %v2065
        %v2130 = vpack.c.bf16 %v2066, %v2066
        %v2131 = vpack.c.bf16 %v2067, %v2067
        %v2132 = vpack.c.bf16 %v2068, %v2068
        %v2133 = vpack.c.bf16 %v2069, %v2069
        %2134 = vst.msk [vmem:[#allocation3 + $0x4] sm:$0xf] %vm594, %v2070
        %2135 = vst.msk [vmem:[#allocation3 + $0x10] sm:$0xf] %vm594, %v2071
        %2136 = vst.msk [vmem:[#allocation3 + $0x1c] sm:$0xf] %vm594, %v2072
        %2137 = vst.msk [vmem:[#allocation3 + $0x28] sm:$0xf] %vm594, %v2073
        %2138 = vst.msk [vmem:[#allocation3 + $0x34] sm:$0xf] %vm594, %v2074
        %2139 = vst.msk [vmem:[#allocation3 + $0x40] sm:$0xf] %vm594, %v2075
        %2140 = vst.msk [vmem:[#allocation3 + $0x4c] sm:$0xf] %vm594, %v2076
        %2141 = vst.msk [vmem:[#allocation3 + $0x58] sm:$0xf] %vm594, %v2077
        %2142 = vst.msk [vmem:[#allocation3 + $0x64] sm:$0xf] %vm594, %v2078
        %2143 = vst.msk [vmem:[#allocation3 + $0x70] sm:$0xf] %vm594, %v2079
        %2144 = vst.msk [vmem:[#allocation3 + $0x7c] sm:$0xf] %vm594, %v2080
        %2145 = vst.msk [vmem:[#allocation3 + $0x88] sm:$0xf] %vm594, %v2081
        %2146 = vst.msk [vmem:[#allocation3 + $0x94] sm:$0xf] %vm594, %v2082
        %2147 = vst.msk [vmem:[#allocation3 + $0xa0] sm:$0xf] %vm594, %v2083
        %2148 = vst.msk [vmem:[#allocation3 + $0xac] sm:$0xf] %vm594, %v2084
        %2149 = vst.msk [vmem:[#allocation3 + $0xb8] sm:$0xf] %vm594, %v2085
        %2150 = vst.msk [vmem:[#allocation3 + $0xc4] sm:$0xf] %vm594, %v2086
        %2151 = vst.msk [vmem:[#allocation3 + $0xd0] sm:$0xf] %vm594, %v2087
        %2152 = vst.msk [vmem:[#allocation3 + $0xdc] sm:$0xf] %vm594, %v2088
        %2153 = vst.msk [vmem:[#allocation3 + $0xe8] sm:$0xf] %vm594, %v2089
        %2154 = vst.msk [vmem:[#allocation3 + $0xf4] sm:$0xf] %vm594, %v2090
        %2155 = vst.msk [vmem:[#allocation3 + $0x100] sm:$0xf] %vm594, %v2091
        %2156 = vst.msk [vmem:[#allocation3 + $0x10c] sm:$0xf] %vm594, %v2092
        %2157 = vst.msk [vmem:[#allocation3 + $0x118] sm:$0xf] %vm594, %v2093
        %2158 = vst.msk [vmem:[#allocation3 + $0x124] sm:$0xf] %vm594, %v2094
        %2159 = vst.msk [vmem:[#allocation3 + $0x130] sm:$0xf] %vm594, %v2095
        %2160 = vst.msk [vmem:[#allocation3 + $0x13c] sm:$0xf] %vm594, %v2096
        %2161 = vst.msk [vmem:[#allocation3 + $0x148] sm:$0xf] %vm594, %v2097
        %2162 = vst.msk [vmem:[#allocation3 + $0x154] sm:$0xf] %vm594, %v2098
        %2163 = vst.msk [vmem:[#allocation3 + $0x160] sm:$0xf] %vm594, %v2099
        %2164 = vst.msk [vmem:[#allocation3 + $0x16c] sm:$0xf] %vm594, %v2100
        %2165 = vst.msk [vmem:[#allocation3 + $0x178] sm:$0xf] %vm594, %v2101
        %2166 = vst.msk [vmem:[#allocation3 + $0x184] sm:$0xf] %vm594, %v2102
        %2167 = vst.msk [vmem:[#allocation3 + $0x190] sm:$0xf] %vm594, %v2103
        %2168 = vst.msk [vmem:[#allocation3 + $0x19c] sm:$0xf] %vm594, %v2104
        %2169 = vst.msk [vmem:[#allocation3 + $0x1a8] sm:$0xf] %vm594, %v2105
        %2170 = vst.msk [vmem:[#allocation3 + $0x1b4] sm:$0xf] %vm594, %v2106
        %2171 = vst.msk [vmem:[#allocation3 + $0x1c0] sm:$0xf] %vm594, %v2107
        %2172 = vst.msk [vmem:[#allocation3 + $0x1cc] sm:$0xf] %vm594, %v2108
        %2173 = vst.msk [vmem:[#allocation3 + $0x1d8] sm:$0xf] %vm594, %v2109
        %2174 = vst.msk [vmem:[#allocation3 + $0x1e4] sm:$0xf] %vm594, %v2110
        %2175 = vst.msk [vmem:[#allocation3 + $0x1f0] sm:$0xf] %vm594, %v2111
        %2176 = vst.msk [vmem:[#allocation3 + $0x1fc] sm:$0xf] %vm594, %v2112
        %2177 = vst.msk [vmem:[#allocation3 + $0x208] sm:$0xf] %vm594, %v2113
        %2178 = vst.msk [vmem:[#allocation3 + $0x214] sm:$0xf] %vm594, %v2114
        %2179 = vst.msk [vmem:[#allocation3 + $0x220] sm:$0xf] %vm594, %v2115
        %2180 = vst.msk [vmem:[#allocation3 + $0x22c] sm:$0xf] %vm594, %v2116
        %2181 = vst.msk [vmem:[#allocation3 + $0x238] sm:$0xf] %vm594, %v2117
        %2182 = vst.msk [vmem:[#allocation3 + $0x244] sm:$0xf] %vm594, %v2118
        %2183 = vst.msk [vmem:[#allocation3 + $0x250] sm:$0xf] %vm594, %v2119
        %2184 = vst.msk [vmem:[#allocation3 + $0x25c] sm:$0xf] %vm594, %v2120
        %2185 = vst.msk [vmem:[#allocation3 + $0x268] sm:$0xf] %vm594, %v2121
        %2186 = vst.msk [vmem:[#allocation3 + $0x274] sm:$0xf] %vm594, %v2122
        %2187 = vst.msk [vmem:[#allocation3 + $0x280] sm:$0xf] %vm594, %v2123
        %2188 = vst.msk [vmem:[#allocation3 + $0x28c] sm:$0xf] %vm594, %v2124
        %2189 = vst.msk [vmem:[#allocation3 + $0x298] sm:$0xf] %vm594, %v2125
        %2190 = vst.msk [vmem:[#allocation3 + $0x2a4] sm:$0xf] %vm594, %v2126
        %2191 = vst.msk [vmem:[#allocation3 + $0x2b0] sm:$0xf] %vm594, %v2127
        %2192 = vst.msk [vmem:[#allocation3 + $0x2bc] sm:$0xf] %vm594, %v2128
        %2193 = vst.msk [vmem:[#allocation3 + $0x2c8] sm:$0xf] %vm594, %v2129
        %2194 = vst.msk [vmem:[#allocation3 + $0x2d4] sm:$0xf] %vm594, %v2130
        %2195 = vst.msk [vmem:[#allocation3 + $0x2e0] sm:$0xf] %vm594, %v2131
        %2196 = vst.msk [vmem:[#allocation3 + $0x2ec] sm:$0xf] %vm594, %v2132
        %2197 = vst.msk [vmem:[#allocation3 + $0x2f8] sm:$0xf] %vm594, %v2133
        %v2198 = vld [vmem:[%s401 + $0x2] sm:$0xff]
        %v2199 = vld [vmem:[%s401 + $0xa] sm:$0xff]
        %v2200 = vld [vmem:[%s401 + $0x1a] sm:$0xff]
        %v2201 = vld [vmem:[%s401 + $0x22] sm:$0xff]
        %v2202 = vld [vmem:[%s401 + $0x32] sm:$0xff]
        %v2203 = vld [vmem:[%s401 + $0x3a] sm:$0xff]
        %v2204 = vld [vmem:[%s401 + $0x4a] sm:$0xff]
        %v2205 = vld [vmem:[%s401 + $0x52] sm:$0xff]
        %v2206 = vld [vmem:[%s401 + $0x62] sm:$0xff]
        %v2207 = vld [vmem:[%s401 + $0x6a] sm:$0xff]
        %v2208 = vld [vmem:[%s401 + $0x7a] sm:$0xff]
        %v2209 = vld [vmem:[%s401 + $0x82] sm:$0xff]
        %v2210 = vld [vmem:[%s401 + $0x92] sm:$0xff]
        %v2211 = vld [vmem:[%s401 + $0x9a] sm:$0xff]
        %v2212 = vld [vmem:[%s401 + $0xaa] sm:$0xff]
        %v2213 = vld [vmem:[%s401 + $0xb2] sm:$0xff]
        %v2214 = vld [vmem:[%s401 + $0xc2] sm:$0xff]
        %v2215 = vld [vmem:[%s401 + $0xca] sm:$0xff]
        %v2216 = vld [vmem:[%s401 + $0xda] sm:$0xff]
        %v2217 = vld [vmem:[%s401 + $0xe2] sm:$0xff]
        %v2218 = vld [vmem:[%s401 + $0xf2] sm:$0xff]
        %v2219 = vld [vmem:[%s401 + $0xfa] sm:$0xff]
        %v2220 = vld [vmem:[%s401 + $0x10a] sm:$0xff]
        %v2221 = vld [vmem:[%s401 + $0x112] sm:$0xff]
        %v2222 = vld [vmem:[%s401 + $0x122] sm:$0xff]
        %v2223 = vld [vmem:[%s401 + $0x12a] sm:$0xff]
        %v2224 = vld [vmem:[%s401 + $0x13a] sm:$0xff]
        %v2225 = vld [vmem:[%s401 + $0x142] sm:$0xff]
        %v2226 = vld [vmem:[%s401 + $0x152] sm:$0xff]
        %v2227 = vld [vmem:[%s401 + $0x15a] sm:$0xff]
        %v2228 = vld [vmem:[%s401 + $0x16a] sm:$0xff]
        %v2229 = vld [vmem:[%s401 + $0x172] sm:$0xff]
        %v2230 = vld [vmem:[%s401 + $0x1b2] sm:$0xff]
        %v2231 = vld [vmem:[%s401 + $0x1ba] sm:$0xff]
        %v2232 = vld [vmem:[%s401 + $0x1ca] sm:$0xff]
        %v2233 = vld [vmem:[%s401 + $0x1d2] sm:$0xff]
        %v2234 = vld [vmem:[%s401 + $0x1e2] sm:$0xff]
        %v2235 = vld [vmem:[%s401 + $0x1ea] sm:$0xff]
        %v2236 = vld [vmem:[%s401 + $0x1fa] sm:$0xff]
        %v2237 = vld [vmem:[%s401 + $0x202] sm:$0xff]
        %v2238 = vld [vmem:[%s401 + $0x212] sm:$0xff]
        %v2239 = vld [vmem:[%s401 + $0x21a] sm:$0xff]
        %v2240 = vld [vmem:[%s401 + $0x22a] sm:$0xff]
        %v2241 = vld [vmem:[%s401 + $0x232] sm:$0xff]
        %v2242 = vld [vmem:[%s401 + $0x242] sm:$0xff]
        %v2243 = vld [vmem:[%s401 + $0x24a] sm:$0xff]
        %v2244 = vld [vmem:[%s401 + $0x25a] sm:$0xff]
        %v2245 = vld [vmem:[%s401 + $0x262] sm:$0xff]
        %v2246 = vld [vmem:[%s401 + $0x272] sm:$0xff]
        %v2247 = vld [vmem:[%s401 + $0x27a] sm:$0xff]
        %v2248 = vld [vmem:[%s401 + $0x28a] sm:$0xff]
        %v2249 = vld [vmem:[%s401 + $0x292] sm:$0xff]
        %v2250 = vld [vmem:[%s401 + $0x2a2] sm:$0xff]
        %v2251 = vld [vmem:[%s401 + $0x2aa] sm:$0xff]
        %v2252 = vld [vmem:[%s401 + $0x2ba] sm:$0xff]
        %v2253 = vld [vmem:[%s401 + $0x2c2] sm:$0xff]
        %v2254 = vld [vmem:[%s401 + $0x2d2] sm:$0xff]
        %v2255 = vld [vmem:[%s401 + $0x2da] sm:$0xff]
        %v2256 = vld [vmem:[%s401 + $0x2ea] sm:$0xff]
        %v2257 = vld [vmem:[%s401 + $0x2f2] sm:$0xff]
        %v2258 = vld [vmem:[%s401 + $0x302] sm:$0xff]
        %v2259 = vld [vmem:[%s401 + $0x30a] sm:$0xff]
        %v2260 = vld [vmem:[%s401 + $0x31a] sm:$0xff]
        %v2261 = vld [vmem:[%s401 + $0x322] sm:$0xff]
        %v2262 = vpack.c.bf16 %v2198, %v2198
        %v2263 = vpack.c.bf16 %v2199, %v2199
        %v2264 = vpack.c.bf16 %v2200, %v2200
        %v2265 = vpack.c.bf16 %v2201, %v2201
        %v2266 = vpack.c.bf16 %v2202, %v2202
        %v2267 = vpack.c.bf16 %v2203, %v2203
        %v2268 = vpack.c.bf16 %v2204, %v2204
        %v2269 = vpack.c.bf16 %v2205, %v2205
        %v2270 = vpack.c.bf16 %v2206, %v2206
        %v2271 = vpack.c.bf16 %v2207, %v2207
        %v2272 = vpack.c.bf16 %v2208, %v2208
        %v2273 = vpack.c.bf16 %v2209, %v2209
        %v2274 = vpack.c.bf16 %v2210, %v2210
        %v2275 = vpack.c.bf16 %v2211, %v2211
        %v2276 = vpack.c.bf16 %v2212, %v2212
        %v2277 = vpack.c.bf16 %v2213, %v2213
        %v2278 = vpack.c.bf16 %v2214, %v2214
        %v2279 = vpack.c.bf16 %v2215, %v2215
        %v2280 = vpack.c.bf16 %v2216, %v2216
        %v2281 = vpack.c.bf16 %v2217, %v2217
        %v2282 = vpack.c.bf16 %v2218, %v2218
        %v2283 = vpack.c.bf16 %v2219, %v2219
        %v2284 = vpack.c.bf16 %v2220, %v2220
        %v2285 = vpack.c.bf16 %v2221, %v2221
        %v2286 = vpack.c.bf16 %v2222, %v2222
        %v2287 = vpack.c.bf16 %v2223, %v2223
        %v2288 = vpack.c.bf16 %v2224, %v2224
        %v2289 = vpack.c.bf16 %v2225, %v2225
        %v2290 = vpack.c.bf16 %v2226, %v2226
        %v2291 = vpack.c.bf16 %v2227, %v2227
        %v2292 = vpack.c.bf16 %v2228, %v2228
        %v2293 = vpack.c.bf16 %v2229, %v2229
        %v2294 = vpack.c.bf16 %v2230, %v2230
        %v2295 = vpack.c.bf16 %v2231, %v2231
        %v2296 = vpack.c.bf16 %v2232, %v2232
        %v2297 = vpack.c.bf16 %v2233, %v2233
        %v2298 = vpack.c.bf16 %v2234, %v2234
        %v2299 = vpack.c.bf16 %v2235, %v2235
        %v2300 = vpack.c.bf16 %v2236, %v2236
        %v2301 = vpack.c.bf16 %v2237, %v2237
        %v2302 = vpack.c.bf16 %v2238, %v2238
        %v2303 = vpack.c.bf16 %v2239, %v2239
        %v2304 = vpack.c.bf16 %v2240, %v2240
        %v2305 = vpack.c.bf16 %v2241, %v2241
        %v2306 = vpack.c.bf16 %v2242, %v2242
        %v2307 = vpack.c.bf16 %v2243, %v2243
        %v2308 = vpack.c.bf16 %v2244, %v2244
        %v2309 = vpack.c.bf16 %v2245, %v2245
        %v2310 = vpack.c.bf16 %v2246, %v2246
        %v2311 = vpack.c.bf16 %v2247, %v2247
        %v2312 = vpack.c.bf16 %v2248, %v2248
        %v2313 = vpack.c.bf16 %v2249, %v2249
        %v2314 = vpack.c.bf16 %v2250, %v2250
        %v2315 = vpack.c.bf16 %v2251, %v2251
        %v2316 = vpack.c.bf16 %v2252, %v2252
        %v2317 = vpack.c.bf16 %v2253, %v2253
        %v2318 = vpack.c.bf16 %v2254, %v2254
        %v2319 = vpack.c.bf16 %v2255, %v2255
        %v2320 = vpack.c.bf16 %v2256, %v2256
        %v2321 = vpack.c.bf16 %v2257, %v2257
        %v2322 = vpack.c.bf16 %v2258, %v2258
        %v2323 = vpack.c.bf16 %v2259, %v2259
        %v2324 = vpack.c.bf16 %v2260, %v2260
        %v2325 = vpack.c.bf16 %v2261, %v2261
        %2390 = vrot.lane.b32.xlu0 %v2262, 32
        %v2391 = vpop.permute.xlu0 %2390
        %2392 = vrot.lane.b32.xlu0 %v2263, 32
        %v2393 = vpop.permute.xlu0 %2392
        %2394 = vrot.lane.b32.xlu0 %v2264, 32
        %v2395 = vpop.permute.xlu0 %2394
        %2396 = vrot.lane.b32.xlu0 %v2265, 32
        %v2397 = vpop.permute.xlu0 %2396
        %2398 = vrot.lane.b32.xlu0 %v2266, 32
        %v2399 = vpop.permute.xlu0 %2398
        %2400 = vrot.lane.b32.xlu0 %v2267, 32
        %v2401 = vpop.permute.xlu0 %2400
        %2402 = vrot.lane.b32.xlu0 %v2268, 32
        %v2403 = vpop.permute.xlu0 %2402
        %2404 = vrot.lane.b32.xlu0 %v2269, 32
        %v2405 = vpop.permute.xlu0 %2404
        %2406 = vrot.lane.b32.xlu0 %v2270, 32
        %v2407 = vpop.permute.xlu0 %2406
        %2408 = vrot.lane.b32.xlu0 %v2271, 32
        %v2409 = vpop.permute.xlu0 %2408
        %2410 = vrot.lane.b32.xlu0 %v2272, 32
        %v2411 = vpop.permute.xlu0 %2410
        %2412 = vrot.lane.b32.xlu0 %v2273, 32
        %v2413 = vpop.permute.xlu0 %2412
        %2414 = vrot.lane.b32.xlu0 %v2274, 32
        %v2415 = vpop.permute.xlu0 %2414
        %2416 = vrot.lane.b32.xlu0 %v2275, 32
        %v2417 = vpop.permute.xlu0 %2416
        %2418 = vrot.lane.b32.xlu0 %v2276, 32
        %v2419 = vpop.permute.xlu0 %2418
        %2420 = vrot.lane.b32.xlu0 %v2277, 32
        %v2421 = vpop.permute.xlu0 %2420
        %2422 = vrot.lane.b32.xlu0 %v2278, 32
        %v2423 = vpop.permute.xlu0 %2422
        %2424 = vrot.lane.b32.xlu0 %v2279, 32
        %v2425 = vpop.permute.xlu0 %2424
        %2426 = vrot.lane.b32.xlu0 %v2280, 32
        %v2427 = vpop.permute.xlu0 %2426
        %2428 = vrot.lane.b32.xlu0 %v2281, 32
        %v2429 = vpop.permute.xlu0 %2428
        %2430 = vrot.lane.b32.xlu0 %v2282, 32
        %v2431 = vpop.permute.xlu0 %2430
        %2432 = vrot.lane.b32.xlu0 %v2283, 32
        %v2433 = vpop.permute.xlu0 %2432
        %2434 = vrot.lane.b32.xlu0 %v2284, 32
        %v2435 = vpop.permute.xlu0 %2434
        %2436 = vrot.lane.b32.xlu0 %v2285, 32
        %v2437 = vpop.permute.xlu0 %2436
        %2438 = vrot.lane.b32.xlu0 %v2286, 32
        %v2439 = vpop.permute.xlu0 %2438
        %2440 = vrot.lane.b32.xlu0 %v2287, 32
        %v2441 = vpop.permute.xlu0 %2440
        %2442 = vrot.lane.b32.xlu0 %v2288, 32
        %v2443 = vpop.permute.xlu0 %2442
        %2444 = vrot.lane.b32.xlu0 %v2289, 32
        %v2445 = vpop.permute.xlu0 %2444
        %2446 = vrot.lane.b32.xlu0 %v2290, 32
        %v2447 = vpop.permute.xlu0 %2446
        %2448 = vrot.lane.b32.xlu0 %v2291, 32
        %v2449 = vpop.permute.xlu0 %2448
        %2450 = vrot.lane.b32.xlu0 %v2292, 32
        %v2451 = vpop.permute.xlu0 %2450
        %2452 = vrot.lane.b32.xlu0 %v2293, 32
        %v2453 = vpop.permute.xlu0 %2452
        %2454 = vrot.lane.b32.xlu0 %v2294, 32
        %v2455 = vpop.permute.xlu0 %2454
        %2456 = vrot.lane.b32.xlu0 %v2295, 32
        %v2457 = vpop.permute.xlu0 %2456
        %2458 = vrot.lane.b32.xlu0 %v2296, 32
        %v2459 = vpop.permute.xlu0 %2458
        %2460 = vrot.lane.b32.xlu0 %v2297, 32
        %v2461 = vpop.permute.xlu0 %2460
        %2462 = vrot.lane.b32.xlu0 %v2298, 32
        %v2463 = vpop.permute.xlu0 %2462
        %2464 = vrot.lane.b32.xlu0 %v2299, 32
        %v2465 = vpop.permute.xlu0 %2464
        %2466 = vrot.lane.b32.xlu0 %v2300, 32
        %v2467 = vpop.permute.xlu0 %2466
        %2468 = vrot.lane.b32.xlu0 %v2301, 32
        %v2469 = vpop.permute.xlu0 %2468
        %2470 = vrot.lane.b32.xlu0 %v2302, 32
        %v2471 = vpop.permute.xlu0 %2470
        %2472 = vrot.lane.b32.xlu0 %v2303, 32
        %v2473 = vpop.permute.xlu0 %2472
        %2474 = vrot.lane.b32.xlu0 %v2304, 32
        %v2475 = vpop.permute.xlu0 %2474
        %2476 = vrot.lane.b32.xlu0 %v2305, 32
        %v2477 = vpop.permute.xlu0 %2476
        %2478 = vrot.lane.b32.xlu0 %v2306, 32
        %v2479 = vpop.permute.xlu0 %2478
        %2480 = vrot.lane.b32.xlu0 %v2307, 32
        %v2481 = vpop.permute.xlu0 %2480
        %2482 = vrot.lane.b32.xlu0 %v2308, 32
        %v2483 = vpop.permute.xlu0 %2482
        %2484 = vrot.lane.b32.xlu0 %v2309, 32
        %v2485 = vpop.permute.xlu0 %2484
        %2486 = vrot.lane.b32.xlu0 %v2310, 32
        %v2487 = vpop.permute.xlu0 %2486
        %2488 = vrot.lane.b32.xlu0 %v2311, 32
        %v2489 = vpop.permute.xlu0 %2488
        %2490 = vrot.lane.b32.xlu0 %v2312, 32
        %v2491 = vpop.permute.xlu0 %2490
        %2492 = vrot.lane.b32.xlu0 %v2313, 32
        %v2493 = vpop.permute.xlu0 %2492
        %2494 = vrot.lane.b32.xlu0 %v2314, 32
        %v2495 = vpop.permute.xlu0 %2494
        %2496 = vrot.lane.b32.xlu0 %v2315, 32
        %v2497 = vpop.permute.xlu0 %2496
        %2498 = vrot.lane.b32.xlu0 %v2316, 32
        %v2499 = vpop.permute.xlu0 %2498
        %2500 = vrot.lane.b32.xlu0 %v2317, 32
        %v2501 = vpop.permute.xlu0 %2500
        %2502 = vrot.lane.b32.xlu0 %v2318, 32
        %v2503 = vpop.permute.xlu0 %2502
        %2504 = vrot.lane.b32.xlu0 %v2319, 32
        %v2505 = vpop.permute.xlu0 %2504
        %2506 = vrot.lane.b32.xlu0 %v2320, 32
        %v2507 = vpop.permute.xlu0 %2506
        %2508 = vrot.lane.b32.xlu0 %v2321, 32
        %v2509 = vpop.permute.xlu0 %2508
        %2510 = vrot.lane.b32.xlu0 %v2322, 32
        %v2511 = vpop.permute.xlu0 %2510
        %2512 = vrot.lane.b32.xlu0 %v2323, 32
        %v2513 = vpop.permute.xlu0 %2512
        %2514 = vrot.lane.b32.xlu0 %v2324, 32
        %v2515 = vpop.permute.xlu0 %2514
        %2516 = vrot.lane.b32.xlu0 %v2325, 32
        %v2517 = vpop.permute.xlu0 %2516
        %2582 = vst.msk [vmem:[#allocation3 + $0x4] sm:$0xf] %vm1043, %v2391
        %2583 = vst.msk [vmem:[#allocation3 + $0x10] sm:$0xf] %vm1043, %v2393
        %2584 = vst.msk [vmem:[#allocation3 + $0x1c] sm:$0xf] %vm1043, %v2395
        %2585 = vst.msk [vmem:[#allocation3 + $0x28] sm:$0xf] %vm1043, %v2397
        %2586 = vst.msk [vmem:[#allocation3 + $0x34] sm:$0xf] %vm1043, %v2399
        %2587 = vst.msk [vmem:[#allocation3 + $0x40] sm:$0xf] %vm1043, %v2401
        %2588 = vst.msk [vmem:[#allocation3 + $0x4c] sm:$0xf] %vm1043, %v2403
        %2589 = vst.msk [vmem:[#allocation3 + $0x58] sm:$0xf] %vm1043, %v2405
        %2590 = vst.msk [vmem:[#allocation3 + $0x64] sm:$0xf] %vm1043, %v2407
        %2591 = vst.msk [vmem:[#allocation3 + $0x70] sm:$0xf] %vm1043, %v2409
        %2592 = vst.msk [vmem:[#allocation3 + $0x7c] sm:$0xf] %vm1043, %v2411
        %2593 = vst.msk [vmem:[#allocation3 + $0x88] sm:$0xf] %vm1043, %v2413
        %2594 = vst.msk [vmem:[#allocation3 + $0x94] sm:$0xf] %vm1043, %v2415
        %2595 = vst.msk [vmem:[#allocation3 + $0xa0] sm:$0xf] %vm1043, %v2417
        %2596 = vst.msk [vmem:[#allocation3 + $0xac] sm:$0xf] %vm1043, %v2419
        %2597 = vst.msk [vmem:[#allocation3 + $0xb8] sm:$0xf] %vm1043, %v2421
        %2598 = vst.msk [vmem:[#allocation3 + $0xc4] sm:$0xf] %vm1043, %v2423
        %2599 = vst.msk [vmem:[#allocation3 + $0xd0] sm:$0xf] %vm1043, %v2425
        %2600 = vst.msk [vmem:[#allocation3 + $0xdc] sm:$0xf] %vm1043, %v2427
        %2601 = vst.msk [vmem:[#allocation3 + $0xe8] sm:$0xf] %vm1043, %v2429
        %2602 = vst.msk [vmem:[#allocation3 + $0xf4] sm:$0xf] %vm1043, %v2431
        %2603 = vst.msk [vmem:[#allocation3 + $0x100] sm:$0xf] %vm1043, %v2433
        %2604 = vst.msk [vmem:[#allocation3 + $0x10c] sm:$0xf] %vm1043, %v2435
        %2605 = vst.msk [vmem:[#allocation3 + $0x118] sm:$0xf] %vm1043, %v2437
        %2606 = vst.msk [vmem:[#allocation3 + $0x124] sm:$0xf] %vm1043, %v2439
        %2607 = vst.msk [vmem:[#allocation3 + $0x130] sm:$0xf] %vm1043, %v2441
        %2608 = vst.msk [vmem:[#allocation3 + $0x13c] sm:$0xf] %vm1043, %v2443
        %2609 = vst.msk [vmem:[#allocation3 + $0x148] sm:$0xf] %vm1043, %v2445
        %2610 = vst.msk [vmem:[#allocation3 + $0x154] sm:$0xf] %vm1043, %v2447
        %2611 = vst.msk [vmem:[#allocation3 + $0x160] sm:$0xf] %vm1043, %v2449
        %2612 = vst.msk [vmem:[#allocation3 + $0x16c] sm:$0xf] %vm1043, %v2451
        %2613 = vst.msk [vmem:[#allocation3 + $0x178] sm:$0xf] %vm1043, %v2453
        %2614 = vst.msk [vmem:[#allocation3 + $0x184] sm:$0xf] %vm1043, %v2455
        %2615 = vst.msk [vmem:[#allocation3 + $0x190] sm:$0xf] %vm1043, %v2457
        %2616 = vst.msk [vmem:[#allocation3 + $0x19c] sm:$0xf] %vm1043, %v2459
        %2617 = vst.msk [vmem:[#allocation3 + $0x1a8] sm:$0xf] %vm1043, %v2461
        %2618 = vst.msk [vmem:[#allocation3 + $0x1b4] sm:$0xf] %vm1043, %v2463
        %2619 = vst.msk [vmem:[#allocation3 + $0x1c0] sm:$0xf] %vm1043, %v2465
        %2620 = vst.msk [vmem:[#allocation3 + $0x1cc] sm:$0xf] %vm1043, %v2467
        %2621 = vst.msk [vmem:[#allocation3 + $0x1d8] sm:$0xf] %vm1043, %v2469
        %2622 = vst.msk [vmem:[#allocation3 + $0x1e4] sm:$0xf] %vm1043, %v2471
        %2623 = vst.msk [vmem:[#allocation3 + $0x1f0] sm:$0xf] %vm1043, %v2473
        %2624 = vst.msk [vmem:[#allocation3 + $0x1fc] sm:$0xf] %vm1043, %v2475
        %2625 = vst.msk [vmem:[#allocation3 + $0x208] sm:$0xf] %vm1043, %v2477
        %2626 = vst.msk [vmem:[#allocation3 + $0x214] sm:$0xf] %vm1043, %v2479
        %2627 = vst.msk [vmem:[#allocation3 + $0x220] sm:$0xf] %vm1043, %v2481
        %2628 = vst.msk [vmem:[#allocation3 + $0x22c] sm:$0xf] %vm1043, %v2483
        %2629 = vst.msk [vmem:[#allocation3 + $0x238] sm:$0xf] %vm1043, %v2485
        %2630 = vst.msk [vmem:[#allocation3 + $0x244] sm:$0xf] %vm1043, %v2487
        %2631 = vst.msk [vmem:[#allocation3 + $0x250] sm:$0xf] %vm1043, %v2489
        %2632 = vst.msk [vmem:[#allocation3 + $0x25c] sm:$0xf] %vm1043, %v2491
        %2633 = vst.msk [vmem:[#allocation3 + $0x268] sm:$0xf] %vm1043, %v2493
        %2634 = vst.msk [vmem:[#allocation3 + $0x274] sm:$0xf] %vm1043, %v2495
        %2635 = vst.msk [vmem:[#allocation3 + $0x280] sm:$0xf] %vm1043, %v2497
        %2636 = vst.msk [vmem:[#allocation3 + $0x28c] sm:$0xf] %vm1043, %v2499
        %2637 = vst.msk [vmem:[#allocation3 + $0x298] sm:$0xf] %vm1043, %v2501
        %2638 = vst.msk [vmem:[#allocation3 + $0x2a4] sm:$0xf] %vm1043, %v2503
        %2639 = vst.msk [vmem:[#allocation3 + $0x2b0] sm:$0xf] %vm1043, %v2505
        %2640 = vst.msk [vmem:[#allocation3 + $0x2bc] sm:$0xf] %vm1043, %v2507
        %2641 = vst.msk [vmem:[#allocation3 + $0x2c8] sm:$0xf] %vm1043, %v2509
        %2642 = vst.msk [vmem:[#allocation3 + $0x2d4] sm:$0xf] %vm1043, %v2511
        %2643 = vst.msk [vmem:[#allocation3 + $0x2e0] sm:$0xf] %vm1043, %v2513
        %2644 = vst.msk [vmem:[#allocation3 + $0x2ec] sm:$0xf] %vm1043, %v2515
        %2645 = vst.msk [vmem:[#allocation3 + $0x2f8] sm:$0xf] %vm1043, %v2517
        %s2646 = scalar_lea.vmem [#allocation2], 48
        %v2647 = vld [vmem:[%s2646] sm:$0xff]
        %v2648 = vld [vmem:[%s2646 + $0x8] sm:$0xff]
        %v2649 = vld [vmem:[%s2646 + $0x18] sm:$0xff]
        %v2650 = vld [vmem:[%s2646 + $0x20] sm:$0xff]
        %v2651 = vld [vmem:[%s2646 + $0x30] sm:$0xff]
        %v2652 = vld [vmem:[%s2646 + $0x38] sm:$0xff]
        %v2653 = vld [vmem:[%s2646 + $0x48] sm:$0xff]
        %v2654 = vld [vmem:[%s2646 + $0x50] sm:$0xff]
        %v2655 = vld [vmem:[%s2646 + $0x60] sm:$0xff]
        %v2656 = vld [vmem:[%s2646 + $0x68] sm:$0xff]
        %v2657 = vld [vmem:[%s2646 + $0x78] sm:$0xff]
        %v2658 = vld [vmem:[%s2646 + $0x80] sm:$0xff]
        %v2659 = vld [vmem:[%s2646 + $0x90] sm:$0xff]
        %v2660 = vld [vmem:[%s2646 + $0x98] sm:$0xff]
        %v2661 = vld [vmem:[%s2646 + $0xa8] sm:$0xff]
        %v2662 = vld [vmem:[%s2646 + $0xb0] sm:$0xff]
        %v2663 = vld [vmem:[%s2646 + $0xc0] sm:$0xff]
        %v2664 = vld [vmem:[%s2646 + $0xc8] sm:$0xff]
        %v2665 = vld [vmem:[%s2646 + $0xd8] sm:$0xff]
        %v2666 = vld [vmem:[%s2646 + $0xe0] sm:$0xff]
        %v2667 = vld [vmem:[%s2646 + $0xf0] sm:$0xff]
        %v2668 = vld [vmem:[%s2646 + $0xf8] sm:$0xff]
        %v2669 = vld [vmem:[%s2646 + $0x108] sm:$0xff]
        %v2670 = vld [vmem:[%s2646 + $0x110] sm:$0xff]
        %v2671 = vld [vmem:[%s2646 + $0x120] sm:$0xff]
        %v2672 = vld [vmem:[%s2646 + $0x128] sm:$0xff]
        %v2673 = vld [vmem:[%s2646 + $0x138] sm:$0xff]
        %v2674 = vld [vmem:[%s2646 + $0x140] sm:$0xff]
        %v2675 = vld [vmem:[%s2646 + $0x150] sm:$0xff]
        %v2676 = vld [vmem:[%s2646 + $0x158] sm:$0xff]
        %v2677 = vld [vmem:[%s2646 + $0x168] sm:$0xff]
        %v2678 = vld [vmem:[%s2646 + $0x170] sm:$0xff]
        %v2679 = vld [vmem:[%s2646 + $0x1b0] sm:$0xff]
        %v2680 = vld [vmem:[%s2646 + $0x1b8] sm:$0xff]
        %v2681 = vld [vmem:[%s2646 + $0x1c8] sm:$0xff]
        %v2682 = vld [vmem:[%s2646 + $0x1d0] sm:$0xff]
        %v2683 = vld [vmem:[%s2646 + $0x1e0] sm:$0xff]
        %v2684 = vld [vmem:[%s2646 + $0x1e8] sm:$0xff]
        %v2685 = vld [vmem:[%s2646 + $0x1f8] sm:$0xff]
        %v2686 = vld [vmem:[%s2646 + $0x200] sm:$0xff]
        %v2687 = vld [vmem:[%s2646 + $0x210] sm:$0xff]
        %v2688 = vld [vmem:[%s2646 + $0x218] sm:$0xff]
        %v2689 = vld [vmem:[%s2646 + $0x228] sm:$0xff]
        %v2690 = vld [vmem:[%s2646 + $0x230] sm:$0xff]
        %v2691 = vld [vmem:[%s2646 + $0x240] sm:$0xff]
        %v2692 = vld [vmem:[%s2646 + $0x248] sm:$0xff]
        %v2693 = vld [vmem:[%s2646 + $0x258] sm:$0xff]
        %v2694 = vld [vmem:[%s2646 + $0x260] sm:$0xff]
        %v2695 = vld [vmem:[%s2646 + $0x270] sm:$0xff]
        %v2696 = vld [vmem:[%s2646 + $0x278] sm:$0xff]
        %v2697 = vld [vmem:[%s2646 + $0x288] sm:$0xff]
        %v2698 = vld [vmem:[%s2646 + $0x290] sm:$0xff]
        %v2699 = vld [vmem:[%s2646 + $0x2a0] sm:$0xff]
        %v2700 = vld [vmem:[%s2646 + $0x2a8] sm:$0xff]
        %v2701 = vld [vmem:[%s2646 + $0x2b8] sm:$0xff]
        %v2702 = vld [vmem:[%s2646 + $0x2c0] sm:$0xff]
        %v2703 = vld [vmem:[%s2646 + $0x2d0] sm:$0xff]
        %v2704 = vld [vmem:[%s2646 + $0x2d8] sm:$0xff]
        %v2705 = vld [vmem:[%s2646 + $0x2e8] sm:$0xff]
        %v2706 = vld [vmem:[%s2646 + $0x2f0] sm:$0xff]
        %v2707 = vld [vmem:[%s2646 + $0x300] sm:$0xff]
        %v2708 = vld [vmem:[%s2646 + $0x308] sm:$0xff]
        %v2709 = vld [vmem:[%s2646 + $0x318] sm:$0xff]
        %v2710 = vld [vmem:[%s2646 + $0x320] sm:$0xff]
        %v2711 = vpack.c.bf16 %v2647, %v2647
        %v2712 = vpack.c.bf16 %v2648, %v2648
        %v2713 = vpack.c.bf16 %v2649, %v2649
        %v2714 = vpack.c.bf16 %v2650, %v2650
        %v2715 = vpack.c.bf16 %v2651, %v2651
        %v2716 = vpack.c.bf16 %v2652, %v2652
        %v2717 = vpack.c.bf16 %v2653, %v2653
        %v2718 = vpack.c.bf16 %v2654, %v2654
        %v2719 = vpack.c.bf16 %v2655, %v2655
        %v2720 = vpack.c.bf16 %v2656, %v2656
        %v2721 = vpack.c.bf16 %v2657, %v2657
        %v2722 = vpack.c.bf16 %v2658, %v2658
        %v2723 = vpack.c.bf16 %v2659, %v2659
        %v2724 = vpack.c.bf16 %v2660, %v2660
        %v2725 = vpack.c.bf16 %v2661, %v2661
        %v2726 = vpack.c.bf16 %v2662, %v2662
        %v2727 = vpack.c.bf16 %v2663, %v2663
        %v2728 = vpack.c.bf16 %v2664, %v2664
        %v2729 = vpack.c.bf16 %v2665, %v2665
        %v2730 = vpack.c.bf16 %v2666, %v2666
        %v2731 = vpack.c.bf16 %v2667, %v2667
        %v2732 = vpack.c.bf16 %v2668, %v2668
        %v2733 = vpack.c.bf16 %v2669, %v2669
        %v2734 = vpack.c.bf16 %v2670, %v2670
        %v2735 = vpack.c.bf16 %v2671, %v2671
        %v2736 = vpack.c.bf16 %v2672, %v2672
        %v2737 = vpack.c.bf16 %v2673, %v2673
        %v2738 = vpack.c.bf16 %v2674, %v2674
        %v2739 = vpack.c.bf16 %v2675, %v2675
        %v2740 = vpack.c.bf16 %v2676, %v2676
        %v2741 = vpack.c.bf16 %v2677, %v2677
        %v2742 = vpack.c.bf16 %v2678, %v2678
        %v2743 = vpack.c.bf16 %v2679, %v2679
        %v2744 = vpack.c.bf16 %v2680, %v2680
        %v2745 = vpack.c.bf16 %v2681, %v2681
        %v2746 = vpack.c.bf16 %v2682, %v2682
        %v2747 = vpack.c.bf16 %v2683, %v2683
        %v2748 = vpack.c.bf16 %v2684, %v2684
        %v2749 = vpack.c.bf16 %v2685, %v2685
        %v2750 = vpack.c.bf16 %v2686, %v2686
        %v2751 = vpack.c.bf16 %v2687, %v2687
        %v2752 = vpack.c.bf16 %v2688, %v2688
        %v2753 = vpack.c.bf16 %v2689, %v2689
        %v2754 = vpack.c.bf16 %v2690, %v2690
        %v2755 = vpack.c.bf16 %v2691, %v2691
        %v2756 = vpack.c.bf16 %v2692, %v2692
        %v2757 = vpack.c.bf16 %v2693, %v2693
        %v2758 = vpack.c.bf16 %v2694, %v2694
        %v2759 = vpack.c.bf16 %v2695, %v2695
        %v2760 = vpack.c.bf16 %v2696, %v2696
        %v2761 = vpack.c.bf16 %v2697, %v2697
        %v2762 = vpack.c.bf16 %v2698, %v2698
        %v2763 = vpack.c.bf16 %v2699, %v2699
        %v2764 = vpack.c.bf16 %v2700, %v2700
        %v2765 = vpack.c.bf16 %v2701, %v2701
        %v2766 = vpack.c.bf16 %v2702, %v2702
        %v2767 = vpack.c.bf16 %v2703, %v2703
        %v2768 = vpack.c.bf16 %v2704, %v2704
        %v2769 = vpack.c.bf16 %v2705, %v2705
        %v2770 = vpack.c.bf16 %v2706, %v2706
        %v2771 = vpack.c.bf16 %v2707, %v2707
        %v2772 = vpack.c.bf16 %v2708, %v2708
        %v2773 = vpack.c.bf16 %v2709, %v2709
        %v2774 = vpack.c.bf16 %v2710, %v2710
        %2839 = vrot.lane.b32.xlu0 %v2711, 64
        %v2840 = vpop.permute.xlu0 %2839
        %2841 = vrot.lane.b32.xlu0 %v2712, 64
        %v2842 = vpop.permute.xlu0 %2841
        %2843 = vrot.lane.b32.xlu0 %v2713, 64
        %v2844 = vpop.permute.xlu0 %2843
        %2845 = vrot.lane.b32.xlu0 %v2714, 64
        %v2846 = vpop.permute.xlu0 %2845
        %2847 = vrot.lane.b32.xlu0 %v2715, 64
        %v2848 = vpop.permute.xlu0 %2847
        %2849 = vrot.lane.b32.xlu0 %v2716, 64
        %v2850 = vpop.permute.xlu0 %2849
        %2851 = vrot.lane.b32.xlu0 %v2717, 64
        %v2852 = vpop.permute.xlu0 %2851
        %2853 = vrot.lane.b32.xlu0 %v2718, 64
        %v2854 = vpop.permute.xlu0 %2853
        %2855 = vrot.lane.b32.xlu0 %v2719, 64
        %v2856 = vpop.permute.xlu0 %2855
        %2857 = vrot.lane.b32.xlu0 %v2720, 64
        %v2858 = vpop.permute.xlu0 %2857
        %2859 = vrot.lane.b32.xlu0 %v2721, 64
        %v2860 = vpop.permute.xlu0 %2859
        %2861 = vrot.lane.b32.xlu0 %v2722, 64
        %v2862 = vpop.permute.xlu0 %2861
        %2863 = vrot.lane.b32.xlu0 %v2723, 64
        %v2864 = vpop.permute.xlu0 %2863
        %2865 = vrot.lane.b32.xlu0 %v2724, 64
        %v2866 = vpop.permute.xlu0 %2865
        %2867 = vrot.lane.b32.xlu0 %v2725, 64
        %v2868 = vpop.permute.xlu0 %2867
        %2869 = vrot.lane.b32.xlu0 %v2726, 64
        %v2870 = vpop.permute.xlu0 %2869
        %2871 = vrot.lane.b32.xlu0 %v2727, 64
        %v2872 = vpop.permute.xlu0 %2871
        %2873 = vrot.lane.b32.xlu0 %v2728, 64
        %v2874 = vpop.permute.xlu0 %2873
        %2875 = vrot.lane.b32.xlu0 %v2729, 64
        %v2876 = vpop.permute.xlu0 %2875
        %2877 = vrot.lane.b32.xlu0 %v2730, 64
        %v2878 = vpop.permute.xlu0 %2877
        %2879 = vrot.lane.b32.xlu0 %v2731, 64
        %v2880 = vpop.permute.xlu0 %2879
        %2881 = vrot.lane.b32.xlu0 %v2732, 64
        %v2882 = vpop.permute.xlu0 %2881
        %2883 = vrot.lane.b32.xlu0 %v2733, 64
        %v2884 = vpop.permute.xlu0 %2883
        %2885 = vrot.lane.b32.xlu0 %v2734, 64
        %v2886 = vpop.permute.xlu0 %2885
        %2887 = vrot.lane.b32.xlu0 %v2735, 64
        %v2888 = vpop.permute.xlu0 %2887
        %2889 = vrot.lane.b32.xlu0 %v2736, 64
        %v2890 = vpop.permute.xlu0 %2889
        %2891 = vrot.lane.b32.xlu0 %v2737, 64
        %v2892 = vpop.permute.xlu0 %2891
        %2893 = vrot.lane.b32.xlu0 %v2738, 64
        %v2894 = vpop.permute.xlu0 %2893
        %2895 = vrot.lane.b32.xlu0 %v2739, 64
        %v2896 = vpop.permute.xlu0 %2895
        %2897 = vrot.lane.b32.xlu0 %v2740, 64
        %v2898 = vpop.permute.xlu0 %2897
        %2899 = vrot.lane.b32.xlu0 %v2741, 64
        %v2900 = vpop.permute.xlu0 %2899
        %2901 = vrot.lane.b32.xlu0 %v2742, 64
        %v2902 = vpop.permute.xlu0 %2901
        %2903 = vrot.lane.b32.xlu0 %v2743, 64
        %v2904 = vpop.permute.xlu0 %2903
        %2905 = vrot.lane.b32.xlu0 %v2744, 64
        %v2906 = vpop.permute.xlu0 %2905
        %2907 = vrot.lane.b32.xlu0 %v2745, 64
        %v2908 = vpop.permute.xlu0 %2907
        %2909 = vrot.lane.b32.xlu0 %v2746, 64
        %v2910 = vpop.permute.xlu0 %2909
        %2911 = vrot.lane.b32.xlu0 %v2747, 64
        %v2912 = vpop.permute.xlu0 %2911
        %2913 = vrot.lane.b32.xlu0 %v2748, 64
        %v2914 = vpop.permute.xlu0 %2913
        %2915 = vrot.lane.b32.xlu0 %v2749, 64
        %v2916 = vpop.permute.xlu0 %2915
        %2917 = vrot.lane.b32.xlu0 %v2750, 64
        %v2918 = vpop.permute.xlu0 %2917
        %2919 = vrot.lane.b32.xlu0 %v2751, 64
        %v2920 = vpop.permute.xlu0 %2919
        %2921 = vrot.lane.b32.xlu0 %v2752, 64
        %v2922 = vpop.permute.xlu0 %2921
        %2923 = vrot.lane.b32.xlu0 %v2753, 64
        %v2924 = vpop.permute.xlu0 %2923
        %2925 = vrot.lane.b32.xlu0 %v2754, 64
        %v2926 = vpop.permute.xlu0 %2925
        %2927 = vrot.lane.b32.xlu0 %v2755, 64
        %v2928 = vpop.permute.xlu0 %2927
        %2929 = vrot.lane.b32.xlu0 %v2756, 64
        %v2930 = vpop.permute.xlu0 %2929
        %2931 = vrot.lane.b32.xlu0 %v2757, 64
        %v2932 = vpop.permute.xlu0 %2931
        %2933 = vrot.lane.b32.xlu0 %v2758, 64
        %v2934 = vpop.permute.xlu0 %2933
        %2935 = vrot.lane.b32.xlu0 %v2759, 64
        %v2936 = vpop.permute.xlu0 %2935
        %2937 = vrot.lane.b32.xlu0 %v2760, 64
        %v2938 = vpop.permute.xlu0 %2937
        %2939 = vrot.lane.b32.xlu0 %v2761, 64
        %v2940 = vpop.permute.xlu0 %2939
        %2941 = vrot.lane.b32.xlu0 %v2762, 64
        %v2942 = vpop.permute.xlu0 %2941
        %2943 = vrot.lane.b32.xlu0 %v2763, 64
        %v2944 = vpop.permute.xlu0 %2943
        %2945 = vrot.lane.b32.xlu0 %v2764, 64
        %v2946 = vpop.permute.xlu0 %2945
        %2947 = vrot.lane.b32.xlu0 %v2765, 64
        %v2948 = vpop.permute.xlu0 %2947
        %2949 = vrot.lane.b32.xlu0 %v2766, 64
        %v2950 = vpop.permute.xlu0 %2949
        %2951 = vrot.lane.b32.xlu0 %v2767, 64
        %v2952 = vpop.permute.xlu0 %2951
        %2953 = vrot.lane.b32.xlu0 %v2768, 64
        %v2954 = vpop.permute.xlu0 %2953
        %2955 = vrot.lane.b32.xlu0 %v2769, 64
        %v2956 = vpop.permute.xlu0 %2955
        %2957 = vrot.lane.b32.xlu0 %v2770, 64
        %v2958 = vpop.permute.xlu0 %2957
        %2959 = vrot.lane.b32.xlu0 %v2771, 64
        %v2960 = vpop.permute.xlu0 %2959
        %2961 = vrot.lane.b32.xlu0 %v2772, 64
        %v2962 = vpop.permute.xlu0 %2961
        %2963 = vrot.lane.b32.xlu0 %v2773, 64
        %v2964 = vpop.permute.xlu0 %2963
        %2965 = vrot.lane.b32.xlu0 %v2774, 64
        %v2966 = vpop.permute.xlu0 %2965
        %3031 = vst.msk [vmem:[#allocation3 + $0x4] sm:$0xf] %vm1492, %v2840
        %3032 = vst.msk [vmem:[#allocation3 + $0x10] sm:$0xf] %vm1492, %v2842
        %3033 = vst.msk [vmem:[#allocation3 + $0x1c] sm:$0xf] %vm1492, %v2844
        %3034 = vst.msk [vmem:[#allocation3 + $0x28] sm:$0xf] %vm1492, %v2846
        %3035 = vst.msk [vmem:[#allocation3 + $0x34] sm:$0xf] %vm1492, %v2848
        %3036 = vst.msk [vmem:[#allocation3 + $0x40] sm:$0xf] %vm1492, %v2850
        %3037 = vst.msk [vmem:[#allocation3 + $0x4c] sm:$0xf] %vm1492, %v2852
        %3038 = vst.msk [vmem:[#allocation3 + $0x58] sm:$0xf] %vm1492, %v2854
        %3039 = vst.msk [vmem:[#allocation3 + $0x64] sm:$0xf] %vm1492, %v2856
        %3040 = vst.msk [vmem:[#allocation3 + $0x70] sm:$0xf] %vm1492, %v2858
        %3041 = vst.msk [vmem:[#allocation3 + $0x7c] sm:$0xf] %vm1492, %v2860
        %3042 = vst.msk [vmem:[#allocation3 + $0x88] sm:$0xf] %vm1492, %v2862
        %3043 = vst.msk [vmem:[#allocation3 + $0x94] sm:$0xf] %vm1492, %v2864
        %3044 = vst.msk [vmem:[#allocation3 + $0xa0] sm:$0xf] %vm1492, %v2866
        %3045 = vst.msk [vmem:[#allocation3 + $0xac] sm:$0xf] %vm1492, %v2868
        %3046 = vst.msk [vmem:[#allocation3 + $0xb8] sm:$0xf] %vm1492, %v2870
        %3047 = vst.msk [vmem:[#allocation3 + $0xc4] sm:$0xf] %vm1492, %v2872
        %3048 = vst.msk [vmem:[#allocation3 + $0xd0] sm:$0xf] %vm1492, %v2874
        %3049 = vst.msk [vmem:[#allocation3 + $0xdc] sm:$0xf] %vm1492, %v2876
        %3050 = vst.msk [vmem:[#allocation3 + $0xe8] sm:$0xf] %vm1492, %v2878
        %3051 = vst.msk [vmem:[#allocation3 + $0xf4] sm:$0xf] %vm1492, %v2880
        %3052 = vst.msk [vmem:[#allocation3 + $0x100] sm:$0xf] %vm1492, %v2882
        %3053 = vst.msk [vmem:[#allocation3 + $0x10c] sm:$0xf] %vm1492, %v2884
        %3054 = vst.msk [vmem:[#allocation3 + $0x118] sm:$0xf] %vm1492, %v2886
        %3055 = vst.msk [vmem:[#allocation3 + $0x124] sm:$0xf] %vm1492, %v2888
        %3056 = vst.msk [vmem:[#allocation3 + $0x130] sm:$0xf] %vm1492, %v2890
        %3057 = vst.msk [vmem:[#allocation3 + $0x13c] sm:$0xf] %vm1492, %v2892
        %3058 = vst.msk [vmem:[#allocation3 + $0x148] sm:$0xf] %vm1492, %v2894
        %3059 = vst.msk [vmem:[#allocation3 + $0x154] sm:$0xf] %vm1492, %v2896
        %3060 = vst.msk [vmem:[#allocation3 + $0x160] sm:$0xf] %vm1492, %v2898
        %3061 = vst.msk [vmem:[#allocation3 + $0x16c] sm:$0xf] %vm1492, %v2900
        %3062 = vst.msk [vmem:[#allocation3 + $0x178] sm:$0xf] %vm1492, %v2902
        %3063 = vst.msk [vmem:[#allocation3 + $0x184] sm:$0xf] %vm1492, %v2904
        %3064 = vst.msk [vmem:[#allocation3 + $0x190] sm:$0xf] %vm1492, %v2906
        %3065 = vst.msk [vmem:[#allocation3 + $0x19c] sm:$0xf] %vm1492, %v2908
        %3066 = vst.msk [vmem:[#allocation3 + $0x1a8] sm:$0xf] %vm1492, %v2910
        %3067 = vst.msk [vmem:[#allocation3 + $0x1b4] sm:$0xf] %vm1492, %v2912
        %3068 = vst.msk [vmem:[#allocation3 + $0x1c0] sm:$0xf] %vm1492, %v2914
        %3069 = vst.msk [vmem:[#allocation3 + $0x1cc] sm:$0xf] %vm1492, %v2916
        %3070 = vst.msk [vmem:[#allocation3 + $0x1d8] sm:$0xf] %vm1492, %v2918
        %3071 = vst.msk [vmem:[#allocation3 + $0x1e4] sm:$0xf] %vm1492, %v2920
        %3072 = vst.msk [vmem:[#allocation3 + $0x1f0] sm:$0xf] %vm1492, %v2922
        %3073 = vst.msk [vmem:[#allocation3 + $0x1fc] sm:$0xf] %vm1492, %v2924
        %3074 = vst.msk [vmem:[#allocation3 + $0x208] sm:$0xf] %vm1492, %v2926
        %3075 = vst.msk [vmem:[#allocation3 + $0x214] sm:$0xf] %vm1492, %v2928
        %3076 = vst.msk [vmem:[#allocation3 + $0x220] sm:$0xf] %vm1492, %v2930
        %3077 = vst.msk [vmem:[#allocation3 + $0x22c] sm:$0xf] %vm1492, %v2932
        %3078 = vst.msk [vmem:[#allocation3 + $0x238] sm:$0xf] %vm1492, %v2934
        %3079 = vst.msk [vmem:[#allocation3 + $0x244] sm:$0xf] %vm1492, %v2936
        %3080 = vst.msk [vmem:[#allocation3 + $0x250] sm:$0xf] %vm1492, %v2938
        %3081 = vst.msk [vmem:[#allocation3 + $0x25c] sm:$0xf] %vm1492, %v2940
        %3082 = vst.msk [vmem:[#allocation3 + $0x268] sm:$0xf] %vm1492, %v2942
        %3083 = vst.msk [vmem:[#allocation3 + $0x274] sm:$0xf] %vm1492, %v2944
        %3084 = vst.msk [vmem:[#allocation3 + $0x280] sm:$0xf] %vm1492, %v2946
        %3085 = vst.msk [vmem:[#allocation3 + $0x28c] sm:$0xf] %vm1492, %v2948
        %3086 = vst.msk [vmem:[#allocation3 + $0x298] sm:$0xf] %vm1492, %v2950
        %3087 = vst.msk [vmem:[#allocation3 + $0x2a4] sm:$0xf] %vm1492, %v2952
        %3088 = vst.msk [vmem:[#allocation3 + $0x2b0] sm:$0xf] %vm1492, %v2954
        %3089 = vst.msk [vmem:[#allocation3 + $0x2bc] sm:$0xf] %vm1492, %v2956
        %3090 = vst.msk [vmem:[#allocation3 + $0x2c8] sm:$0xf] %vm1492, %v2958
        %3091 = vst.msk [vmem:[#allocation3 + $0x2d4] sm:$0xf] %vm1492, %v2960
        %3092 = vst.msk [vmem:[#allocation3 + $0x2e0] sm:$0xf] %vm1492, %v2962
        %3093 = vst.msk [vmem:[#allocation3 + $0x2ec] sm:$0xf] %vm1492, %v2964
        %3094 = vst.msk [vmem:[#allocation3 + $0x2f8] sm:$0xf] %vm1492, %v2966
        %v3095 = vld [vmem:[%s2646 + $0x1] sm:$0xff]
        %v3096 = vld [vmem:[%s2646 + $0x9] sm:$0xff]
        %v3097 = vld [vmem:[%s2646 + $0x19] sm:$0xff]
        %v3098 = vld [vmem:[%s2646 + $0x21] sm:$0xff]
        %v3099 = vld [vmem:[%s2646 + $0x31] sm:$0xff]
        %v3100 = vld [vmem:[%s2646 + $0x39] sm:$0xff]
        %v3101 = vld [vmem:[%s2646 + $0x49] sm:$0xff]
        %v3102 = vld [vmem:[%s2646 + $0x51] sm:$0xff]
        %v3103 = vld [vmem:[%s2646 + $0x61] sm:$0xff]
        %v3104 = vld [vmem:[%s2646 + $0x69] sm:$0xff]
        %v3105 = vld [vmem:[%s2646 + $0x79] sm:$0xff]
        %v3106 = vld [vmem:[%s2646 + $0x81] sm:$0xff]
        %v3107 = vld [vmem:[%s2646 + $0x91] sm:$0xff]
        %v3108 = vld [vmem:[%s2646 + $0x99] sm:$0xff]
        %v3109 = vld [vmem:[%s2646 + $0xa9] sm:$0xff]
        %v3110 = vld [vmem:[%s2646 + $0xb1] sm:$0xff]
        %v3111 = vld [vmem:[%s2646 + $0xc1] sm:$0xff]
        %v3112 = vld [vmem:[%s2646 + $0xc9] sm:$0xff]
        %v3113 = vld [vmem:[%s2646 + $0xd9] sm:$0xff]
        %v3114 = vld [vmem:[%s2646 + $0xe1] sm:$0xff]
        %v3115 = vld [vmem:[%s2646 + $0xf1] sm:$0xff]
        %v3116 = vld [vmem:[%s2646 + $0xf9] sm:$0xff]
        %v3117 = vld [vmem:[%s2646 + $0x109] sm:$0xff]
        %v3118 = vld [vmem:[%s2646 + $0x111] sm:$0xff]
        %v3119 = vld [vmem:[%s2646 + $0x121] sm:$0xff]
        %v3120 = vld [vmem:[%s2646 + $0x129] sm:$0xff]
        %v3121 = vld [vmem:[%s2646 + $0x139] sm:$0xff]
        %v3122 = vld [vmem:[%s2646 + $0x141] sm:$0xff]
        %v3123 = vld [vmem:[%s2646 + $0x151] sm:$0xff]
        %v3124 = vld [vmem:[%s2646 + $0x159] sm:$0xff]
        %v3125 = vld [vmem:[%s2646 + $0x169] sm:$0xff]
        %v3126 = vld [vmem:[%s2646 + $0x171] sm:$0xff]
        %v3127 = vld [vmem:[%s2646 + $0x1b1] sm:$0xff]
        %v3128 = vld [vmem:[%s2646 + $0x1b9] sm:$0xff]
        %v3129 = vld [vmem:[%s2646 + $0x1c9] sm:$0xff]
        %v3130 = vld [vmem:[%s2646 + $0x1d1] sm:$0xff]
        %v3131 = vld [vmem:[%s2646 + $0x1e1] sm:$0xff]
        %v3132 = vld [vmem:[%s2646 + $0x1e9] sm:$0xff]
        %v3133 = vld [vmem:[%s2646 + $0x1f9] sm:$0xff]
        %v3134 = vld [vmem:[%s2646 + $0x201] sm:$0xff]
        %v3135 = vld [vmem:[%s2646 + $0x211] sm:$0xff]
        %v3136 = vld [vmem:[%s2646 + $0x219] sm:$0xff]
        %v3137 = vld [vmem:[%s2646 + $0x229] sm:$0xff]
        %v3138 = vld [vmem:[%s2646 + $0x231] sm:$0xff]
        %v3139 = vld [vmem:[%s2646 + $0x241] sm:$0xff]
        %v3140 = vld [vmem:[%s2646 + $0x249] sm:$0xff]
        %v3141 = vld [vmem:[%s2646 + $0x259] sm:$0xff]
        %v3142 = vld [vmem:[%s2646 + $0x261] sm:$0xff]
        %v3143 = vld [vmem:[%s2646 + $0x271] sm:$0xff]
        %v3144 = vld [vmem:[%s2646 + $0x279] sm:$0xff]
        %v3145 = vld [vmem:[%s2646 + $0x289] sm:$0xff]
        %v3146 = vld [vmem:[%s2646 + $0x291] sm:$0xff]
        %v3147 = vld [vmem:[%s2646 + $0x2a1] sm:$0xff]
        %v3148 = vld [vmem:[%s2646 + $0x2a9] sm:$0xff]
        %v3149 = vld [vmem:[%s2646 + $0x2b9] sm:$0xff]
        %v3150 = vld [vmem:[%s2646 + $0x2c1] sm:$0xff]
        %v3151 = vld [vmem:[%s2646 + $0x2d1] sm:$0xff]
        %v3152 = vld [vmem:[%s2646 + $0x2d9] sm:$0xff]
        %v3153 = vld [vmem:[%s2646 + $0x2e9] sm:$0xff]
        %v3154 = vld [vmem:[%s2646 + $0x2f1] sm:$0xff]
        %v3155 = vld [vmem:[%s2646 + $0x301] sm:$0xff]
        %v3156 = vld [vmem:[%s2646 + $0x309] sm:$0xff]
        %v3157 = vld [vmem:[%s2646 + $0x319] sm:$0xff]
        %v3158 = vld [vmem:[%s2646 + $0x321] sm:$0xff]
        %v3159 = vpack.c.bf16 %v3095, %v3095
        %v3160 = vpack.c.bf16 %v3096, %v3096
        %v3161 = vpack.c.bf16 %v3097, %v3097
        %v3162 = vpack.c.bf16 %v3098, %v3098
        %v3163 = vpack.c.bf16 %v3099, %v3099
        %v3164 = vpack.c.bf16 %v3100, %v3100
        %v3165 = vpack.c.bf16 %v3101, %v3101
        %v3166 = vpack.c.bf16 %v3102, %v3102
        %v3167 = vpack.c.bf16 %v3103, %v3103
        %v3168 = vpack.c.bf16 %v3104, %v3104
        %v3169 = vpack.c.bf16 %v3105, %v3105
        %v3170 = vpack.c.bf16 %v3106, %v3106
        %v3171 = vpack.c.bf16 %v3107, %v3107
        %v3172 = vpack.c.bf16 %v3108, %v3108
        %v3173 = vpack.c.bf16 %v3109, %v3109
        %v3174 = vpack.c.bf16 %v3110, %v3110
        %v3175 = vpack.c.bf16 %v3111, %v3111
        %v3176 = vpack.c.bf16 %v3112, %v3112
        %v3177 = vpack.c.bf16 %v3113, %v3113
        %v3178 = vpack.c.bf16 %v3114, %v3114
        %v3179 = vpack.c.bf16 %v3115, %v3115
        %v3180 = vpack.c.bf16 %v3116, %v3116
        %v3181 = vpack.c.bf16 %v3117, %v3117
        %v3182 = vpack.c.bf16 %v3118, %v3118
        %v3183 = vpack.c.bf16 %v3119, %v3119
        %v3184 = vpack.c.bf16 %v3120, %v3120
        %v3185 = vpack.c.bf16 %v3121, %v3121
        %v3186 = vpack.c.bf16 %v3122, %v3122
        %v3187 = vpack.c.bf16 %v3123, %v3123
        %v3188 = vpack.c.bf16 %v3124, %v3124
        %v3189 = vpack.c.bf16 %v3125, %v3125
        %v3190 = vpack.c.bf16 %v3126, %v3126
        %v3191 = vpack.c.bf16 %v3127, %v3127
        %v3192 = vpack.c.bf16 %v3128, %v3128
        %v3193 = vpack.c.bf16 %v3129, %v3129
        %v3194 = vpack.c.bf16 %v3130, %v3130
        %v3195 = vpack.c.bf16 %v3131, %v3131
        %v3196 = vpack.c.bf16 %v3132, %v3132
        %v3197 = vpack.c.bf16 %v3133, %v3133
        %v3198 = vpack.c.bf16 %v3134, %v3134
        %v3199 = vpack.c.bf16 %v3135, %v3135
        %v3200 = vpack.c.bf16 %v3136, %v3136
        %v3201 = vpack.c.bf16 %v3137, %v3137
        %v3202 = vpack.c.bf16 %v3138, %v3138
        %v3203 = vpack.c.bf16 %v3139, %v3139
        %v3204 = vpack.c.bf16 %v3140, %v3140
        %v3205 = vpack.c.bf16 %v3141, %v3141
        %v3206 = vpack.c.bf16 %v3142, %v3142
        %v3207 = vpack.c.bf16 %v3143, %v3143
        %v3208 = vpack.c.bf16 %v3144, %v3144
        %v3209 = vpack.c.bf16 %v3145, %v3145
        %v3210 = vpack.c.bf16 %v3146, %v3146
        %v3211 = vpack.c.bf16 %v3147, %v3147
        %v3212 = vpack.c.bf16 %v3148, %v3148
        %v3213 = vpack.c.bf16 %v3149, %v3149
        %v3214 = vpack.c.bf16 %v3150, %v3150
        %v3215 = vpack.c.bf16 %v3151, %v3151
        %v3216 = vpack.c.bf16 %v3152, %v3152
        %v3217 = vpack.c.bf16 %v3153, %v3153
        %v3218 = vpack.c.bf16 %v3154, %v3154
        %v3219 = vpack.c.bf16 %v3155, %v3155
        %v3220 = vpack.c.bf16 %v3156, %v3156
        %v3221 = vpack.c.bf16 %v3157, %v3157
        %v3222 = vpack.c.bf16 %v3158, %v3158
        %3287 = vrot.lane.b32.xlu0 %v3159, 96
        %v3288 = vpop.permute.xlu0 %3287
        %3289 = vrot.lane.b32.xlu0 %v3160, 96
        %v3290 = vpop.permute.xlu0 %3289
        %3291 = vrot.lane.b32.xlu0 %v3161, 96
        %v3292 = vpop.permute.xlu0 %3291
        %3293 = vrot.lane.b32.xlu0 %v3162, 96
        %v3294 = vpop.permute.xlu0 %3293
        %3295 = vrot.lane.b32.xlu0 %v3163, 96
        %v3296 = vpop.permute.xlu0 %3295
        %3297 = vrot.lane.b32.xlu0 %v3164, 96
        %v3298 = vpop.permute.xlu0 %3297
        %3299 = vrot.lane.b32.xlu0 %v3165, 96
        %v3300 = vpop.permute.xlu0 %3299
        %3301 = vrot.lane.b32.xlu0 %v3166, 96
        %v3302 = vpop.permute.xlu0 %3301
        %3303 = vrot.lane.b32.xlu0 %v3167, 96
        %v3304 = vpop.permute.xlu0 %3303
        %3305 = vrot.lane.b32.xlu0 %v3168, 96
        %v3306 = vpop.permute.xlu0 %3305
        %3307 = vrot.lane.b32.xlu0 %v3169, 96
        %v3308 = vpop.permute.xlu0 %3307
        %3309 = vrot.lane.b32.xlu0 %v3170, 96
        %v3310 = vpop.permute.xlu0 %3309
        %3311 = vrot.lane.b32.xlu0 %v3171, 96
        %v3312 = vpop.permute.xlu0 %3311
        %3313 = vrot.lane.b32.xlu0 %v3172, 96
        %v3314 = vpop.permute.xlu0 %3313
        %3315 = vrot.lane.b32.xlu0 %v3173, 96
        %v3316 = vpop.permute.xlu0 %3315
        %3317 = vrot.lane.b32.xlu0 %v3174, 96
        %v3318 = vpop.permute.xlu0 %3317
        %3319 = vrot.lane.b32.xlu0 %v3175, 96
        %v3320 = vpop.permute.xlu0 %3319
        %3321 = vrot.lane.b32.xlu0 %v3176, 96
        %v3322 = vpop.permute.xlu0 %3321
        %3323 = vrot.lane.b32.xlu0 %v3177, 96
        %v3324 = vpop.permute.xlu0 %3323
        %3325 = vrot.lane.b32.xlu0 %v3178, 96
        %v3326 = vpop.permute.xlu0 %3325
        %3327 = vrot.lane.b32.xlu0 %v3179, 96
        %v3328 = vpop.permute.xlu0 %3327
        %3329 = vrot.lane.b32.xlu0 %v3180, 96
        %v3330 = vpop.permute.xlu0 %3329
        %3331 = vrot.lane.b32.xlu0 %v3181, 96
        %v3332 = vpop.permute.xlu0 %3331
        %3333 = vrot.lane.b32.xlu0 %v3182, 96
        %v3334 = vpop.permute.xlu0 %3333
        %3335 = vrot.lane.b32.xlu0 %v3183, 96
        %v3336 = vpop.permute.xlu0 %3335
        %3337 = vrot.lane.b32.xlu0 %v3184, 96
        %v3338 = vpop.permute.xlu0 %3337
        %3339 = vrot.lane.b32.xlu0 %v3185, 96
        %v3340 = vpop.permute.xlu0 %3339
        %3341 = vrot.lane.b32.xlu0 %v3186, 96
        %v3342 = vpop.permute.xlu0 %3341
        %3343 = vrot.lane.b32.xlu0 %v3187, 96
        %v3344 = vpop.permute.xlu0 %3343
        %3345 = vrot.lane.b32.xlu0 %v3188, 96
        %v3346 = vpop.permute.xlu0 %3345
        %3347 = vrot.lane.b32.xlu0 %v3189, 96
        %v3348 = vpop.permute.xlu0 %3347
        %3349 = vrot.lane.b32.xlu0 %v3190, 96
        %v3350 = vpop.permute.xlu0 %3349
        %3351 = vrot.lane.b32.xlu0 %v3191, 96
        %v3352 = vpop.permute.xlu0 %3351
        %3353 = vrot.lane.b32.xlu0 %v3192, 96
        %v3354 = vpop.permute.xlu0 %3353
        %3355 = vrot.lane.b32.xlu0 %v3193, 96
        %v3356 = vpop.permute.xlu0 %3355
        %3357 = vrot.lane.b32.xlu0 %v3194, 96
        %v3358 = vpop.permute.xlu0 %3357
        %3359 = vrot.lane.b32.xlu0 %v3195, 96
        %v3360 = vpop.permute.xlu0 %3359
        %3361 = vrot.lane.b32.xlu0 %v3196, 96
        %v3362 = vpop.permute.xlu0 %3361
        %3363 = vrot.lane.b32.xlu0 %v3197, 96
        %v3364 = vpop.permute.xlu0 %3363
        %3365 = vrot.lane.b32.xlu0 %v3198, 96
        %v3366 = vpop.permute.xlu0 %3365
        %3367 = vrot.lane.b32.xlu0 %v3199, 96
        %v3368 = vpop.permute.xlu0 %3367
        %3369 = vrot.lane.b32.xlu0 %v3200, 96
        %v3370 = vpop.permute.xlu0 %3369
        %3371 = vrot.lane.b32.xlu0 %v3201, 96
        %v3372 = vpop.permute.xlu0 %3371
        %3373 = vrot.lane.b32.xlu0 %v3202, 96
        %v3374 = vpop.permute.xlu0 %3373
        %3375 = vrot.lane.b32.xlu0 %v3203, 96
        %v3376 = vpop.permute.xlu0 %3375
        %3377 = vrot.lane.b32.xlu0 %v3204, 96
        %v3378 = vpop.permute.xlu0 %3377
        %3379 = vrot.lane.b32.xlu0 %v3205, 96
        %v3380 = vpop.permute.xlu0 %3379
        %3381 = vrot.lane.b32.xlu0 %v3206, 96
        %v3382 = vpop.permute.xlu0 %3381
        %3383 = vrot.lane.b32.xlu0 %v3207, 96
        %v3384 = vpop.permute.xlu0 %3383
        %3385 = vrot.lane.b32.xlu0 %v3208, 96
        %v3386 = vpop.permute.xlu0 %3385
        %3387 = vrot.lane.b32.xlu0 %v3209, 96
        %v3388 = vpop.permute.xlu0 %3387
        %3389 = vrot.lane.b32.xlu0 %v3210, 96
        %v3390 = vpop.permute.xlu0 %3389
        %3391 = vrot.lane.b32.xlu0 %v3211, 96
        %v3392 = vpop.permute.xlu0 %3391
        %3393 = vrot.lane.b32.xlu0 %v3212, 96
        %v3394 = vpop.permute.xlu0 %3393
        %3395 = vrot.lane.b32.xlu0 %v3213, 96
        %v3396 = vpop.permute.xlu0 %3395
        %3397 = vrot.lane.b32.xlu0 %v3214, 96
        %v3398 = vpop.permute.xlu0 %3397
        %3399 = vrot.lane.b32.xlu0 %v3215, 96
        %v3400 = vpop.permute.xlu0 %3399
        %3401 = vrot.lane.b32.xlu0 %v3216, 96
        %v3402 = vpop.permute.xlu0 %3401
        %3403 = vrot.lane.b32.xlu0 %v3217, 96
        %v3404 = vpop.permute.xlu0 %3403
        %3405 = vrot.lane.b32.xlu0 %v3218, 96
        %v3406 = vpop.permute.xlu0 %3405
        %3407 = vrot.lane.b32.xlu0 %v3219, 96
        %v3408 = vpop.permute.xlu0 %3407
        %3409 = vrot.lane.b32.xlu0 %v3220, 96
        %v3410 = vpop.permute.xlu0 %3409
        %3411 = vrot.lane.b32.xlu0 %v3221, 96
        %v3412 = vpop.permute.xlu0 %3411
        %3413 = vrot.lane.b32.xlu0 %v3222, 96
        %v3414 = vpop.permute.xlu0 %3413
        %3479 = vst.msk [vmem:[#allocation3 + $0x4] sm:$0xf] %vm1941, %v3288
        %3480 = vst.msk [vmem:[#allocation3 + $0x10] sm:$0xf] %vm1941, %v3290
        %3481 = vst.msk [vmem:[#allocation3 + $0x1c] sm:$0xf] %vm1941, %v3292
        %3482 = vst.msk [vmem:[#allocation3 + $0x28] sm:$0xf] %vm1941, %v3294
        %3483 = vst.msk [vmem:[#allocation3 + $0x34] sm:$0xf] %vm1941, %v3296
        %3484 = vst.msk [vmem:[#allocation3 + $0x40] sm:$0xf] %vm1941, %v3298
        %3485 = vst.msk [vmem:[#allocation3 + $0x4c] sm:$0xf] %vm1941, %v3300
        %3486 = vst.msk [vmem:[#allocation3 + $0x58] sm:$0xf] %vm1941, %v3302
        %3487 = vst.msk [vmem:[#allocation3 + $0x64] sm:$0xf] %vm1941, %v3304
        %3488 = vst.msk [vmem:[#allocation3 + $0x70] sm:$0xf] %vm1941, %v3306
        %3489 = vst.msk [vmem:[#allocation3 + $0x7c] sm:$0xf] %vm1941, %v3308
        %3490 = vst.msk [vmem:[#allocation3 + $0x88] sm:$0xf] %vm1941, %v3310
        %3491 = vst.msk [vmem:[#allocation3 + $0x94] sm:$0xf] %vm1941, %v3312
        %3492 = vst.msk [vmem:[#allocation3 + $0xa0] sm:$0xf] %vm1941, %v3314
        %3493 = vst.msk [vmem:[#allocation3 + $0xac] sm:$0xf] %vm1941, %v3316
        %3494 = vst.msk [vmem:[#allocation3 + $0xb8] sm:$0xf] %vm1941, %v3318
        %3495 = vst.msk [vmem:[#allocation3 + $0xc4] sm:$0xf] %vm1941, %v3320
        %3496 = vst.msk [vmem:[#allocation3 + $0xd0] sm:$0xf] %vm1941, %v3322
        %3497 = vst.msk [vmem:[#allocation3 + $0xdc] sm:$0xf] %vm1941, %v3324
        %3498 = vst.msk [vmem:[#allocation3 + $0xe8] sm:$0xf] %vm1941, %v3326
        %3499 = vst.msk [vmem:[#allocation3 + $0xf4] sm:$0xf] %vm1941, %v3328
        %3500 = vst.msk [vmem:[#allocation3 + $0x100] sm:$0xf] %vm1941, %v3330
        %3501 = vst.msk [vmem:[#allocation3 + $0x10c] sm:$0xf] %vm1941, %v3332
        %3502 = vst.msk [vmem:[#allocation3 + $0x118] sm:$0xf] %vm1941, %v3334
        %3503 = vst.msk [vmem:[#allocation3 + $0x124] sm:$0xf] %vm1941, %v3336
        %3504 = vst.msk [vmem:[#allocation3 + $0x130] sm:$0xf] %vm1941, %v3338
        %3505 = vst.msk [vmem:[#allocation3 + $0x13c] sm:$0xf] %vm1941, %v3340
        %3506 = vst.msk [vmem:[#allocation3 + $0x148] sm:$0xf] %vm1941, %v3342
        %3507 = vst.msk [vmem:[#allocation3 + $0x154] sm:$0xf] %vm1941, %v3344
        %3508 = vst.msk [vmem:[#allocation3 + $0x160] sm:$0xf] %vm1941, %v3346
        %3509 = vst.msk [vmem:[#allocation3 + $0x16c] sm:$0xf] %vm1941, %v3348
        %3510 = vst.msk [vmem:[#allocation3 + $0x178] sm:$0xf] %vm1941, %v3350
        %3511 = vst.msk [vmem:[#allocation3 + $0x184] sm:$0xf] %vm1941, %v3352
        %3512 = vst.msk [vmem:[#allocation3 + $0x190] sm:$0xf] %vm1941, %v3354
        %3513 = vst.msk [vmem:[#allocation3 + $0x19c] sm:$0xf] %vm1941, %v3356
        %3514 = vst.msk [vmem:[#allocation3 + $0x1a8] sm:$0xf] %vm1941, %v3358
        %3515 = vst.msk [vmem:[#allocation3 + $0x1b4] sm:$0xf] %vm1941, %v3360
        %3516 = vst.msk [vmem:[#allocation3 + $0x1c0] sm:$0xf] %vm1941, %v3362
        %3517 = vst.msk [vmem:[#allocation3 + $0x1cc] sm:$0xf] %vm1941, %v3364
        %3518 = vst.msk [vmem:[#allocation3 + $0x1d8] sm:$0xf] %vm1941, %v3366
        %3519 = vst.msk [vmem:[#allocation3 + $0x1e4] sm:$0xf] %vm1941, %v3368
        %3520 = vst.msk [vmem:[#allocation3 + $0x1f0] sm:$0xf] %vm1941, %v3370
        %3521 = vst.msk [vmem:[#allocation3 + $0x1fc] sm:$0xf] %vm1941, %v3372
        %3522 = vst.msk [vmem:[#allocation3 + $0x208] sm:$0xf] %vm1941, %v3374
        %3523 = vst.msk [vmem:[#allocation3 + $0x214] sm:$0xf] %vm1941, %v3376
        %3524 = vst.msk [vmem:[#allocation3 + $0x220] sm:$0xf] %vm1941, %v3378
        %3525 = vst.msk [vmem:[#allocation3 + $0x22c] sm:$0xf] %vm1941, %v3380
        %3526 = vst.msk [vmem:[#allocation3 + $0x238] sm:$0xf] %vm1941, %v3382
        %3527 = vst.msk [vmem:[#allocation3 + $0x244] sm:$0xf] %vm1941, %v3384
        %3528 = vst.msk [vmem:[#allocation3 + $0x250] sm:$0xf] %vm1941, %v3386
        %3529 = vst.msk [vmem:[#allocation3 + $0x25c] sm:$0xf] %vm1941, %v3388
        %3530 = vst.msk [vmem:[#allocation3 + $0x268] sm:$0xf] %vm1941, %v3390
        %3531 = vst.msk [vmem:[#allocation3 + $0x274] sm:$0xf] %vm1941, %v3392
        %3532 = vst.msk [vmem:[#allocation3 + $0x280] sm:$0xf] %vm1941, %v3394
        %3533 = vst.msk [vmem:[#allocation3 + $0x28c] sm:$0xf] %vm1941, %v3396
        %3534 = vst.msk [vmem:[#allocation3 + $0x298] sm:$0xf] %vm1941, %v3398
        %3535 = vst.msk [vmem:[#allocation3 + $0x2a4] sm:$0xf] %vm1941, %v3400
        %3536 = vst.msk [vmem:[#allocation3 + $0x2b0] sm:$0xf] %vm1941, %v3402
        %3537 = vst.msk [vmem:[#allocation3 + $0x2bc] sm:$0xf] %vm1941, %v3404
        %3538 = vst.msk [vmem:[#allocation3 + $0x2c8] sm:$0xf] %vm1941, %v3406
        %3539 = vst.msk [vmem:[#allocation3 + $0x2d4] sm:$0xf] %vm1941, %v3408
        %3540 = vst.msk [vmem:[#allocation3 + $0x2e0] sm:$0xf] %vm1941, %v3410
        %3541 = vst.msk [vmem:[#allocation3 + $0x2ec] sm:$0xf] %vm1941, %v3412
        %3542 = vst.msk [vmem:[#allocation3 + $0x2f8] sm:$0xf] %vm1941, %v3414
        %v3543 = vld [vmem:[%s2646 + $0x2] sm:$0xff]
        %v3544 = vld [vmem:[%s2646 + $0xa] sm:$0xff]
        %v3545 = vld [vmem:[%s2646 + $0x1a] sm:$0xff]
        %v3546 = vld [vmem:[%s2646 + $0x22] sm:$0xff]
        %v3547 = vld [vmem:[%s2646 + $0x32] sm:$0xff]
        %v3548 = vld [vmem:[%s2646 + $0x3a] sm:$0xff]
        %v3549 = vld [vmem:[%s2646 + $0x4a] sm:$0xff]
        %v3550 = vld [vmem:[%s2646 + $0x52] sm:$0xff]
        %v3551 = vld [vmem:[%s2646 + $0x62] sm:$0xff]
        %v3552 = vld [vmem:[%s2646 + $0x6a] sm:$0xff]
        %v3553 = vld [vmem:[%s2646 + $0x7a] sm:$0xff]
        %v3554 = vld [vmem:[%s2646 + $0x82] sm:$0xff]
        %v3555 = vld [vmem:[%s2646 + $0x92] sm:$0xff]
        %v3556 = vld [vmem:[%s2646 + $0x9a] sm:$0xff]
        %v3557 = vld [vmem:[%s2646 + $0xaa] sm:$0xff]
        %v3558 = vld [vmem:[%s2646 + $0xb2] sm:$0xff]
        %v3559 = vld [vmem:[%s2646 + $0xc2] sm:$0xff]
        %v3560 = vld [vmem:[%s2646 + $0xca] sm:$0xff]
        %v3561 = vld [vmem:[%s2646 + $0xda] sm:$0xff]
        %v3562 = vld [vmem:[%s2646 + $0xe2] sm:$0xff]
        %v3563 = vld [vmem:[%s2646 + $0xf2] sm:$0xff]
        %v3564 = vld [vmem:[%s2646 + $0xfa] sm:$0xff]
        %v3565 = vld [vmem:[%s2646 + $0x10a] sm:$0xff]
        %v3566 = vld [vmem:[%s2646 + $0x112] sm:$0xff]
        %v3567 = vld [vmem:[%s2646 + $0x122] sm:$0xff]
        %v3568 = vld [vmem:[%s2646 + $0x12a] sm:$0xff]
        %v3569 = vld [vmem:[%s2646 + $0x13a] sm:$0xff]
        %v3570 = vld [vmem:[%s2646 + $0x142] sm:$0xff]
        %v3571 = vld [vmem:[%s2646 + $0x152] sm:$0xff]
        %v3572 = vld [vmem:[%s2646 + $0x15a] sm:$0xff]
        %v3573 = vld [vmem:[%s2646 + $0x16a] sm:$0xff]
        %v3574 = vld [vmem:[%s2646 + $0x172] sm:$0xff]
        %v3575 = vld [vmem:[%s2646 + $0x1b2] sm:$0xff]
        %v3576 = vld [vmem:[%s2646 + $0x1ba] sm:$0xff]
        %v3577 = vld [vmem:[%s2646 + $0x1ca] sm:$0xff]
        %v3578 = vld [vmem:[%s2646 + $0x1d2] sm:$0xff]
        %v3579 = vld [vmem:[%s2646 + $0x1e2] sm:$0xff]
        %v3580 = vld [vmem:[%s2646 + $0x1ea] sm:$0xff]
        %v3581 = vld [vmem:[%s2646 + $0x1fa] sm:$0xff]
        %v3582 = vld [vmem:[%s2646 + $0x202] sm:$0xff]
        %v3583 = vld [vmem:[%s2646 + $0x212] sm:$0xff]
        %v3584 = vld [vmem:[%s2646 + $0x21a] sm:$0xff]
        %v3585 = vld [vmem:[%s2646 + $0x22a] sm:$0xff]
        %v3586 = vld [vmem:[%s2646 + $0x232] sm:$0xff]
        %v3587 = vld [vmem:[%s2646 + $0x242] sm:$0xff]
        %v3588 = vld [vmem:[%s2646 + $0x24a] sm:$0xff]
        %v3589 = vld [vmem:[%s2646 + $0x25a] sm:$0xff]
        %v3590 = vld [vmem:[%s2646 + $0x262] sm:$0xff]
        %v3591 = vld [vmem:[%s2646 + $0x272] sm:$0xff]
        %v3592 = vld [vmem:[%s2646 + $0x27a] sm:$0xff]
        %v3593 = vld [vmem:[%s2646 + $0x28a] sm:$0xff]
        %v3594 = vld [vmem:[%s2646 + $0x292] sm:$0xff]
        %v3595 = vld [vmem:[%s2646 + $0x2a2] sm:$0xff]
        %v3596 = vld [vmem:[%s2646 + $0x2aa] sm:$0xff]
        %v3597 = vld [vmem:[%s2646 + $0x2ba] sm:$0xff]
        %v3598 = vld [vmem:[%s2646 + $0x2c2] sm:$0xff]
        %v3599 = vld [vmem:[%s2646 + $0x2d2] sm:$0xff]
        %v3600 = vld [vmem:[%s2646 + $0x2da] sm:$0xff]
        %v3601 = vld [vmem:[%s2646 + $0x2ea] sm:$0xff]
        %v3602 = vld [vmem:[%s2646 + $0x2f2] sm:$0xff]
        %v3603 = vld [vmem:[%s2646 + $0x302] sm:$0xff]
        %v3604 = vld [vmem:[%s2646 + $0x30a] sm:$0xff]
        %v3605 = vld [vmem:[%s2646 + $0x31a] sm:$0xff]
        %v3606 = vld [vmem:[%s2646 + $0x322] sm:$0xff]
        %v3607 = vpack.c.bf16 %v3543, %v3543
        %v3608 = vpack.c.bf16 %v3544, %v3544
        %v3609 = vpack.c.bf16 %v3545, %v3545
        %v3610 = vpack.c.bf16 %v3546, %v3546
        %v3611 = vpack.c.bf16 %v3547, %v3547
        %v3612 = vpack.c.bf16 %v3548, %v3548
        %v3613 = vpack.c.bf16 %v3549, %v3549
        %v3614 = vpack.c.bf16 %v3550, %v3550
        %v3615 = vpack.c.bf16 %v3551, %v3551
        %v3616 = vpack.c.bf16 %v3552, %v3552
        %v3617 = vpack.c.bf16 %v3553, %v3553
        %v3618 = vpack.c.bf16 %v3554, %v3554
        %v3619 = vpack.c.bf16 %v3555, %v3555
        %v3620 = vpack.c.bf16 %v3556, %v3556
        %v3621 = vpack.c.bf16 %v3557, %v3557
        %v3622 = vpack.c.bf16 %v3558, %v3558
        %v3623 = vpack.c.bf16 %v3559, %v3559
        %v3624 = vpack.c.bf16 %v3560, %v3560
        %v3625 = vpack.c.bf16 %v3561, %v3561
        %v3626 = vpack.c.bf16 %v3562, %v3562
        %v3627 = vpack.c.bf16 %v3563, %v3563
        %v3628 = vpack.c.bf16 %v3564, %v3564
        %v3629 = vpack.c.bf16 %v3565, %v3565
        %v3630 = vpack.c.bf16 %v3566, %v3566
        %v3631 = vpack.c.bf16 %v3567, %v3567
        %v3632 = vpack.c.bf16 %v3568, %v3568
        %v3633 = vpack.c.bf16 %v3569, %v3569
        %v3634 = vpack.c.bf16 %v3570, %v3570
        %v3635 = vpack.c.bf16 %v3571, %v3571
        %v3636 = vpack.c.bf16 %v3572, %v3572
        %v3637 = vpack.c.bf16 %v3573, %v3573
        %v3638 = vpack.c.bf16 %v3574, %v3574
        %v3639 = vpack.c.bf16 %v3575, %v3575
        %v3640 = vpack.c.bf16 %v3576, %v3576
        %v3641 = vpack.c.bf16 %v3577, %v3577
        %v3642 = vpack.c.bf16 %v3578, %v3578
        %v3643 = vpack.c.bf16 %v3579, %v3579
        %v3644 = vpack.c.bf16 %v3580, %v3580
        %v3645 = vpack.c.bf16 %v3581, %v3581
        %v3646 = vpack.c.bf16 %v3582, %v3582
        %v3647 = vpack.c.bf16 %v3583, %v3583
        %v3648 = vpack.c.bf16 %v3584, %v3584
        %v3649 = vpack.c.bf16 %v3585, %v3585
        %v3650 = vpack.c.bf16 %v3586, %v3586
        %v3651 = vpack.c.bf16 %v3587, %v3587
        %v3652 = vpack.c.bf16 %v3588, %v3588
        %v3653 = vpack.c.bf16 %v3589, %v3589
        %v3654 = vpack.c.bf16 %v3590, %v3590
        %v3655 = vpack.c.bf16 %v3591, %v3591
        %v3656 = vpack.c.bf16 %v3592, %v3592
        %v3657 = vpack.c.bf16 %v3593, %v3593
        %v3658 = vpack.c.bf16 %v3594, %v3594
        %v3659 = vpack.c.bf16 %v3595, %v3595
        %v3660 = vpack.c.bf16 %v3596, %v3596
        %v3661 = vpack.c.bf16 %v3597, %v3597
        %v3662 = vpack.c.bf16 %v3598, %v3598
        %v3663 = vpack.c.bf16 %v3599, %v3599
        %v3664 = vpack.c.bf16 %v3600, %v3600
        %v3665 = vpack.c.bf16 %v3601, %v3601
        %v3666 = vpack.c.bf16 %v3602, %v3602
        %v3667 = vpack.c.bf16 %v3603, %v3603
        %v3668 = vpack.c.bf16 %v3604, %v3604
        %v3669 = vpack.c.bf16 %v3605, %v3605
        %v3670 = vpack.c.bf16 %v3606, %v3606
        %3671 = vst.msk [vmem:[#allocation3 + $0x8] sm:$0xf] %vm594, %v3607
        %3672 = vst.msk [vmem:[#allocation3 + $0x14] sm:$0xf] %vm594, %v3608
        %3673 = vst.msk [vmem:[#allocation3 + $0x20] sm:$0xf] %vm594, %v3609
        %3674 = vst.msk [vmem:[#allocation3 + $0x2c] sm:$0xf] %vm594, %v3610
        %3675 = vst.msk [vmem:[#allocation3 + $0x38] sm:$0xf] %vm594, %v3611
        %3676 = vst.msk [vmem:[#allocation3 + $0x44] sm:$0xf] %vm594, %v3612
        %3677 = vst.msk [vmem:[#allocation3 + $0x50] sm:$0xf] %vm594, %v3613
        %3678 = vst.msk [vmem:[#allocation3 + $0x5c] sm:$0xf] %vm594, %v3614
        %3679 = vst.msk [vmem:[#allocation3 + $0x68] sm:$0xf] %vm594, %v3615
        %3680 = vst.msk [vmem:[#allocation3 + $0x74] sm:$0xf] %vm594, %v3616
        %3681 = vst.msk [vmem:[#allocation3 + $0x80] sm:$0xf] %vm594, %v3617
        %3682 = vst.msk [vmem:[#allocation3 + $0x8c] sm:$0xf] %vm594, %v3618
        %3683 = vst.msk [vmem:[#allocation3 + $0x98] sm:$0xf] %vm594, %v3619
        %3684 = vst.msk [vmem:[#allocation3 + $0xa4] sm:$0xf] %vm594, %v3620
        %3685 = vst.msk [vmem:[#allocation3 + $0xb0] sm:$0xf] %vm594, %v3621
        %3686 = vst.msk [vmem:[#allocation3 + $0xbc] sm:$0xf] %vm594, %v3622
        %3687 = vst.msk [vmem:[#allocation3 + $0xc8] sm:$0xf] %vm594, %v3623
        %3688 = vst.msk [vmem:[#allocation3 + $0xd4] sm:$0xf] %vm594, %v3624
        %3689 = vst.msk [vmem:[#allocation3 + $0xe0] sm:$0xf] %vm594, %v3625
        %3690 = vst.msk [vmem:[#allocation3 + $0xec] sm:$0xf] %vm594, %v3626
        %3691 = vst.msk [vmem:[#allocation3 + $0xf8] sm:$0xf] %vm594, %v3627
        %3692 = vst.msk [vmem:[#allocation3 + $0x104] sm:$0xf] %vm594, %v3628
        %3693 = vst.msk [vmem:[#allocation3 + $0x110] sm:$0xf] %vm594, %v3629
        %3694 = vst.msk [vmem:[#allocation3 + $0x11c] sm:$0xf] %vm594, %v3630
        %3695 = vst.msk [vmem:[#allocation3 + $0x128] sm:$0xf] %vm594, %v3631
        %3696 = vst.msk [vmem:[#allocation3 + $0x134] sm:$0xf] %vm594, %v3632
        %3697 = vst.msk [vmem:[#allocation3 + $0x140] sm:$0xf] %vm594, %v3633
        %3698 = vst.msk [vmem:[#allocation3 + $0x14c] sm:$0xf] %vm594, %v3634
        %3699 = vst.msk [vmem:[#allocation3 + $0x158] sm:$0xf] %vm594, %v3635
        %3700 = vst.msk [vmem:[#allocation3 + $0x164] sm:$0xf] %vm594, %v3636
        %3701 = vst.msk [vmem:[#allocation3 + $0x170] sm:$0xf] %vm594, %v3637
        %3702 = vst.msk [vmem:[#allocation3 + $0x17c] sm:$0xf] %vm594, %v3638
        %3703 = vst.msk [vmem:[#allocation3 + $0x188] sm:$0xf] %vm594, %v3639
        %3704 = vst.msk [vmem:[#allocation3 + $0x194] sm:$0xf] %vm594, %v3640
        %3705 = vst.msk [vmem:[#allocation3 + $0x1a0] sm:$0xf] %vm594, %v3641
        %3706 = vst.msk [vmem:[#allocation3 + $0x1ac] sm:$0xf] %vm594, %v3642
        %3707 = vst.msk [vmem:[#allocation3 + $0x1b8] sm:$0xf] %vm594, %v3643
        %3708 = vst.msk [vmem:[#allocation3 + $0x1c4] sm:$0xf] %vm594, %v3644
        %3709 = vst.msk [vmem:[#allocation3 + $0x1d0] sm:$0xf] %vm594, %v3645
        %3710 = vst.msk [vmem:[#allocation3 + $0x1dc] sm:$0xf] %vm594, %v3646
        %3711 = vst.msk [vmem:[#allocation3 + $0x1e8] sm:$0xf] %vm594, %v3647
        %3712 = vst.msk [vmem:[#allocation3 + $0x1f4] sm:$0xf] %vm594, %v3648
        %3713 = vst.msk [vmem:[#allocation3 + $0x200] sm:$0xf] %vm594, %v3649
        %3714 = vst.msk [vmem:[#allocation3 + $0x20c] sm:$0xf] %vm594, %v3650
        %3715 = vst.msk [vmem:[#allocation3 + $0x218] sm:$0xf] %vm594, %v3651
        %3716 = vst.msk [vmem:[#allocation3 + $0x224] sm:$0xf] %vm594, %v3652
        %3717 = vst.msk [vmem:[#allocation3 + $0x230] sm:$0xf] %vm594, %v3653
        %3718 = vst.msk [vmem:[#allocation3 + $0x23c] sm:$0xf] %vm594, %v3654
        %3719 = vst.msk [vmem:[#allocation3 + $0x248] sm:$0xf] %vm594, %v3655
        %3720 = vst.msk [vmem:[#allocation3 + $0x254] sm:$0xf] %vm594, %v3656
        %3721 = vst.msk [vmem:[#allocation3 + $0x260] sm:$0xf] %vm594, %v3657
        %3722 = vst.msk [vmem:[#allocation3 + $0x26c] sm:$0xf] %vm594, %v3658
        %3723 = vst.msk [vmem:[#allocation3 + $0x278] sm:$0xf] %vm594, %v3659
        %3724 = vst.msk [vmem:[#allocation3 + $0x284] sm:$0xf] %vm594, %v3660
        %3725 = vst.msk [vmem:[#allocation3 + $0x290] sm:$0xf] %vm594, %v3661
        %3726 = vst.msk [vmem:[#allocation3 + $0x29c] sm:$0xf] %vm594, %v3662
        %3727 = vst.msk [vmem:[#allocation3 + $0x2a8] sm:$0xf] %vm594, %v3663
        %3728 = vst.msk [vmem:[#allocation3 + $0x2b4] sm:$0xf] %vm594, %v3664
        %3729 = vst.msk [vmem:[#allocation3 + $0x2c0] sm:$0xf] %vm594, %v3665
        %3730 = vst.msk [vmem:[#allocation3 + $0x2cc] sm:$0xf] %vm594, %v3666
        %3731 = vst.msk [vmem:[#allocation3 + $0x2d8] sm:$0xf] %vm594, %v3667
        %3732 = vst.msk [vmem:[#allocation3 + $0x2e4] sm:$0xf] %vm594, %v3668
        %3733 = vst.msk [vmem:[#allocation3 + $0x2f0] sm:$0xf] %vm594, %v3669
        %3734 = vst.msk [vmem:[#allocation3 + $0x2fc] sm:$0xf] %vm594, %v3670
        %v3735 = vld [vmem:[#allocation3] sm:$0xff]
        %v3736 = vld [vmem:[#allocation3 + $0x8] sm:$0xf]
        %v3737 = vld [vmem:[#allocation3 + $0xc] sm:$0xff]
        %v3738 = vld [vmem:[#allocation3 + $0x14] sm:$0xf]
        %v3739 = vld [vmem:[#allocation3 + $0x18] sm:$0xff]
        %v3740 = vld [vmem:[#allocation3 + $0x20] sm:$0xf]
        %v3741 = vld [vmem:[#allocation3 + $0x24] sm:$0xff]
        %v3742 = vld [vmem:[#allocation3 + $0x2c] sm:$0xf]
        %v3743 = vld [vmem:[#allocation3 + $0x30] sm:$0xff]
        %v3744 = vld [vmem:[#allocation3 + $0x38] sm:$0xf]
        %v3745 = vld [vmem:[#allocation3 + $0x3c] sm:$0xff]
        %v3746 = vld [vmem:[#allocation3 + $0x44] sm:$0xf]
        %v3747 = vld [vmem:[#allocation3 + $0x48] sm:$0xff]
        %v3748 = vld [vmem:[#allocation3 + $0x50] sm:$0xf]
        %v3749 = vld [vmem:[#allocation3 + $0x54] sm:$0xff]
        %v3750 = vld [vmem:[#allocation3 + $0x5c] sm:$0xf]
        %v3751 = vld [vmem:[#allocation3 + $0x60] sm:$0xff]
        %v3752 = vld [vmem:[#allocation3 + $0x68] sm:$0xf]
        %v3753 = vld [vmem:[#allocation3 + $0x6c] sm:$0xff]
        %v3754 = vld [vmem:[#allocation3 + $0x74] sm:$0xf]
        %v3755 = vld [vmem:[#allocation3 + $0x78] sm:$0xff]
        %v3756 = vld [vmem:[#allocation3 + $0x80] sm:$0xf]
        %v3757 = vld [vmem:[#allocation3 + $0x84] sm:$0xff]
        %v3758 = vld [vmem:[#allocation3 + $0x8c] sm:$0xf]
        %v3759 = vld [vmem:[#allocation3 + $0x90] sm:$0xff]
        %v3760 = vld [vmem:[#allocation3 + $0x98] sm:$0xf]
        %v3761 = vld [vmem:[#allocation3 + $0x9c] sm:$0xff]
        %v3762 = vld [vmem:[#allocation3 + $0xa4] sm:$0xf]
        %v3763 = vld [vmem:[#allocation3 + $0xa8] sm:$0xff]
        %v3764 = vld [vmem:[#allocation3 + $0xb0] sm:$0xf]
        %v3765 = vld [vmem:[#allocation3 + $0xb4] sm:$0xff]
        %v3766 = vld [vmem:[#allocation3 + $0xbc] sm:$0xf]
        %v3767 = vld [vmem:[#allocation3 + $0xc0] sm:$0xff]
        %v3768 = vld [vmem:[#allocation3 + $0xc8] sm:$0xf]
        %v3769 = vld [vmem:[#allocation3 + $0xcc] sm:$0xff]
        %v3770 = vld [vmem:[#allocation3 + $0xd4] sm:$0xf]
        %v3771 = vld [vmem:[#allocation3 + $0xd8] sm:$0xff]
        %v3772 = vld [vmem:[#allocation3 + $0xe0] sm:$0xf]
        %v3773 = vld [vmem:[#allocation3 + $0xe4] sm:$0xff]
        %v3774 = vld [vmem:[#allocation3 + $0xec] sm:$0xf]
        %v3775 = vld [vmem:[#allocation3 + $0xf0] sm:$0xff]
        %v3776 = vld [vmem:[#allocation3 + $0xf8] sm:$0xf]
        %v3777 = vld [vmem:[#allocation3 + $0xfc] sm:$0xff]
        %v3778 = vld [vmem:[#allocation3 + $0x104] sm:$0xf]
        %v3779 = vld [vmem:[#allocation3 + $0x108] sm:$0xff]
        %v3780 = vld [vmem:[#allocation3 + $0x110] sm:$0xf]
        %v3781 = vld [vmem:[#allocation3 + $0x114] sm:$0xff]
        %v3782 = vld [vmem:[#allocation3 + $0x11c] sm:$0xf]
        %v3783 = vld [vmem:[#allocation3 + $0x120] sm:$0xff]
        %v3784 = vld [vmem:[#allocation3 + $0x128] sm:$0xf]
        %v3785 = vld [vmem:[#allocation3 + $0x12c] sm:$0xff]
        %v3786 = vld [vmem:[#allocation3 + $0x134] sm:$0xf]
        %v3787 = vld [vmem:[#allocation3 + $0x138] sm:$0xff]
        %v3788 = vld [vmem:[#allocation3 + $0x140] sm:$0xf]
        %v3789 = vld [vmem:[#allocation3 + $0x144] sm:$0xff]
        %v3790 = vld [vmem:[#allocation3 + $0x14c] sm:$0xf]
        %v3791 = vld [vmem:[#allocation3 + $0x150] sm:$0xff]
        %v3792 = vld [vmem:[#allocation3 + $0x158] sm:$0xf]
        %v3793 = vld [vmem:[#allocation3 + $0x15c] sm:$0xff]
        %v3794 = vld [vmem:[#allocation3 + $0x164] sm:$0xf]
        %v3795 = vld [vmem:[#allocation3 + $0x168] sm:$0xff]
        %v3796 = vld [vmem:[#allocation3 + $0x170] sm:$0xf]
        %v3797 = vld [vmem:[#allocation3 + $0x174] sm:$0xff]
        %v3798 = vld [vmem:[#allocation3 + $0x17c] sm:$0xf]
        %v3799 = vld [vmem:[#allocation3 + $0x180] sm:$0xff]
        %v3800 = vld [vmem:[#allocation3 + $0x188] sm:$0xf]
        %v3801 = vld [vmem:[#allocation3 + $0x18c] sm:$0xff]
        %v3802 = vld [vmem:[#allocation3 + $0x194] sm:$0xf]
        %v3803 = vld [vmem:[#allocation3 + $0x198] sm:$0xff]
        %v3804 = vld [vmem:[#allocation3 + $0x1a0] sm:$0xf]
        %v3805 = vld [vmem:[#allocation3 + $0x1a4] sm:$0xff]
        %v3806 = vld [vmem:[#allocation3 + $0x1ac] sm:$0xf]
        %v3807 = vld [vmem:[#allocation3 + $0x1b0] sm:$0xff]
        %v3808 = vld [vmem:[#allocation3 + $0x1b8] sm:$0xf]
        %v3809 = vld [vmem:[#allocation3 + $0x1bc] sm:$0xff]
        %v3810 = vld [vmem:[#allocation3 + $0x1c4] sm:$0xf]
        %v3811 = vld [vmem:[#allocation3 + $0x1c8] sm:$0xff]
        %v3812 = vld [vmem:[#allocation3 + $0x1d0] sm:$0xf]
        %v3813 = vld [vmem:[#allocation3 + $0x1d4] sm:$0xff]
        %v3814 = vld [vmem:[#allocation3 + $0x1dc] sm:$0xf]
        %v3815 = vld [vmem:[#allocation3 + $0x1e0] sm:$0xff]
        %v3816 = vld [vmem:[#allocation3 + $0x1e8] sm:$0xf]
        %v3817 = vld [vmem:[#allocation3 + $0x1ec] sm:$0xff]
        %v3818 = vld [vmem:[#allocation3 + $0x1f4] sm:$0xf]
        %v3819 = vld [vmem:[#allocation3 + $0x1f8] sm:$0xff]
        %v3820 = vld [vmem:[#allocation3 + $0x200] sm:$0xf]
        %v3821 = vld [vmem:[#allocation3 + $0x204] sm:$0xff]
        %v3822 = vld [vmem:[#allocation3 + $0x20c] sm:$0xf]
        %v3823 = vld [vmem:[#allocation3 + $0x210] sm:$0xff]
        %v3824 = vld [vmem:[#allocation3 + $0x218] sm:$0xf]
        %v3825 = vld [vmem:[#allocation3 + $0x21c] sm:$0xff]
        %v3826 = vld [vmem:[#allocation3 + $0x224] sm:$0xf]
        %v3827 = vld [vmem:[#allocation3 + $0x228] sm:$0xff]
        %v3828 = vld [vmem:[#allocation3 + $0x230] sm:$0xf]
        %v3829 = vld [vmem:[#allocation3 + $0x234] sm:$0xff]
        %v3830 = vld [vmem:[#allocation3 + $0x23c] sm:$0xf]
        %v3831 = vld [vmem:[#allocation3 + $0x240] sm:$0xff]
        %v3832 = vld [vmem:[#allocation3 + $0x248] sm:$0xf]
        %v3833 = vld [vmem:[#allocation3 + $0x24c] sm:$0xff]
        %v3834 = vld [vmem:[#allocation3 + $0x254] sm:$0xf]
        %v3835 = vld [vmem:[#allocation3 + $0x258] sm:$0xff]
        %v3836 = vld [vmem:[#allocation3 + $0x260] sm:$0xf]
        %v3837 = vld [vmem:[#allocation3 + $0x264] sm:$0xff]
        %v3838 = vld [vmem:[#allocation3 + $0x26c] sm:$0xf]
        %v3839 = vld [vmem:[#allocation3 + $0x270] sm:$0xff]
        %v3840 = vld [vmem:[#allocation3 + $0x278] sm:$0xf]
        %v3841 = vld [vmem:[#allocation3 + $0x27c] sm:$0xff]
        %v3842 = vld [vmem:[#allocation3 + $0x284] sm:$0xf]
        %v3843 = vld [vmem:[#allocation3 + $0x288] sm:$0xff]
        %v3844 = vld [vmem:[#allocation3 + $0x290] sm:$0xf]
        %v3845 = vld [vmem:[#allocation3 + $0x294] sm:$0xff]
        %v3846 = vld [vmem:[#allocation3 + $0x29c] sm:$0xf]
        %v3847 = vld [vmem:[#allocation3 + $0x2a0] sm:$0xff]
        %v3848 = vld [vmem:[#allocation3 + $0x2a8] sm:$0xf]
        %v3849 = vld [vmem:[#allocation3 + $0x2ac] sm:$0xff]
        %v3850 = vld [vmem:[#allocation3 + $0x2b4] sm:$0xf]
        %v3851 = vld [vmem:[#allocation3 + $0x2b8] sm:$0xff]
        %v3852 = vld [vmem:[#allocation3 + $0x2c0] sm:$0xf]
        %v3853 = vld [vmem:[#allocation3 + $0x2c4] sm:$0xff]
        %v3854 = vld [vmem:[#allocation3 + $0x2cc] sm:$0xf]
        %v3855 = vld [vmem:[#allocation3 + $0x2d0] sm:$0xff]
        %v3856 = vld [vmem:[#allocation3 + $0x2d8] sm:$0xf]
        %v3857 = vld [vmem:[#allocation3 + $0x2dc] sm:$0xff]
        %v3858 = vld [vmem:[#allocation3 + $0x2e4] sm:$0xf]
        %v3859 = vld [vmem:[#allocation3 + $0x2e8] sm:$0xff]
        %v3860 = vld [vmem:[#allocation3 + $0x2f0] sm:$0xf]
        %v3861 = vld [vmem:[#allocation3 + $0x2f4] sm:$0xff]
        %v3862 = vld [vmem:[#allocation3 + $0x2fc] sm:$0xf]
        %v3863 = vld [vmem:[%s1] sm:$0xf]
        %v3864 = vld [vmem:[%s1 + $0x4] sm:$0xf]
        %v3865 = vld [vmem:[%s1 + $0x8] sm:$0xf]
        %v3866 = vld [vmem:[%s1 + $0xc] sm:$0xf]
        %v3867 = vld [vmem:[%s1 + $0x10] sm:$0xf]
        %v3868 = vld [vmem:[%s1 + $0x14] sm:$0xf]
        %v3869 = vld [vmem:[%s1 + $0x18] sm:$0xf]
        %v3870 = vld [vmem:[%s1 + $0x1c] sm:$0xf]
        %v3871 = vld [vmem:[%s1 + $0x20] sm:$0xf]
        %v3872 = vld [vmem:[%s1 + $0x24] sm:$0xf]
        %v3873 = vld [vmem:[%s1 + $0x28] sm:$0xf]
        %v3874 = vld [vmem:[%s1 + $0x2c] sm:$0xf]
        %v3875 = vld [vmem:[%s1 + $0x30] sm:$0xf]
        %v3876 = vld [vmem:[%s1 + $0x34] sm:$0xf]
        %v3877 = vld [vmem:[%s1 + $0x38] sm:$0xf]
        %v3878 = vld [vmem:[%s1 + $0x3c] sm:$0xf]
        %v3879 = vld [vmem:[%s1 + $0x40] sm:$0xf]
        %v3880 = vld [vmem:[%s1 + $0x44] sm:$0xf]
        %v3881 = vld [vmem:[%s1 + $0x48] sm:$0xf]
        %v3882 = vld [vmem:[%s1 + $0x4c] sm:$0xf]
        %v3883 = vld [vmem:[%s1 + $0x50] sm:$0xf]
        %v3884 = vld [vmem:[%s1 + $0x54] sm:$0xf]
        %v3885 = vld [vmem:[%s1 + $0x58] sm:$0xf]
        %v3886 = vld [vmem:[%s1 + $0x5c] sm:$0xf]
        %v3887 = vld [vmem:[%s1 + $0x60] sm:$0xf]
        %v3888 = vld [vmem:[%s1 + $0x64] sm:$0xf]
        %v3889 = vld [vmem:[%s1 + $0x68] sm:$0xf]
        %v3890 = vld [vmem:[%s1 + $0x6c] sm:$0xf]
        %v3891 = vld [vmem:[%s1 + $0x70] sm:$0xf]
        %v3892 = vld [vmem:[%s1 + $0x74] sm:$0xf]
        %v3893 = vld [vmem:[%s1 + $0x78] sm:$0xf]
        %v3894 = vld [vmem:[%s1 + $0x7c] sm:$0xf]
        %v3895 = vld [vmem:[%s1 + $0x80] sm:$0xf]
        %v3896 = vld [vmem:[%s1 + $0x84] sm:$0xf]
        %v3897 = vld [vmem:[%s1 + $0x88] sm:$0xf]
        %v3898 = vld [vmem:[%s1 + $0x8c] sm:$0xf]
        %v3899 = vld [vmem:[%s2] sm:$0x1]
        %v3901 = vperm.slane %v3899, 0
        %v4031 = vunpack.c.l.b16 %v3735
        %v4032 = vunpack.c.h.b16 %v3735
        %v4033 = vunpack.c.l.b16 %v3736
        %v4034 = vunpack.c.l.b16 %v3737
        %v4035 = vunpack.c.h.b16 %v3737
        %v4036 = vunpack.c.l.b16 %v3738
        %v4037 = vunpack.c.l.b16 %v3739
        %v4038 = vunpack.c.h.b16 %v3739
        %v4039 = vunpack.c.l.b16 %v3740
        %v4040 = vunpack.c.l.b16 %v3741
        %v4041 = vunpack.c.h.b16 %v3741
        %v4042 = vunpack.c.l.b16 %v3742
        %v4043 = vunpack.c.l.b16 %v3743
        %v4044 = vunpack.c.h.b16 %v3743
        %v4045 = vunpack.c.l.b16 %v3744
        %v4046 = vunpack.c.l.b16 %v3745
        %v4047 = vunpack.c.h.b16 %v3745
        %v4048 = vunpack.c.l.b16 %v3746
        %v4049 = vunpack.c.l.b16 %v3747
        %v4050 = vunpack.c.h.b16 %v3747
        %v4051 = vunpack.c.l.b16 %v3748
        %v4052 = vunpack.c.l.b16 %v3749
        %v4053 = vunpack.c.h.b16 %v3749
        %v4054 = vunpack.c.l.b16 %v3750
        %v4055 = vunpack.c.l.b16 %v3751
        %v4056 = vunpack.c.h.b16 %v3751
        %v4057 = vunpack.c.l.b16 %v3752
        %v4058 = vunpack.c.l.b16 %v3753
        %v4059 = vunpack.c.h.b16 %v3753
        %v4060 = vunpack.c.l.b16 %v3754
        %v4061 = vunpack.c.l.b16 %v3755
        %v4062 = vunpack.c.h.b16 %v3755
        %v4063 = vunpack.c.l.b16 %v3756
        %v4064 = vunpack.c.l.b16 %v3757
        %v4065 = vunpack.c.h.b16 %v3757
        %v4066 = vunpack.c.l.b16 %v3758
        %v4067 = vunpack.c.l.b16 %v3759
        %v4068 = vunpack.c.h.b16 %v3759
        %v4069 = vunpack.c.l.b16 %v3760
        %v4070 = vunpack.c.l.b16 %v3761
        %v4071 = vunpack.c.h.b16 %v3761
        %v4072 = vunpack.c.l.b16 %v3762
        %v4073 = vunpack.c.l.b16 %v3763
        %v4074 = vunpack.c.h.b16 %v3763
        %v4075 = vunpack.c.l.b16 %v3764
        %v4076 = vunpack.c.l.b16 %v3765
        %v4077 = vunpack.c.h.b16 %v3765
        %v4078 = vunpack.c.l.b16 %v3766
        %v4079 = vunpack.c.l.b16 %v3767
        %v4080 = vunpack.c.h.b16 %v3767
        %v4081 = vunpack.c.l.b16 %v3768
        %v4082 = vunpack.c.l.b16 %v3769
        %v4083 = vunpack.c.h.b16 %v3769
        %v4084 = vunpack.c.l.b16 %v3770
        %v4085 = vunpack.c.l.b16 %v3771
        %v4086 = vunpack.c.h.b16 %v3771
        %v4087 = vunpack.c.l.b16 %v3772
        %v4088 = vunpack.c.l.b16 %v3773
        %v4089 = vunpack.c.h.b16 %v3773
        %v4090 = vunpack.c.l.b16 %v3774
        %v4091 = vunpack.c.l.b16 %v3775
        %v4092 = vunpack.c.h.b16 %v3775
        %v4093 = vunpack.c.l.b16 %v3776
        %v4094 = vunpack.c.l.b16 %v3777
        %v4095 = vunpack.c.h.b16 %v3777
        %v4096 = vunpack.c.l.b16 %v3778
        %v4097 = vunpack.c.l.b16 %v3779
        %v4098 = vunpack.c.h.b16 %v3779
        %v4099 = vunpack.c.l.b16 %v3780
        %v4100 = vunpack.c.l.b16 %v3781
        %v4101 = vunpack.c.h.b16 %v3781
        %v4102 = vunpack.c.l.b16 %v3782
        %v4103 = vunpack.c.l.b16 %v3783
        %v4104 = vunpack.c.h.b16 %v3783
        %v4105 = vunpack.c.l.b16 %v3784
        %v4106 = vunpack.c.l.b16 %v3785
        %v4107 = vunpack.c.h.b16 %v3785
        %v4108 = vunpack.c.l.b16 %v3786
        %v4109 = vunpack.c.l.b16 %v3787
        %v4110 = vunpack.c.h.b16 %v3787
        %v4111 = vunpack.c.l.b16 %v3788
        %v4112 = vunpack.c.l.b16 %v3789
        %v4113 = vunpack.c.h.b16 %v3789
        %v4114 = vunpack.c.l.b16 %v3790
        %v4115 = vunpack.c.l.b16 %v3791
        %v4116 = vunpack.c.h.b16 %v3791
        %v4117 = vunpack.c.l.b16 %v3792
        %v4118 = vunpack.c.l.b16 %v3793
        %v4119 = vunpack.c.h.b16 %v3793
        %v4120 = vunpack.c.l.b16 %v3794
        %v4121 = vunpack.c.l.b16 %v3795
        %v4122 = vunpack.c.h.b16 %v3795
        %v4123 = vunpack.c.l.b16 %v3796
        %v4124 = vunpack.c.l.b16 %v3797
        %v4125 = vunpack.c.h.b16 %v3797
        %v4126 = vunpack.c.l.b16 %v3798
        %v4127 = vunpack.c.l.b16 %v3799
        %v4128 = vunpack.c.h.b16 %v3799
        %v4129 = vunpack.c.l.b16 %v3800
        %v4130 = vunpack.c.l.b16 %v3801
        %v4131 = vunpack.c.h.b16 %v3801
        %v4132 = vunpack.c.l.b16 %v3802
        %v4133 = vunpack.c.l.b16 %v3803
        %v4134 = vunpack.c.h.b16 %v3803
        %v4135 = vunpack.c.l.b16 %v3804
        %v4136 = vunpack.c.l.b16 %v3805
        %v4137 = vunpack.c.h.b16 %v3805
        %v4138 = vunpack.c.l.b16 %v3806
        %v4139 = vunpack.c.l.b16 %v3807
        %v4140 = vunpack.c.h.b16 %v3807
        %v4141 = vunpack.c.l.b16 %v3808
        %v4142 = vunpack.c.l.b16 %v3809
        %v4143 = vunpack.c.h.b16 %v3809
        %v4144 = vunpack.c.l.b16 %v3810
        %v4145 = vunpack.c.l.b16 %v3811
        %v4146 = vunpack.c.h.b16 %v3811
        %v4147 = vunpack.c.l.b16 %v3812
        %v4148 = vunpack.c.l.b16 %v3813
        %v4149 = vunpack.c.h.b16 %v3813
        %v4150 = vunpack.c.l.b16 %v3814
        %v4151 = vunpack.c.l.b16 %v3815
        %v4152 = vunpack.c.h.b16 %v3815
        %v4153 = vunpack.c.l.b16 %v3816
        %v4154 = vunpack.c.l.b16 %v3817
        %v4155 = vunpack.c.h.b16 %v3817
        %v4156 = vunpack.c.l.b16 %v3818
        %v4157 = vunpack.c.l.b16 %v3819
        %v4158 = vunpack.c.h.b16 %v3819
        %v4159 = vunpack.c.l.b16 %v3820
        %v4160 = vunpack.c.l.b16 %v3821
        %v4161 = vunpack.c.h.b16 %v3821
        %v4162 = vunpack.c.l.b16 %v3822
        %v4163 = vunpack.c.l.b16 %v3823
        %v4164 = vunpack.c.h.b16 %v3823
        %v4165 = vunpack.c.l.b16 %v3824
        %v4166 = vunpack.c.l.b16 %v3825
        %v4167 = vunpack.c.h.b16 %v3825
        %v4168 = vunpack.c.l.b16 %v3826
        %v4169 = vunpack.c.l.b16 %v3827
        %v4170 = vunpack.c.h.b16 %v3827
        %v4171 = vunpack.c.l.b16 %v3828
        %v4172 = vunpack.c.l.b16 %v3829
        %v4173 = vunpack.c.h.b16 %v3829
        %v4174 = vunpack.c.l.b16 %v3830
        %v4175 = vunpack.c.l.b16 %v3831
        %v4176 = vunpack.c.h.b16 %v3831
        %v4177 = vunpack.c.l.b16 %v3832
        %v4178 = vunpack.c.l.b16 %v3833
        %v4179 = vunpack.c.h.b16 %v3833
        %v4180 = vunpack.c.l.b16 %v3834
        %v4181 = vunpack.c.l.b16 %v3835
        %v4182 = vunpack.c.h.b16 %v3835
        %v4183 = vunpack.c.l.b16 %v3836
        %v4184 = vunpack.c.l.b16 %v3837
        %v4185 = vunpack.c.h.b16 %v3837
        %v4186 = vunpack.c.l.b16 %v3838
        %v4187 = vunpack.c.l.b16 %v3839
        %v4188 = vunpack.c.h.b16 %v3839
        %v4189 = vunpack.c.l.b16 %v3840
        %v4190 = vunpack.c.l.b16 %v3841
        %v4191 = vunpack.c.h.b16 %v3841
        %v4192 = vunpack.c.l.b16 %v3842
        %v4193 = vunpack.c.l.b16 %v3843
        %v4194 = vunpack.c.h.b16 %v3843
        %v4195 = vunpack.c.l.b16 %v3844
        %v4196 = vunpack.c.l.b16 %v3845
        %v4197 = vunpack.c.h.b16 %v3845
        %v4198 = vunpack.c.l.b16 %v3846
        %v4199 = vunpack.c.l.b16 %v3847
        %v4200 = vunpack.c.h.b16 %v3847
        %v4201 = vunpack.c.l.b16 %v3848
        %v4202 = vunpack.c.l.b16 %v3849
        %v4203 = vunpack.c.h.b16 %v3849
        %v4204 = vunpack.c.l.b16 %v3850
        %v4205 = vunpack.c.l.b16 %v3851
        %v4206 = vunpack.c.h.b16 %v3851
        %v4207 = vunpack.c.l.b16 %v3852
        %v4208 = vunpack.c.l.b16 %v3853
        %v4209 = vunpack.c.h.b16 %v3853
        %v4210 = vunpack.c.l.b16 %v3854
        %v4211 = vunpack.c.l.b16 %v3855
        %v4212 = vunpack.c.h.b16 %v3855
        %v4213 = vunpack.c.l.b16 %v3856
        %v4214 = vunpack.c.l.b16 %v3857
        %v4215 = vunpack.c.h.b16 %v3857
        %v4216 = vunpack.c.l.b16 %v3858
        %v4217 = vunpack.c.l.b16 %v3859
        %v4218 = vunpack.c.h.b16 %v3859
        %v4219 = vunpack.c.l.b16 %v3860
        %v4220 = vunpack.c.l.b16 %v3861
        %v4221 = vunpack.c.h.b16 %v3861
        %v4222 = vunpack.c.l.b16 %v3862
        %v4223 = vpack.c.b16 %v4034, %v4031
        %v4224 = vpack.c.b16 %v4035, %v4032
        %v4225 = vpack.c.b16 %v4036, %v4033
        %v4226 = vpack.c.b16 %v4040, %v4037
        %v4227 = vpack.c.b16 %v4041, %v4038
        %v4228 = vpack.c.b16 %v4042, %v4039
        %v4229 = vpack.c.b16 %v4046, %v4043
        %v4230 = vpack.c.b16 %v4047, %v4044
        %v4231 = vpack.c.b16 %v4048, %v4045
        %v4232 = vpack.c.b16 %v4052, %v4049
        %v4233 = vpack.c.b16 %v4053, %v4050
        %v4234 = vpack.c.b16 %v4054, %v4051
        %v4235 = vpack.c.b16 %v4058, %v4055
        %v4236 = vpack.c.b16 %v4059, %v4056
        %v4237 = vpack.c.b16 %v4060, %v4057
        %v4238 = vpack.c.b16 %v4064, %v4061
        %v4239 = vpack.c.b16 %v4065, %v4062
        %v4240 = vpack.c.b16 %v4066, %v4063
        %v4241 = vpack.c.b16 %v4070, %v4067
        %v4242 = vpack.c.b16 %v4071, %v4068
        %v4243 = vpack.c.b16 %v4072, %v4069
        %v4244 = vpack.c.b16 %v4076, %v4073
        %v4245 = vpack.c.b16 %v4077, %v4074
        %v4246 = vpack.c.b16 %v4078, %v4075
        %v4247 = vpack.c.b16 %v4082, %v4079
        %v4248 = vpack.c.b16 %v4083, %v4080
        %v4249 = vpack.c.b16 %v4084, %v4081
        %v4250 = vpack.c.b16 %v4088, %v4085
        %v4251 = vpack.c.b16 %v4089, %v4086
        %v4252 = vpack.c.b16 %v4090, %v4087
        %v4253 = vpack.c.b16 %v4094, %v4091
        %v4254 = vpack.c.b16 %v4095, %v4092
        %v4255 = vpack.c.b16 %v4096, %v4093
        %v4256 = vpack.c.b16 %v4100, %v4097
        %v4257 = vpack.c.b16 %v4101, %v4098
        %v4258 = vpack.c.b16 %v4102, %v4099
        %v4259 = vpack.c.b16 %v4106, %v4103
        %v4260 = vpack.c.b16 %v4107, %v4104
        %v4261 = vpack.c.b16 %v4108, %v4105
        %v4262 = vpack.c.b16 %v4112, %v4109
        %v4263 = vpack.c.b16 %v4113, %v4110
        %v4264 = vpack.c.b16 %v4114, %v4111
        %v4265 = vpack.c.b16 %v4118, %v4115
        %v4266 = vpack.c.b16 %v4119, %v4116
        %v4267 = vpack.c.b16 %v4120, %v4117
        %v4268 = vpack.c.b16 %v4124, %v4121
        %v4269 = vpack.c.b16 %v4125, %v4122
        %v4270 = vpack.c.b16 %v4126, %v4123
        %v4271 = vpack.c.b16 %v4130, %v4127
        %v4272 = vpack.c.b16 %v4131, %v4128
        %v4273 = vpack.c.b16 %v4132, %v4129
        %v4274 = vpack.c.b16 %v4136, %v4133
        %v4275 = vpack.c.b16 %v4137, %v4134
        %v4276 = vpack.c.b16 %v4138, %v4135
        %v4277 = vpack.c.b16 %v4142, %v4139
        %v4278 = vpack.c.b16 %v4143, %v4140
        %v4279 = vpack.c.b16 %v4144, %v4141
        %v4280 = vpack.c.b16 %v4148, %v4145
        %v4281 = vpack.c.b16 %v4149, %v4146
        %v4282 = vpack.c.b16 %v4150, %v4147
        %v4283 = vpack.c.b16 %v4154, %v4151
        %v4284 = vpack.c.b16 %v4155, %v4152
        %v4285 = vpack.c.b16 %v4156, %v4153
        %v4286 = vpack.c.b16 %v4160, %v4157
        %v4287 = vpack.c.b16 %v4161, %v4158
        %v4288 = vpack.c.b16 %v4162, %v4159
        %v4289 = vpack.c.b16 %v4166, %v4163
        %v4290 = vpack.c.b16 %v4167, %v4164
        %v4291 = vpack.c.b16 %v4168, %v4165
        %v4292 = vpack.c.b16 %v4172, %v4169
        %v4293 = vpack.c.b16 %v4173, %v4170
        %v4294 = vpack.c.b16 %v4174, %v4171
        %v4295 = vpack.c.b16 %v4178, %v4175
        %v4296 = vpack.c.b16 %v4179, %v4176
        %v4297 = vpack.c.b16 %v4180, %v4177
        %v4298 = vpack.c.b16 %v4184, %v4181
        %v4299 = vpack.c.b16 %v4185, %v4182
        %v4300 = vpack.c.b16 %v4186, %v4183
        %v4301 = vpack.c.b16 %v4190, %v4187
        %v4302 = vpack.c.b16 %v4191, %v4188
        %v4303 = vpack.c.b16 %v4192, %v4189
        %v4304 = vpack.c.b16 %v4196, %v4193
        %v4305 = vpack.c.b16 %v4197, %v4194
        %v4306 = vpack.c.b16 %v4198, %v4195
        %v4307 = vpack.c.b16 %v4202, %v4199
        %v4308 = vpack.c.b16 %v4203, %v4200
        %v4309 = vpack.c.b16 %v4204, %v4201
        %v4310 = vpack.c.b16 %v4208, %v4205
        %v4311 = vpack.c.b16 %v4209, %v4206
        %v4312 = vpack.c.b16 %v4210, %v4207
        %v4313 = vpack.c.b16 %v4214, %v4211
        %v4314 = vpack.c.b16 %v4215, %v4212
        %v4315 = vpack.c.b16 %v4216, %v4213
        %v4316 = vpack.c.b16 %v4220, %v4217
        %v4317 = vpack.c.b16 %v4221, %v4218
        %v4318 = vpack.c.b16 %v4222, %v4219
        %v4419 = vunpack.c.l.b16 %v3863
        %v4420 = vunpack.c.l.b16 %v3864
        %v4421 = vunpack.c.l.b16 %v3865
        %v4422 = vunpack.c.l.b16 %v3866
        %v4423 = vunpack.c.l.b16 %v3867
        %v4424 = vunpack.c.l.b16 %v3868
        %v4425 = vunpack.c.l.b16 %v3869
        %v4426 = vunpack.c.l.b16 %v3870
        %v4427 = vunpack.c.l.b16 %v3871
        %v4428 = vunpack.c.l.b16 %v3872
        %v4429 = vunpack.c.l.b16 %v3873
        %v4430 = vunpack.c.l.b16 %v3874
        %v4431 = vunpack.c.l.b16 %v3875
        %v4432 = vunpack.c.l.b16 %v3876
        %v4433 = vunpack.c.l.b16 %v3877
        %v4434 = vunpack.c.l.b16 %v3878
        %v4435 = vunpack.c.l.b16 %v3879
        %v4436 = vunpack.c.l.b16 %v3880
        %v4437 = vunpack.c.l.b16 %v3881
        %v4438 = vunpack.c.l.b16 %v3882
        %v4439 = vunpack.c.l.b16 %v3883
        %v4440 = vunpack.c.l.b16 %v3884
        %v4441 = vunpack.c.l.b16 %v3885
        %v4442 = vunpack.c.l.b16 %v3886
        %v4443 = vunpack.c.l.b16 %v3887
        %v4444 = vunpack.c.l.b16 %v3888
        %v4445 = vunpack.c.l.b16 %v3889
        %v4446 = vunpack.c.l.b16 %v3890
        %v4447 = vunpack.c.l.b16 %v3891
        %v4448 = vunpack.c.l.b16 %v3892
        %v4449 = vunpack.c.l.b16 %v3893
        %v4450 = vunpack.c.l.b16 %v3894
        %v4451 = vunpack.c.l.b16 %v3895
        %v4452 = vunpack.c.l.b16 %v3896
        %v4453 = vunpack.c.l.b16 %v3897
        %v4454 = vunpack.c.l.b16 %v3898
        %v4455 = vpack.c.b16 %v4420, %v4419
        %v4456 = vpack.c.b16 %v4422, %v4421
        %v4457 = vpack.c.b16 %v4424, %v4423
        %v4458 = vpack.c.b16 %v4426, %v4425
        %v4459 = vpack.c.b16 %v4428, %v4427
        %v4460 = vpack.c.b16 %v4430, %v4429
        %v4461 = vpack.c.b16 %v4432, %v4431
        %v4462 = vpack.c.b16 %v4434, %v4433
        %v4463 = vpack.c.b16 %v4436, %v4435
        %v4464 = vpack.c.b16 %v4438, %v4437
        %v4465 = vpack.c.b16 %v4440, %v4439
        %v4466 = vpack.c.b16 %v4442, %v4441
        %v4467 = vpack.c.b16 %v4444, %v4443
        %v4468 = vpack.c.b16 %v4446, %v4445
        %v4469 = vpack.c.b16 %v4448, %v4447
        %v4470 = vpack.c.b16 %v4450, %v4449
        %v4471 = vpack.c.b16 %v4452, %v4451
        %v4472 = vpack.c.b16 %v4454, %v4453
        %v4492 = vsel %vm249, %v4225, 0
        %v4495 = vsel %vm249, %v4228, 0
        %v4498 = vsel %vm249, %v4231, 0
        %v4501 = vsel %vm249, %v4234, 0
        %v4504 = vsel %vm249, %v4237, 0
        %v4507 = vsel %vm249, %v4240, 0
        %v4510 = vsel %vm249, %v4243, 0
        %v4513 = vsel %vm249, %v4246, 0
        %v4516 = vsel %vm249, %v4249, 0
        %v4519 = vsel %vm249, %v4252, 0
        %v4522 = vsel %vm249, %v4255, 0
        %v4525 = vsel %vm249, %v4258, 0
        %v4528 = vsel %vm249, %v4261, 0
        %v4531 = vsel %vm249, %v4264, 0
        %v4534 = vsel %vm249, %v4267, 0
        %v4537 = vsel %vm249, %v4270, 0
        %v4540 = vsel %vm249, %v4273, 0
        %v4543 = vsel %vm249, %v4276, 0
        %v4546 = vsel %vm249, %v4279, 0
        %v4549 = vsel %vm249, %v4282, 0
        %v4552 = vsel %vm249, %v4285, 0
        %v4555 = vsel %vm249, %v4288, 0
        %v4558 = vsel %vm249, %v4291, 0
        %v4561 = vsel %vm249, %v4294, 0
        %v4564 = vsel %vm249, %v4297, 0
        %v4567 = vsel %vm249, %v4300, 0
        %v4570 = vsel %vm249, %v4303, 0
        %v4573 = vsel %vm249, %v4306, 0
        %v4576 = vsel %vm249, %v4309, 0
        %v4579 = vsel %vm249, %v4312, 0
        %v4582 = vsel %vm249, %v4315, 0
        %v4585 = vsel %vm249, %v4318, 0
        %4587 = vmatpush.bf16.msra.mxu0 %v4462
        %4588 = vmatpush.bf16.msra.mxu0 %v4461
        %4589 = vmatpush.bf16.msra.mxu0 %v4460
        %4590 = vmatpush.bf16.msra.mxu0 %v4459
        %4591 = vmatpush.bf16.msra.mxu0 %v4458
        %4592 = vmatpush.bf16.msra.mxu0 %v4457
        %4593 = vmatpush.bf16.msra.mxu0 %v4456
        %4594 = vmatpush.bf16.msra.mxu0 %v4455
        %4595 = vmatmul.bf16.gmra.mxu0 %v4223
        %v4596 = vpop.f32.mrf.mxu0
        %v4597 = vadd.f32 %v3901, %v4596
        %v4598 = vpop.f32.mrf.mxu0
        %v4599 = vadd.f32 %v3901, %v4598
        %4600 = vmatmul.bf16.gmra.mxu0 %v4226
        %v4601 = vpop.f32.mrf.mxu0
        %v4602 = vadd.f32 %v3901, %v4601
        %v4603 = vpop.f32.mrf.mxu0
        %v4604 = vadd.f32 %v3901, %v4603
        %4605 = vmatmul.bf16.gmra.mxu0 %v4229
        %v4606 = vpop.f32.mrf.mxu0
        %v4607 = vadd.f32 %v3901, %v4606
        %v4608 = vpop.f32.mrf.mxu0
        %v4609 = vadd.f32 %v3901, %v4608
        %4610 = vmatmul.bf16.gmra.mxu0 %v4232
        %v4611 = vpop.f32.mrf.mxu0
        %v4612 = vadd.f32 %v3901, %v4611
        %v4613 = vpop.f32.mrf.mxu0
        %v4614 = vadd.f32 %v3901, %v4613
        %4615 = vmatmul.bf16.gmra.mxu0 %v4235
        %v4616 = vpop.f32.mrf.mxu0
        %v4617 = vadd.f32 %v3901, %v4616
        %v4618 = vpop.f32.mrf.mxu0
        %v4619 = vadd.f32 %v3901, %v4618
        %4620 = vmatmul.bf16.gmra.mxu0 %v4238
        %v4621 = vpop.f32.mrf.mxu0
        %v4622 = vadd.f32 %v3901, %v4621
        %v4623 = vpop.f32.mrf.mxu0
        %v4624 = vadd.f32 %v3901, %v4623
        %4625 = vmatmul.bf16.gmra.mxu0 %v4241
        %v4626 = vpop.f32.mrf.mxu0
        %v4627 = vadd.f32 %v3901, %v4626
        %v4628 = vpop.f32.mrf.mxu0
        %v4629 = vadd.f32 %v3901, %v4628
        %4630 = vmatmul.bf16.gmra.mxu0 %v4244
        %v4631 = vpop.f32.mrf.mxu0
        %v4632 = vadd.f32 %v3901, %v4631
        %v4633 = vpop.f32.mrf.mxu0
        %v4634 = vadd.f32 %v3901, %v4633
        %4635 = vmatmul.bf16.gmra.mxu0 %v4247
        %v4636 = vpop.f32.mrf.mxu0
        %v4637 = vadd.f32 %v3901, %v4636
        %v4638 = vpop.f32.mrf.mxu0
        %v4639 = vadd.f32 %v3901, %v4638
        %4640 = vmatmul.bf16.gmra.mxu0 %v4250
        %v4641 = vpop.f32.mrf.mxu0
        %v4642 = vadd.f32 %v3901, %v4641
        %v4643 = vpop.f32.mrf.mxu0
        %v4644 = vadd.f32 %v3901, %v4643
        %4645 = vmatmul.bf16.gmra.mxu0 %v4253
        %v4646 = vpop.f32.mrf.mxu0
        %v4647 = vadd.f32 %v3901, %v4646
        %v4648 = vpop.f32.mrf.mxu0
        %v4649 = vadd.f32 %v3901, %v4648
        %4650 = vmatmul.bf16.gmra.mxu0 %v4256
        %v4651 = vpop.f32.mrf.mxu0
        %v4652 = vadd.f32 %v3901, %v4651
        %v4653 = vpop.f32.mrf.mxu0
        %v4654 = vadd.f32 %v3901, %v4653
        %4655 = vmatmul.bf16.gmra.mxu0 %v4259
        %v4656 = vpop.f32.mrf.mxu0
        %v4657 = vadd.f32 %v3901, %v4656
        %v4658 = vpop.f32.mrf.mxu0
        %v4659 = vadd.f32 %v3901, %v4658
        %4660 = vmatmul.bf16.gmra.mxu0 %v4262
        %v4661 = vpop.f32.mrf.mxu0
        %v4662 = vadd.f32 %v3901, %v4661
        %v4663 = vpop.f32.mrf.mxu0
        %v4664 = vadd.f32 %v3901, %v4663
        %4665 = vmatmul.bf16.gmra.mxu0 %v4265
        %v4666 = vpop.f32.mrf.mxu0
        %v4667 = vadd.f32 %v3901, %v4666
        %v4668 = vpop.f32.mrf.mxu0
        %v4669 = vadd.f32 %v3901, %v4668
        %4670 = vmatmul.bf16.gmra.mxu0 %v4268
        %v4671 = vpop.f32.mrf.mxu0
        %v4672 = vadd.f32 %v3901, %v4671
        %v4673 = vpop.f32.mrf.mxu0
        %v4674 = vadd.f32 %v3901, %v4673
        %4675 = vmatmul.bf16.gmra.mxu0 %v4271
        %v4676 = vpop.f32.mrf.mxu0
        %v4677 = vadd.f32 %v3901, %v4676
        %v4678 = vpop.f32.mrf.mxu0
        %v4679 = vadd.f32 %v3901, %v4678
        %4680 = vmatmul.bf16.gmra.mxu0 %v4274
        %v4681 = vpop.f32.mrf.mxu0
        %v4682 = vadd.f32 %v3901, %v4681
        %v4683 = vpop.f32.mrf.mxu0
        %v4684 = vadd.f32 %v3901, %v4683
        %4685 = vmatmul.bf16.gmra.mxu0 %v4277
        %v4686 = vpop.f32.mrf.mxu0
        %v4687 = vadd.f32 %v3901, %v4686
        %v4688 = vpop.f32.mrf.mxu0
        %v4689 = vadd.f32 %v3901, %v4688
        %4690 = vmatmul.bf16.gmra.mxu0 %v4280
        %v4691 = vpop.f32.mrf.mxu0
        %v4692 = vadd.f32 %v3901, %v4691
        %v4693 = vpop.f32.mrf.mxu0
        %v4694 = vadd.f32 %v3901, %v4693
        %4695 = vmatmul.bf16.gmra.mxu0 %v4283
        %v4696 = vpop.f32.mrf.mxu0
        %v4697 = vadd.f32 %v3901, %v4696
        %v4698 = vpop.f32.mrf.mxu0
        %v4699 = vadd.f32 %v3901, %v4698
        %4700 = vmatmul.bf16.gmra.mxu0 %v4286
        %v4701 = vpop.f32.mrf.mxu0
        %v4702 = vadd.f32 %v3901, %v4701
        %v4703 = vpop.f32.mrf.mxu0
        %v4704 = vadd.f32 %v3901, %v4703
        %4705 = vmatmul.bf16.gmra.mxu0 %v4289
        %v4706 = vpop.f32.mrf.mxu0
        %v4707 = vadd.f32 %v3901, %v4706
        %v4708 = vpop.f32.mrf.mxu0
        %v4709 = vadd.f32 %v3901, %v4708
        %4710 = vmatmul.bf16.gmra.mxu0 %v4292
        %v4711 = vpop.f32.mrf.mxu0
        %v4712 = vadd.f32 %v3901, %v4711
        %v4713 = vpop.f32.mrf.mxu0
        %v4714 = vadd.f32 %v3901, %v4713
        %4715 = vmatmul.bf16.gmra.mxu0 %v4295
        %v4716 = vpop.f32.mrf.mxu0
        %v4717 = vadd.f32 %v3901, %v4716
        %v4718 = vpop.f32.mrf.mxu0
        %v4719 = vadd.f32 %v3901, %v4718
        %4720 = vmatmul.bf16.gmra.mxu0 %v4298
        %v4721 = vpop.f32.mrf.mxu0
        %v4722 = vadd.f32 %v3901, %v4721
        %v4723 = vpop.f32.mrf.mxu0
        %v4724 = vadd.f32 %v3901, %v4723
        %4725 = vmatmul.bf16.gmra.mxu0 %v4301
        %v4726 = vpop.f32.mrf.mxu0
        %v4727 = vadd.f32 %v3901, %v4726
        %v4728 = vpop.f32.mrf.mxu0
        %v4729 = vadd.f32 %v3901, %v4728
        %4730 = vmatmul.bf16.gmra.mxu0 %v4304
        %v4731 = vpop.f32.mrf.mxu0
        %v4732 = vadd.f32 %v3901, %v4731
        %v4733 = vpop.f32.mrf.mxu0
        %v4734 = vadd.f32 %v3901, %v4733
        %4735 = vmatmul.bf16.gmra.mxu0 %v4307
        %v4736 = vpop.f32.mrf.mxu0
        %v4737 = vadd.f32 %v3901, %v4736
        %v4738 = vpop.f32.mrf.mxu0
        %v4739 = vadd.f32 %v3901, %v4738
        %4740 = vmatmul.bf16.gmra.mxu0 %v4310
        %v4741 = vpop.f32.mrf.mxu0
        %v4742 = vadd.f32 %v3901, %v4741
        %v4743 = vpop.f32.mrf.mxu0
        %v4744 = vadd.f32 %v3901, %v4743
        %4745 = vmatmul.bf16.gmra.mxu0 %v4313
        %v4746 = vpop.f32.mrf.mxu0
        %v4747 = vadd.f32 %v3901, %v4746
        %v4748 = vpop.f32.mrf.mxu0
        %v4749 = vadd.f32 %v3901, %v4748
        %4750 = vmatmul.bf16.gmra.mxu0 %v4316
        %v4751 = vpop.f32.mrf.mxu0
        %v4752 = vadd.f32 %v3901, %v4751
        %v4753 = vpop.f32.mrf.mxu0
        %v4754 = vadd.f32 %v3901, %v4753
        %4755 = vdwg.mxu0
        %4756 = vmatpush.bf16.msra.mxu0 %v4470
        %4757 = vmatpush.bf16.msra.mxu0 %v4469
        %4758 = vmatpush.bf16.msra.mxu0 %v4468
        %4759 = vmatpush.bf16.msra.mxu0 %v4467
        %4760 = vmatpush.bf16.msra.mxu0 %v4466
        %4761 = vmatpush.bf16.msra.mxu0 %v4465
        %4762 = vmatpush.bf16.msra.mxu0 %v4464
        %4763 = vmatpush.bf16.msra.mxu0 %v4463
        %4764 = vmatmul.bf16.gmra.mxu0 %v4224
        %v4765 = vpop.f32.mrf.mxu0
        %v4766 = vadd.f32 %v4597, %v4765
        %v4767 = vpop.f32.mrf.mxu0
        %v4768 = vadd.f32 %v4599, %v4767
        %4769 = vmatmul.bf16.gmra.mxu0 %v4227
        %v4770 = vpop.f32.mrf.mxu0
        %v4771 = vadd.f32 %v4602, %v4770
        %v4772 = vpop.f32.mrf.mxu0
        %v4773 = vadd.f32 %v4604, %v4772
        %4774 = vmatmul.bf16.gmra.mxu0 %v4230
        %v4775 = vpop.f32.mrf.mxu0
        %v4776 = vadd.f32 %v4607, %v4775
        %v4777 = vpop.f32.mrf.mxu0
        %v4778 = vadd.f32 %v4609, %v4777
        %4779 = vmatmul.bf16.gmra.mxu0 %v4233
        %v4780 = vpop.f32.mrf.mxu0
        %v4781 = vadd.f32 %v4612, %v4780
        %v4782 = vpop.f32.mrf.mxu0
        %v4783 = vadd.f32 %v4614, %v4782
        %4784 = vmatmul.bf16.gmra.mxu0 %v4236
        %v4785 = vpop.f32.mrf.mxu0
        %v4786 = vadd.f32 %v4617, %v4785
        %v4787 = vpop.f32.mrf.mxu0
        %v4788 = vadd.f32 %v4619, %v4787
        %4789 = vmatmul.bf16.gmra.mxu0 %v4239
        %v4790 = vpop.f32.mrf.mxu0
        %v4791 = vadd.f32 %v4622, %v4790
        %v4792 = vpop.f32.mrf.mxu0
        %v4793 = vadd.f32 %v4624, %v4792
        %4794 = vmatmul.bf16.gmra.mxu0 %v4242
        %v4795 = vpop.f32.mrf.mxu0
        %v4796 = vadd.f32 %v4627, %v4795
        %v4797 = vpop.f32.mrf.mxu0
        %v4798 = vadd.f32 %v4629, %v4797
        %4799 = vmatmul.bf16.gmra.mxu0 %v4245
        %v4800 = vpop.f32.mrf.mxu0
        %v4801 = vadd.f32 %v4632, %v4800
        %v4802 = vpop.f32.mrf.mxu0
        %v4803 = vadd.f32 %v4634, %v4802
        %4804 = vmatmul.bf16.gmra.mxu0 %v4248
        %v4805 = vpop.f32.mrf.mxu0
        %v4806 = vadd.f32 %v4637, %v4805
        %v4807 = vpop.f32.mrf.mxu0
        %v4808 = vadd.f32 %v4639, %v4807
        %4809 = vmatmul.bf16.gmra.mxu0 %v4251
        %v4810 = vpop.f32.mrf.mxu0
        %v4811 = vadd.f32 %v4642, %v4810
        %v4812 = vpop.f32.mrf.mxu0
        %v4813 = vadd.f32 %v4644, %v4812
        %4814 = vmatmul.bf16.gmra.mxu0 %v4254
        %v4815 = vpop.f32.mrf.mxu0
        %v4816 = vadd.f32 %v4647, %v4815
        %v4817 = vpop.f32.mrf.mxu0
        %v4818 = vadd.f32 %v4649, %v4817
        %4819 = vmatmul.bf16.gmra.mxu0 %v4257
        %v4820 = vpop.f32.mrf.mxu0
        %v4821 = vadd.f32 %v4652, %v4820
        %v4822 = vpop.f32.mrf.mxu0
        %v4823 = vadd.f32 %v4654, %v4822
        %4824 = vmatmul.bf16.gmra.mxu0 %v4260
        %v4825 = vpop.f32.mrf.mxu0
        %v4826 = vadd.f32 %v4657, %v4825
        %v4827 = vpop.f32.mrf.mxu0
        %v4828 = vadd.f32 %v4659, %v4827
        %4829 = vmatmul.bf16.gmra.mxu0 %v4263
        %v4830 = vpop.f32.mrf.mxu0
        %v4831 = vadd.f32 %v4662, %v4830
        %v4832 = vpop.f32.mrf.mxu0
        %v4833 = vadd.f32 %v4664, %v4832
        %4834 = vmatmul.bf16.gmra.mxu0 %v4266
        %v4835 = vpop.f32.mrf.mxu0
        %v4836 = vadd.f32 %v4667, %v4835
        %v4837 = vpop.f32.mrf.mxu0
        %v4838 = vadd.f32 %v4669, %v4837
        %4839 = vmatmul.bf16.gmra.mxu0 %v4269
        %v4840 = vpop.f32.mrf.mxu0
        %v4841 = vadd.f32 %v4672, %v4840
        %v4842 = vpop.f32.mrf.mxu0
        %v4843 = vadd.f32 %v4674, %v4842
        %4844 = vmatmul.bf16.gmra.mxu0 %v4272
        %v4845 = vpop.f32.mrf.mxu0
        %v4846 = vadd.f32 %v4677, %v4845
        %v4847 = vpop.f32.mrf.mxu0
        %v4848 = vadd.f32 %v4679, %v4847
        %4849 = vmatmul.bf16.gmra.mxu0 %v4275
        %v4850 = vpop.f32.mrf.mxu0
        %v4851 = vadd.f32 %v4682, %v4850
        %v4852 = vpop.f32.mrf.mxu0
        %v4853 = vadd.f32 %v4684, %v4852
        %4854 = vmatmul.bf16.gmra.mxu0 %v4278
        %v4855 = vpop.f32.mrf.mxu0
        %v4856 = vadd.f32 %v4687, %v4855
        %v4857 = vpop.f32.mrf.mxu0
        %v4858 = vadd.f32 %v4689, %v4857
        %4859 = vmatmul.bf16.gmra.mxu0 %v4281
        %v4860 = vpop.f32.mrf.mxu0
        %v4861 = vadd.f32 %v4692, %v4860
        %v4862 = vpop.f32.mrf.mxu0
        %v4863 = vadd.f32 %v4694, %v4862
        %4864 = vmatmul.bf16.gmra.mxu0 %v4284
        %v4865 = vpop.f32.mrf.mxu0
        %v4866 = vadd.f32 %v4697, %v4865
        %v4867 = vpop.f32.mrf.mxu0
        %v4868 = vadd.f32 %v4699, %v4867
        %4869 = vmatmul.bf16.gmra.mxu0 %v4287
        %v4870 = vpop.f32.mrf.mxu0
        %v4871 = vadd.f32 %v4702, %v4870
        %v4872 = vpop.f32.mrf.mxu0
        %v4873 = vadd.f32 %v4704, %v4872
        %4874 = vmatmul.bf16.gmra.mxu0 %v4290
        %v4875 = vpop.f32.mrf.mxu0
        %v4876 = vadd.f32 %v4707, %v4875
        %v4877 = vpop.f32.mrf.mxu0
        %v4878 = vadd.f32 %v4709, %v4877
        %4879 = vmatmul.bf16.gmra.mxu0 %v4293
        %v4880 = vpop.f32.mrf.mxu0
        %v4881 = vadd.f32 %v4712, %v4880
        %v4882 = vpop.f32.mrf.mxu0
        %v4883 = vadd.f32 %v4714, %v4882
        %4884 = vmatmul.bf16.gmra.mxu0 %v4296
        %v4885 = vpop.f32.mrf.mxu0
        %v4886 = vadd.f32 %v4717, %v4885
        %v4887 = vpop.f32.mrf.mxu0
        %v4888 = vadd.f32 %v4719, %v4887
        %4889 = vmatmul.bf16.gmra.mxu0 %v4299
        %v4890 = vpop.f32.mrf.mxu0
        %v4891 = vadd.f32 %v4722, %v4890
        %v4892 = vpop.f32.mrf.mxu0
        %v4893 = vadd.f32 %v4724, %v4892
        %4894 = vmatmul.bf16.gmra.mxu0 %v4302
        %v4895 = vpop.f32.mrf.mxu0
        %v4896 = vadd.f32 %v4727, %v4895
        %v4897 = vpop.f32.mrf.mxu0
        %v4898 = vadd.f32 %v4729, %v4897
        %4899 = vmatmul.bf16.gmra.mxu0 %v4305
        %v4900 = vpop.f32.mrf.mxu0
        %v4901 = vadd.f32 %v4732, %v4900
        %v4902 = vpop.f32.mrf.mxu0
        %v4903 = vadd.f32 %v4734, %v4902
        %4904 = vmatmul.bf16.gmra.mxu0 %v4308
        %v4905 = vpop.f32.mrf.mxu0
        %v4906 = vadd.f32 %v4737, %v4905
        %v4907 = vpop.f32.mrf.mxu0
        %v4908 = vadd.f32 %v4739, %v4907
        %4909 = vmatmul.bf16.gmra.mxu0 %v4311
        %v4910 = vpop.f32.mrf.mxu0
        %v4911 = vadd.f32 %v4742, %v4910
        %v4912 = vpop.f32.mrf.mxu0
        %v4913 = vadd.f32 %v4744, %v4912
        %4914 = vmatmul.bf16.gmra.mxu0 %v4314
        %v4915 = vpop.f32.mrf.mxu0
        %v4916 = vadd.f32 %v4747, %v4915
        %v4917 = vpop.f32.mrf.mxu0
        %v4918 = vadd.f32 %v4749, %v4917
        %4919 = vmatmul.bf16.gmra.mxu0 %v4317
        %v4920 = vpop.f32.mrf.mxu0
        %v4921 = vadd.f32 %v4752, %v4920
        %v4922 = vpop.f32.mrf.mxu0
        %v4923 = vadd.f32 %v4754, %v4922
        %4924 = vdwg.mxu0
        %4925 = vmatpush.bf16.msra.mxu0 0
        %4926 = vmatpush.bf16.msra.mxu0 0
        %4927 = vmatpush.bf16.msra.mxu0 0
        %4928 = vmatpush.bf16.msra.mxu0 0
        %4929 = vmatpush.bf16.msra.mxu0 0
        %4930 = vmatpush.bf16.msra.mxu0 0
        %4931 = vmatpush.bf16.msra.mxu0 %v4472
        %4932 = vmatpush.bf16.msra.mxu0 %v4471
        %4933 = vmatmul.bf16.gmra.mxu0 %v4492
        %v4934 = vpop.f32.mrf.mxu0
        %v4935 = vadd.f32 %v4766, %v4934
        %v4936 = vpop.f32.mrf.mxu0
        %v4937 = vadd.f32 %v4768, %v4936
        %4938 = vmatmul.bf16.gmra.mxu0 %v4495
        %v4939 = vpop.f32.mrf.mxu0
        %v4940 = vadd.f32 %v4771, %v4939
        %v4941 = vpop.f32.mrf.mxu0
        %v4942 = vadd.f32 %v4773, %v4941
        %4943 = vmatmul.bf16.gmra.mxu0 %v4498
        %v4944 = vpop.f32.mrf.mxu0
        %v4945 = vadd.f32 %v4776, %v4944
        %v4946 = vpop.f32.mrf.mxu0
        %v4947 = vadd.f32 %v4778, %v4946
        %4948 = vmatmul.bf16.gmra.mxu0 %v4501
        %v4949 = vpop.f32.mrf.mxu0
        %v4950 = vadd.f32 %v4781, %v4949
        %v4951 = vpop.f32.mrf.mxu0
        %v4952 = vadd.f32 %v4783, %v4951
        %4953 = vmatmul.bf16.gmra.mxu0 %v4504
        %v4954 = vpop.f32.mrf.mxu0
        %v4955 = vadd.f32 %v4786, %v4954
        %v4956 = vpop.f32.mrf.mxu0
        %v4957 = vadd.f32 %v4788, %v4956
        %4958 = vmatmul.bf16.gmra.mxu0 %v4507
        %v4959 = vpop.f32.mrf.mxu0
        %v4960 = vadd.f32 %v4791, %v4959
        %v4961 = vpop.f32.mrf.mxu0
        %v4962 = vadd.f32 %v4793, %v4961
        %4963 = vmatmul.bf16.gmra.mxu0 %v4510
        %v4964 = vpop.f32.mrf.mxu0
        %v4965 = vadd.f32 %v4796, %v4964
        %v4966 = vpop.f32.mrf.mxu0
        %v4967 = vadd.f32 %v4798, %v4966
        %4968 = vmatmul.bf16.gmra.mxu0 %v4513
        %v4969 = vpop.f32.mrf.mxu0
        %v4970 = vadd.f32 %v4801, %v4969
        %v4971 = vpop.f32.mrf.mxu0
        %v4972 = vadd.f32 %v4803, %v4971
        %4973 = vmatmul.bf16.gmra.mxu0 %v4516
        %v4974 = vpop.f32.mrf.mxu0
        %v4975 = vadd.f32 %v4806, %v4974
        %v4976 = vpop.f32.mrf.mxu0
        %v4977 = vadd.f32 %v4808, %v4976
        %4978 = vmatmul.bf16.gmra.mxu0 %v4519
        %v4979 = vpop.f32.mrf.mxu0
        %v4980 = vadd.f32 %v4811, %v4979
        %v4981 = vpop.f32.mrf.mxu0
        %v4982 = vadd.f32 %v4813, %v4981
        %4983 = vmatmul.bf16.gmra.mxu0 %v4522
        %v4984 = vpop.f32.mrf.mxu0
        %v4985 = vadd.f32 %v4816, %v4984
        %v4986 = vpop.f32.mrf.mxu0
        %v4987 = vadd.f32 %v4818, %v4986
        %4988 = vmatmul.bf16.gmra.mxu0 %v4525
        %v4989 = vpop.f32.mrf.mxu0
        %v4990 = vadd.f32 %v4821, %v4989
        %v4991 = vpop.f32.mrf.mxu0
        %v4992 = vadd.f32 %v4823, %v4991
        %4993 = vmatmul.bf16.gmra.mxu0 %v4528
        %v4994 = vpop.f32.mrf.mxu0
        %v4995 = vadd.f32 %v4826, %v4994
        %v4996 = vpop.f32.mrf.mxu0
        %v4997 = vadd.f32 %v4828, %v4996
        %4998 = vmatmul.bf16.gmra.mxu0 %v4531
        %v4999 = vpop.f32.mrf.mxu0
        %v5000 = vadd.f32 %v4831, %v4999
        %v5001 = vpop.f32.mrf.mxu0
        %v5002 = vadd.f32 %v4833, %v5001
        %5003 = vmatmul.bf16.gmra.mxu0 %v4534
        %v5004 = vpop.f32.mrf.mxu0
        %v5005 = vadd.f32 %v4836, %v5004
        %v5006 = vpop.f32.mrf.mxu0
        %v5007 = vadd.f32 %v4838, %v5006
        %5008 = vmatmul.bf16.gmra.mxu0 %v4537
        %v5009 = vpop.f32.mrf.mxu0
        %v5010 = vadd.f32 %v4841, %v5009
        %v5011 = vpop.f32.mrf.mxu0
        %v5012 = vadd.f32 %v4843, %v5011
        %5013 = vmatmul.bf16.gmra.mxu0 %v4540
        %v5014 = vpop.f32.mrf.mxu0
        %v5015 = vadd.f32 %v4846, %v5014
        %v5016 = vpop.f32.mrf.mxu0
        %v5017 = vadd.f32 %v4848, %v5016
        %5018 = vmatmul.bf16.gmra.mxu0 %v4543
        %v5019 = vpop.f32.mrf.mxu0
        %v5020 = vadd.f32 %v4851, %v5019
        %v5021 = vpop.f32.mrf.mxu0
        %v5022 = vadd.f32 %v4853, %v5021
        %5023 = vmatmul.bf16.gmra.mxu0 %v4546
        %v5024 = vpop.f32.mrf.mxu0
        %v5025 = vadd.f32 %v4856, %v5024
        %v5026 = vpop.f32.mrf.mxu0
        %v5027 = vadd.f32 %v4858, %v5026
        %5028 = vmatmul.bf16.gmra.mxu0 %v4549
        %v5029 = vpop.f32.mrf.mxu0
        %v5030 = vadd.f32 %v4861, %v5029
        %v5031 = vpop.f32.mrf.mxu0
        %v5032 = vadd.f32 %v4863, %v5031
        %5033 = vmatmul.bf16.gmra.mxu0 %v4552
        %v5034 = vpop.f32.mrf.mxu0
        %v5035 = vadd.f32 %v4866, %v5034
        %v5036 = vpop.f32.mrf.mxu0
        %v5037 = vadd.f32 %v4868, %v5036
        %5038 = vmatmul.bf16.gmra.mxu0 %v4555
        %v5039 = vpop.f32.mrf.mxu0
        %v5040 = vadd.f32 %v4871, %v5039
        %v5041 = vpop.f32.mrf.mxu0
        %v5042 = vadd.f32 %v4873, %v5041
        %5043 = vmatmul.bf16.gmra.mxu0 %v4558
        %v5044 = vpop.f32.mrf.mxu0
        %v5045 = vadd.f32 %v4876, %v5044
        %v5046 = vpop.f32.mrf.mxu0
        %v5047 = vadd.f32 %v4878, %v5046
        %5048 = vmatmul.bf16.gmra.mxu0 %v4561
        %v5049 = vpop.f32.mrf.mxu0
        %v5050 = vadd.f32 %v4881, %v5049
        %v5051 = vpop.f32.mrf.mxu0
        %v5052 = vadd.f32 %v4883, %v5051
        %5053 = vmatmul.bf16.gmra.mxu0 %v4564
        %v5054 = vpop.f32.mrf.mxu0
        %v5055 = vadd.f32 %v4886, %v5054
        %v5056 = vpop.f32.mrf.mxu0
        %v5057 = vadd.f32 %v4888, %v5056
        %5058 = vmatmul.bf16.gmra.mxu0 %v4567
        %v5059 = vpop.f32.mrf.mxu0
        %v5060 = vadd.f32 %v4891, %v5059
        %v5061 = vpop.f32.mrf.mxu0
        %v5062 = vadd.f32 %v4893, %v5061
        %5063 = vmatmul.bf16.gmra.mxu0 %v4570
        %v5064 = vpop.f32.mrf.mxu0
        %v5065 = vadd.f32 %v4896, %v5064
        %v5066 = vpop.f32.mrf.mxu0
        %v5067 = vadd.f32 %v4898, %v5066
        %5068 = vmatmul.bf16.gmra.mxu0 %v4573
        %v5069 = vpop.f32.mrf.mxu0
        %v5070 = vadd.f32 %v4901, %v5069
        %v5071 = vpop.f32.mrf.mxu0
        %v5072 = vadd.f32 %v4903, %v5071
        %5073 = vmatmul.bf16.gmra.mxu0 %v4576
        %v5074 = vpop.f32.mrf.mxu0
        %v5075 = vadd.f32 %v4906, %v5074
        %v5076 = vpop.f32.mrf.mxu0
        %v5077 = vadd.f32 %v4908, %v5076
        %5078 = vmatmul.bf16.gmra.mxu0 %v4579
        %v5079 = vpop.f32.mrf.mxu0
        %v5080 = vadd.f32 %v4911, %v5079
        %v5081 = vpop.f32.mrf.mxu0
        %v5082 = vadd.f32 %v4913, %v5081
        %5083 = vmatmul.bf16.gmra.mxu0 %v4582
        %v5084 = vpop.f32.mrf.mxu0
        %v5085 = vadd.f32 %v4916, %v5084
        %v5086 = vpop.f32.mrf.mxu0
        %v5087 = vadd.f32 %v4918, %v5086
        %5088 = vmatmul.bf16.gmra.mxu0 %v4585
        %v5089 = vpop.f32.mrf.mxu0
        %v5090 = vadd.f32 %v4921, %v5089
        %v5091 = vpop.f32.mrf.mxu0
        %v5092 = vadd.f32 %v4923, %v5091
        %5093 = vdwg.mxu0
        %v5094 = vmax.f32 %v4935, 0.0
        %v5095 = vmax.f32 %v4937, 0.0
        %v5096 = vmax.f32 %v4940, 0.0
        %v5097 = vmax.f32 %v4942, 0.0
        %v5098 = vmax.f32 %v4945, 0.0
        %v5099 = vmax.f32 %v4947, 0.0
        %v5100 = vmax.f32 %v4950, 0.0
        %v5101 = vmax.f32 %v4952, 0.0
        %v5102 = vmax.f32 %v4955, 0.0
        %v5103 = vmax.f32 %v4957, 0.0
        %v5104 = vmax.f32 %v4960, 0.0
        %v5105 = vmax.f32 %v4962, 0.0
        %v5106 = vmax.f32 %v4965, 0.0
        %v5107 = vmax.f32 %v4967, 0.0
        %v5108 = vmax.f32 %v4970, 0.0
        %v5109 = vmax.f32 %v4972, 0.0
        %v5110 = vmax.f32 %v4975, 0.0
        %v5111 = vmax.f32 %v4977, 0.0
        %v5112 = vmax.f32 %v4980, 0.0
        %v5113 = vmax.f32 %v4982, 0.0
        %v5114 = vmax.f32 %v4985, 0.0
        %v5115 = vmax.f32 %v4987, 0.0
        %v5116 = vmax.f32 %v4990, 0.0
        %v5117 = vmax.f32 %v4992, 0.0
        %v5118 = vmax.f32 %v4995, 0.0
        %v5119 = vmax.f32 %v4997, 0.0
        %v5120 = vmax.f32 %v5000, 0.0
        %v5121 = vmax.f32 %v5002, 0.0
        %v5122 = vmax.f32 %v5005, 0.0
        %v5123 = vmax.f32 %v5007, 0.0
        %v5124 = vmax.f32 %v5010, 0.0
        %v5125 = vmax.f32 %v5012, 0.0
        %v5126 = vmax.f32 %v5015, 0.0
        %v5127 = vmax.f32 %v5017, 0.0
        %v5128 = vmax.f32 %v5020, 0.0
        %v5129 = vmax.f32 %v5022, 0.0
        %v5130 = vmax.f32 %v5025, 0.0
        %v5131 = vmax.f32 %v5027, 0.0
        %v5132 = vmax.f32 %v5030, 0.0
        %v5133 = vmax.f32 %v5032, 0.0
        %v5134 = vmax.f32 %v5035, 0.0
        %v5135 = vmax.f32 %v5037, 0.0
        %v5136 = vmax.f32 %v5040, 0.0
        %v5137 = vmax.f32 %v5042, 0.0
        %v5138 = vmax.f32 %v5045, 0.0
        %v5139 = vmax.f32 %v5047, 0.0
        %v5140 = vmax.f32 %v5050, 0.0
        %v5141 = vmax.f32 %v5052, 0.0
        %v5142 = vmax.f32 %v5055, 0.0
        %v5143 = vmax.f32 %v5057, 0.0
        %v5144 = vmax.f32 %v5060, 0.0
        %v5145 = vmax.f32 %v5062, 0.0
        %v5146 = vmax.f32 %v5065, 0.0
        %v5147 = vmax.f32 %v5067, 0.0
        %v5148 = vmax.f32 %v5070, 0.0
        %v5149 = vmax.f32 %v5072, 0.0
        %v5150 = vmax.f32 %v5075, 0.0
        %v5151 = vmax.f32 %v5077, 0.0
        %v5152 = vmax.f32 %v5080, 0.0
        %v5153 = vmax.f32 %v5082, 0.0
        %v5154 = vmax.f32 %v5085, 0.0
        %v5155 = vmax.f32 %v5087, 0.0
        %v5156 = vmax.f32 %v5090, 0.0
        %v5157 = vmax.f32 %v5092, 0.0
        %5158 = vst.msk [vmem:[%s401 + $0x1] sm:$0xff] %vm249, %v5094
        %5159 = vst.msk [vmem:[%s401 + $0x9] sm:$0xff] %vm249, %v5095
        %5160 = vst.msk [vmem:[%s401 + $0x19] sm:$0xff] %vm249, %v5096
        %5161 = vst.msk [vmem:[%s401 + $0x21] sm:$0xff] %vm249, %v5097
        %5162 = vst.msk [vmem:[%s401 + $0x31] sm:$0xff] %vm249, %v5098
        %5163 = vst.msk [vmem:[%s401 + $0x39] sm:$0xff] %vm249, %v5099
        %5164 = vst.msk [vmem:[%s401 + $0x49] sm:$0xff] %vm249, %v5100
        %5165 = vst.msk [vmem:[%s401 + $0x51] sm:$0xff] %vm249, %v5101
        %5166 = vst.msk [vmem:[%s401 + $0x61] sm:$0xff] %vm249, %v5102
        %5167 = vst.msk [vmem:[%s401 + $0x69] sm:$0xff] %vm249, %v5103
        %5168 = vst.msk [vmem:[%s401 + $0x79] sm:$0xff] %vm249, %v5104
        %5169 = vst.msk [vmem:[%s401 + $0x81] sm:$0xff] %vm249, %v5105
        %5170 = vst.msk [vmem:[%s401 + $0x91] sm:$0xff] %vm249, %v5106
        %5171 = vst.msk [vmem:[%s401 + $0x99] sm:$0xff] %vm249, %v5107
        %5172 = vst.msk [vmem:[%s401 + $0xa9] sm:$0xff] %vm249, %v5108
        %5173 = vst.msk [vmem:[%s401 + $0xb1] sm:$0xff] %vm249, %v5109
        %5174 = vst.msk [vmem:[%s401 + $0xc1] sm:$0xff] %vm249, %v5110
        %5175 = vst.msk [vmem:[%s401 + $0xc9] sm:$0xff] %vm249, %v5111
        %5176 = vst.msk [vmem:[%s401 + $0xd9] sm:$0xff] %vm249, %v5112
        %5177 = vst.msk [vmem:[%s401 + $0xe1] sm:$0xff] %vm249, %v5113
        %5178 = vst.msk [vmem:[%s401 + $0xf1] sm:$0xff] %vm249, %v5114
        %5179 = vst.msk [vmem:[%s401 + $0xf9] sm:$0xff] %vm249, %v5115
        %5180 = vst.msk [vmem:[%s401 + $0x109] sm:$0xff] %vm249, %v5116
        %5181 = vst.msk [vmem:[%s401 + $0x111] sm:$0xff] %vm249, %v5117
        %5182 = vst.msk [vmem:[%s401 + $0x121] sm:$0xff] %vm249, %v5118
        %5183 = vst.msk [vmem:[%s401 + $0x129] sm:$0xff] %vm249, %v5119
        %5184 = vst.msk [vmem:[%s401 + $0x139] sm:$0xff] %vm249, %v5120
        %5185 = vst.msk [vmem:[%s401 + $0x141] sm:$0xff] %vm249, %v5121
        %5186 = vst.msk [vmem:[%s401 + $0x151] sm:$0xff] %vm249, %v5122
        %5187 = vst.msk [vmem:[%s401 + $0x159] sm:$0xff] %vm249, %v5123
        %5188 = vst.msk [vmem:[%s401 + $0x169] sm:$0xff] %vm249, %v5124
        %5189 = vst.msk [vmem:[%s401 + $0x171] sm:$0xff] %vm249, %v5125
        %5190 = vst.msk [vmem:[%s401 + $0x1b1] sm:$0xff] %vm249, %v5126
        %5191 = vst.msk [vmem:[%s401 + $0x1b9] sm:$0xff] %vm249, %v5127
        %5192 = vst.msk [vmem:[%s401 + $0x1c9] sm:$0xff] %vm249, %v5128
        %5193 = vst.msk [vmem:[%s401 + $0x1d1] sm:$0xff] %vm249, %v5129
        %5194 = vst.msk [vmem:[%s401 + $0x1e1] sm:$0xff] %vm249, %v5130
        %5195 = vst.msk [vmem:[%s401 + $0x1e9] sm:$0xff] %vm249, %v5131
        %5196 = vst.msk [vmem:[%s401 + $0x1f9] sm:$0xff] %vm249, %v5132
        %5197 = vst.msk [vmem:[%s401 + $0x201] sm:$0xff] %vm249, %v5133
        %5198 = vst.msk [vmem:[%s401 + $0x211] sm:$0xff] %vm249, %v5134
        %5199 = vst.msk [vmem:[%s401 + $0x219] sm:$0xff] %vm249, %v5135
        %5200 = vst.msk [vmem:[%s401 + $0x229] sm:$0xff] %vm249, %v5136
        %5201 = vst.msk [vmem:[%s401 + $0x231] sm:$0xff] %vm249, %v5137
        %5202 = vst.msk [vmem:[%s401 + $0x241] sm:$0xff] %vm249, %v5138
        %5203 = vst.msk [vmem:[%s401 + $0x249] sm:$0xff] %vm249, %v5139
        %5204 = vst.msk [vmem:[%s401 + $0x259] sm:$0xff] %vm249, %v5140
        %5205 = vst.msk [vmem:[%s401 + $0x261] sm:$0xff] %vm249, %v5141
        %5206 = vst.msk [vmem:[%s401 + $0x271] sm:$0xff] %vm249, %v5142
        %5207 = vst.msk [vmem:[%s401 + $0x279] sm:$0xff] %vm249, %v5143
        %5208 = vst.msk [vmem:[%s401 + $0x289] sm:$0xff] %vm249, %v5144
        %5209 = vst.msk [vmem:[%s401 + $0x291] sm:$0xff] %vm249, %v5145
        %5210 = vst.msk [vmem:[%s401 + $0x2a1] sm:$0xff] %vm249, %v5146
        %5211 = vst.msk [vmem:[%s401 + $0x2a9] sm:$0xff] %vm249, %v5147
        %5212 = vst.msk [vmem:[%s401 + $0x2b9] sm:$0xff] %vm249, %v5148
        %5213 = vst.msk [vmem:[%s401 + $0x2c1] sm:$0xff] %vm249, %v5149
        %5214 = vst.msk [vmem:[%s401 + $0x2d1] sm:$0xff] %vm249, %v5150
        %5215 = vst.msk [vmem:[%s401 + $0x2d9] sm:$0xff] %vm249, %v5151
        %5216 = vst.msk [vmem:[%s401 + $0x2e9] sm:$0xff] %vm249, %v5152
        %5217 = vst.msk [vmem:[%s401 + $0x2f1] sm:$0xff] %vm249, %v5153
        %5218 = vst.msk [vmem:[%s401 + $0x301] sm:$0xff] %vm249, %v5154
        %5219 = vst.msk [vmem:[%s401 + $0x309] sm:$0xff] %vm249, %v5155
        %5220 = vst.msk [vmem:[%s401 + $0x319] sm:$0xff] %vm249, %v5156
        %5221 = vst.msk [vmem:[%s401 + $0x321] sm:$0xff] %vm249, %v5157
        %v5222 = vld [vmem:[#allocation2] sm:$0xff]
        %v5223 = vld [vmem:[#allocation2 + $0x8] sm:$0xff]
        %v5224 = vld [vmem:[#allocation2 + $0x18] sm:$0xff]
        %v5225 = vld [vmem:[#allocation2 + $0x20] sm:$0xff]
        %v5226 = vld [vmem:[#allocation2 + $0x30] sm:$0xff]
        %v5227 = vld [vmem:[#allocation2 + $0x38] sm:$0xff]
        %v5228 = vld [vmem:[#allocation2 + $0x48] sm:$0xff]
        %v5229 = vld [vmem:[#allocation2 + $0x50] sm:$0xff]
        %v5230 = vld [vmem:[#allocation2 + $0x60] sm:$0xff]
        %v5231 = vld [vmem:[#allocation2 + $0x68] sm:$0xff]
        %v5232 = vld [vmem:[#allocation2 + $0x78] sm:$0xff]
        %v5233 = vld [vmem:[#allocation2 + $0x80] sm:$0xff]
        %v5234 = vld [vmem:[#allocation2 + $0x90] sm:$0xff]
        %v5235 = vld [vmem:[#allocation2 + $0x98] sm:$0xff]
        %v5236 = vld [vmem:[#allocation2 + $0xa8] sm:$0xff]
        %v5237 = vld [vmem:[#allocation2 + $0xb0] sm:$0xff]
        %v5238 = vld [vmem:[#allocation2 + $0xc0] sm:$0xff]
        %v5239 = vld [vmem:[#allocation2 + $0xc8] sm:$0xff]
        %v5240 = vld [vmem:[#allocation2 + $0xd8] sm:$0xff]
        %v5241 = vld [vmem:[#allocation2 + $0xe0] sm:$0xff]
        %v5242 = vld [vmem:[#allocation2 + $0xf0] sm:$0xff]
        %v5243 = vld [vmem:[#allocation2 + $0xf8] sm:$0xff]
        %v5244 = vld [vmem:[#allocation2 + $0x108] sm:$0xff]
        %v5245 = vld [vmem:[#allocation2 + $0x110] sm:$0xff]
        %v5246 = vld [vmem:[#allocation2 + $0x120] sm:$0xff]
        %v5247 = vld [vmem:[#allocation2 + $0x128] sm:$0xff]
        %v5248 = vld [vmem:[#allocation2 + $0x138] sm:$0xff]
        %v5249 = vld [vmem:[#allocation2 + $0x140] sm:$0xff]
        %v5250 = vld [vmem:[#allocation2 + $0x150] sm:$0xff]
        %v5251 = vld [vmem:[#allocation2 + $0x158] sm:$0xff]
        %v5252 = vld [vmem:[#allocation2 + $0x168] sm:$0xff]
        %v5253 = vld [vmem:[#allocation2 + $0x170] sm:$0xff]
        %v5254 = vld [vmem:[#allocation2 + $0x1b0] sm:$0xff]
        %v5255 = vld [vmem:[#allocation2 + $0x1b8] sm:$0xff]
        %v5256 = vld [vmem:[#allocation2 + $0x1c8] sm:$0xff]
        %v5257 = vld [vmem:[#allocation2 + $0x1d0] sm:$0xff]
        %v5258 = vld [vmem:[#allocation2 + $0x1e0] sm:$0xff]
        %v5259 = vld [vmem:[#allocation2 + $0x1e8] sm:$0xff]
        %v5260 = vld [vmem:[#allocation2 + $0x1f8] sm:$0xff]
        %v5261 = vld [vmem:[#allocation2 + $0x200] sm:$0xff]
        %v5262 = vld [vmem:[#allocation2 + $0x210] sm:$0xff]
        %v5263 = vld [vmem:[#allocation2 + $0x218] sm:$0xff]
        %v5264 = vld [vmem:[#allocation2 + $0x228] sm:$0xff]
        %v5265 = vld [vmem:[#allocation2 + $0x230] sm:$0xff]
        %v5266 = vld [vmem:[#allocation2 + $0x240] sm:$0xff]
        %v5267 = vld [vmem:[#allocation2 + $0x248] sm:$0xff]
        %v5268 = vld [vmem:[#allocation2 + $0x258] sm:$0xff]
        %v5269 = vld [vmem:[#allocation2 + $0x260] sm:$0xff]
        %v5270 = vld [vmem:[#allocation2 + $0x270] sm:$0xff]
        %v5271 = vld [vmem:[#allocation2 + $0x278] sm:$0xff]
        %v5272 = vld [vmem:[#allocation2 + $0x288] sm:$0xff]
        %v5273 = vld [vmem:[#allocation2 + $0x290] sm:$0xff]
        %v5274 = vld [vmem:[#allocation2 + $0x2a0] sm:$0xff]
        %v5275 = vld [vmem:[#allocation2 + $0x2a8] sm:$0xff]
        %v5276 = vld [vmem:[#allocation2 + $0x2b8] sm:$0xff]
        %v5277 = vld [vmem:[#allocation2 + $0x2c0] sm:$0xff]
        %v5278 = vld [vmem:[#allocation2 + $0x2d0] sm:$0xff]
        %v5279 = vld [vmem:[#allocation2 + $0x2d8] sm:$0xff]
        %v5280 = vld [vmem:[#allocation2 + $0x2e8] sm:$0xff]
        %v5281 = vld [vmem:[#allocation2 + $0x2f0] sm:$0xff]
        %v5282 = vld [vmem:[#allocation2 + $0x300] sm:$0xff]
        %v5283 = vld [vmem:[#allocation2 + $0x308] sm:$0xff]
        %v5284 = vld [vmem:[#allocation2 + $0x318] sm:$0xff]
        %v5285 = vld [vmem:[#allocation2 + $0x320] sm:$0xff]
        %v5286 = vpack.c.bf16 %v5222, %v5222
        %v5287 = vpack.c.bf16 %v5223, %v5223
        %v5288 = vpack.c.bf16 %v5224, %v5224
        %v5289 = vpack.c.bf16 %v5225, %v5225
        %v5290 = vpack.c.bf16 %v5226, %v5226
        %v5291 = vpack.c.bf16 %v5227, %v5227
        %v5292 = vpack.c.bf16 %v5228, %v5228
        %v5293 = vpack.c.bf16 %v5229, %v5229
        %v5294 = vpack.c.bf16 %v5230, %v5230
        %v5295 = vpack.c.bf16 %v5231, %v5231
        %v5296 = vpack.c.bf16 %v5232, %v5232
        %v5297 = vpack.c.bf16 %v5233, %v5233
        %v5298 = vpack.c.bf16 %v5234, %v5234
        %v5299 = vpack.c.bf16 %v5235, %v5235
        %v5300 = vpack.c.bf16 %v5236, %v5236
        %v5301 = vpack.c.bf16 %v5237, %v5237
        %v5302 = vpack.c.bf16 %v5238, %v5238
        %v5303 = vpack.c.bf16 %v5239, %v5239
        %v5304 = vpack.c.bf16 %v5240, %v5240
        %v5305 = vpack.c.bf16 %v5241, %v5241
        %v5306 = vpack.c.bf16 %v5242, %v5242
        %v5307 = vpack.c.bf16 %v5243, %v5243
        %v5308 = vpack.c.bf16 %v5244, %v5244
        %v5309 = vpack.c.bf16 %v5245, %v5245
        %v5310 = vpack.c.bf16 %v5246, %v5246
        %v5311 = vpack.c.bf16 %v5247, %v5247
        %v5312 = vpack.c.bf16 %v5248, %v5248
        %v5313 = vpack.c.bf16 %v5249, %v5249
        %v5314 = vpack.c.bf16 %v5250, %v5250
        %v5315 = vpack.c.bf16 %v5251, %v5251
        %v5316 = vpack.c.bf16 %v5252, %v5252
        %v5317 = vpack.c.bf16 %v5253, %v5253
        %v5318 = vpack.c.bf16 %v5254, %v5254
        %v5319 = vpack.c.bf16 %v5255, %v5255
        %v5320 = vpack.c.bf16 %v5256, %v5256
        %v5321 = vpack.c.bf16 %v5257, %v5257
        %v5322 = vpack.c.bf16 %v5258, %v5258
        %v5323 = vpack.c.bf16 %v5259, %v5259
        %v5324 = vpack.c.bf16 %v5260, %v5260
        %v5325 = vpack.c.bf16 %v5261, %v5261
        %v5326 = vpack.c.bf16 %v5262, %v5262
        %v5327 = vpack.c.bf16 %v5263, %v5263
        %v5328 = vpack.c.bf16 %v5264, %v5264
        %v5329 = vpack.c.bf16 %v5265, %v5265
        %v5330 = vpack.c.bf16 %v5266, %v5266
        %v5331 = vpack.c.bf16 %v5267, %v5267
        %v5332 = vpack.c.bf16 %v5268, %v5268
        %v5333 = vpack.c.bf16 %v5269, %v5269
        %v5334 = vpack.c.bf16 %v5270, %v5270
        %v5335 = vpack.c.bf16 %v5271, %v5271
        %v5336 = vpack.c.bf16 %v5272, %v5272
        %v5337 = vpack.c.bf16 %v5273, %v5273
        %v5338 = vpack.c.bf16 %v5274, %v5274
        %v5339 = vpack.c.bf16 %v5275, %v5275
        %v5340 = vpack.c.bf16 %v5276, %v5276
        %v5341 = vpack.c.bf16 %v5277, %v5277
        %v5342 = vpack.c.bf16 %v5278, %v5278
        %v5343 = vpack.c.bf16 %v5279, %v5279
        %v5344 = vpack.c.bf16 %v5280, %v5280
        %v5345 = vpack.c.bf16 %v5281, %v5281
        %v5346 = vpack.c.bf16 %v5282, %v5282
        %v5347 = vpack.c.bf16 %v5283, %v5283
        %v5348 = vpack.c.bf16 %v5284, %v5284
        %v5349 = vpack.c.bf16 %v5285, %v5285
        %5350 = vst.msk [vmem:[#allocation3] sm:$0xf] %vm594, %v5286
        %5351 = vst.msk [vmem:[#allocation3 + $0xc] sm:$0xf] %vm594, %v5287
        %5352 = vst.msk [vmem:[#allocation3 + $0x18] sm:$0xf] %vm594, %v5288
        %5353 = vst.msk [vmem:[#allocation3 + $0x24] sm:$0xf] %vm594, %v5289
        %5354 = vst.msk [vmem:[#allocation3 + $0x30] sm:$0xf] %vm594, %v5290
        %5355 = vst.msk [vmem:[#allocation3 + $0x3c] sm:$0xf] %vm594, %v5291
        %5356 = vst.msk [vmem:[#allocation3 + $0x48] sm:$0xf] %vm594, %v5292
        %5357 = vst.msk [vmem:[#allocation3 + $0x54] sm:$0xf] %vm594, %v5293
        %5358 = vst.msk [vmem:[#allocation3 + $0x60] sm:$0xf] %vm594, %v5294
        %5359 = vst.msk [vmem:[#allocation3 + $0x6c] sm:$0xf] %vm594, %v5295
        %5360 = vst.msk [vmem:[#allocation3 + $0x78] sm:$0xf] %vm594, %v5296
        %5361 = vst.msk [vmem:[#allocation3 + $0x84] sm:$0xf] %vm594, %v5297
        %5362 = vst.msk [vmem:[#allocation3 + $0x90] sm:$0xf] %vm594, %v5298
        %5363 = vst.msk [vmem:[#allocation3 + $0x9c] sm:$0xf] %vm594, %v5299
        %5364 = vst.msk [vmem:[#allocation3 + $0xa8] sm:$0xf] %vm594, %v5300
        %5365 = vst.msk [vmem:[#allocation3 + $0xb4] sm:$0xf] %vm594, %v5301
        %5366 = vst.msk [vmem:[#allocation3 + $0xc0] sm:$0xf] %vm594, %v5302
        %5367 = vst.msk [vmem:[#allocation3 + $0xcc] sm:$0xf] %vm594, %v5303
        %5368 = vst.msk [vmem:[#allocation3 + $0xd8] sm:$0xf] %vm594, %v5304
        %5369 = vst.msk [vmem:[#allocation3 + $0xe4] sm:$0xf] %vm594, %v5305
        %5370 = vst.msk [vmem:[#allocation3 + $0xf0] sm:$0xf] %vm594, %v5306
        %5371 = vst.msk [vmem:[#allocation3 + $0xfc] sm:$0xf] %vm594, %v5307
        %5372 = vst.msk [vmem:[#allocation3 + $0x108] sm:$0xf] %vm594, %v5308
        %5373 = vst.msk [vmem:[#allocation3 + $0x114] sm:$0xf] %vm594, %v5309
        %5374 = vst.msk [vmem:[#allocation3 + $0x120] sm:$0xf] %vm594, %v5310
        %5375 = vst.msk [vmem:[#allocation3 + $0x12c] sm:$0xf] %vm594, %v5311
        %5376 = vst.msk [vmem:[#allocation3 + $0x138] sm:$0xf] %vm594, %v5312
        %5377 = vst.msk [vmem:[#allocation3 + $0x144] sm:$0xf] %vm594, %v5313
        %5378 = vst.msk [vmem:[#allocation3 + $0x150] sm:$0xf] %vm594, %v5314
        %5379 = vst.msk [vmem:[#allocation3 + $0x15c] sm:$0xf] %vm594, %v5315
        %5380 = vst.msk [vmem:[#allocation3 + $0x168] sm:$0xf] %vm594, %v5316
        %5381 = vst.msk [vmem:[#allocation3 + $0x174] sm:$0xf] %vm594, %v5317
        %5382 = vst.msk [vmem:[#allocation3 + $0x180] sm:$0xf] %vm594, %v5318
        %5383 = vst.msk [vmem:[#allocation3 + $0x18c] sm:$0xf] %vm594, %v5319
        %5384 = vst.msk [vmem:[#allocation3 + $0x198] sm:$0xf] %vm594, %v5320
        %5385 = vst.msk [vmem:[#allocation3 + $0x1a4] sm:$0xf] %vm594, %v5321
        %5386 = vst.msk [vmem:[#allocation3 + $0x1b0] sm:$0xf] %vm594, %v5322
        %5387 = vst.msk [vmem:[#allocation3 + $0x1bc] sm:$0xf] %vm594, %v5323
        %5388 = vst.msk [vmem:[#allocation3 + $0x1c8] sm:$0xf] %vm594, %v5324
        %5389 = vst.msk [vmem:[#allocation3 + $0x1d4] sm:$0xf] %vm594, %v5325
        %5390 = vst.msk [vmem:[#allocation3 + $0x1e0] sm:$0xf] %vm594, %v5326
        %5391 = vst.msk [vmem:[#allocation3 + $0x1ec] sm:$0xf] %vm594, %v5327
        %5392 = vst.msk [vmem:[#allocation3 + $0x1f8] sm:$0xf] %vm594, %v5328
        %5393 = vst.msk [vmem:[#allocation3 + $0x204] sm:$0xf] %vm594, %v5329
        %5394 = vst.msk [vmem:[#allocation3 + $0x210] sm:$0xf] %vm594, %v5330
        %5395 = vst.msk [vmem:[#allocation3 + $0x21c] sm:$0xf] %vm594, %v5331
        %5396 = vst.msk [vmem:[#allocation3 + $0x228] sm:$0xf] %vm594, %v5332
        %5397 = vst.msk [vmem:[#allocation3 + $0x234] sm:$0xf] %vm594, %v5333
        %5398 = vst.msk [vmem:[#allocation3 + $0x240] sm:$0xf] %vm594, %v5334
        %5399 = vst.msk [vmem:[#allocation3 + $0x24c] sm:$0xf] %vm594, %v5335
        %5400 = vst.msk [vmem:[#allocation3 + $0x258] sm:$0xf] %vm594, %v5336
        %5401 = vst.msk [vmem:[#allocation3 + $0x264] sm:$0xf] %vm594, %v5337
        %5402 = vst.msk [vmem:[#allocation3 + $0x270] sm:$0xf] %vm594, %v5338
        %5403 = vst.msk [vmem:[#allocation3 + $0x27c] sm:$0xf] %vm594, %v5339
        %5404 = vst.msk [vmem:[#allocation3 + $0x288] sm:$0xf] %vm594, %v5340
        %5405 = vst.msk [vmem:[#allocation3 + $0x294] sm:$0xf] %vm594, %v5341
        %5406 = vst.msk [vmem:[#allocation3 + $0x2a0] sm:$0xf] %vm594, %v5342
        %5407 = vst.msk [vmem:[#allocation3 + $0x2ac] sm:$0xf] %vm594, %v5343
        %5408 = vst.msk [vmem:[#allocation3 + $0x2b8] sm:$0xf] %vm594, %v5344
        %5409 = vst.msk [vmem:[#allocation3 + $0x2c4] sm:$0xf] %vm594, %v5345
        %5410 = vst.msk [vmem:[#allocation3 + $0x2d0] sm:$0xf] %vm594, %v5346
        %5411 = vst.msk [vmem:[#allocation3 + $0x2dc] sm:$0xf] %vm594, %v5347
        %5412 = vst.msk [vmem:[#allocation3 + $0x2e8] sm:$0xf] %vm594, %v5348
        %5413 = vst.msk [vmem:[#allocation3 + $0x2f4] sm:$0xf] %vm594, %v5349
        %v5414 = vld [vmem:[#allocation2 + $0x1] sm:$0xff]
        %v5415 = vld [vmem:[#allocation2 + $0x9] sm:$0xff]
        %v5416 = vld [vmem:[#allocation2 + $0x19] sm:$0xff]
        %v5417 = vld [vmem:[#allocation2 + $0x21] sm:$0xff]
        %v5418 = vld [vmem:[#allocation2 + $0x31] sm:$0xff]
        %v5419 = vld [vmem:[#allocation2 + $0x39] sm:$0xff]
        %v5420 = vld [vmem:[#allocation2 + $0x49] sm:$0xff]
        %v5421 = vld [vmem:[#allocation2 + $0x51] sm:$0xff]
        %v5422 = vld [vmem:[#allocation2 + $0x61] sm:$0xff]
        %v5423 = vld [vmem:[#allocation2 + $0x69] sm:$0xff]
        %v5424 = vld [vmem:[#allocation2 + $0x79] sm:$0xff]
        %v5425 = vld [vmem:[#allocation2 + $0x81] sm:$0xff]
        %v5426 = vld [vmem:[#allocation2 + $0x91] sm:$0xff]
        %v5427 = vld [vmem:[#allocation2 + $0x99] sm:$0xff]
        %v5428 = vld [vmem:[#allocation2 + $0xa9] sm:$0xff]
        %v5429 = vld [vmem:[#allocation2 + $0xb1] sm:$0xff]
        %v5430 = vld [vmem:[#allocation2 + $0xc1] sm:$0xff]
        %v5431 = vld [vmem:[#allocation2 + $0xc9] sm:$0xff]
        %v5432 = vld [vmem:[#allocation2 + $0xd9] sm:$0xff]
        %v5433 = vld [vmem:[#allocation2 + $0xe1] sm:$0xff]
        %v5434 = vld [vmem:[#allocation2 + $0xf1] sm:$0xff]
        %v5435 = vld [vmem:[#allocation2 + $0xf9] sm:$0xff]
        %v5436 = vld [vmem:[#allocation2 + $0x109] sm:$0xff]
        %v5437 = vld [vmem:[#allocation2 + $0x111] sm:$0xff]
        %v5438 = vld [vmem:[#allocation2 + $0x121] sm:$0xff]
        %v5439 = vld [vmem:[#allocation2 + $0x129] sm:$0xff]
        %v5440 = vld [vmem:[#allocation2 + $0x139] sm:$0xff]
        %v5441 = vld [vmem:[#allocation2 + $0x141] sm:$0xff]
        %v5442 = vld [vmem:[#allocation2 + $0x151] sm:$0xff]
        %v5443 = vld [vmem:[#allocation2 + $0x159] sm:$0xff]
        %v5444 = vld [vmem:[#allocation2 + $0x169] sm:$0xff]
        %v5445 = vld [vmem:[#allocation2 + $0x171] sm:$0xff]
        %v5446 = vld [vmem:[#allocation2 + $0x1b1] sm:$0xff]
        %v5447 = vld [vmem:[#allocation2 + $0x1b9] sm:$0xff]
        %v5448 = vld [vmem:[#allocation2 + $0x1c9] sm:$0xff]
        %v5449 = vld [vmem:[#allocation2 + $0x1d1] sm:$0xff]
        %v5450 = vld [vmem:[#allocation2 + $0x1e1] sm:$0xff]
        %v5451 = vld [vmem:[#allocation2 + $0x1e9] sm:$0xff]
        %v5452 = vld [vmem:[#allocation2 + $0x1f9] sm:$0xff]
        %v5453 = vld [vmem:[#allocation2 + $0x201] sm:$0xff]
        %v5454 = vld [vmem:[#allocation2 + $0x211] sm:$0xff]
        %v5455 = vld [vmem:[#allocation2 + $0x219] sm:$0xff]
        %v5456 = vld [vmem:[#allocation2 + $0x229] sm:$0xff]
        %v5457 = vld [vmem:[#allocation2 + $0x231] sm:$0xff]
        %v5458 = vld [vmem:[#allocation2 + $0x241] sm:$0xff]
        %v5459 = vld [vmem:[#allocation2 + $0x249] sm:$0xff]
        %v5460 = vld [vmem:[#allocation2 + $0x259] sm:$0xff]
        %v5461 = vld [vmem:[#allocation2 + $0x261] sm:$0xff]
        %v5462 = vld [vmem:[#allocation2 + $0x271] sm:$0xff]
        %v5463 = vld [vmem:[#allocation2 + $0x279] sm:$0xff]
        %v5464 = vld [vmem:[#allocation2 + $0x289] sm:$0xff]
        %v5465 = vld [vmem:[#allocation2 + $0x291] sm:$0xff]
        %v5466 = vld [vmem:[#allocation2 + $0x2a1] sm:$0xff]
        %v5467 = vld [vmem:[#allocation2 + $0x2a9] sm:$0xff]
        %v5468 = vld [vmem:[#allocation2 + $0x2b9] sm:$0xff]
        %v5469 = vld [vmem:[#allocation2 + $0x2c1] sm:$0xff]
        %v5470 = vld [vmem:[#allocation2 + $0x2d1] sm:$0xff]
        %v5471 = vld [vmem:[#allocation2 + $0x2d9] sm:$0xff]
        %v5472 = vld [vmem:[#allocation2 + $0x2e9] sm:$0xff]
        %v5473 = vld [vmem:[#allocation2 + $0x2f1] sm:$0xff]
        %v5474 = vld [vmem:[#allocation2 + $0x301] sm:$0xff]
        %v5475 = vld [vmem:[#allocation2 + $0x309] sm:$0xff]
        %v5476 = vld [vmem:[#allocation2 + $0x319] sm:$0xff]
        %v5477 = vld [vmem:[#allocation2 + $0x321] sm:$0xff]
        %v5478 = vpack.c.bf16 %v5414, %v5414
        %v5479 = vpack.c.bf16 %v5415, %v5415
        %v5480 = vpack.c.bf16 %v5416, %v5416
        %v5481 = vpack.c.bf16 %v5417, %v5417
        %v5482 = vpack.c.bf16 %v5418, %v5418
        %v5483 = vpack.c.bf16 %v5419, %v5419
        %v5484 = vpack.c.bf16 %v5420, %v5420
        %v5485 = vpack.c.bf16 %v5421, %v5421
        %v5486 = vpack.c.bf16 %v5422, %v5422
        %v5487 = vpack.c.bf16 %v5423, %v5423
        %v5488 = vpack.c.bf16 %v5424, %v5424
        %v5489 = vpack.c.bf16 %v5425, %v5425
        %v5490 = vpack.c.bf16 %v5426, %v5426
        %v5491 = vpack.c.bf16 %v5427, %v5427
        %v5492 = vpack.c.bf16 %v5428, %v5428
        %v5493 = vpack.c.bf16 %v5429, %v5429
        %v5494 = vpack.c.bf16 %v5430, %v5430
        %v5495 = vpack.c.bf16 %v5431, %v5431
        %v5496 = vpack.c.bf16 %v5432, %v5432
        %v5497 = vpack.c.bf16 %v5433, %v5433
        %v5498 = vpack.c.bf16 %v5434, %v5434
        %v5499 = vpack.c.bf16 %v5435, %v5435
        %v5500 = vpack.c.bf16 %v5436, %v5436
        %v5501 = vpack.c.bf16 %v5437, %v5437
        %v5502 = vpack.c.bf16 %v5438, %v5438
        %v5503 = vpack.c.bf16 %v5439, %v5439
        %v5504 = vpack.c.bf16 %v5440, %v5440
        %v5505 = vpack.c.bf16 %v5441, %v5441
        %v5506 = vpack.c.bf16 %v5442, %v5442
        %v5507 = vpack.c.bf16 %v5443, %v5443
        %v5508 = vpack.c.bf16 %v5444, %v5444
        %v5509 = vpack.c.bf16 %v5445, %v5445
        %v5510 = vpack.c.bf16 %v5446, %v5446
        %v5511 = vpack.c.bf16 %v5447, %v5447
        %v5512 = vpack.c.bf16 %v5448, %v5448
        %v5513 = vpack.c.bf16 %v5449, %v5449
        %v5514 = vpack.c.bf16 %v5450, %v5450
        %v5515 = vpack.c.bf16 %v5451, %v5451
        %v5516 = vpack.c.bf16 %v5452, %v5452
        %v5517 = vpack.c.bf16 %v5453, %v5453
        %v5518 = vpack.c.bf16 %v5454, %v5454
        %v5519 = vpack.c.bf16 %v5455, %v5455
        %v5520 = vpack.c.bf16 %v5456, %v5456
        %v5521 = vpack.c.bf16 %v5457, %v5457
        %v5522 = vpack.c.bf16 %v5458, %v5458
        %v5523 = vpack.c.bf16 %v5459, %v5459
        %v5524 = vpack.c.bf16 %v5460, %v5460
        %v5525 = vpack.c.bf16 %v5461, %v5461
        %v5526 = vpack.c.bf16 %v5462, %v5462
        %v5527 = vpack.c.bf16 %v5463, %v5463
        %v5528 = vpack.c.bf16 %v5464, %v5464
        %v5529 = vpack.c.bf16 %v5465, %v5465
        %v5530 = vpack.c.bf16 %v5466, %v5466
        %v5531 = vpack.c.bf16 %v5467, %v5467
        %v5532 = vpack.c.bf16 %v5468, %v5468
        %v5533 = vpack.c.bf16 %v5469, %v5469
        %v5534 = vpack.c.bf16 %v5470, %v5470
        %v5535 = vpack.c.bf16 %v5471, %v5471
        %v5536 = vpack.c.bf16 %v5472, %v5472
        %v5537 = vpack.c.bf16 %v5473, %v5473
        %v5538 = vpack.c.bf16 %v5474, %v5474
        %v5539 = vpack.c.bf16 %v5475, %v5475
        %v5540 = vpack.c.bf16 %v5476, %v5476
        %v5541 = vpack.c.bf16 %v5477, %v5477
        %5606 = vrot.lane.b32.xlu0 %v5478, 32
        %v5607 = vpop.permute.xlu0 %5606
        %5608 = vrot.lane.b32.xlu0 %v5479, 32
        %v5609 = vpop.permute.xlu0 %5608
        %5610 = vrot.lane.b32.xlu0 %v5480, 32
        %v5611 = vpop.permute.xlu0 %5610
        %5612 = vrot.lane.b32.xlu0 %v5481, 32
        %v5613 = vpop.permute.xlu0 %5612
        %5614 = vrot.lane.b32.xlu0 %v5482, 32
        %v5615 = vpop.permute.xlu0 %5614
        %5616 = vrot.lane.b32.xlu0 %v5483, 32
        %v5617 = vpop.permute.xlu0 %5616
        %5618 = vrot.lane.b32.xlu0 %v5484, 32
        %v5619 = vpop.permute.xlu0 %5618
        %5620 = vrot.lane.b32.xlu0 %v5485, 32
        %v5621 = vpop.permute.xlu0 %5620
        %5622 = vrot.lane.b32.xlu0 %v5486, 32
        %v5623 = vpop.permute.xlu0 %5622
        %5624 = vrot.lane.b32.xlu0 %v5487, 32
        %v5625 = vpop.permute.xlu0 %5624
        %5626 = vrot.lane.b32.xlu0 %v5488, 32
        %v5627 = vpop.permute.xlu0 %5626
        %5628 = vrot.lane.b32.xlu0 %v5489, 32
        %v5629 = vpop.permute.xlu0 %5628
        %5630 = vrot.lane.b32.xlu0 %v5490, 32
        %v5631 = vpop.permute.xlu0 %5630
        %5632 = vrot.lane.b32.xlu0 %v5491, 32
        %v5633 = vpop.permute.xlu0 %5632
        %5634 = vrot.lane.b32.xlu0 %v5492, 32
        %v5635 = vpop.permute.xlu0 %5634
        %5636 = vrot.lane.b32.xlu0 %v5493, 32
        %v5637 = vpop.permute.xlu0 %5636
        %5638 = vrot.lane.b32.xlu0 %v5494, 32
        %v5639 = vpop.permute.xlu0 %5638
        %5640 = vrot.lane.b32.xlu0 %v5495, 32
        %v5641 = vpop.permute.xlu0 %5640
        %5642 = vrot.lane.b32.xlu0 %v5496, 32
        %v5643 = vpop.permute.xlu0 %5642
        %5644 = vrot.lane.b32.xlu0 %v5497, 32
        %v5645 = vpop.permute.xlu0 %5644
        %5646 = vrot.lane.b32.xlu0 %v5498, 32
        %v5647 = vpop.permute.xlu0 %5646
        %5648 = vrot.lane.b32.xlu0 %v5499, 32
        %v5649 = vpop.permute.xlu0 %5648
        %5650 = vrot.lane.b32.xlu0 %v5500, 32
        %v5651 = vpop.permute.xlu0 %5650
        %5652 = vrot.lane.b32.xlu0 %v5501, 32
        %v5653 = vpop.permute.xlu0 %5652
        %5654 = vrot.lane.b32.xlu0 %v5502, 32
        %v5655 = vpop.permute.xlu0 %5654
        %5656 = vrot.lane.b32.xlu0 %v5503, 32
        %v5657 = vpop.permute.xlu0 %5656
        %5658 = vrot.lane.b32.xlu0 %v5504, 32
        %v5659 = vpop.permute.xlu0 %5658
        %5660 = vrot.lane.b32.xlu0 %v5505, 32
        %v5661 = vpop.permute.xlu0 %5660
        %5662 = vrot.lane.b32.xlu0 %v5506, 32
        %v5663 = vpop.permute.xlu0 %5662
        %5664 = vrot.lane.b32.xlu0 %v5507, 32
        %v5665 = vpop.permute.xlu0 %5664
        %5666 = vrot.lane.b32.xlu0 %v5508, 32
        %v5667 = vpop.permute.xlu0 %5666
        %5668 = vrot.lane.b32.xlu0 %v5509, 32
        %v5669 = vpop.permute.xlu0 %5668
        %5670 = vrot.lane.b32.xlu0 %v5510, 32
        %v5671 = vpop.permute.xlu0 %5670
        %5672 = vrot.lane.b32.xlu0 %v5511, 32
        %v5673 = vpop.permute.xlu0 %5672
        %5674 = vrot.lane.b32.xlu0 %v5512, 32
        %v5675 = vpop.permute.xlu0 %5674
        %5676 = vrot.lane.b32.xlu0 %v5513, 32
        %v5677 = vpop.permute.xlu0 %5676
        %5678 = vrot.lane.b32.xlu0 %v5514, 32
        %v5679 = vpop.permute.xlu0 %5678
        %5680 = vrot.lane.b32.xlu0 %v5515, 32
        %v5681 = vpop.permute.xlu0 %5680
        %5682 = vrot.lane.b32.xlu0 %v5516, 32
        %v5683 = vpop.permute.xlu0 %5682
        %5684 = vrot.lane.b32.xlu0 %v5517, 32
        %v5685 = vpop.permute.xlu0 %5684
        %5686 = vrot.lane.b32.xlu0 %v5518, 32
        %v5687 = vpop.permute.xlu0 %5686
        %5688 = vrot.lane.b32.xlu0 %v5519, 32
        %v5689 = vpop.permute.xlu0 %5688
        %5690 = vrot.lane.b32.xlu0 %v5520, 32
        %v5691 = vpop.permute.xlu0 %5690
        %5692 = vrot.lane.b32.xlu0 %v5521, 32
        %v5693 = vpop.permute.xlu0 %5692
        %5694 = vrot.lane.b32.xlu0 %v5522, 32
        %v5695 = vpop.permute.xlu0 %5694
        %5696 = vrot.lane.b32.xlu0 %v5523, 32
        %v5697 = vpop.permute.xlu0 %5696
        %5698 = vrot.lane.b32.xlu0 %v5524, 32
        %v5699 = vpop.permute.xlu0 %5698
        %5700 = vrot.lane.b32.xlu0 %v5525, 32
        %v5701 = vpop.permute.xlu0 %5700
        %5702 = vrot.lane.b32.xlu0 %v5526, 32
        %v5703 = vpop.permute.xlu0 %5702
        %5704 = vrot.lane.b32.xlu0 %v5527, 32
        %v5705 = vpop.permute.xlu0 %5704
        %5706 = vrot.lane.b32.xlu0 %v5528, 32
        %v5707 = vpop.permute.xlu0 %5706
        %5708 = vrot.lane.b32.xlu0 %v5529, 32
        %v5709 = vpop.permute.xlu0 %5708
        %5710 = vrot.lane.b32.xlu0 %v5530, 32
        %v5711 = vpop.permute.xlu0 %5710
        %5712 = vrot.lane.b32.xlu0 %v5531, 32
        %v5713 = vpop.permute.xlu0 %5712
        %5714 = vrot.lane.b32.xlu0 %v5532, 32
        %v5715 = vpop.permute.xlu0 %5714
        %5716 = vrot.lane.b32.xlu0 %v5533, 32
        %v5717 = vpop.permute.xlu0 %5716
        %5718 = vrot.lane.b32.xlu0 %v5534, 32
        %v5719 = vpop.permute.xlu0 %5718
        %5720 = vrot.lane.b32.xlu0 %v5535, 32
        %v5721 = vpop.permute.xlu0 %5720
        %5722 = vrot.lane.b32.xlu0 %v5536, 32
        %v5723 = vpop.permute.xlu0 %5722
        %5724 = vrot.lane.b32.xlu0 %v5537, 32
        %v5725 = vpop.permute.xlu0 %5724
        %5726 = vrot.lane.b32.xlu0 %v5538, 32
        %v5727 = vpop.permute.xlu0 %5726
        %5728 = vrot.lane.b32.xlu0 %v5539, 32
        %v5729 = vpop.permute.xlu0 %5728
        %5730 = vrot.lane.b32.xlu0 %v5540, 32
        %v5731 = vpop.permute.xlu0 %5730
        %5732 = vrot.lane.b32.xlu0 %v5541, 32
        %v5733 = vpop.permute.xlu0 %5732
        %5798 = vst.msk [vmem:[#allocation3] sm:$0xf] %vm1043, %v5607
        %5799 = vst.msk [vmem:[#allocation3 + $0xc] sm:$0xf] %vm1043, %v5609
        %5800 = vst.msk [vmem:[#allocation3 + $0x18] sm:$0xf] %vm1043, %v5611
        %5801 = vst.msk [vmem:[#allocation3 + $0x24] sm:$0xf] %vm1043, %v5613
        %5802 = vst.msk [vmem:[#allocation3 + $0x30] sm:$0xf] %vm1043, %v5615
        %5803 = vst.msk [vmem:[#allocation3 + $0x3c] sm:$0xf] %vm1043, %v5617
        %5804 = vst.msk [vmem:[#allocation3 + $0x48] sm:$0xf] %vm1043, %v5619
        %5805 = vst.msk [vmem:[#allocation3 + $0x54] sm:$0xf] %vm1043, %v5621
        %5806 = vst.msk [vmem:[#allocation3 + $0x60] sm:$0xf] %vm1043, %v5623
        %5807 = vst.msk [vmem:[#allocation3 + $0x6c] sm:$0xf] %vm1043, %v5625
        %5808 = vst.msk [vmem:[#allocation3 + $0x78] sm:$0xf] %vm1043, %v5627
        %5809 = vst.msk [vmem:[#allocation3 + $0x84] sm:$0xf] %vm1043, %v5629
        %5810 = vst.msk [vmem:[#allocation3 + $0x90] sm:$0xf] %vm1043, %v5631
        %5811 = vst.msk [vmem:[#allocation3 + $0x9c] sm:$0xf] %vm1043, %v5633
        %5812 = vst.msk [vmem:[#allocation3 + $0xa8] sm:$0xf] %vm1043, %v5635
        %5813 = vst.msk [vmem:[#allocation3 + $0xb4] sm:$0xf] %vm1043, %v5637
        %5814 = vst.msk [vmem:[#allocation3 + $0xc0] sm:$0xf] %vm1043, %v5639
        %5815 = vst.msk [vmem:[#allocation3 + $0xcc] sm:$0xf] %vm1043, %v5641
        %5816 = vst.msk [vmem:[#allocation3 + $0xd8] sm:$0xf] %vm1043, %v5643
        %5817 = vst.msk [vmem:[#allocation3 + $0xe4] sm:$0xf] %vm1043, %v5645
        %5818 = vst.msk [vmem:[#allocation3 + $0xf0] sm:$0xf] %vm1043, %v5647
        %5819 = vst.msk [vmem:[#allocation3 + $0xfc] sm:$0xf] %vm1043, %v5649
        %5820 = vst.msk [vmem:[#allocation3 + $0x108] sm:$0xf] %vm1043, %v5651
        %5821 = vst.msk [vmem:[#allocation3 + $0x114] sm:$0xf] %vm1043, %v5653
        %5822 = vst.msk [vmem:[#allocation3 + $0x120] sm:$0xf] %vm1043, %v5655
        %5823 = vst.msk [vmem:[#allocation3 + $0x12c] sm:$0xf] %vm1043, %v5657
        %5824 = vst.msk [vmem:[#allocation3 + $0x138] sm:$0xf] %vm1043, %v5659
        %5825 = vst.msk [vmem:[#allocation3 + $0x144] sm:$0xf] %vm1043, %v5661
        %5826 = vst.msk [vmem:[#allocation3 + $0x150] sm:$0xf] %vm1043, %v5663
        %5827 = vst.msk [vmem:[#allocation3 + $0x15c] sm:$0xf] %vm1043, %v5665
        %5828 = vst.msk [vmem:[#allocation3 + $0x168] sm:$0xf] %vm1043, %v5667
        %5829 = vst.msk [vmem:[#allocation3 + $0x174] sm:$0xf] %vm1043, %v5669
        %5830 = vst.msk [vmem:[#allocation3 + $0x180] sm:$0xf] %vm1043, %v5671
        %5831 = vst.msk [vmem:[#allocation3 + $0x18c] sm:$0xf] %vm1043, %v5673
        %5832 = vst.msk [vmem:[#allocation3 + $0x198] sm:$0xf] %vm1043, %v5675
        %5833 = vst.msk [vmem:[#allocation3 + $0x1a4] sm:$0xf] %vm1043, %v5677
        %5834 = vst.msk [vmem:[#allocation3 + $0x1b0] sm:$0xf] %vm1043, %v5679
        %5835 = vst.msk [vmem:[#allocation3 + $0x1bc] sm:$0xf] %vm1043, %v5681
        %5836 = vst.msk [vmem:[#allocation3 + $0x1c8] sm:$0xf] %vm1043, %v5683
        %5837 = vst.msk [vmem:[#allocation3 + $0x1d4] sm:$0xf] %vm1043, %v5685
        %5838 = vst.msk [vmem:[#allocation3 + $0x1e0] sm:$0xf] %vm1043, %v5687
        %5839 = vst.msk [vmem:[#allocation3 + $0x1ec] sm:$0xf] %vm1043, %v5689
        %5840 = vst.msk [vmem:[#allocation3 + $0x1f8] sm:$0xf] %vm1043, %v5691
        %5841 = vst.msk [vmem:[#allocation3 + $0x204] sm:$0xf] %vm1043, %v5693
        %5842 = vst.msk [vmem:[#allocation3 + $0x210] sm:$0xf] %vm1043, %v5695
        %5843 = vst.msk [vmem:[#allocation3 + $0x21c] sm:$0xf] %vm1043, %v5697
        %5844 = vst.msk [vmem:[#allocation3 + $0x228] sm:$0xf] %vm1043, %v5699
        %5845 = vst.msk [vmem:[#allocation3 + $0x234] sm:$0xf] %vm1043, %v5701
        %5846 = vst.msk [vmem:[#allocation3 + $0x240] sm:$0xf] %vm1043, %v5703
        %5847 = vst.msk [vmem:[#allocation3 + $0x24c] sm:$0xf] %vm1043, %v5705
        %5848 = vst.msk [vmem:[#allocation3 + $0x258] sm:$0xf] %vm1043, %v5707
        %5849 = vst.msk [vmem:[#allocation3 + $0x264] sm:$0xf] %vm1043, %v5709
        %5850 = vst.msk [vmem:[#allocation3 + $0x270] sm:$0xf] %vm1043, %v5711
        %5851 = vst.msk [vmem:[#allocation3 + $0x27c] sm:$0xf] %vm1043, %v5713
        %5852 = vst.msk [vmem:[#allocation3 + $0x288] sm:$0xf] %vm1043, %v5715
        %5853 = vst.msk [vmem:[#allocation3 + $0x294] sm:$0xf] %vm1043, %v5717
        %5854 = vst.msk [vmem:[#allocation3 + $0x2a0] sm:$0xf] %vm1043, %v5719
        %5855 = vst.msk [vmem:[#allocation3 + $0x2ac] sm:$0xf] %vm1043, %v5721
        %5856 = vst.msk [vmem:[#allocation3 + $0x2b8] sm:$0xf] %vm1043, %v5723
        %5857 = vst.msk [vmem:[#allocation3 + $0x2c4] sm:$0xf] %vm1043, %v5725
        %5858 = vst.msk [vmem:[#allocation3 + $0x2d0] sm:$0xf] %vm1043, %v5727
        %5859 = vst.msk [vmem:[#allocation3 + $0x2dc] sm:$0xf] %vm1043, %v5729
        %5860 = vst.msk [vmem:[#allocation3 + $0x2e8] sm:$0xf] %vm1043, %v5731
        %5861 = vst.msk [vmem:[#allocation3 + $0x2f4] sm:$0xf] %vm1043, %v5733
        %v5862 = vld [vmem:[#allocation2 + $0x2] sm:$0xff]
        %v5863 = vld [vmem:[#allocation2 + $0xa] sm:$0xff]
        %v5864 = vld [vmem:[#allocation2 + $0x1a] sm:$0xff]
        %v5865 = vld [vmem:[#allocation2 + $0x22] sm:$0xff]
        %v5866 = vld [vmem:[#allocation2 + $0x32] sm:$0xff]
        %v5867 = vld [vmem:[#allocation2 + $0x3a] sm:$0xff]
        %v5868 = vld [vmem:[#allocation2 + $0x4a] sm:$0xff]
        %v5869 = vld [vmem:[#allocation2 + $0x52] sm:$0xff]
        %v5870 = vld [vmem:[#allocation2 + $0x62] sm:$0xff]
        %v5871 = vld [vmem:[#allocation2 + $0x6a] sm:$0xff]
        %v5872 = vld [vmem:[#allocation2 + $0x7a] sm:$0xff]
        %v5873 = vld [vmem:[#allocation2 + $0x82] sm:$0xff]
        %v5874 = vld [vmem:[#allocation2 + $0x92] sm:$0xff]
        %v5875 = vld [vmem:[#allocation2 + $0x9a] sm:$0xff]
        %v5876 = vld [vmem:[#allocation2 + $0xaa] sm:$0xff]
        %v5877 = vld [vmem:[#allocation2 + $0xb2] sm:$0xff]
        %v5878 = vld [vmem:[#allocation2 + $0xc2] sm:$0xff]
        %v5879 = vld [vmem:[#allocation2 + $0xca] sm:$0xff]
        %v5880 = vld [vmem:[#allocation2 + $0xda] sm:$0xff]
        %v5881 = vld [vmem:[#allocation2 + $0xe2] sm:$0xff]
        %v5882 = vld [vmem:[#allocation2 + $0xf2] sm:$0xff]
        %v5883 = vld [vmem:[#allocation2 + $0xfa] sm:$0xff]
        %v5884 = vld [vmem:[#allocation2 + $0x10a] sm:$0xff]
        %v5885 = vld [vmem:[#allocation2 + $0x112] sm:$0xff]
        %v5886 = vld [vmem:[#allocation2 + $0x122] sm:$0xff]
        %v5887 = vld [vmem:[#allocation2 + $0x12a] sm:$0xff]
        %v5888 = vld [vmem:[#allocation2 + $0x13a] sm:$0xff]
        %v5889 = vld [vmem:[#allocation2 + $0x142] sm:$0xff]
        %v5890 = vld [vmem:[#allocation2 + $0x152] sm:$0xff]
        %v5891 = vld [vmem:[#allocation2 + $0x15a] sm:$0xff]
        %v5892 = vld [vmem:[#allocation2 + $0x16a] sm:$0xff]
        %v5893 = vld [vmem:[#allocation2 + $0x172] sm:$0xff]
        %v5894 = vld [vmem:[#allocation2 + $0x1b2] sm:$0xff]
        %v5895 = vld [vmem:[#allocation2 + $0x1ba] sm:$0xff]
        %v5896 = vld [vmem:[#allocation2 + $0x1ca] sm:$0xff]
        %v5897 = vld [vmem:[#allocation2 + $0x1d2] sm:$0xff]
        %v5898 = vld [vmem:[#allocation2 + $0x1e2] sm:$0xff]
        %v5899 = vld [vmem:[#allocation2 + $0x1ea] sm:$0xff]
        %v5900 = vld [vmem:[#allocation2 + $0x1fa] sm:$0xff]
        %v5901 = vld [vmem:[#allocation2 + $0x202] sm:$0xff]
        %v5902 = vld [vmem:[#allocation2 + $0x212] sm:$0xff]
        %v5903 = vld [vmem:[#allocation2 + $0x21a] sm:$0xff]
        %v5904 = vld [vmem:[#allocation2 + $0x22a] sm:$0xff]
        %v5905 = vld [vmem:[#allocation2 + $0x232] sm:$0xff]
        %v5906 = vld [vmem:[#allocation2 + $0x242] sm:$0xff]
        %v5907 = vld [vmem:[#allocation2 + $0x24a] sm:$0xff]
        %v5908 = vld [vmem:[#allocation2 + $0x25a] sm:$0xff]
        %v5909 = vld [vmem:[#allocation2 + $0x262] sm:$0xff]
        %v5910 = vld [vmem:[#allocation2 + $0x272] sm:$0xff]
        %v5911 = vld [vmem:[#allocation2 + $0x27a] sm:$0xff]
        %v5912 = vld [vmem:[#allocation2 + $0x28a] sm:$0xff]
        %v5913 = vld [vmem:[#allocation2 + $0x292] sm:$0xff]
        %v5914 = vld [vmem:[#allocation2 + $0x2a2] sm:$0xff]
        %v5915 = vld [vmem:[#allocation2 + $0x2aa] sm:$0xff]
        %v5916 = vld [vmem:[#allocation2 + $0x2ba] sm:$0xff]
        %v5917 = vld [vmem:[#allocation2 + $0x2c2] sm:$0xff]
        %v5918 = vld [vmem:[#allocation2 + $0x2d2] sm:$0xff]
        %v5919 = vld [vmem:[#allocation2 + $0x2da] sm:$0xff]
        %v5920 = vld [vmem:[#allocation2 + $0x2ea] sm:$0xff]
        %v5921 = vld [vmem:[#allocation2 + $0x2f2] sm:$0xff]
        %v5922 = vld [vmem:[#allocation2 + $0x302] sm:$0xff]
        %v5923 = vld [vmem:[#allocation2 + $0x30a] sm:$0xff]
        %v5924 = vld [vmem:[#allocation2 + $0x31a] sm:$0xff]
        %v5925 = vld [vmem:[#allocation2 + $0x322] sm:$0xff]
        %v5926 = vpack.c.bf16 %v5862, %v5862
        %v5927 = vpack.c.bf16 %v5863, %v5863
        %v5928 = vpack.c.bf16 %v5864, %v5864
        %v5929 = vpack.c.bf16 %v5865, %v5865
        %v5930 = vpack.c.bf16 %v5866, %v5866
        %v5931 = vpack.c.bf16 %v5867, %v5867
        %v5932 = vpack.c.bf16 %v5868, %v5868
        %v5933 = vpack.c.bf16 %v5869, %v5869
        %v5934 = vpack.c.bf16 %v5870, %v5870
        %v5935 = vpack.c.bf16 %v5871, %v5871
        %v5936 = vpack.c.bf16 %v5872, %v5872
        %v5937 = vpack.c.bf16 %v5873, %v5873
        %v5938 = vpack.c.bf16 %v5874, %v5874
        %v5939 = vpack.c.bf16 %v5875, %v5875
        %v5940 = vpack.c.bf16 %v5876, %v5876
        %v5941 = vpack.c.bf16 %v5877, %v5877
        %v5942 = vpack.c.bf16 %v5878, %v5878
        %v5943 = vpack.c.bf16 %v5879, %v5879
        %v5944 = vpack.c.bf16 %v5880, %v5880
        %v5945 = vpack.c.bf16 %v5881, %v5881
        %v5946 = vpack.c.bf16 %v5882, %v5882
        %v5947 = vpack.c.bf16 %v5883, %v5883
        %v5948 = vpack.c.bf16 %v5884, %v5884
        %v5949 = vpack.c.bf16 %v5885, %v5885
        %v5950 = vpack.c.bf16 %v5886, %v5886
        %v5951 = vpack.c.bf16 %v5887, %v5887
        %v5952 = vpack.c.bf16 %v5888, %v5888
        %v5953 = vpack.c.bf16 %v5889, %v5889
        %v5954 = vpack.c.bf16 %v5890, %v5890
        %v5955 = vpack.c.bf16 %v5891, %v5891
        %v5956 = vpack.c.bf16 %v5892, %v5892
        %v5957 = vpack.c.bf16 %v5893, %v5893
        %v5958 = vpack.c.bf16 %v5894, %v5894
        %v5959 = vpack.c.bf16 %v5895, %v5895
        %v5960 = vpack.c.bf16 %v5896, %v5896
        %v5961 = vpack.c.bf16 %v5897, %v5897
        %v5962 = vpack.c.bf16 %v5898, %v5898
        %v5963 = vpack.c.bf16 %v5899, %v5899
        %v5964 = vpack.c.bf16 %v5900, %v5900
        %v5965 = vpack.c.bf16 %v5901, %v5901
        %v5966 = vpack.c.bf16 %v5902, %v5902
        %v5967 = vpack.c.bf16 %v5903, %v5903
        %v5968 = vpack.c.bf16 %v5904, %v5904
        %v5969 = vpack.c.bf16 %v5905, %v5905
        %v5970 = vpack.c.bf16 %v5906, %v5906
        %v5971 = vpack.c.bf16 %v5907, %v5907
        %v5972 = vpack.c.bf16 %v5908, %v5908
        %v5973 = vpack.c.bf16 %v5909, %v5909
        %v5974 = vpack.c.bf16 %v5910, %v5910
        %v5975 = vpack.c.bf16 %v5911, %v5911
        %v5976 = vpack.c.bf16 %v5912, %v5912
        %v5977 = vpack.c.bf16 %v5913, %v5913
        %v5978 = vpack.c.bf16 %v5914, %v5914
        %v5979 = vpack.c.bf16 %v5915, %v5915
        %v5980 = vpack.c.bf16 %v5916, %v5916
        %v5981 = vpack.c.bf16 %v5917, %v5917
        %v5982 = vpack.c.bf16 %v5918, %v5918
        %v5983 = vpack.c.bf16 %v5919, %v5919
        %v5984 = vpack.c.bf16 %v5920, %v5920
        %v5985 = vpack.c.bf16 %v5921, %v5921
        %v5986 = vpack.c.bf16 %v5922, %v5922
        %v5987 = vpack.c.bf16 %v5923, %v5923
        %v5988 = vpack.c.bf16 %v5924, %v5924
        %v5989 = vpack.c.bf16 %v5925, %v5925
        %6054 = vrot.lane.b32.xlu0 %v5926, 64
        %v6055 = vpop.permute.xlu0 %6054
        %6056 = vrot.lane.b32.xlu0 %v5927, 64
        %v6057 = vpop.permute.xlu0 %6056
        %6058 = vrot.lane.b32.xlu0 %v5928, 64
        %v6059 = vpop.permute.xlu0 %6058
        %6060 = vrot.lane.b32.xlu0 %v5929, 64
        %v6061 = vpop.permute.xlu0 %6060
        %6062 = vrot.lane.b32.xlu0 %v5930, 64
        %v6063 = vpop.permute.xlu0 %6062
        %6064 = vrot.lane.b32.xlu0 %v5931, 64
        %v6065 = vpop.permute.xlu0 %6064
        %6066 = vrot.lane.b32.xlu0 %v5932, 64
        %v6067 = vpop.permute.xlu0 %6066
        %6068 = vrot.lane.b32.xlu0 %v5933, 64
        %v6069 = vpop.permute.xlu0 %6068
        %6070 = vrot.lane.b32.xlu0 %v5934, 64
        %v6071 = vpop.permute.xlu0 %6070
        %6072 = vrot.lane.b32.xlu0 %v5935, 64
        %v6073 = vpop.permute.xlu0 %6072
        %6074 = vrot.lane.b32.xlu0 %v5936, 64
        %v6075 = vpop.permute.xlu0 %6074
        %6076 = vrot.lane.b32.xlu0 %v5937, 64
        %v6077 = vpop.permute.xlu0 %6076
        %6078 = vrot.lane.b32.xlu0 %v5938, 64
        %v6079 = vpop.permute.xlu0 %6078
        %6080 = vrot.lane.b32.xlu0 %v5939, 64
        %v6081 = vpop.permute.xlu0 %6080
        %6082 = vrot.lane.b32.xlu0 %v5940, 64
        %v6083 = vpop.permute.xlu0 %6082
        %6084 = vrot.lane.b32.xlu0 %v5941, 64
        %v6085 = vpop.permute.xlu0 %6084
        %6086 = vrot.lane.b32.xlu0 %v5942, 64
        %v6087 = vpop.permute.xlu0 %6086
        %6088 = vrot.lane.b32.xlu0 %v5943, 64
        %v6089 = vpop.permute.xlu0 %6088
        %6090 = vrot.lane.b32.xlu0 %v5944, 64
        %v6091 = vpop.permute.xlu0 %6090
        %6092 = vrot.lane.b32.xlu0 %v5945, 64
        %v6093 = vpop.permute.xlu0 %6092
        %6094 = vrot.lane.b32.xlu0 %v5946, 64
        %v6095 = vpop.permute.xlu0 %6094
        %6096 = vrot.lane.b32.xlu0 %v5947, 64
        %v6097 = vpop.permute.xlu0 %6096
        %6098 = vrot.lane.b32.xlu0 %v5948, 64
        %v6099 = vpop.permute.xlu0 %6098
        %6100 = vrot.lane.b32.xlu0 %v5949, 64
        %v6101 = vpop.permute.xlu0 %6100
        %6102 = vrot.lane.b32.xlu0 %v5950, 64
        %v6103 = vpop.permute.xlu0 %6102
        %6104 = vrot.lane.b32.xlu0 %v5951, 64
        %v6105 = vpop.permute.xlu0 %6104
        %6106 = vrot.lane.b32.xlu0 %v5952, 64
        %v6107 = vpop.permute.xlu0 %6106
        %6108 = vrot.lane.b32.xlu0 %v5953, 64
        %v6109 = vpop.permute.xlu0 %6108
        %6110 = vrot.lane.b32.xlu0 %v5954, 64
        %v6111 = vpop.permute.xlu0 %6110
        %6112 = vrot.lane.b32.xlu0 %v5955, 64
        %v6113 = vpop.permute.xlu0 %6112
        %6114 = vrot.lane.b32.xlu0 %v5956, 64
        %v6115 = vpop.permute.xlu0 %6114
        %6116 = vrot.lane.b32.xlu0 %v5957, 64
        %v6117 = vpop.permute.xlu0 %6116
        %6118 = vrot.lane.b32.xlu0 %v5958, 64
        %v6119 = vpop.permute.xlu0 %6118
        %6120 = vrot.lane.b32.xlu0 %v5959, 64
        %v6121 = vpop.permute.xlu0 %6120
        %6122 = vrot.lane.b32.xlu0 %v5960, 64
        %v6123 = vpop.permute.xlu0 %6122
        %6124 = vrot.lane.b32.xlu0 %v5961, 64
        %v6125 = vpop.permute.xlu0 %6124
        %6126 = vrot.lane.b32.xlu0 %v5962, 64
        %v6127 = vpop.permute.xlu0 %6126
        %6128 = vrot.lane.b32.xlu0 %v5963, 64
        %v6129 = vpop.permute.xlu0 %6128
        %6130 = vrot.lane.b32.xlu0 %v5964, 64
        %v6131 = vpop.permute.xlu0 %6130
        %6132 = vrot.lane.b32.xlu0 %v5965, 64
        %v6133 = vpop.permute.xlu0 %6132
        %6134 = vrot.lane.b32.xlu0 %v5966, 64
        %v6135 = vpop.permute.xlu0 %6134
        %6136 = vrot.lane.b32.xlu0 %v5967, 64
        %v6137 = vpop.permute.xlu0 %6136
        %6138 = vrot.lane.b32.xlu0 %v5968, 64
        %v6139 = vpop.permute.xlu0 %6138
        %6140 = vrot.lane.b32.xlu0 %v5969, 64
        %v6141 = vpop.permute.xlu0 %6140
        %6142 = vrot.lane.b32.xlu0 %v5970, 64
        %v6143 = vpop.permute.xlu0 %6142
        %6144 = vrot.lane.b32.xlu0 %v5971, 64
        %v6145 = vpop.permute.xlu0 %6144
        %6146 = vrot.lane.b32.xlu0 %v5972, 64
        %v6147 = vpop.permute.xlu0 %6146
        %6148 = vrot.lane.b32.xlu0 %v5973, 64
        %v6149 = vpop.permute.xlu0 %6148
        %6150 = vrot.lane.b32.xlu0 %v5974, 64
        %v6151 = vpop.permute.xlu0 %6150
        %6152 = vrot.lane.b32.xlu0 %v5975, 64
        %v6153 = vpop.permute.xlu0 %6152
        %6154 = vrot.lane.b32.xlu0 %v5976, 64
        %v6155 = vpop.permute.xlu0 %6154
        %6156 = vrot.lane.b32.xlu0 %v5977, 64
        %v6157 = vpop.permute.xlu0 %6156
        %6158 = vrot.lane.b32.xlu0 %v5978, 64
        %v6159 = vpop.permute.xlu0 %6158
        %6160 = vrot.lane.b32.xlu0 %v5979, 64
        %v6161 = vpop.permute.xlu0 %6160
        %6162 = vrot.lane.b32.xlu0 %v5980, 64
        %v6163 = vpop.permute.xlu0 %6162
        %6164 = vrot.lane.b32.xlu0 %v5981, 64
        %v6165 = vpop.permute.xlu0 %6164
        %6166 = vrot.lane.b32.xlu0 %v5982, 64
        %v6167 = vpop.permute.xlu0 %6166
        %6168 = vrot.lane.b32.xlu0 %v5983, 64
        %v6169 = vpop.permute.xlu0 %6168
        %6170 = vrot.lane.b32.xlu0 %v5984, 64
        %v6171 = vpop.permute.xlu0 %6170
        %6172 = vrot.lane.b32.xlu0 %v5985, 64
        %v6173 = vpop.permute.xlu0 %6172
        %6174 = vrot.lane.b32.xlu0 %v5986, 64
        %v6175 = vpop.permute.xlu0 %6174
        %6176 = vrot.lane.b32.xlu0 %v5987, 64
        %v6177 = vpop.permute.xlu0 %6176
        %6178 = vrot.lane.b32.xlu0 %v5988, 64
        %v6179 = vpop.permute.xlu0 %6178
        %6180 = vrot.lane.b32.xlu0 %v5989, 64
        %v6181 = vpop.permute.xlu0 %6180
        %6246 = vst.msk [vmem:[#allocation3] sm:$0xf] %vm1492, %v6055
        %6247 = vst.msk [vmem:[#allocation3 + $0xc] sm:$0xf] %vm1492, %v6057
        %6248 = vst.msk [vmem:[#allocation3 + $0x18] sm:$0xf] %vm1492, %v6059
        %6249 = vst.msk [vmem:[#allocation3 + $0x24] sm:$0xf] %vm1492, %v6061
        %6250 = vst.msk [vmem:[#allocation3 + $0x30] sm:$0xf] %vm1492, %v6063
        %6251 = vst.msk [vmem:[#allocation3 + $0x3c] sm:$0xf] %vm1492, %v6065
        %6252 = vst.msk [vmem:[#allocation3 + $0x48] sm:$0xf] %vm1492, %v6067
        %6253 = vst.msk [vmem:[#allocation3 + $0x54] sm:$0xf] %vm1492, %v6069
        %6254 = vst.msk [vmem:[#allocation3 + $0x60] sm:$0xf] %vm1492, %v6071
        %6255 = vst.msk [vmem:[#allocation3 + $0x6c] sm:$0xf] %vm1492, %v6073
        %6256 = vst.msk [vmem:[#allocation3 + $0x78] sm:$0xf] %vm1492, %v6075
        %6257 = vst.msk [vmem:[#allocation3 + $0x84] sm:$0xf] %vm1492, %v6077
        %6258 = vst.msk [vmem:[#allocation3 + $0x90] sm:$0xf] %vm1492, %v6079
        %6259 = vst.msk [vmem:[#allocation3 + $0x9c] sm:$0xf] %vm1492, %v6081
        %6260 = vst.msk [vmem:[#allocation3 + $0xa8] sm:$0xf] %vm1492, %v6083
        %6261 = vst.msk [vmem:[#allocation3 + $0xb4] sm:$0xf] %vm1492, %v6085
        %6262 = vst.msk [vmem:[#allocation3 + $0xc0] sm:$0xf] %vm1492, %v6087
        %6263 = vst.msk [vmem:[#allocation3 + $0xcc] sm:$0xf] %vm1492, %v6089
        %6264 = vst.msk [vmem:[#allocation3 + $0xd8] sm:$0xf] %vm1492, %v6091
        %6265 = vst.msk [vmem:[#allocation3 + $0xe4] sm:$0xf] %vm1492, %v6093
        %6266 = vst.msk [vmem:[#allocation3 + $0xf0] sm:$0xf] %vm1492, %v6095
        %6267 = vst.msk [vmem:[#allocation3 + $0xfc] sm:$0xf] %vm1492, %v6097
        %6268 = vst.msk [vmem:[#allocation3 + $0x108] sm:$0xf] %vm1492, %v6099
        %6269 = vst.msk [vmem:[#allocation3 + $0x114] sm:$0xf] %vm1492, %v6101
        %6270 = vst.msk [vmem:[#allocation3 + $0x120] sm:$0xf] %vm1492, %v6103
        %6271 = vst.msk [vmem:[#allocation3 + $0x12c] sm:$0xf] %vm1492, %v6105
        %6272 = vst.msk [vmem:[#allocation3 + $0x138] sm:$0xf] %vm1492, %v6107
        %6273 = vst.msk [vmem:[#allocation3 + $0x144] sm:$0xf] %vm1492, %v6109
        %6274 = vst.msk [vmem:[#allocation3 + $0x150] sm:$0xf] %vm1492, %v6111
        %6275 = vst.msk [vmem:[#allocation3 + $0x15c] sm:$0xf] %vm1492, %v6113
        %6276 = vst.msk [vmem:[#allocation3 + $0x168] sm:$0xf] %vm1492, %v6115
        %6277 = vst.msk [vmem:[#allocation3 + $0x174] sm:$0xf] %vm1492, %v6117
        %6278 = vst.msk [vmem:[#allocation3 + $0x180] sm:$0xf] %vm1492, %v6119
        %6279 = vst.msk [vmem:[#allocation3 + $0x18c] sm:$0xf] %vm1492, %v6121
        %6280 = vst.msk [vmem:[#allocation3 + $0x198] sm:$0xf] %vm1492, %v6123
        %6281 = vst.msk [vmem:[#allocation3 + $0x1a4] sm:$0xf] %vm1492, %v6125
        %6282 = vst.msk [vmem:[#allocation3 + $0x1b0] sm:$0xf] %vm1492, %v6127
        %6283 = vst.msk [vmem:[#allocation3 + $0x1bc] sm:$0xf] %vm1492, %v6129
        %6284 = vst.msk [vmem:[#allocation3 + $0x1c8] sm:$0xf] %vm1492, %v6131
        %6285 = vst.msk [vmem:[#allocation3 + $0x1d4] sm:$0xf] %vm1492, %v6133
        %6286 = vst.msk [vmem:[#allocation3 + $0x1e0] sm:$0xf] %vm1492, %v6135
        %6287 = vst.msk [vmem:[#allocation3 + $0x1ec] sm:$0xf] %vm1492, %v6137
        %6288 = vst.msk [vmem:[#allocation3 + $0x1f8] sm:$0xf] %vm1492, %v6139
        %6289 = vst.msk [vmem:[#allocation3 + $0x204] sm:$0xf] %vm1492, %v6141
        %6290 = vst.msk [vmem:[#allocation3 + $0x210] sm:$0xf] %vm1492, %v6143
        %6291 = vst.msk [vmem:[#allocation3 + $0x21c] sm:$0xf] %vm1492, %v6145
        %6292 = vst.msk [vmem:[#allocation3 + $0x228] sm:$0xf] %vm1492, %v6147
        %6293 = vst.msk [vmem:[#allocation3 + $0x234] sm:$0xf] %vm1492, %v6149
        %6294 = vst.msk [vmem:[#allocation3 + $0x240] sm:$0xf] %vm1492, %v6151
        %6295 = vst.msk [vmem:[#allocation3 + $0x24c] sm:$0xf] %vm1492, %v6153
        %6296 = vst.msk [vmem:[#allocation3 + $0x258] sm:$0xf] %vm1492, %v6155
        %6297 = vst.msk [vmem:[#allocation3 + $0x264] sm:$0xf] %vm1492, %v6157
        %6298 = vst.msk [vmem:[#allocation3 + $0x270] sm:$0xf] %vm1492, %v6159
        %6299 = vst.msk [vmem:[#allocation3 + $0x27c] sm:$0xf] %vm1492, %v6161
        %6300 = vst.msk [vmem:[#allocation3 + $0x288] sm:$0xf] %vm1492, %v6163
        %6301 = vst.msk [vmem:[#allocation3 + $0x294] sm:$0xf] %vm1492, %v6165
        %6302 = vst.msk [vmem:[#allocation3 + $0x2a0] sm:$0xf] %vm1492, %v6167
        %6303 = vst.msk [vmem:[#allocation3 + $0x2ac] sm:$0xf] %vm1492, %v6169
        %6304 = vst.msk [vmem:[#allocation3 + $0x2b8] sm:$0xf] %vm1492, %v6171
        %6305 = vst.msk [vmem:[#allocation3 + $0x2c4] sm:$0xf] %vm1492, %v6173
        %6306 = vst.msk [vmem:[#allocation3 + $0x2d0] sm:$0xf] %vm1492, %v6175
        %6307 = vst.msk [vmem:[#allocation3 + $0x2dc] sm:$0xf] %vm1492, %v6177
        %6308 = vst.msk [vmem:[#allocation3 + $0x2e8] sm:$0xf] %vm1492, %v6179
        %6309 = vst.msk [vmem:[#allocation3 + $0x2f4] sm:$0xf] %vm1492, %v6181
        %v6310 = vld [vmem:[%s401] sm:$0xff]
        %v6311 = vld [vmem:[%s401 + $0x8] sm:$0xff]
        %v6312 = vld [vmem:[%s401 + $0x18] sm:$0xff]
        %v6313 = vld [vmem:[%s401 + $0x20] sm:$0xff]
        %v6314 = vld [vmem:[%s401 + $0x30] sm:$0xff]
        %v6315 = vld [vmem:[%s401 + $0x38] sm:$0xff]
        %v6316 = vld [vmem:[%s401 + $0x48] sm:$0xff]
        %v6317 = vld [vmem:[%s401 + $0x50] sm:$0xff]
        %v6318 = vld [vmem:[%s401 + $0x60] sm:$0xff]
        %v6319 = vld [vmem:[%s401 + $0x68] sm:$0xff]
        %v6320 = vld [vmem:[%s401 + $0x78] sm:$0xff]
        %v6321 = vld [vmem:[%s401 + $0x80] sm:$0xff]
        %v6322 = vld [vmem:[%s401 + $0x90] sm:$0xff]
        %v6323 = vld [vmem:[%s401 + $0x98] sm:$0xff]
        %v6324 = vld [vmem:[%s401 + $0xa8] sm:$0xff]
        %v6325 = vld [vmem:[%s401 + $0xb0] sm:$0xff]
        %v6326 = vld [vmem:[%s401 + $0xc0] sm:$0xff]
        %v6327 = vld [vmem:[%s401 + $0xc8] sm:$0xff]
        %v6328 = vld [vmem:[%s401 + $0xd8] sm:$0xff]
        %v6329 = vld [vmem:[%s401 + $0xe0] sm:$0xff]
        %v6330 = vld [vmem:[%s401 + $0xf0] sm:$0xff]
        %v6331 = vld [vmem:[%s401 + $0xf8] sm:$0xff]
        %v6332 = vld [vmem:[%s401 + $0x108] sm:$0xff]
        %v6333 = vld [vmem:[%s401 + $0x110] sm:$0xff]
        %v6334 = vld [vmem:[%s401 + $0x120] sm:$0xff]
        %v6335 = vld [vmem:[%s401 + $0x128] sm:$0xff]
        %v6336 = vld [vmem:[%s401 + $0x138] sm:$0xff]
        %v6337 = vld [vmem:[%s401 + $0x140] sm:$0xff]
        %v6338 = vld [vmem:[%s401 + $0x150] sm:$0xff]
        %v6339 = vld [vmem:[%s401 + $0x158] sm:$0xff]
        %v6340 = vld [vmem:[%s401 + $0x168] sm:$0xff]
        %v6341 = vld [vmem:[%s401 + $0x170] sm:$0xff]
        %v6342 = vld [vmem:[%s401 + $0x1b0] sm:$0xff]
        %v6343 = vld [vmem:[%s401 + $0x1b8] sm:$0xff]
        %v6344 = vld [vmem:[%s401 + $0x1c8] sm:$0xff]
        %v6345 = vld [vmem:[%s401 + $0x1d0] sm:$0xff]
        %v6346 = vld [vmem:[%s401 + $0x1e0] sm:$0xff]
        %v6347 = vld [vmem:[%s401 + $0x1e8] sm:$0xff]
        %v6348 = vld [vmem:[%s401 + $0x1f8] sm:$0xff]
        %v6349 = vld [vmem:[%s401 + $0x200] sm:$0xff]
        %v6350 = vld [vmem:[%s401 + $0x210] sm:$0xff]
        %v6351 = vld [vmem:[%s401 + $0x218] sm:$0xff]
        %v6352 = vld [vmem:[%s401 + $0x228] sm:$0xff]
        %v6353 = vld [vmem:[%s401 + $0x230] sm:$0xff]
        %v6354 = vld [vmem:[%s401 + $0x240] sm:$0xff]
        %v6355 = vld [vmem:[%s401 + $0x248] sm:$0xff]
        %v6356 = vld [vmem:[%s401 + $0x258] sm:$0xff]
        %v6357 = vld [vmem:[%s401 + $0x260] sm:$0xff]
        %v6358 = vld [vmem:[%s401 + $0x270] sm:$0xff]
        %v6359 = vld [vmem:[%s401 + $0x278] sm:$0xff]
        %v6360 = vld [vmem:[%s401 + $0x288] sm:$0xff]
        %v6361 = vld [vmem:[%s401 + $0x290] sm:$0xff]
        %v6362 = vld [vmem:[%s401 + $0x2a0] sm:$0xff]
        %v6363 = vld [vmem:[%s401 + $0x2a8] sm:$0xff]
        %v6364 = vld [vmem:[%s401 + $0x2b8] sm:$0xff]
        %v6365 = vld [vmem:[%s401 + $0x2c0] sm:$0xff]
        %v6366 = vld [vmem:[%s401 + $0x2d0] sm:$0xff]
        %v6367 = vld [vmem:[%s401 + $0x2d8] sm:$0xff]
        %v6368 = vld [vmem:[%s401 + $0x2e8] sm:$0xff]
        %v6369 = vld [vmem:[%s401 + $0x2f0] sm:$0xff]
        %v6370 = vld [vmem:[%s401 + $0x300] sm:$0xff]
        %v6371 = vld [vmem:[%s401 + $0x308] sm:$0xff]
        %v6372 = vld [vmem:[%s401 + $0x318] sm:$0xff]
        %v6373 = vld [vmem:[%s401 + $0x320] sm:$0xff]
        %v6374 = vpack.c.bf16 %v6310, %v6310
        %v6375 = vpack.c.bf16 %v6311, %v6311
        %v6376 = vpack.c.bf16 %v6312, %v6312
        %v6377 = vpack.c.bf16 %v6313, %v6313
        %v6378 = vpack.c.bf16 %v6314, %v6314
        %v6379 = vpack.c.bf16 %v6315, %v6315
        %v6380 = vpack.c.bf16 %v6316, %v6316
        %v6381 = vpack.c.bf16 %v6317, %v6317
        %v6382 = vpack.c.bf16 %v6318, %v6318
        %v6383 = vpack.c.bf16 %v6319, %v6319
        %v6384 = vpack.c.bf16 %v6320, %v6320
        %v6385 = vpack.c.bf16 %v6321, %v6321
        %v6386 = vpack.c.bf16 %v6322, %v6322
        %v6387 = vpack.c.bf16 %v6323, %v6323
        %v6388 = vpack.c.bf16 %v6324, %v6324
        %v6389 = vpack.c.bf16 %v6325, %v6325
        %v6390 = vpack.c.bf16 %v6326, %v6326
        %v6391 = vpack.c.bf16 %v6327, %v6327
        %v6392 = vpack.c.bf16 %v6328, %v6328
        %v6393 = vpack.c.bf16 %v6329, %v6329
        %v6394 = vpack.c.bf16 %v6330, %v6330
        %v6395 = vpack.c.bf16 %v6331, %v6331
        %v6396 = vpack.c.bf16 %v6332, %v6332
        %v6397 = vpack.c.bf16 %v6333, %v6333
        %v6398 = vpack.c.bf16 %v6334, %v6334
        %v6399 = vpack.c.bf16 %v6335, %v6335
        %v6400 = vpack.c.bf16 %v6336, %v6336
        %v6401 = vpack.c.bf16 %v6337, %v6337
        %v6402 = vpack.c.bf16 %v6338, %v6338
        %v6403 = vpack.c.bf16 %v6339, %v6339
        %v6404 = vpack.c.bf16 %v6340, %v6340
        %v6405 = vpack.c.bf16 %v6341, %v6341
        %v6406 = vpack.c.bf16 %v6342, %v6342
        %v6407 = vpack.c.bf16 %v6343, %v6343
        %v6408 = vpack.c.bf16 %v6344, %v6344
        %v6409 = vpack.c.bf16 %v6345, %v6345
        %v6410 = vpack.c.bf16 %v6346, %v6346
        %v6411 = vpack.c.bf16 %v6347, %v6347
        %v6412 = vpack.c.bf16 %v6348, %v6348
        %v6413 = vpack.c.bf16 %v6349, %v6349
        %v6414 = vpack.c.bf16 %v6350, %v6350
        %v6415 = vpack.c.bf16 %v6351, %v6351
        %v6416 = vpack.c.bf16 %v6352, %v6352
        %v6417 = vpack.c.bf16 %v6353, %v6353
        %v6418 = vpack.c.bf16 %v6354, %v6354
        %v6419 = vpack.c.bf16 %v6355, %v6355
        %v6420 = vpack.c.bf16 %v6356, %v6356
        %v6421 = vpack.c.bf16 %v6357, %v6357
        %v6422 = vpack.c.bf16 %v6358, %v6358
        %v6423 = vpack.c.bf16 %v6359, %v6359
        %v6424 = vpack.c.bf16 %v6360, %v6360
        %v6425 = vpack.c.bf16 %v6361, %v6361
        %v6426 = vpack.c.bf16 %v6362, %v6362
        %v6427 = vpack.c.bf16 %v6363, %v6363
        %v6428 = vpack.c.bf16 %v6364, %v6364
        %v6429 = vpack.c.bf16 %v6365, %v6365
        %v6430 = vpack.c.bf16 %v6366, %v6366
        %v6431 = vpack.c.bf16 %v6367, %v6367
        %v6432 = vpack.c.bf16 %v6368, %v6368
        %v6433 = vpack.c.bf16 %v6369, %v6369
        %v6434 = vpack.c.bf16 %v6370, %v6370
        %v6435 = vpack.c.bf16 %v6371, %v6371
        %v6436 = vpack.c.bf16 %v6372, %v6372
        %v6437 = vpack.c.bf16 %v6373, %v6373
        %6502 = vrot.lane.b32.xlu0 %v6374, 96
        %v6503 = vpop.permute.xlu0 %6502
        %6504 = vrot.lane.b32.xlu0 %v6375, 96
        %v6505 = vpop.permute.xlu0 %6504
        %6506 = vrot.lane.b32.xlu0 %v6376, 96
        %v6507 = vpop.permute.xlu0 %6506
        %6508 = vrot.lane.b32.xlu0 %v6377, 96
        %v6509 = vpop.permute.xlu0 %6508
        %6510 = vrot.lane.b32.xlu0 %v6378, 96
        %v6511 = vpop.permute.xlu0 %6510
        %6512 = vrot.lane.b32.xlu0 %v6379, 96
        %v6513 = vpop.permute.xlu0 %6512
        %6514 = vrot.lane.b32.xlu0 %v6380, 96
        %v6515 = vpop.permute.xlu0 %6514
        %6516 = vrot.lane.b32.xlu0 %v6381, 96
        %v6517 = vpop.permute.xlu0 %6516
        %6518 = vrot.lane.b32.xlu0 %v6382, 96
        %v6519 = vpop.permute.xlu0 %6518
        %6520 = vrot.lane.b32.xlu0 %v6383, 96
        %v6521 = vpop.permute.xlu0 %6520
        %6522 = vrot.lane.b32.xlu0 %v6384, 96
        %v6523 = vpop.permute.xlu0 %6522
        %6524 = vrot.lane.b32.xlu0 %v6385, 96
        %v6525 = vpop.permute.xlu0 %6524
        %6526 = vrot.lane.b32.xlu0 %v6386, 96
        %v6527 = vpop.permute.xlu0 %6526
        %6528 = vrot.lane.b32.xlu0 %v6387, 96
        %v6529 = vpop.permute.xlu0 %6528
        %6530 = vrot.lane.b32.xlu0 %v6388, 96
        %v6531 = vpop.permute.xlu0 %6530
        %6532 = vrot.lane.b32.xlu0 %v6389, 96
        %v6533 = vpop.permute.xlu0 %6532
        %6534 = vrot.lane.b32.xlu0 %v6390, 96
        %v6535 = vpop.permute.xlu0 %6534
        %6536 = vrot.lane.b32.xlu0 %v6391, 96
        %v6537 = vpop.permute.xlu0 %6536
        %6538 = vrot.lane.b32.xlu0 %v6392, 96
        %v6539 = vpop.permute.xlu0 %6538
        %6540 = vrot.lane.b32.xlu0 %v6393, 96
        %v6541 = vpop.permute.xlu0 %6540
        %6542 = vrot.lane.b32.xlu0 %v6394, 96
        %v6543 = vpop.permute.xlu0 %6542
        %6544 = vrot.lane.b32.xlu0 %v6395, 96
        %v6545 = vpop.permute.xlu0 %6544
        %6546 = vrot.lane.b32.xlu0 %v6396, 96
        %v6547 = vpop.permute.xlu0 %6546
        %6548 = vrot.lane.b32.xlu0 %v6397, 96
        %v6549 = vpop.permute.xlu0 %6548
        %6550 = vrot.lane.b32.xlu0 %v6398, 96
        %v6551 = vpop.permute.xlu0 %6550
        %6552 = vrot.lane.b32.xlu0 %v6399, 96
        %v6553 = vpop.permute.xlu0 %6552
        %6554 = vrot.lane.b32.xlu0 %v6400, 96
        %v6555 = vpop.permute.xlu0 %6554
        %6556 = vrot.lane.b32.xlu0 %v6401, 96
        %v6557 = vpop.permute.xlu0 %6556
        %6558 = vrot.lane.b32.xlu0 %v6402, 96
        %v6559 = vpop.permute.xlu0 %6558
        %6560 = vrot.lane.b32.xlu0 %v6403, 96
        %v6561 = vpop.permute.xlu0 %6560
        %6562 = vrot.lane.b32.xlu0 %v6404, 96
        %v6563 = vpop.permute.xlu0 %6562
        %6564 = vrot.lane.b32.xlu0 %v6405, 96
        %v6565 = vpop.permute.xlu0 %6564
        %6566 = vrot.lane.b32.xlu0 %v6406, 96
        %v6567 = vpop.permute.xlu0 %6566
        %6568 = vrot.lane.b32.xlu0 %v6407, 96
        %v6569 = vpop.permute.xlu0 %6568
        %6570 = vrot.lane.b32.xlu0 %v6408, 96
        %v6571 = vpop.permute.xlu0 %6570
        %6572 = vrot.lane.b32.xlu0 %v6409, 96
        %v6573 = vpop.permute.xlu0 %6572
        %6574 = vrot.lane.b32.xlu0 %v6410, 96
        %v6575 = vpop.permute.xlu0 %6574
        %6576 = vrot.lane.b32.xlu0 %v6411, 96
        %v6577 = vpop.permute.xlu0 %6576
        %6578 = vrot.lane.b32.xlu0 %v6412, 96
        %v6579 = vpop.permute.xlu0 %6578
        %6580 = vrot.lane.b32.xlu0 %v6413, 96
        %v6581 = vpop.permute.xlu0 %6580
        %6582 = vrot.lane.b32.xlu0 %v6414, 96
        %v6583 = vpop.permute.xlu0 %6582
        %6584 = vrot.lane.b32.xlu0 %v6415, 96
        %v6585 = vpop.permute.xlu0 %6584
        %6586 = vrot.lane.b32.xlu0 %v6416, 96
        %v6587 = vpop.permute.xlu0 %6586
        %6588 = vrot.lane.b32.xlu0 %v6417, 96
        %v6589 = vpop.permute.xlu0 %6588
        %6590 = vrot.lane.b32.xlu0 %v6418, 96
        %v6591 = vpop.permute.xlu0 %6590
        %6592 = vrot.lane.b32.xlu0 %v6419, 96
        %v6593 = vpop.permute.xlu0 %6592
        %6594 = vrot.lane.b32.xlu0 %v6420, 96
        %v6595 = vpop.permute.xlu0 %6594
        %6596 = vrot.lane.b32.xlu0 %v6421, 96
        %v6597 = vpop.permute.xlu0 %6596
        %6598 = vrot.lane.b32.xlu0 %v6422, 96
        %v6599 = vpop.permute.xlu0 %6598
        %6600 = vrot.lane.b32.xlu0 %v6423, 96
        %v6601 = vpop.permute.xlu0 %6600
        %6602 = vrot.lane.b32.xlu0 %v6424, 96
        %v6603 = vpop.permute.xlu0 %6602
        %6604 = vrot.lane.b32.xlu0 %v6425, 96
        %v6605 = vpop.permute.xlu0 %6604
        %6606 = vrot.lane.b32.xlu0 %v6426, 96
        %v6607 = vpop.permute.xlu0 %6606
        %6608 = vrot.lane.b32.xlu0 %v6427, 96
        %v6609 = vpop.permute.xlu0 %6608
        %6610 = vrot.lane.b32.xlu0 %v6428, 96
        %v6611 = vpop.permute.xlu0 %6610
        %6612 = vrot.lane.b32.xlu0 %v6429, 96
        %v6613 = vpop.permute.xlu0 %6612
        %6614 = vrot.lane.b32.xlu0 %v6430, 96
        %v6615 = vpop.permute.xlu0 %6614
        %6616 = vrot.lane.b32.xlu0 %v6431, 96
        %v6617 = vpop.permute.xlu0 %6616
        %6618 = vrot.lane.b32.xlu0 %v6432, 96
        %v6619 = vpop.permute.xlu0 %6618
        %6620 = vrot.lane.b32.xlu0 %v6433, 96
        %v6621 = vpop.permute.xlu0 %6620
        %6622 = vrot.lane.b32.xlu0 %v6434, 96
        %v6623 = vpop.permute.xlu0 %6622
        %6624 = vrot.lane.b32.xlu0 %v6435, 96
        %v6625 = vpop.permute.xlu0 %6624
        %6626 = vrot.lane.b32.xlu0 %v6436, 96
        %v6627 = vpop.permute.xlu0 %6626
        %6628 = vrot.lane.b32.xlu0 %v6437, 96
        %v6629 = vpop.permute.xlu0 %6628
        %6694 = vst.msk [vmem:[#allocation3] sm:$0xf] %vm1941, %v6503
        %6695 = vst.msk [vmem:[#allocation3 + $0xc] sm:$0xf] %vm1941, %v6505
        %6696 = vst.msk [vmem:[#allocation3 + $0x18] sm:$0xf] %vm1941, %v6507
        %6697 = vst.msk [vmem:[#allocation3 + $0x24] sm:$0xf] %vm1941, %v6509
        %6698 = vst.msk [vmem:[#allocation3 + $0x30] sm:$0xf] %vm1941, %v6511
        %6699 = vst.msk [vmem:[#allocation3 + $0x3c] sm:$0xf] %vm1941, %v6513
        %6700 = vst.msk [vmem:[#allocation3 + $0x48] sm:$0xf] %vm1941, %v6515
        %6701 = vst.msk [vmem:[#allocation3 + $0x54] sm:$0xf] %vm1941, %v6517
        %6702 = vst.msk [vmem:[#allocation3 + $0x60] sm:$0xf] %vm1941, %v6519
        %6703 = vst.msk [vmem:[#allocation3 + $0x6c] sm:$0xf] %vm1941, %v6521
        %6704 = vst.msk [vmem:[#allocation3 + $0x78] sm:$0xf] %vm1941, %v6523
        %6705 = vst.msk [vmem:[#allocation3 + $0x84] sm:$0xf] %vm1941, %v6525
        %6706 = vst.msk [vmem:[#allocation3 + $0x90] sm:$0xf] %vm1941, %v6527
        %6707 = vst.msk [vmem:[#allocation3 + $0x9c] sm:$0xf] %vm1941, %v6529
        %6708 = vst.msk [vmem:[#allocation3 + $0xa8] sm:$0xf] %vm1941, %v6531
        %6709 = vst.msk [vmem:[#allocation3 + $0xb4] sm:$0xf] %vm1941, %v6533
        %6710 = vst.msk [vmem:[#allocation3 + $0xc0] sm:$0xf] %vm1941, %v6535
        %6711 = vst.msk [vmem:[#allocation3 + $0xcc] sm:$0xf] %vm1941, %v6537
        %6712 = vst.msk [vmem:[#allocation3 + $0xd8] sm:$0xf] %vm1941, %v6539
        %6713 = vst.msk [vmem:[#allocation3 + $0xe4] sm:$0xf] %vm1941, %v6541
        %6714 = vst.msk [vmem:[#allocation3 + $0xf0] sm:$0xf] %vm1941, %v6543
        %6715 = vst.msk [vmem:[#allocation3 + $0xfc] sm:$0xf] %vm1941, %v6545
        %6716 = vst.msk [vmem:[#allocation3 + $0x108] sm:$0xf] %vm1941, %v6547
        %6717 = vst.msk [vmem:[#allocation3 + $0x114] sm:$0xf] %vm1941, %v6549
        %6718 = vst.msk [vmem:[#allocation3 + $0x120] sm:$0xf] %vm1941, %v6551
        %6719 = vst.msk [vmem:[#allocation3 + $0x12c] sm:$0xf] %vm1941, %v6553
        %6720 = vst.msk [vmem:[#allocation3 + $0x138] sm:$0xf] %vm1941, %v6555
        %6721 = vst.msk [vmem:[#allocation3 + $0x144] sm:$0xf] %vm1941, %v6557
        %6722 = vst.msk [vmem:[#allocation3 + $0x150] sm:$0xf] %vm1941, %v6559
        %6723 = vst.msk [vmem:[#allocation3 + $0x15c] sm:$0xf] %vm1941, %v6561
        %6724 = vst.msk [vmem:[#allocation3 + $0x168] sm:$0xf] %vm1941, %v6563
        %6725 = vst.msk [vmem:[#allocation3 + $0x174] sm:$0xf] %vm1941, %v6565
        %6726 = vst.msk [vmem:[#allocation3 + $0x180] sm:$0xf] %vm1941, %v6567
        %6727 = vst.msk [vmem:[#allocation3 + $0x18c] sm:$0xf] %vm1941, %v6569
        %6728 = vst.msk [vmem:[#allocation3 + $0x198] sm:$0xf] %vm1941, %v6571
        %6729 = vst.msk [vmem:[#allocation3 + $0x1a4] sm:$0xf] %vm1941, %v6573
        %6730 = vst.msk [vmem:[#allocation3 + $0x1b0] sm:$0xf] %vm1941, %v6575
        %6731 = vst.msk [vmem:[#allocation3 + $0x1bc] sm:$0xf] %vm1941, %v6577
        %6732 = vst.msk [vmem:[#allocation3 + $0x1c8] sm:$0xf] %vm1941, %v6579
        %6733 = vst.msk [vmem:[#allocation3 + $0x1d4] sm:$0xf] %vm1941, %v6581
        %6734 = vst.msk [vmem:[#allocation3 + $0x1e0] sm:$0xf] %vm1941, %v6583
        %6735 = vst.msk [vmem:[#allocation3 + $0x1ec] sm:$0xf] %vm1941, %v6585
        %6736 = vst.msk [vmem:[#allocation3 + $0x1f8] sm:$0xf] %vm1941, %v6587
        %6737 = vst.msk [vmem:[#allocation3 + $0x204] sm:$0xf] %vm1941, %v6589
        %6738 = vst.msk [vmem:[#allocation3 + $0x210] sm:$0xf] %vm1941, %v6591
        %6739 = vst.msk [vmem:[#allocation3 + $0x21c] sm:$0xf] %vm1941, %v6593
        %6740 = vst.msk [vmem:[#allocation3 + $0x228] sm:$0xf] %vm1941, %v6595
        %6741 = vst.msk [vmem:[#allocation3 + $0x234] sm:$0xf] %vm1941, %v6597
        %6742 = vst.msk [vmem:[#allocation3 + $0x240] sm:$0xf] %vm1941, %v6599
        %6743 = vst.msk [vmem:[#allocation3 + $0x24c] sm:$0xf] %vm1941, %v6601
        %6744 = vst.msk [vmem:[#allocation3 + $0x258] sm:$0xf] %vm1941, %v6603
        %6745 = vst.msk [vmem:[#allocation3 + $0x264] sm:$0xf] %vm1941, %v6605
        %6746 = vst.msk [vmem:[#allocation3 + $0x270] sm:$0xf] %vm1941, %v6607
        %6747 = vst.msk [vmem:[#allocation3 + $0x27c] sm:$0xf] %vm1941, %v6609
        %6748 = vst.msk [vmem:[#allocation3 + $0x288] sm:$0xf] %vm1941, %v6611
        %6749 = vst.msk [vmem:[#allocation3 + $0x294] sm:$0xf] %vm1941, %v6613
        %6750 = vst.msk [vmem:[#allocation3 + $0x2a0] sm:$0xf] %vm1941, %v6615
        %6751 = vst.msk [vmem:[#allocation3 + $0x2ac] sm:$0xf] %vm1941, %v6617
        %6752 = vst.msk [vmem:[#allocation3 + $0x2b8] sm:$0xf] %vm1941, %v6619
        %6753 = vst.msk [vmem:[#allocation3 + $0x2c4] sm:$0xf] %vm1941, %v6621
        %6754 = vst.msk [vmem:[#allocation3 + $0x2d0] sm:$0xf] %vm1941, %v6623
        %6755 = vst.msk [vmem:[#allocation3 + $0x2dc] sm:$0xf] %vm1941, %v6625
        %6756 = vst.msk [vmem:[#allocation3 + $0x2e8] sm:$0xf] %vm1941, %v6627
        %6757 = vst.msk [vmem:[#allocation3 + $0x2f4] sm:$0xf] %vm1941, %v6629
        %v6758 = vld [vmem:[%s401 + $0x1] sm:$0xff]
        %v6759 = vld [vmem:[%s401 + $0x9] sm:$0xff]
        %v6760 = vld [vmem:[%s401 + $0x19] sm:$0xff]
        %v6761 = vld [vmem:[%s401 + $0x21] sm:$0xff]
        %v6762 = vld [vmem:[%s401 + $0x31] sm:$0xff]
        %v6763 = vld [vmem:[%s401 + $0x39] sm:$0xff]
        %v6764 = vld [vmem:[%s401 + $0x49] sm:$0xff]
        %v6765 = vld [vmem:[%s401 + $0x51] sm:$0xff]
        %v6766 = vld [vmem:[%s401 + $0x61] sm:$0xff]
        %v6767 = vld [vmem:[%s401 + $0x69] sm:$0xff]
        %v6768 = vld [vmem:[%s401 + $0x79] sm:$0xff]
        %v6769 = vld [vmem:[%s401 + $0x81] sm:$0xff]
        %v6770 = vld [vmem:[%s401 + $0x91] sm:$0xff]
        %v6771 = vld [vmem:[%s401 + $0x99] sm:$0xff]
        %v6772 = vld [vmem:[%s401 + $0xa9] sm:$0xff]
        %v6773 = vld [vmem:[%s401 + $0xb1] sm:$0xff]
        %v6774 = vld [vmem:[%s401 + $0xc1] sm:$0xff]
        %v6775 = vld [vmem:[%s401 + $0xc9] sm:$0xff]
        %v6776 = vld [vmem:[%s401 + $0xd9] sm:$0xff]
        %v6777 = vld [vmem:[%s401 + $0xe1] sm:$0xff]
        %v6778 = vld [vmem:[%s401 + $0xf1] sm:$0xff]
        %v6779 = vld [vmem:[%s401 + $0xf9] sm:$0xff]
        %v6780 = vld [vmem:[%s401 + $0x109] sm:$0xff]
        %v6781 = vld [vmem:[%s401 + $0x111] sm:$0xff]
        %v6782 = vld [vmem:[%s401 + $0x121] sm:$0xff]
        %v6783 = vld [vmem:[%s401 + $0x129] sm:$0xff]
        %v6784 = vld [vmem:[%s401 + $0x139] sm:$0xff]
        %v6785 = vld [vmem:[%s401 + $0x141] sm:$0xff]
        %v6786 = vld [vmem:[%s401 + $0x151] sm:$0xff]
        %v6787 = vld [vmem:[%s401 + $0x159] sm:$0xff]
        %v6788 = vld [vmem:[%s401 + $0x169] sm:$0xff]
        %v6789 = vld [vmem:[%s401 + $0x171] sm:$0xff]
        %v6790 = vld [vmem:[%s401 + $0x1b1] sm:$0xff]
        %v6791 = vld [vmem:[%s401 + $0x1b9] sm:$0xff]
        %v6792 = vld [vmem:[%s401 + $0x1c9] sm:$0xff]
        %v6793 = vld [vmem:[%s401 + $0x1d1] sm:$0xff]
        %v6794 = vld [vmem:[%s401 + $0x1e1] sm:$0xff]
        %v6795 = vld [vmem:[%s401 + $0x1e9] sm:$0xff]
        %v6796 = vld [vmem:[%s401 + $0x1f9] sm:$0xff]
        %v6797 = vld [vmem:[%s401 + $0x201] sm:$0xff]
        %v6798 = vld [vmem:[%s401 + $0x211] sm:$0xff]
        %v6799 = vld [vmem:[%s401 + $0x219] sm:$0xff]
        %v6800 = vld [vmem:[%s401 + $0x229] sm:$0xff]
        %v6801 = vld [vmem:[%s401 + $0x231] sm:$0xff]
        %v6802 = vld [vmem:[%s401 + $0x241] sm:$0xff]
        %v6803 = vld [vmem:[%s401 + $0x249] sm:$0xff]
        %v6804 = vld [vmem:[%s401 + $0x259] sm:$0xff]
        %v6805 = vld [vmem:[%s401 + $0x261] sm:$0xff]
        %v6806 = vld [vmem:[%s401 + $0x271] sm:$0xff]
        %v6807 = vld [vmem:[%s401 + $0x279] sm:$0xff]
        %v6808 = vld [vmem:[%s401 + $0x289] sm:$0xff]
        %v6809 = vld [vmem:[%s401 + $0x291] sm:$0xff]
        %v6810 = vld [vmem:[%s401 + $0x2a1] sm:$0xff]
        %v6811 = vld [vmem:[%s401 + $0x2a9] sm:$0xff]
        %v6812 = vld [vmem:[%s401 + $0x2b9] sm:$0xff]
        %v6813 = vld [vmem:[%s401 + $0x2c1] sm:$0xff]
        %v6814 = vld [vmem:[%s401 + $0x2d1] sm:$0xff]
        %v6815 = vld [vmem:[%s401 + $0x2d9] sm:$0xff]
        %v6816 = vld [vmem:[%s401 + $0x2e9] sm:$0xff]
        %v6817 = vld [vmem:[%s401 + $0x2f1] sm:$0xff]
        %v6818 = vld [vmem:[%s401 + $0x301] sm:$0xff]
        %v6819 = vld [vmem:[%s401 + $0x309] sm:$0xff]
        %v6820 = vld [vmem:[%s401 + $0x319] sm:$0xff]
        %v6821 = vld [vmem:[%s401 + $0x321] sm:$0xff]
        %v6822 = vpack.c.bf16 %v6758, %v6758
        %v6823 = vpack.c.bf16 %v6759, %v6759
        %v6824 = vpack.c.bf16 %v6760, %v6760
        %v6825 = vpack.c.bf16 %v6761, %v6761
        %v6826 = vpack.c.bf16 %v6762, %v6762
        %v6827 = vpack.c.bf16 %v6763, %v6763
        %v6828 = vpack.c.bf16 %v6764, %v6764
        %v6829 = vpack.c.bf16 %v6765, %v6765
        %v6830 = vpack.c.bf16 %v6766, %v6766
        %v6831 = vpack.c.bf16 %v6767, %v6767
        %v6832 = vpack.c.bf16 %v6768, %v6768
        %v6833 = vpack.c.bf16 %v6769, %v6769
        %v6834 = vpack.c.bf16 %v6770, %v6770
        %v6835 = vpack.c.bf16 %v6771, %v6771
        %v6836 = vpack.c.bf16 %v6772, %v6772
        %v6837 = vpack.c.bf16 %v6773, %v6773
        %v6838 = vpack.c.bf16 %v6774, %v6774
        %v6839 = vpack.c.bf16 %v6775, %v6775
        %v6840 = vpack.c.bf16 %v6776, %v6776
        %v6841 = vpack.c.bf16 %v6777, %v6777
        %v6842 = vpack.c.bf16 %v6778, %v6778
        %v6843 = vpack.c.bf16 %v6779, %v6779
        %v6844 = vpack.c.bf16 %v6780, %v6780
        %v6845 = vpack.c.bf16 %v6781, %v6781
        %v6846 = vpack.c.bf16 %v6782, %v6782
        %v6847 = vpack.c.bf16 %v6783, %v6783
        %v6848 = vpack.c.bf16 %v6784, %v6784
        %v6849 = vpack.c.bf16 %v6785, %v6785
        %v6850 = vpack.c.bf16 %v6786, %v6786
        %v6851 = vpack.c.bf16 %v6787, %v6787
        %v6852 = vpack.c.bf16 %v6788, %v6788
        %v6853 = vpack.c.bf16 %v6789, %v6789
        %v6854 = vpack.c.bf16 %v6790, %v6790
        %v6855 = vpack.c.bf16 %v6791, %v6791
        %v6856 = vpack.c.bf16 %v6792, %v6792
        %v6857 = vpack.c.bf16 %v6793, %v6793
        %v6858 = vpack.c.bf16 %v6794, %v6794
        %v6859 = vpack.c.bf16 %v6795, %v6795
        %v6860 = vpack.c.bf16 %v6796, %v6796
        %v6861 = vpack.c.bf16 %v6797, %v6797
        %v6862 = vpack.c.bf16 %v6798, %v6798
        %v6863 = vpack.c.bf16 %v6799, %v6799
        %v6864 = vpack.c.bf16 %v6800, %v6800
        %v6865 = vpack.c.bf16 %v6801, %v6801
        %v6866 = vpack.c.bf16 %v6802, %v6802
        %v6867 = vpack.c.bf16 %v6803, %v6803
        %v6868 = vpack.c.bf16 %v6804, %v6804
        %v6869 = vpack.c.bf16 %v6805, %v6805
        %v6870 = vpack.c.bf16 %v6806, %v6806
        %v6871 = vpack.c.bf16 %v6807, %v6807
        %v6872 = vpack.c.bf16 %v6808, %v6808
        %v6873 = vpack.c.bf16 %v6809, %v6809
        %v6874 = vpack.c.bf16 %v6810, %v6810
        %v6875 = vpack.c.bf16 %v6811, %v6811
        %v6876 = vpack.c.bf16 %v6812, %v6812
        %v6877 = vpack.c.bf16 %v6813, %v6813
        %v6878 = vpack.c.bf16 %v6814, %v6814
        %v6879 = vpack.c.bf16 %v6815, %v6815
        %v6880 = vpack.c.bf16 %v6816, %v6816
        %v6881 = vpack.c.bf16 %v6817, %v6817
        %v6882 = vpack.c.bf16 %v6818, %v6818
        %v6883 = vpack.c.bf16 %v6819, %v6819
        %v6884 = vpack.c.bf16 %v6820, %v6820
        %v6885 = vpack.c.bf16 %v6821, %v6821
        %6886 = vst.msk [vmem:[#allocation3 + $0x4] sm:$0xf] %vm594, %v6822
        %6887 = vst.msk [vmem:[#allocation3 + $0x10] sm:$0xf] %vm594, %v6823
        %6888 = vst.msk [vmem:[#allocation3 + $0x1c] sm:$0xf] %vm594, %v6824
        %6889 = vst.msk [vmem:[#allocation3 + $0x28] sm:$0xf] %vm594, %v6825
        %6890 = vst.msk [vmem:[#allocation3 + $0x34] sm:$0xf] %vm594, %v6826
        %6891 = vst.msk [vmem:[#allocation3 + $0x40] sm:$0xf] %vm594, %v6827
        %6892 = vst.msk [vmem:[#allocation3 + $0x4c] sm:$0xf] %vm594, %v6828
        %6893 = vst.msk [vmem:[#allocation3 + $0x58] sm:$0xf] %vm594, %v6829
        %6894 = vst.msk [vmem:[#allocation3 + $0x64] sm:$0xf] %vm594, %v6830
        %6895 = vst.msk [vmem:[#allocation3 + $0x70] sm:$0xf] %vm594, %v6831
        %6896 = vst.msk [vmem:[#allocation3 + $0x7c] sm:$0xf] %vm594, %v6832
        %6897 = vst.msk [vmem:[#allocation3 + $0x88] sm:$0xf] %vm594, %v6833
        %6898 = vst.msk [vmem:[#allocation3 + $0x94] sm:$0xf] %vm594, %v6834
        %6899 = vst.msk [vmem:[#allocation3 + $0xa0] sm:$0xf] %vm594, %v6835
        %6900 = vst.msk [vmem:[#allocation3 + $0xac] sm:$0xf] %vm594, %v6836
        %6901 = vst.msk [vmem:[#allocation3 + $0xb8] sm:$0xf] %vm594, %v6837
        %6902 = vst.msk [vmem:[#allocation3 + $0xc4] sm:$0xf] %vm594, %v6838
        %6903 = vst.msk [vmem:[#allocation3 + $0xd0] sm:$0xf] %vm594, %v6839
        %6904 = vst.msk [vmem:[#allocation3 + $0xdc] sm:$0xf] %vm594, %v6840
        %6905 = vst.msk [vmem:[#allocation3 + $0xe8] sm:$0xf] %vm594, %v6841
        %6906 = vst.msk [vmem:[#allocation3 + $0xf4] sm:$0xf] %vm594, %v6842
        %6907 = vst.msk [vmem:[#allocation3 + $0x100] sm:$0xf] %vm594, %v6843
        %6908 = vst.msk [vmem:[#allocation3 + $0x10c] sm:$0xf] %vm594, %v6844
        %6909 = vst.msk [vmem:[#allocation3 + $0x118] sm:$0xf] %vm594, %v6845
        %6910 = vst.msk [vmem:[#allocation3 + $0x124] sm:$0xf] %vm594, %v6846
        %6911 = vst.msk [vmem:[#allocation3 + $0x130] sm:$0xf] %vm594, %v6847
        %6912 = vst.msk [vmem:[#allocation3 + $0x13c] sm:$0xf] %vm594, %v6848
        %6913 = vst.msk [vmem:[#allocation3 + $0x148] sm:$0xf] %vm594, %v6849
        %6914 = vst.msk [vmem:[#allocation3 + $0x154] sm:$0xf] %vm594, %v6850
        %6915 = vst.msk [vmem:[#allocation3 + $0x160] sm:$0xf] %vm594, %v6851
        %6916 = vst.msk [vmem:[#allocation3 + $0x16c] sm:$0xf] %vm594, %v6852
        %6917 = vst.msk [vmem:[#allocation3 + $0x178] sm:$0xf] %vm594, %v6853
        %6918 = vst.msk [vmem:[#allocation3 + $0x184] sm:$0xf] %vm594, %v6854
        %6919 = vst.msk [vmem:[#allocation3 + $0x190] sm:$0xf] %vm594, %v6855
        %6920 = vst.msk [vmem:[#allocation3 + $0x19c] sm:$0xf] %vm594, %v6856
        %6921 = vst.msk [vmem:[#allocation3 + $0x1a8] sm:$0xf] %vm594, %v6857
        %6922 = vst.msk [vmem:[#allocation3 + $0x1b4] sm:$0xf] %vm594, %v6858
        %6923 = vst.msk [vmem:[#allocation3 + $0x1c0] sm:$0xf] %vm594, %v6859
        %6924 = vst.msk [vmem:[#allocation3 + $0x1cc] sm:$0xf] %vm594, %v6860
        %6925 = vst.msk [vmem:[#allocation3 + $0x1d8] sm:$0xf] %vm594, %v6861
        %6926 = vst.msk [vmem:[#allocation3 + $0x1e4] sm:$0xf] %vm594, %v6862
        %6927 = vst.msk [vmem:[#allocation3 + $0x1f0] sm:$0xf] %vm594, %v6863
        %6928 = vst.msk [vmem:[#allocation3 + $0x1fc] sm:$0xf] %vm594, %v6864
        %6929 = vst.msk [vmem:[#allocation3 + $0x208] sm:$0xf] %vm594, %v6865
        %6930 = vst.msk [vmem:[#allocation3 + $0x214] sm:$0xf] %vm594, %v6866
        %6931 = vst.msk [vmem:[#allocation3 + $0x220] sm:$0xf] %vm594, %v6867
        %6932 = vst.msk [vmem:[#allocation3 + $0x22c] sm:$0xf] %vm594, %v6868
        %6933 = vst.msk [vmem:[#allocation3 + $0x238] sm:$0xf] %vm594, %v6869
        %6934 = vst.msk [vmem:[#allocation3 + $0x244] sm:$0xf] %vm594, %v6870
        %6935 = vst.msk [vmem:[#allocation3 + $0x250] sm:$0xf] %vm594, %v6871
        %6936 = vst.msk [vmem:[#allocation3 + $0x25c] sm:$0xf] %vm594, %v6872
        %6937 = vst.msk [vmem:[#allocation3 + $0x268] sm:$0xf] %vm594, %v6873
        %6938 = vst.msk [vmem:[#allocation3 + $0x274] sm:$0xf] %vm594, %v6874
        %6939 = vst.msk [vmem:[#allocation3 + $0x280] sm:$0xf] %vm594, %v6875
        %6940 = vst.msk [vmem:[#allocation3 + $0x28c] sm:$0xf] %vm594, %v6876
        %6941 = vst.msk [vmem:[#allocation3 + $0x298] sm:$0xf] %vm594, %v6877
        %6942 = vst.msk [vmem:[#allocation3 + $0x2a4] sm:$0xf] %vm594, %v6878
        %6943 = vst.msk [vmem:[#allocation3 + $0x2b0] sm:$0xf] %vm594, %v6879
        %6944 = vst.msk [vmem:[#allocation3 + $0x2bc] sm:$0xf] %vm594, %v6880
        %6945 = vst.msk [vmem:[#allocation3 + $0x2c8] sm:$0xf] %vm594, %v6881
        %6946 = vst.msk [vmem:[#allocation3 + $0x2d4] sm:$0xf] %vm594, %v6882
        %6947 = vst.msk [vmem:[#allocation3 + $0x2e0] sm:$0xf] %vm594, %v6883
        %6948 = vst.msk [vmem:[#allocation3 + $0x2ec] sm:$0xf] %vm594, %v6884
        %6949 = vst.msk [vmem:[#allocation3 + $0x2f8] sm:$0xf] %vm594, %v6885
        %v6950 = vld [vmem:[%s401 + $0x2] sm:$0xff]
        %v6951 = vld [vmem:[%s401 + $0xa] sm:$0xff]
        %v6952 = vld [vmem:[%s401 + $0x1a] sm:$0xff]
        %v6953 = vld [vmem:[%s401 + $0x22] sm:$0xff]
        %v6954 = vld [vmem:[%s401 + $0x32] sm:$0xff]
        %v6955 = vld [vmem:[%s401 + $0x3a] sm:$0xff]
        %v6956 = vld [vmem:[%s401 + $0x4a] sm:$0xff]
        %v6957 = vld [vmem:[%s401 + $0x52] sm:$0xff]
        %v6958 = vld [vmem:[%s401 + $0x62] sm:$0xff]
        %v6959 = vld [vmem:[%s401 + $0x6a] sm:$0xff]
        %v6960 = vld [vmem:[%s401 + $0x7a] sm:$0xff]
        %v6961 = vld [vmem:[%s401 + $0x82] sm:$0xff]
        %v6962 = vld [vmem:[%s401 + $0x92] sm:$0xff]
        %v6963 = vld [vmem:[%s401 + $0x9a] sm:$0xff]
        %v6964 = vld [vmem:[%s401 + $0xaa] sm:$0xff]
        %v6965 = vld [vmem:[%s401 + $0xb2] sm:$0xff]
        %v6966 = vld [vmem:[%s401 + $0xc2] sm:$0xff]
        %v6967 = vld [vmem:[%s401 + $0xca] sm:$0xff]
        %v6968 = vld [vmem:[%s401 + $0xda] sm:$0xff]
        %v6969 = vld [vmem:[%s401 + $0xe2] sm:$0xff]
        %v6970 = vld [vmem:[%s401 + $0xf2] sm:$0xff]
        %v6971 = vld [vmem:[%s401 + $0xfa] sm:$0xff]
        %v6972 = vld [vmem:[%s401 + $0x10a] sm:$0xff]
        %v6973 = vld [vmem:[%s401 + $0x112] sm:$0xff]
        %v6974 = vld [vmem:[%s401 + $0x122] sm:$0xff]
        %v6975 = vld [vmem:[%s401 + $0x12a] sm:$0xff]
        %v6976 = vld [vmem:[%s401 + $0x13a] sm:$0xff]
        %v6977 = vld [vmem:[%s401 + $0x142] sm:$0xff]
        %v6978 = vld [vmem:[%s401 + $0x152] sm:$0xff]
        %v6979 = vld [vmem:[%s401 + $0x15a] sm:$0xff]
        %v6980 = vld [vmem:[%s401 + $0x16a] sm:$0xff]
        %v6981 = vld [vmem:[%s401 + $0x172] sm:$0xff]
        %v6982 = vld [vmem:[%s401 + $0x1b2] sm:$0xff]
        %v6983 = vld [vmem:[%s401 + $0x1ba] sm:$0xff]
        %v6984 = vld [vmem:[%s401 + $0x1ca] sm:$0xff]
        %v6985 = vld [vmem:[%s401 + $0x1d2] sm:$0xff]
        %v6986 = vld [vmem:[%s401 + $0x1e2] sm:$0xff]
        %v6987 = vld [vmem:[%s401 + $0x1ea] sm:$0xff]
        %v6988 = vld [vmem:[%s401 + $0x1fa] sm:$0xff]
        %v6989 = vld [vmem:[%s401 + $0x202] sm:$0xff]
        %v6990 = vld [vmem:[%s401 + $0x212] sm:$0xff]
        %v6991 = vld [vmem:[%s401 + $0x21a] sm:$0xff]
        %v6992 = vld [vmem:[%s401 + $0x22a] sm:$0xff]
        %v6993 = vld [vmem:[%s401 + $0x232] sm:$0xff]
        %v6994 = vld [vmem:[%s401 + $0x242] sm:$0xff]
        %v6995 = vld [vmem:[%s401 + $0x24a] sm:$0xff]
        %v6996 = vld [vmem:[%s401 + $0x25a] sm:$0xff]
        %v6997 = vld [vmem:[%s401 + $0x262] sm:$0xff]
        %v6998 = vld [vmem:[%s401 + $0x272] sm:$0xff]
        %v6999 = vld [vmem:[%s401 + $0x27a] sm:$0xff]
        %v7000 = vld [vmem:[%s401 + $0x28a] sm:$0xff]
        %v7001 = vld [vmem:[%s401 + $0x292] sm:$0xff]
        %v7002 = vld [vmem:[%s401 + $0x2a2] sm:$0xff]
        %v7003 = vld [vmem:[%s401 + $0x2aa] sm:$0xff]
        %v7004 = vld [vmem:[%s401 + $0x2ba] sm:$0xff]
        %v7005 = vld [vmem:[%s401 + $0x2c2] sm:$0xff]
        %v7006 = vld [vmem:[%s401 + $0x2d2] sm:$0xff]
        %v7007 = vld [vmem:[%s401 + $0x2da] sm:$0xff]
        %v7008 = vld [vmem:[%s401 + $0x2ea] sm:$0xff]
        %v7009 = vld [vmem:[%s401 + $0x2f2] sm:$0xff]
        %v7010 = vld [vmem:[%s401 + $0x302] sm:$0xff]
        %v7011 = vld [vmem:[%s401 + $0x30a] sm:$0xff]
        %v7012 = vld [vmem:[%s401 + $0x31a] sm:$0xff]
        %v7013 = vld [vmem:[%s401 + $0x322] sm:$0xff]
        %v7014 = vpack.c.bf16 %v6950, %v6950
        %v7015 = vpack.c.bf16 %v6951, %v6951
        %v7016 = vpack.c.bf16 %v6952, %v6952
        %v7017 = vpack.c.bf16 %v6953, %v6953
        %v7018 = vpack.c.bf16 %v6954, %v6954
        %v7019 = vpack.c.bf16 %v6955, %v6955
        %v7020 = vpack.c.bf16 %v6956, %v6956
        %v7021 = vpack.c.bf16 %v6957, %v6957
        %v7022 = vpack.c.bf16 %v6958, %v6958
        %v7023 = vpack.c.bf16 %v6959, %v6959
        %v7024 = vpack.c.bf16 %v6960, %v6960
        %v7025 = vpack.c.bf16 %v6961, %v6961
        %v7026 = vpack.c.bf16 %v6962, %v6962
        %v7027 = vpack.c.bf16 %v6963, %v6963
        %v7028 = vpack.c.bf16 %v6964, %v6964
        %v7029 = vpack.c.bf16 %v6965, %v6965
        %v7030 = vpack.c.bf16 %v6966, %v6966
        %v7031 = vpack.c.bf16 %v6967, %v6967
        %v7032 = vpack.c.bf16 %v6968, %v6968
        %v7033 = vpack.c.bf16 %v6969, %v6969
        %v7034 = vpack.c.bf16 %v6970, %v6970
        %v7035 = vpack.c.bf16 %v6971, %v6971
        %v7036 = vpack.c.bf16 %v6972, %v6972
        %v7037 = vpack.c.bf16 %v6973, %v6973
        %v7038 = vpack.c.bf16 %v6974, %v6974
        %v7039 = vpack.c.bf16 %v6975, %v6975
        %v7040 = vpack.c.bf16 %v6976, %v6976
        %v7041 = vpack.c.bf16 %v6977, %v6977
        %v7042 = vpack.c.bf16 %v6978, %v6978
        %v7043 = vpack.c.bf16 %v6979, %v6979
        %v7044 = vpack.c.bf16 %v6980, %v6980
        %v7045 = vpack.c.bf16 %v6981, %v6981
        %v7046 = vpack.c.bf16 %v6982, %v6982
        %v7047 = vpack.c.bf16 %v6983, %v6983
        %v7048 = vpack.c.bf16 %v6984, %v6984
        %v7049 = vpack.c.bf16 %v6985, %v6985
        %v7050 = vpack.c.bf16 %v6986, %v6986
        %v7051 = vpack.c.bf16 %v6987, %v6987
        %v7052 = vpack.c.bf16 %v6988, %v6988
        %v7053 = vpack.c.bf16 %v6989, %v6989
        %v7054 = vpack.c.bf16 %v6990, %v6990
        %v7055 = vpack.c.bf16 %v6991, %v6991
        %v7056 = vpack.c.bf16 %v6992, %v6992
        %v7057 = vpack.c.bf16 %v6993, %v6993
        %v7058 = vpack.c.bf16 %v6994, %v6994
        %v7059 = vpack.c.bf16 %v6995, %v6995
        %v7060 = vpack.c.bf16 %v6996, %v6996
        %v7061 = vpack.c.bf16 %v6997, %v6997
        %v7062 = vpack.c.bf16 %v6998, %v6998
        %v7063 = vpack.c.bf16 %v6999, %v6999
        %v7064 = vpack.c.bf16 %v7000, %v7000
        %v7065 = vpack.c.bf16 %v7001, %v7001
        %v7066 = vpack.c.bf16 %v7002, %v7002
        %v7067 = vpack.c.bf16 %v7003, %v7003
        %v7068 = vpack.c.bf16 %v7004, %v7004
        %v7069 = vpack.c.bf16 %v7005, %v7005
        %v7070 = vpack.c.bf16 %v7006, %v7006
        %v7071 = vpack.c.bf16 %v7007, %v7007
        %v7072 = vpack.c.bf16 %v7008, %v7008
        %v7073 = vpack.c.bf16 %v7009, %v7009
        %v7074 = vpack.c.bf16 %v7010, %v7010
        %v7075 = vpack.c.bf16 %v7011, %v7011
        %v7076 = vpack.c.bf16 %v7012, %v7012
        %v7077 = vpack.c.bf16 %v7013, %v7013
        %7142 = vrot.lane.b32.xlu0 %v7014, 32
        %v7143 = vpop.permute.xlu0 %7142
        %7144 = vrot.lane.b32.xlu0 %v7015, 32
        %v7145 = vpop.permute.xlu0 %7144
        %7146 = vrot.lane.b32.xlu0 %v7016, 32
        %v7147 = vpop.permute.xlu0 %7146
        %7148 = vrot.lane.b32.xlu0 %v7017, 32
        %v7149 = vpop.permute.xlu0 %7148
        %7150 = vrot.lane.b32.xlu0 %v7018, 32
        %v7151 = vpop.permute.xlu0 %7150
        %7152 = vrot.lane.b32.xlu0 %v7019, 32
        %v7153 = vpop.permute.xlu0 %7152
        %7154 = vrot.lane.b32.xlu0 %v7020, 32
        %v7155 = vpop.permute.xlu0 %7154
        %7156 = vrot.lane.b32.xlu0 %v7021, 32
        %v7157 = vpop.permute.xlu0 %7156
        %7158 = vrot.lane.b32.xlu0 %v7022, 32
        %v7159 = vpop.permute.xlu0 %7158
        %7160 = vrot.lane.b32.xlu0 %v7023, 32
        %v7161 = vpop.permute.xlu0 %7160
        %7162 = vrot.lane.b32.xlu0 %v7024, 32
        %v7163 = vpop.permute.xlu0 %7162
        %7164 = vrot.lane.b32.xlu0 %v7025, 32
        %v7165 = vpop.permute.xlu0 %7164
        %7166 = vrot.lane.b32.xlu0 %v7026, 32
        %v7167 = vpop.permute.xlu0 %7166
        %7168 = vrot.lane.b32.xlu0 %v7027, 32
        %v7169 = vpop.permute.xlu0 %7168
        %7170 = vrot.lane.b32.xlu0 %v7028, 32
        %v7171 = vpop.permute.xlu0 %7170
        %7172 = vrot.lane.b32.xlu0 %v7029, 32
        %v7173 = vpop.permute.xlu0 %7172
        %7174 = vrot.lane.b32.xlu0 %v7030, 32
        %v7175 = vpop.permute.xlu0 %7174
        %7176 = vrot.lane.b32.xlu0 %v7031, 32
        %v7177 = vpop.permute.xlu0 %7176
        %7178 = vrot.lane.b32.xlu0 %v7032, 32
        %v7179 = vpop.permute.xlu0 %7178
        %7180 = vrot.lane.b32.xlu0 %v7033, 32
        %v7181 = vpop.permute.xlu0 %7180
        %7182 = vrot.lane.b32.xlu0 %v7034, 32
        %v7183 = vpop.permute.xlu0 %7182
        %7184 = vrot.lane.b32.xlu0 %v7035, 32
        %v7185 = vpop.permute.xlu0 %7184
        %7186 = vrot.lane.b32.xlu0 %v7036, 32
        %v7187 = vpop.permute.xlu0 %7186
        %7188 = vrot.lane.b32.xlu0 %v7037, 32
        %v7189 = vpop.permute.xlu0 %7188
        %7190 = vrot.lane.b32.xlu0 %v7038, 32
        %v7191 = vpop.permute.xlu0 %7190
        %7192 = vrot.lane.b32.xlu0 %v7039, 32
        %v7193 = vpop.permute.xlu0 %7192
        %7194 = vrot.lane.b32.xlu0 %v7040, 32
        %v7195 = vpop.permute.xlu0 %7194
        %7196 = vrot.lane.b32.xlu0 %v7041, 32
        %v7197 = vpop.permute.xlu0 %7196
        %7198 = vrot.lane.b32.xlu0 %v7042, 32
        %v7199 = vpop.permute.xlu0 %7198
        %7200 = vrot.lane.b32.xlu0 %v7043, 32
        %v7201 = vpop.permute.xlu0 %7200
        %7202 = vrot.lane.b32.xlu0 %v7044, 32
        %v7203 = vpop.permute.xlu0 %7202
        %7204 = vrot.lane.b32.xlu0 %v7045, 32
        %v7205 = vpop.permute.xlu0 %7204
        %7206 = vrot.lane.b32.xlu0 %v7046, 32
        %v7207 = vpop.permute.xlu0 %7206
        %7208 = vrot.lane.b32.xlu0 %v7047, 32
        %v7209 = vpop.permute.xlu0 %7208
        %7210 = vrot.lane.b32.xlu0 %v7048, 32
        %v7211 = vpop.permute.xlu0 %7210
        %7212 = vrot.lane.b32.xlu0 %v7049, 32
        %v7213 = vpop.permute.xlu0 %7212
        %7214 = vrot.lane.b32.xlu0 %v7050, 32
        %v7215 = vpop.permute.xlu0 %7214
        %7216 = vrot.lane.b32.xlu0 %v7051, 32
        %v7217 = vpop.permute.xlu0 %7216
        %7218 = vrot.lane.b32.xlu0 %v7052, 32
        %v7219 = vpop.permute.xlu0 %7218
        %7220 = vrot.lane.b32.xlu0 %v7053, 32
        %v7221 = vpop.permute.xlu0 %7220
        %7222 = vrot.lane.b32.xlu0 %v7054, 32
        %v7223 = vpop.permute.xlu0 %7222
        %7224 = vrot.lane.b32.xlu0 %v7055, 32
        %v7225 = vpop.permute.xlu0 %7224
        %7226 = vrot.lane.b32.xlu0 %v7056, 32
        %v7227 = vpop.permute.xlu0 %7226
        %7228 = vrot.lane.b32.xlu0 %v7057, 32
        %v7229 = vpop.permute.xlu0 %7228
        %7230 = vrot.lane.b32.xlu0 %v7058, 32
        %v7231 = vpop.permute.xlu0 %7230
        %7232 = vrot.lane.b32.xlu0 %v7059, 32
        %v7233 = vpop.permute.xlu0 %7232
        %7234 = vrot.lane.b32.xlu0 %v7060, 32
        %v7235 = vpop.permute.xlu0 %7234
        %7236 = vrot.lane.b32.xlu0 %v7061, 32
        %v7237 = vpop.permute.xlu0 %7236
        %7238 = vrot.lane.b32.xlu0 %v7062, 32
        %v7239 = vpop.permute.xlu0 %7238
        %7240 = vrot.lane.b32.xlu0 %v7063, 32
        %v7241 = vpop.permute.xlu0 %7240
        %7242 = vrot.lane.b32.xlu0 %v7064, 32
        %v7243 = vpop.permute.xlu0 %7242
        %7244 = vrot.lane.b32.xlu0 %v7065, 32
        %v7245 = vpop.permute.xlu0 %7244
        %7246 = vrot.lane.b32.xlu0 %v7066, 32
        %v7247 = vpop.permute.xlu0 %7246
        %7248 = vrot.lane.b32.xlu0 %v7067, 32
        %v7249 = vpop.permute.xlu0 %7248
        %7250 = vrot.lane.b32.xlu0 %v7068, 32
        %v7251 = vpop.permute.xlu0 %7250
        %7252 = vrot.lane.b32.xlu0 %v7069, 32
        %v7253 = vpop.permute.xlu0 %7252
        %7254 = vrot.lane.b32.xlu0 %v7070, 32
        %v7255 = vpop.permute.xlu0 %7254
        %7256 = vrot.lane.b32.xlu0 %v7071, 32
        %v7257 = vpop.permute.xlu0 %7256
        %7258 = vrot.lane.b32.xlu0 %v7072, 32
        %v7259 = vpop.permute.xlu0 %7258
        %7260 = vrot.lane.b32.xlu0 %v7073, 32
        %v7261 = vpop.permute.xlu0 %7260
        %7262 = vrot.lane.b32.xlu0 %v7074, 32
        %v7263 = vpop.permute.xlu0 %7262
        %7264 = vrot.lane.b32.xlu0 %v7075, 32
        %v7265 = vpop.permute.xlu0 %7264
        %7266 = vrot.lane.b32.xlu0 %v7076, 32
        %v7267 = vpop.permute.xlu0 %7266
        %7268 = vrot.lane.b32.xlu0 %v7077, 32
        %v7269 = vpop.permute.xlu0 %7268
        %7334 = vst.msk [vmem:[#allocation3 + $0x4] sm:$0xf] %vm1043, %v7143
        %7335 = vst.msk [vmem:[#allocation3 + $0x10] sm:$0xf] %vm1043, %v7145
        %7336 = vst.msk [vmem:[#allocation3 + $0x1c] sm:$0xf] %vm1043, %v7147
        %7337 = vst.msk [vmem:[#allocation3 + $0x28] sm:$0xf] %vm1043, %v7149
        %7338 = vst.msk [vmem:[#allocation3 + $0x34] sm:$0xf] %vm1043, %v7151
        %7339 = vst.msk [vmem:[#allocation3 + $0x40] sm:$0xf] %vm1043, %v7153
        %7340 = vst.msk [vmem:[#allocation3 + $0x4c] sm:$0xf] %vm1043, %v7155
        %7341 = vst.msk [vmem:[#allocation3 + $0x58] sm:$0xf] %vm1043, %v7157
        %7342 = vst.msk [vmem:[#allocation3 + $0x64] sm:$0xf] %vm1043, %v7159
        %7343 = vst.msk [vmem:[#allocation3 + $0x70] sm:$0xf] %vm1043, %v7161
        %7344 = vst.msk [vmem:[#allocation3 + $0x7c] sm:$0xf] %vm1043, %v7163
        %7345 = vst.msk [vmem:[#allocation3 + $0x88] sm:$0xf] %vm1043, %v7165
        %7346 = vst.msk [vmem:[#allocation3 + $0x94] sm:$0xf] %vm1043, %v7167
        %7347 = vst.msk [vmem:[#allocation3 + $0xa0] sm:$0xf] %vm1043, %v7169
        %7348 = vst.msk [vmem:[#allocation3 + $0xac] sm:$0xf] %vm1043, %v7171
        %7349 = vst.msk [vmem:[#allocation3 + $0xb8] sm:$0xf] %vm1043, %v7173
        %7350 = vst.msk [vmem:[#allocation3 + $0xc4] sm:$0xf] %vm1043, %v7175
        %7351 = vst.msk [vmem:[#allocation3 + $0xd0] sm:$0xf] %vm1043, %v7177
        %7352 = vst.msk [vmem:[#allocation3 + $0xdc] sm:$0xf] %vm1043, %v7179
        %7353 = vst.msk [vmem:[#allocation3 + $0xe8] sm:$0xf] %vm1043, %v7181
        %7354 = vst.msk [vmem:[#allocation3 + $0xf4] sm:$0xf] %vm1043, %v7183
        %7355 = vst.msk [vmem:[#allocation3 + $0x100] sm:$0xf] %vm1043, %v7185
        %7356 = vst.msk [vmem:[#allocation3 + $0x10c] sm:$0xf] %vm1043, %v7187
        %7357 = vst.msk [vmem:[#allocation3 + $0x118] sm:$0xf] %vm1043, %v7189
        %7358 = vst.msk [vmem:[#allocation3 + $0x124] sm:$0xf] %vm1043, %v7191
        %7359 = vst.msk [vmem:[#allocation3 + $0x130] sm:$0xf] %vm1043, %v7193
        %7360 = vst.msk [vmem:[#allocation3 + $0x13c] sm:$0xf] %vm1043, %v7195
        %7361 = vst.msk [vmem:[#allocation3 + $0x148] sm:$0xf] %vm1043, %v7197
        %7362 = vst.msk [vmem:[#allocation3 + $0x154] sm:$0xf] %vm1043, %v7199
        %7363 = vst.msk [vmem:[#allocation3 + $0x160] sm:$0xf] %vm1043, %v7201
        %7364 = vst.msk [vmem:[#allocation3 + $0x16c] sm:$0xf] %vm1043, %v7203
        %7365 = vst.msk [vmem:[#allocation3 + $0x178] sm:$0xf] %vm1043, %v7205
        %7366 = vst.msk [vmem:[#allocation3 + $0x184] sm:$0xf] %vm1043, %v7207
        %7367 = vst.msk [vmem:[#allocation3 + $0x190] sm:$0xf] %vm1043, %v7209
        %7368 = vst.msk [vmem:[#allocation3 + $0x19c] sm:$0xf] %vm1043, %v7211
        %7369 = vst.msk [vmem:[#allocation3 + $0x1a8] sm:$0xf] %vm1043, %v7213
        %7370 = vst.msk [vmem:[#allocation3 + $0x1b4] sm:$0xf] %vm1043, %v7215
        %7371 = vst.msk [vmem:[#allocation3 + $0x1c0] sm:$0xf] %vm1043, %v7217
        %7372 = vst.msk [vmem:[#allocation3 + $0x1cc] sm:$0xf] %vm1043, %v7219
        %7373 = vst.msk [vmem:[#allocation3 + $0x1d8] sm:$0xf] %vm1043, %v7221
        %7374 = vst.msk [vmem:[#allocation3 + $0x1e4] sm:$0xf] %vm1043, %v7223
        %7375 = vst.msk [vmem:[#allocation3 + $0x1f0] sm:$0xf] %vm1043, %v7225
        %7376 = vst.msk [vmem:[#allocation3 + $0x1fc] sm:$0xf] %vm1043, %v7227
        %7377 = vst.msk [vmem:[#allocation3 + $0x208] sm:$0xf] %vm1043, %v7229
        %7378 = vst.msk [vmem:[#allocation3 + $0x214] sm:$0xf] %vm1043, %v7231
        %7379 = vst.msk [vmem:[#allocation3 + $0x220] sm:$0xf] %vm1043, %v7233
        %7380 = vst.msk [vmem:[#allocation3 + $0x22c] sm:$0xf] %vm1043, %v7235
        %7381 = vst.msk [vmem:[#allocation3 + $0x238] sm:$0xf] %vm1043, %v7237
        %7382 = vst.msk [vmem:[#allocation3 + $0x244] sm:$0xf] %vm1043, %v7239
        %7383 = vst.msk [vmem:[#allocation3 + $0x250] sm:$0xf] %vm1043, %v7241
        %7384 = vst.msk [vmem:[#allocation3 + $0x25c] sm:$0xf] %vm1043, %v7243
        %7385 = vst.msk [vmem:[#allocation3 + $0x268] sm:$0xf] %vm1043, %v7245
        %7386 = vst.msk [vmem:[#allocation3 + $0x274] sm:$0xf] %vm1043, %v7247
        %7387 = vst.msk [vmem:[#allocation3 + $0x280] sm:$0xf] %vm1043, %v7249
        %7388 = vst.msk [vmem:[#allocation3 + $0x28c] sm:$0xf] %vm1043, %v7251
        %7389 = vst.msk [vmem:[#allocation3 + $0x298] sm:$0xf] %vm1043, %v7253
        %7390 = vst.msk [vmem:[#allocation3 + $0x2a4] sm:$0xf] %vm1043, %v7255
        %7391 = vst.msk [vmem:[#allocation3 + $0x2b0] sm:$0xf] %vm1043, %v7257
        %7392 = vst.msk [vmem:[#allocation3 + $0x2bc] sm:$0xf] %vm1043, %v7259
        %7393 = vst.msk [vmem:[#allocation3 + $0x2c8] sm:$0xf] %vm1043, %v7261
        %7394 = vst.msk [vmem:[#allocation3 + $0x2d4] sm:$0xf] %vm1043, %v7263
        %7395 = vst.msk [vmem:[#allocation3 + $0x2e0] sm:$0xf] %vm1043, %v7265
        %7396 = vst.msk [vmem:[#allocation3 + $0x2ec] sm:$0xf] %vm1043, %v7267
        %7397 = vst.msk [vmem:[#allocation3 + $0x2f8] sm:$0xf] %vm1043, %v7269
        %v7398 = vld [vmem:[%s2646] sm:$0xff]
        %v7399 = vld [vmem:[%s2646 + $0x8] sm:$0xff]
        %v7400 = vld [vmem:[%s2646 + $0x18] sm:$0xff]
        %v7401 = vld [vmem:[%s2646 + $0x20] sm:$0xff]
        %v7402 = vld [vmem:[%s2646 + $0x30] sm:$0xff]
        %v7403 = vld [vmem:[%s2646 + $0x38] sm:$0xff]
        %v7404 = vld [vmem:[%s2646 + $0x48] sm:$0xff]
        %v7405 = vld [vmem:[%s2646 + $0x50] sm:$0xff]
        %v7406 = vld [vmem:[%s2646 + $0x60] sm:$0xff]
        %v7407 = vld [vmem:[%s2646 + $0x68] sm:$0xff]
        %v7408 = vld [vmem:[%s2646 + $0x78] sm:$0xff]
        %v7409 = vld [vmem:[%s2646 + $0x80] sm:$0xff]
        %v7410 = vld [vmem:[%s2646 + $0x90] sm:$0xff]
        %v7411 = vld [vmem:[%s2646 + $0x98] sm:$0xff]
        %v7412 = vld [vmem:[%s2646 + $0xa8] sm:$0xff]
        %v7413 = vld [vmem:[%s2646 + $0xb0] sm:$0xff]
        %v7414 = vld [vmem:[%s2646 + $0xc0] sm:$0xff]
        %v7415 = vld [vmem:[%s2646 + $0xc8] sm:$0xff]
        %v7416 = vld [vmem:[%s2646 + $0xd8] sm:$0xff]
        %v7417 = vld [vmem:[%s2646 + $0xe0] sm:$0xff]
        %v7418 = vld [vmem:[%s2646 + $0xf0] sm:$0xff]
        %v7419 = vld [vmem:[%s2646 + $0xf8] sm:$0xff]
        %v7420 = vld [vmem:[%s2646 + $0x108] sm:$0xff]
        %v7421 = vld [vmem:[%s2646 + $0x110] sm:$0xff]
        %v7422 = vld [vmem:[%s2646 + $0x120] sm:$0xff]
        %v7423 = vld [vmem:[%s2646 + $0x128] sm:$0xff]
        %v7424 = vld [vmem:[%s2646 + $0x138] sm:$0xff]
        %v7425 = vld [vmem:[%s2646 + $0x140] sm:$0xff]
        %v7426 = vld [vmem:[%s2646 + $0x150] sm:$0xff]
        %v7427 = vld [vmem:[%s2646 + $0x158] sm:$0xff]
        %v7428 = vld [vmem:[%s2646 + $0x168] sm:$0xff]
        %v7429 = vld [vmem:[%s2646 + $0x170] sm:$0xff]
        %v7430 = vld [vmem:[%s2646 + $0x1b0] sm:$0xff]
        %v7431 = vld [vmem:[%s2646 + $0x1b8] sm:$0xff]
        %v7432 = vld [vmem:[%s2646 + $0x1c8] sm:$0xff]
        %v7433 = vld [vmem:[%s2646 + $0x1d0] sm:$0xff]
        %v7434 = vld [vmem:[%s2646 + $0x1e0] sm:$0xff]
        %v7435 = vld [vmem:[%s2646 + $0x1e8] sm:$0xff]
        %v7436 = vld [vmem:[%s2646 + $0x1f8] sm:$0xff]
        %v7437 = vld [vmem:[%s2646 + $0x200] sm:$0xff]
        %v7438 = vld [vmem:[%s2646 + $0x210] sm:$0xff]
        %v7439 = vld [vmem:[%s2646 + $0x218] sm:$0xff]
        %v7440 = vld [vmem:[%s2646 + $0x228] sm:$0xff]
        %v7441 = vld [vmem:[%s2646 + $0x230] sm:$0xff]
        %v7442 = vld [vmem:[%s2646 + $0x240] sm:$0xff]
        %v7443 = vld [vmem:[%s2646 + $0x248] sm:$0xff]
        %v7444 = vld [vmem:[%s2646 + $0x258] sm:$0xff]
        %v7445 = vld [vmem:[%s2646 + $0x260] sm:$0xff]
        %v7446 = vld [vmem:[%s2646 + $0x270] sm:$0xff]
        %v7447 = vld [vmem:[%s2646 + $0x278] sm:$0xff]
        %v7448 = vld [vmem:[%s2646 + $0x288] sm:$0xff]
        %v7449 = vld [vmem:[%s2646 + $0x290] sm:$0xff]
        %v7450 = vld [vmem:[%s2646 + $0x2a0] sm:$0xff]
        %v7451 = vld [vmem:[%s2646 + $0x2a8] sm:$0xff]
        %v7452 = vld [vmem:[%s2646 + $0x2b8] sm:$0xff]
        %v7453 = vld [vmem:[%s2646 + $0x2c0] sm:$0xff]
        %v7454 = vld [vmem:[%s2646 + $0x2d0] sm:$0xff]
        %v7455 = vld [vmem:[%s2646 + $0x2d8] sm:$0xff]
        %v7456 = vld [vmem:[%s2646 + $0x2e8] sm:$0xff]
        %v7457 = vld [vmem:[%s2646 + $0x2f0] sm:$0xff]
        %v7458 = vld [vmem:[%s2646 + $0x300] sm:$0xff]
        %v7459 = vld [vmem:[%s2646 + $0x308] sm:$0xff]
        %v7460 = vld [vmem:[%s2646 + $0x318] sm:$0xff]
        %v7461 = vld [vmem:[%s2646 + $0x320] sm:$0xff]
        %v7462 = vpack.c.bf16 %v7398, %v7398
        %v7463 = vpack.c.bf16 %v7399, %v7399
        %v7464 = vpack.c.bf16 %v7400, %v7400
        %v7465 = vpack.c.bf16 %v7401, %v7401
        %v7466 = vpack.c.bf16 %v7402, %v7402
        %v7467 = vpack.c.bf16 %v7403, %v7403
        %v7468 = vpack.c.bf16 %v7404, %v7404
        %v7469 = vpack.c.bf16 %v7405, %v7405
        %v7470 = vpack.c.bf16 %v7406, %v7406
        %v7471 = vpack.c.bf16 %v7407, %v7407
        %v7472 = vpack.c.bf16 %v7408, %v7408
        %v7473 = vpack.c.bf16 %v7409, %v7409
        %v7474 = vpack.c.bf16 %v7410, %v7410
        %v7475 = vpack.c.bf16 %v7411, %v7411
        %v7476 = vpack.c.bf16 %v7412, %v7412
        %v7477 = vpack.c.bf16 %v7413, %v7413
        %v7478 = vpack.c.bf16 %v7414, %v7414
        %v7479 = vpack.c.bf16 %v7415, %v7415
        %v7480 = vpack.c.bf16 %v7416, %v7416
        %v7481 = vpack.c.bf16 %v7417, %v7417
        %v7482 = vpack.c.bf16 %v7418, %v7418
        %v7483 = vpack.c.bf16 %v7419, %v7419
        %v7484 = vpack.c.bf16 %v7420, %v7420
        %v7485 = vpack.c.bf16 %v7421, %v7421
        %v7486 = vpack.c.bf16 %v7422, %v7422
        %v7487 = vpack.c.bf16 %v7423, %v7423
        %v7488 = vpack.c.bf16 %v7424, %v7424
        %v7489 = vpack.c.bf16 %v7425, %v7425
        %v7490 = vpack.c.bf16 %v7426, %v7426
        %v7491 = vpack.c.bf16 %v7427, %v7427
        %v7492 = vpack.c.bf16 %v7428, %v7428
        %v7493 = vpack.c.bf16 %v7429, %v7429
        %v7494 = vpack.c.bf16 %v7430, %v7430
        %v7495 = vpack.c.bf16 %v7431, %v7431
        %v7496 = vpack.c.bf16 %v7432, %v7432
        %v7497 = vpack.c.bf16 %v7433, %v7433
        %v7498 = vpack.c.bf16 %v7434, %v7434
        %v7499 = vpack.c.bf16 %v7435, %v7435
        %v7500 = vpack.c.bf16 %v7436, %v7436
        %v7501 = vpack.c.bf16 %v7437, %v7437
        %v7502 = vpack.c.bf16 %v7438, %v7438
        %v7503 = vpack.c.bf16 %v7439, %v7439
        %v7504 = vpack.c.bf16 %v7440, %v7440
        %v7505 = vpack.c.bf16 %v7441, %v7441
        %v7506 = vpack.c.bf16 %v7442, %v7442
        %v7507 = vpack.c.bf16 %v7443, %v7443
        %v7508 = vpack.c.bf16 %v7444, %v7444
        %v7509 = vpack.c.bf16 %v7445, %v7445
        %v7510 = vpack.c.bf16 %v7446, %v7446
        %v7511 = vpack.c.bf16 %v7447, %v7447
        %v7512 = vpack.c.bf16 %v7448, %v7448
        %v7513 = vpack.c.bf16 %v7449, %v7449
        %v7514 = vpack.c.bf16 %v7450, %v7450
        %v7515 = vpack.c.bf16 %v7451, %v7451
        %v7516 = vpack.c.bf16 %v7452, %v7452
        %v7517 = vpack.c.bf16 %v7453, %v7453
        %v7518 = vpack.c.bf16 %v7454, %v7454
        %v7519 = vpack.c.bf16 %v7455, %v7455
        %v7520 = vpack.c.bf16 %v7456, %v7456
        %v7521 = vpack.c.bf16 %v7457, %v7457
        %v7522 = vpack.c.bf16 %v7458, %v7458
        %v7523 = vpack.c.bf16 %v7459, %v7459
        %v7524 = vpack.c.bf16 %v7460, %v7460
        %v7525 = vpack.c.bf16 %v7461, %v7461
        %7590 = vrot.lane.b32.xlu0 %v7462, 64
        %v7591 = vpop.permute.xlu0 %7590
        %7592 = vrot.lane.b32.xlu0 %v7463, 64
        %v7593 = vpop.permute.xlu0 %7592
        %7594 = vrot.lane.b32.xlu0 %v7464, 64
        %v7595 = vpop.permute.xlu0 %7594
        %7596 = vrot.lane.b32.xlu0 %v7465, 64
        %v7597 = vpop.permute.xlu0 %7596
        %7598 = vrot.lane.b32.xlu0 %v7466, 64
        %v7599 = vpop.permute.xlu0 %7598
        %7600 = vrot.lane.b32.xlu0 %v7467, 64
        %v7601 = vpop.permute.xlu0 %7600
        %7602 = vrot.lane.b32.xlu0 %v7468, 64
        %v7603 = vpop.permute.xlu0 %7602
        %7604 = vrot.lane.b32.xlu0 %v7469, 64
        %v7605 = vpop.permute.xlu0 %7604
        %7606 = vrot.lane.b32.xlu0 %v7470, 64
        %v7607 = vpop.permute.xlu0 %7606
        %7608 = vrot.lane.b32.xlu0 %v7471, 64
        %v7609 = vpop.permute.xlu0 %7608
        %7610 = vrot.lane.b32.xlu0 %v7472, 64
        %v7611 = vpop.permute.xlu0 %7610
        %7612 = vrot.lane.b32.xlu0 %v7473, 64
        %v7613 = vpop.permute.xlu0 %7612
        %7614 = vrot.lane.b32.xlu0 %v7474, 64
        %v7615 = vpop.permute.xlu0 %7614
        %7616 = vrot.lane.b32.xlu0 %v7475, 64
        %v7617 = vpop.permute.xlu0 %7616
        %7618 = vrot.lane.b32.xlu0 %v7476, 64
        %v7619 = vpop.permute.xlu0 %7618
        %7620 = vrot.lane.b32.xlu0 %v7477, 64
        %v7621 = vpop.permute.xlu0 %7620
        %7622 = vrot.lane.b32.xlu0 %v7478, 64
        %v7623 = vpop.permute.xlu0 %7622
        %7624 = vrot.lane.b32.xlu0 %v7479, 64
        %v7625 = vpop.permute.xlu0 %7624
        %7626 = vrot.lane.b32.xlu0 %v7480, 64
        %v7627 = vpop.permute.xlu0 %7626
        %7628 = vrot.lane.b32.xlu0 %v7481, 64
        %v7629 = vpop.permute.xlu0 %7628
        %7630 = vrot.lane.b32.xlu0 %v7482, 64
        %v7631 = vpop.permute.xlu0 %7630
        %7632 = vrot.lane.b32.xlu0 %v7483, 64
        %v7633 = vpop.permute.xlu0 %7632
        %7634 = vrot.lane.b32.xlu0 %v7484, 64
        %v7635 = vpop.permute.xlu0 %7634
        %7636 = vrot.lane.b32.xlu0 %v7485, 64
        %v7637 = vpop.permute.xlu0 %7636
        %7638 = vrot.lane.b32.xlu0 %v7486, 64
        %v7639 = vpop.permute.xlu0 %7638
        %7640 = vrot.lane.b32.xlu0 %v7487, 64
        %v7641 = vpop.permute.xlu0 %7640
        %7642 = vrot.lane.b32.xlu0 %v7488, 64
        %v7643 = vpop.permute.xlu0 %7642
        %7644 = vrot.lane.b32.xlu0 %v7489, 64
        %v7645 = vpop.permute.xlu0 %7644
        %7646 = vrot.lane.b32.xlu0 %v7490, 64
        %v7647 = vpop.permute.xlu0 %7646
        %7648 = vrot.lane.b32.xlu0 %v7491, 64
        %v7649 = vpop.permute.xlu0 %7648
        %7650 = vrot.lane.b32.xlu0 %v7492, 64
        %v7651 = vpop.permute.xlu0 %7650
        %7652 = vrot.lane.b32.xlu0 %v7493, 64
        %v7653 = vpop.permute.xlu0 %7652
        %7654 = vrot.lane.b32.xlu0 %v7494, 64
        %v7655 = vpop.permute.xlu0 %7654
        %7656 = vrot.lane.b32.xlu0 %v7495, 64
        %v7657 = vpop.permute.xlu0 %7656
        %7658 = vrot.lane.b32.xlu0 %v7496, 64
        %v7659 = vpop.permute.xlu0 %7658
        %7660 = vrot.lane.b32.xlu0 %v7497, 64
        %v7661 = vpop.permute.xlu0 %7660
        %7662 = vrot.lane.b32.xlu0 %v7498, 64
        %v7663 = vpop.permute.xlu0 %7662
        %7664 = vrot.lane.b32.xlu0 %v7499, 64
        %v7665 = vpop.permute.xlu0 %7664
        %7666 = vrot.lane.b32.xlu0 %v7500, 64
        %v7667 = vpop.permute.xlu0 %7666
        %7668 = vrot.lane.b32.xlu0 %v7501, 64
        %v7669 = vpop.permute.xlu0 %7668
        %7670 = vrot.lane.b32.xlu0 %v7502, 64
        %v7671 = vpop.permute.xlu0 %7670
        %7672 = vrot.lane.b32.xlu0 %v7503, 64
        %v7673 = vpop.permute.xlu0 %7672
        %7674 = vrot.lane.b32.xlu0 %v7504, 64
        %v7675 = vpop.permute.xlu0 %7674
        %7676 = vrot.lane.b32.xlu0 %v7505, 64
        %v7677 = vpop.permute.xlu0 %7676
        %7678 = vrot.lane.b32.xlu0 %v7506, 64
        %v7679 = vpop.permute.xlu0 %7678
        %7680 = vrot.lane.b32.xlu0 %v7507, 64
        %v7681 = vpop.permute.xlu0 %7680
        %7682 = vrot.lane.b32.xlu0 %v7508, 64
        %v7683 = vpop.permute.xlu0 %7682
        %7684 = vrot.lane.b32.xlu0 %v7509, 64
        %v7685 = vpop.permute.xlu0 %7684
        %7686 = vrot.lane.b32.xlu0 %v7510, 64
        %v7687 = vpop.permute.xlu0 %7686
        %7688 = vrot.lane.b32.xlu0 %v7511, 64
        %v7689 = vpop.permute.xlu0 %7688
        %7690 = vrot.lane.b32.xlu0 %v7512, 64
        %v7691 = vpop.permute.xlu0 %7690
        %7692 = vrot.lane.b32.xlu0 %v7513, 64
        %v7693 = vpop.permute.xlu0 %7692
        %7694 = vrot.lane.b32.xlu0 %v7514, 64
        %v7695 = vpop.permute.xlu0 %7694
        %7696 = vrot.lane.b32.xlu0 %v7515, 64
        %v7697 = vpop.permute.xlu0 %7696
        %7698 = vrot.lane.b32.xlu0 %v7516, 64
        %v7699 = vpop.permute.xlu0 %7698
        %7700 = vrot.lane.b32.xlu0 %v7517, 64
        %v7701 = vpop.permute.xlu0 %7700
        %7702 = vrot.lane.b32.xlu0 %v7518, 64
        %v7703 = vpop.permute.xlu0 %7702
        %7704 = vrot.lane.b32.xlu0 %v7519, 64
        %v7705 = vpop.permute.xlu0 %7704
        %7706 = vrot.lane.b32.xlu0 %v7520, 64
        %v7707 = vpop.permute.xlu0 %7706
        %7708 = vrot.lane.b32.xlu0 %v7521, 64
        %v7709 = vpop.permute.xlu0 %7708
        %7710 = vrot.lane.b32.xlu0 %v7522, 64
        %v7711 = vpop.permute.xlu0 %7710
        %7712 = vrot.lane.b32.xlu0 %v7523, 64
        %v7713 = vpop.permute.xlu0 %7712
        %7714 = vrot.lane.b32.xlu0 %v7524, 64
        %v7715 = vpop.permute.xlu0 %7714
        %7716 = vrot.lane.b32.xlu0 %v7525, 64
        %v7717 = vpop.permute.xlu0 %7716
        %7782 = vst.msk [vmem:[#allocation3 + $0x4] sm:$0xf] %vm1492, %v7591
        %7783 = vst.msk [vmem:[#allocation3 + $0x10] sm:$0xf] %vm1492, %v7593
        %7784 = vst.msk [vmem:[#allocation3 + $0x1c] sm:$0xf] %vm1492, %v7595
        %7785 = vst.msk [vmem:[#allocation3 + $0x28] sm:$0xf] %vm1492, %v7597
        %7786 = vst.msk [vmem:[#allocation3 + $0x34] sm:$0xf] %vm1492, %v7599
        %7787 = vst.msk [vmem:[#allocation3 + $0x40] sm:$0xf] %vm1492, %v7601
        %7788 = vst.msk [vmem:[#allocation3 + $0x4c] sm:$0xf] %vm1492, %v7603
        %7789 = vst.msk [vmem:[#allocation3 + $0x58] sm:$0xf] %vm1492, %v7605
        %7790 = vst.msk [vmem:[#allocation3 + $0x64] sm:$0xf] %vm1492, %v7607
        %7791 = vst.msk [vmem:[#allocation3 + $0x70] sm:$0xf] %vm1492, %v7609
        %7792 = vst.msk [vmem:[#allocation3 + $0x7c] sm:$0xf] %vm1492, %v7611
        %7793 = vst.msk [vmem:[#allocation3 + $0x88] sm:$0xf] %vm1492, %v7613
        %7794 = vst.msk [vmem:[#allocation3 + $0x94] sm:$0xf] %vm1492, %v7615
        %7795 = vst.msk [vmem:[#allocation3 + $0xa0] sm:$0xf] %vm1492, %v7617
        %7796 = vst.msk [vmem:[#allocation3 + $0xac] sm:$0xf] %vm1492, %v7619
        %7797 = vst.msk [vmem:[#allocation3 + $0xb8] sm:$0xf] %vm1492, %v7621
        %7798 = vst.msk [vmem:[#allocation3 + $0xc4] sm:$0xf] %vm1492, %v7623
        %7799 = vst.msk [vmem:[#allocation3 + $0xd0] sm:$0xf] %vm1492, %v7625
        %7800 = vst.msk [vmem:[#allocation3 + $0xdc] sm:$0xf] %vm1492, %v7627
        %7801 = vst.msk [vmem:[#allocation3 + $0xe8] sm:$0xf] %vm1492, %v7629
        %7802 = vst.msk [vmem:[#allocation3 + $0xf4] sm:$0xf] %vm1492, %v7631
        %7803 = vst.msk [vmem:[#allocation3 + $0x100] sm:$0xf] %vm1492, %v7633
        %7804 = vst.msk [vmem:[#allocation3 + $0x10c] sm:$0xf] %vm1492, %v7635
        %7805 = vst.msk [vmem:[#allocation3 + $0x118] sm:$0xf] %vm1492, %v7637
        %7806 = vst.msk [vmem:[#allocation3 + $0x124] sm:$0xf] %vm1492, %v7639
        %7807 = vst.msk [vmem:[#allocation3 + $0x130] sm:$0xf] %vm1492, %v7641
        %7808 = vst.msk [vmem:[#allocation3 + $0x13c] sm:$0xf] %vm1492, %v7643
        %7809 = vst.msk [vmem:[#allocation3 + $0x148] sm:$0xf] %vm1492, %v7645
        %7810 = vst.msk [vmem:[#allocation3 + $0x154] sm:$0xf] %vm1492, %v7647
        %7811 = vst.msk [vmem:[#allocation3 + $0x160] sm:$0xf] %vm1492, %v7649
        %7812 = vst.msk [vmem:[#allocation3 + $0x16c] sm:$0xf] %vm1492, %v7651
        %7813 = vst.msk [vmem:[#allocation3 + $0x178] sm:$0xf] %vm1492, %v7653
        %7814 = vst.msk [vmem:[#allocation3 + $0x184] sm:$0xf] %vm1492, %v7655
        %7815 = vst.msk [vmem:[#allocation3 + $0x190] sm:$0xf] %vm1492, %v7657
        %7816 = vst.msk [vmem:[#allocation3 + $0x19c] sm:$0xf] %vm1492, %v7659
        %7817 = vst.msk [vmem:[#allocation3 + $0x1a8] sm:$0xf] %vm1492, %v7661
        %7818 = vst.msk [vmem:[#allocation3 + $0x1b4] sm:$0xf] %vm1492, %v7663
        %7819 = vst.msk [vmem:[#allocation3 + $0x1c0] sm:$0xf] %vm1492, %v7665
        %7820 = vst.msk [vmem:[#allocation3 + $0x1cc] sm:$0xf] %vm1492, %v7667
        %7821 = vst.msk [vmem:[#allocation3 + $0x1d8] sm:$0xf] %vm1492, %v7669
        %7822 = vst.msk [vmem:[#allocation3 + $0x1e4] sm:$0xf] %vm1492, %v7671
        %7823 = vst.msk [vmem:[#allocation3 + $0x1f0] sm:$0xf] %vm1492, %v7673
        %7824 = vst.msk [vmem:[#allocation3 + $0x1fc] sm:$0xf] %vm1492, %v7675
        %7825 = vst.msk [vmem:[#allocation3 + $0x208] sm:$0xf] %vm1492, %v7677
        %7826 = vst.msk [vmem:[#allocation3 + $0x214] sm:$0xf] %vm1492, %v7679
        %7827 = vst.msk [vmem:[#allocation3 + $0x220] sm:$0xf] %vm1492, %v7681
        %7828 = vst.msk [vmem:[#allocation3 + $0x22c] sm:$0xf] %vm1492, %v7683
        %7829 = vst.msk [vmem:[#allocation3 + $0x238] sm:$0xf] %vm1492, %v7685
        %7830 = vst.msk [vmem:[#allocation3 + $0x244] sm:$0xf] %vm1492, %v7687
        %7831 = vst.msk [vmem:[#allocation3 + $0x250] sm:$0xf] %vm1492, %v7689
        %7832 = vst.msk [vmem:[#allocation3 + $0x25c] sm:$0xf] %vm1492, %v7691
        %7833 = vst.msk [vmem:[#allocation3 + $0x268] sm:$0xf] %vm1492, %v7693
        %7834 = vst.msk [vmem:[#allocation3 + $0x274] sm:$0xf] %vm1492, %v7695
        %7835 = vst.msk [vmem:[#allocation3 + $0x280] sm:$0xf] %vm1492, %v7697
        %7836 = vst.msk [vmem:[#allocation3 + $0x28c] sm:$0xf] %vm1492, %v7699
        %7837 = vst.msk [vmem:[#allocation3 + $0x298] sm:$0xf] %vm1492, %v7701
        %7838 = vst.msk [vmem:[#allocation3 + $0x2a4] sm:$0xf] %vm1492, %v7703
        %7839 = vst.msk [vmem:[#allocation3 + $0x2b0] sm:$0xf] %vm1492, %v7705
        %7840 = vst.msk [vmem:[#allocation3 + $0x2bc] sm:$0xf] %vm1492, %v7707
        %7841 = vst.msk [vmem:[#allocation3 + $0x2c8] sm:$0xf] %vm1492, %v7709
        %7842 = vst.msk [vmem:[#allocation3 + $0x2d4] sm:$0xf] %vm1492, %v7711
        %7843 = vst.msk [vmem:[#allocation3 + $0x2e0] sm:$0xf] %vm1492, %v7713
        %7844 = vst.msk [vmem:[#allocation3 + $0x2ec] sm:$0xf] %vm1492, %v7715
        %7845 = vst.msk [vmem:[#allocation3 + $0x2f8] sm:$0xf] %vm1492, %v7717
        %v7846 = vld [vmem:[%s2646 + $0x1] sm:$0xff]
        %v7847 = vld [vmem:[%s2646 + $0x9] sm:$0xff]
        %v7848 = vld [vmem:[%s2646 + $0x19] sm:$0xff]
        %v7849 = vld [vmem:[%s2646 + $0x21] sm:$0xff]
        %v7850 = vld [vmem:[%s2646 + $0x31] sm:$0xff]
        %v7851 = vld [vmem:[%s2646 + $0x39] sm:$0xff]
        %v7852 = vld [vmem:[%s2646 + $0x49] sm:$0xff]
        %v7853 = vld [vmem:[%s2646 + $0x51] sm:$0xff]
        %v7854 = vld [vmem:[%s2646 + $0x61] sm:$0xff]
        %v7855 = vld [vmem:[%s2646 + $0x69] sm:$0xff]
        %v7856 = vld [vmem:[%s2646 + $0x79] sm:$0xff]
        %v7857 = vld [vmem:[%s2646 + $0x81] sm:$0xff]
        %v7858 = vld [vmem:[%s2646 + $0x91] sm:$0xff]
        %v7859 = vld [vmem:[%s2646 + $0x99] sm:$0xff]
        %v7860 = vld [vmem:[%s2646 + $0xa9] sm:$0xff]
        %v7861 = vld [vmem:[%s2646 + $0xb1] sm:$0xff]
        %v7862 = vld [vmem:[%s2646 + $0xc1] sm:$0xff]
        %v7863 = vld [vmem:[%s2646 + $0xc9] sm:$0xff]
        %v7864 = vld [vmem:[%s2646 + $0xd9] sm:$0xff]
        %v7865 = vld [vmem:[%s2646 + $0xe1] sm:$0xff]
        %v7866 = vld [vmem:[%s2646 + $0xf1] sm:$0xff]
        %v7867 = vld [vmem:[%s2646 + $0xf9] sm:$0xff]
        %v7868 = vld [vmem:[%s2646 + $0x109] sm:$0xff]
        %v7869 = vld [vmem:[%s2646 + $0x111] sm:$0xff]
        %v7870 = vld [vmem:[%s2646 + $0x121] sm:$0xff]
        %v7871 = vld [vmem:[%s2646 + $0x129] sm:$0xff]
        %v7872 = vld [vmem:[%s2646 + $0x139] sm:$0xff]
        %v7873 = vld [vmem:[%s2646 + $0x141] sm:$0xff]
        %v7874 = vld [vmem:[%s2646 + $0x151] sm:$0xff]
        %v7875 = vld [vmem:[%s2646 + $0x159] sm:$0xff]
        %v7876 = vld [vmem:[%s2646 + $0x169] sm:$0xff]
        %v7877 = vld [vmem:[%s2646 + $0x171] sm:$0xff]
        %v7878 = vld [vmem:[%s2646 + $0x1b1] sm:$0xff]
        %v7879 = vld [vmem:[%s2646 + $0x1b9] sm:$0xff]
        %v7880 = vld [vmem:[%s2646 + $0x1c9] sm:$0xff]
        %v7881 = vld [vmem:[%s2646 + $0x1d1] sm:$0xff]
        %v7882 = vld [vmem:[%s2646 + $0x1e1] sm:$0xff]
        %v7883 = vld [vmem:[%s2646 + $0x1e9] sm:$0xff]
        %v7884 = vld [vmem:[%s2646 + $0x1f9] sm:$0xff]
        %v7885 = vld [vmem:[%s2646 + $0x201] sm:$0xff]
        %v7886 = vld [vmem:[%s2646 + $0x211] sm:$0xff]
        %v7887 = vld [vmem:[%s2646 + $0x219] sm:$0xff]
        %v7888 = vld [vmem:[%s2646 + $0x229] sm:$0xff]
        %v7889 = vld [vmem:[%s2646 + $0x231] sm:$0xff]
        %v7890 = vld [vmem:[%s2646 + $0x241] sm:$0xff]
        %v7891 = vld [vmem:[%s2646 + $0x249] sm:$0xff]
        %v7892 = vld [vmem:[%s2646 + $0x259] sm:$0xff]
        %v7893 = vld [vmem:[%s2646 + $0x261] sm:$0xff]
        %v7894 = vld [vmem:[%s2646 + $0x271] sm:$0xff]
        %v7895 = vld [vmem:[%s2646 + $0x279] sm:$0xff]
        %v7896 = vld [vmem:[%s2646 + $0x289] sm:$0xff]
        %v7897 = vld [vmem:[%s2646 + $0x291] sm:$0xff]
        %v7898 = vld [vmem:[%s2646 + $0x2a1] sm:$0xff]
        %v7899 = vld [vmem:[%s2646 + $0x2a9] sm:$0xff]
        %v7900 = vld [vmem:[%s2646 + $0x2b9] sm:$0xff]
        %v7901 = vld [vmem:[%s2646 + $0x2c1] sm:$0xff]
        %v7902 = vld [vmem:[%s2646 + $0x2d1] sm:$0xff]
        %v7903 = vld [vmem:[%s2646 + $0x2d9] sm:$0xff]
        %v7904 = vld [vmem:[%s2646 + $0x2e9] sm:$0xff]
        %v7905 = vld [vmem:[%s2646 + $0x2f1] sm:$0xff]
        %v7906 = vld [vmem:[%s2646 + $0x301] sm:$0xff]
        %v7907 = vld [vmem:[%s2646 + $0x309] sm:$0xff]
        %v7908 = vld [vmem:[%s2646 + $0x319] sm:$0xff]
        %v7909 = vld [vmem:[%s2646 + $0x321] sm:$0xff]
        %v7910 = vpack.c.bf16 %v7846, %v7846
        %v7911 = vpack.c.bf16 %v7847, %v7847
        %v7912 = vpack.c.bf16 %v7848, %v7848
        %v7913 = vpack.c.bf16 %v7849, %v7849
        %v7914 = vpack.c.bf16 %v7850, %v7850
        %v7915 = vpack.c.bf16 %v7851, %v7851
        %v7916 = vpack.c.bf16 %v7852, %v7852
        %v7917 = vpack.c.bf16 %v7853, %v7853
        %v7918 = vpack.c.bf16 %v7854, %v7854
        %v7919 = vpack.c.bf16 %v7855, %v7855
        %v7920 = vpack.c.bf16 %v7856, %v7856
        %v7921 = vpack.c.bf16 %v7857, %v7857
        %v7922 = vpack.c.bf16 %v7858, %v7858
        %v7923 = vpack.c.bf16 %v7859, %v7859
        %v7924 = vpack.c.bf16 %v7860, %v7860
        %v7925 = vpack.c.bf16 %v7861, %v7861
        %v7926 = vpack.c.bf16 %v7862, %v7862
        %v7927 = vpack.c.bf16 %v7863, %v7863
        %v7928 = vpack.c.bf16 %v7864, %v7864
        %v7929 = vpack.c.bf16 %v7865, %v7865
        %v7930 = vpack.c.bf16 %v7866, %v7866
        %v7931 = vpack.c.bf16 %v7867, %v7867
        %v7932 = vpack.c.bf16 %v7868, %v7868
        %v7933 = vpack.c.bf16 %v7869, %v7869
        %v7934 = vpack.c.bf16 %v7870, %v7870
        %v7935 = vpack.c.bf16 %v7871, %v7871
        %v7936 = vpack.c.bf16 %v7872, %v7872
        %v7937 = vpack.c.bf16 %v7873, %v7873
        %v7938 = vpack.c.bf16 %v7874, %v7874
        %v7939 = vpack.c.bf16 %v7875, %v7875
        %v7940 = vpack.c.bf16 %v7876, %v7876
        %v7941 = vpack.c.bf16 %v7877, %v7877
        %v7942 = vpack.c.bf16 %v7878, %v7878
        %v7943 = vpack.c.bf16 %v7879, %v7879
        %v7944 = vpack.c.bf16 %v7880, %v7880
        %v7945 = vpack.c.bf16 %v7881, %v7881
        %v7946 = vpack.c.bf16 %v7882, %v7882
        %v7947 = vpack.c.bf16 %v7883, %v7883
        %v7948 = vpack.c.bf16 %v7884, %v7884
        %v7949 = vpack.c.bf16 %v7885, %v7885
        %v7950 = vpack.c.bf16 %v7886, %v7886
        %v7951 = vpack.c.bf16 %v7887, %v7887
        %v7952 = vpack.c.bf16 %v7888, %v7888
        %v7953 = vpack.c.bf16 %v7889, %v7889
        %v7954 = vpack.c.bf16 %v7890, %v7890
        %v7955 = vpack.c.bf16 %v7891, %v7891
        %v7956 = vpack.c.bf16 %v7892, %v7892
        %v7957 = vpack.c.bf16 %v7893, %v7893
        %v7958 = vpack.c.bf16 %v7894, %v7894
        %v7959 = vpack.c.bf16 %v7895, %v7895
        %v7960 = vpack.c.bf16 %v7896, %v7896
        %v7961 = vpack.c.bf16 %v7897, %v7897
        %v7962 = vpack.c.bf16 %v7898, %v7898
        %v7963 = vpack.c.bf16 %v7899, %v7899
        %v7964 = vpack.c.bf16 %v7900, %v7900
        %v7965 = vpack.c.bf16 %v7901, %v7901
        %v7966 = vpack.c.bf16 %v7902, %v7902
        %v7967 = vpack.c.bf16 %v7903, %v7903
        %v7968 = vpack.c.bf16 %v7904, %v7904
        %v7969 = vpack.c.bf16 %v7905, %v7905
        %v7970 = vpack.c.bf16 %v7906, %v7906
        %v7971 = vpack.c.bf16 %v7907, %v7907
        %v7972 = vpack.c.bf16 %v7908, %v7908
        %v7973 = vpack.c.bf16 %v7909, %v7909
        %8038 = vrot.lane.b32.xlu0 %v7910, 96
        %v8039 = vpop.permute.xlu0 %8038
        %8040 = vrot.lane.b32.xlu0 %v7911, 96
        %v8041 = vpop.permute.xlu0 %8040
        %8042 = vrot.lane.b32.xlu0 %v7912, 96
        %v8043 = vpop.permute.xlu0 %8042
        %8044 = vrot.lane.b32.xlu0 %v7913, 96
        %v8045 = vpop.permute.xlu0 %8044
        %8046 = vrot.lane.b32.xlu0 %v7914, 96
        %v8047 = vpop.permute.xlu0 %8046
        %8048 = vrot.lane.b32.xlu0 %v7915, 96
        %v8049 = vpop.permute.xlu0 %8048
        %8050 = vrot.lane.b32.xlu0 %v7916, 96
        %v8051 = vpop.permute.xlu0 %8050
        %8052 = vrot.lane.b32.xlu0 %v7917, 96
        %v8053 = vpop.permute.xlu0 %8052
        %8054 = vrot.lane.b32.xlu0 %v7918, 96
        %v8055 = vpop.permute.xlu0 %8054
        %8056 = vrot.lane.b32.xlu0 %v7919, 96
        %v8057 = vpop.permute.xlu0 %8056
        %8058 = vrot.lane.b32.xlu0 %v7920, 96
        %v8059 = vpop.permute.xlu0 %8058
        %8060 = vrot.lane.b32.xlu0 %v7921, 96
        %v8061 = vpop.permute.xlu0 %8060
        %8062 = vrot.lane.b32.xlu0 %v7922, 96
        %v8063 = vpop.permute.xlu0 %8062
        %8064 = vrot.lane.b32.xlu0 %v7923, 96
        %v8065 = vpop.permute.xlu0 %8064
        %8066 = vrot.lane.b32.xlu0 %v7924, 96
        %v8067 = vpop.permute.xlu0 %8066
        %8068 = vrot.lane.b32.xlu0 %v7925, 96
        %v8069 = vpop.permute.xlu0 %8068
        %8070 = vrot.lane.b32.xlu0 %v7926, 96
        %v8071 = vpop.permute.xlu0 %8070
        %8072 = vrot.lane.b32.xlu0 %v7927, 96
        %v8073 = vpop.permute.xlu0 %8072
        %8074 = vrot.lane.b32.xlu0 %v7928, 96
        %v8075 = vpop.permute.xlu0 %8074
        %8076 = vrot.lane.b32.xlu0 %v7929, 96
        %v8077 = vpop.permute.xlu0 %8076
        %8078 = vrot.lane.b32.xlu0 %v7930, 96
        %v8079 = vpop.permute.xlu0 %8078
        %8080 = vrot.lane.b32.xlu0 %v7931, 96
        %v8081 = vpop.permute.xlu0 %8080
        %8082 = vrot.lane.b32.xlu0 %v7932, 96
        %v8083 = vpop.permute.xlu0 %8082
        %8084 = vrot.lane.b32.xlu0 %v7933, 96
        %v8085 = vpop.permute.xlu0 %8084
        %8086 = vrot.lane.b32.xlu0 %v7934, 96
        %v8087 = vpop.permute.xlu0 %8086
        %8088 = vrot.lane.b32.xlu0 %v7935, 96
        %v8089 = vpop.permute.xlu0 %8088
        %8090 = vrot.lane.b32.xlu0 %v7936, 96
        %v8091 = vpop.permute.xlu0 %8090
        %8092 = vrot.lane.b32.xlu0 %v7937, 96
        %v8093 = vpop.permute.xlu0 %8092
        %8094 = vrot.lane.b32.xlu0 %v7938, 96
        %v8095 = vpop.permute.xlu0 %8094
        %8096 = vrot.lane.b32.xlu0 %v7939, 96
        %v8097 = vpop.permute.xlu0 %8096
        %8098 = vrot.lane.b32.xlu0 %v7940, 96
        %v8099 = vpop.permute.xlu0 %8098
        %8100 = vrot.lane.b32.xlu0 %v7941, 96
        %v8101 = vpop.permute.xlu0 %8100
        %8102 = vrot.lane.b32.xlu0 %v7942, 96
        %v8103 = vpop.permute.xlu0 %8102
        %8104 = vrot.lane.b32.xlu0 %v7943, 96
        %v8105 = vpop.permute.xlu0 %8104
        %8106 = vrot.lane.b32.xlu0 %v7944, 96
        %v8107 = vpop.permute.xlu0 %8106
        %8108 = vrot.lane.b32.xlu0 %v7945, 96
        %v8109 = vpop.permute.xlu0 %8108
        %8110 = vrot.lane.b32.xlu0 %v7946, 96
        %v8111 = vpop.permute.xlu0 %8110
        %8112 = vrot.lane.b32.xlu0 %v7947, 96
        %v8113 = vpop.permute.xlu0 %8112
        %8114 = vrot.lane.b32.xlu0 %v7948, 96
        %v8115 = vpop.permute.xlu0 %8114
        %8116 = vrot.lane.b32.xlu0 %v7949, 96
        %v8117 = vpop.permute.xlu0 %8116
        %8118 = vrot.lane.b32.xlu0 %v7950, 96
        %v8119 = vpop.permute.xlu0 %8118
        %8120 = vrot.lane.b32.xlu0 %v7951, 96
        %v8121 = vpop.permute.xlu0 %8120
        %8122 = vrot.lane.b32.xlu0 %v7952, 96
        %v8123 = vpop.permute.xlu0 %8122
        %8124 = vrot.lane.b32.xlu0 %v7953, 96
        %v8125 = vpop.permute.xlu0 %8124
        %8126 = vrot.lane.b32.xlu0 %v7954, 96
        %v8127 = vpop.permute.xlu0 %8126
        %8128 = vrot.lane.b32.xlu0 %v7955, 96
        %v8129 = vpop.permute.xlu0 %8128
        %8130 = vrot.lane.b32.xlu0 %v7956, 96
        %v8131 = vpop.permute.xlu0 %8130
        %8132 = vrot.lane.b32.xlu0 %v7957, 96
        %v8133 = vpop.permute.xlu0 %8132
        %8134 = vrot.lane.b32.xlu0 %v7958, 96
        %v8135 = vpop.permute.xlu0 %8134
        %8136 = vrot.lane.b32.xlu0 %v7959, 96
        %v8137 = vpop.permute.xlu0 %8136
        %8138 = vrot.lane.b32.xlu0 %v7960, 96
        %v8139 = vpop.permute.xlu0 %8138
        %8140 = vrot.lane.b32.xlu0 %v7961, 96
        %v8141 = vpop.permute.xlu0 %8140
        %8142 = vrot.lane.b32.xlu0 %v7962, 96
        %v8143 = vpop.permute.xlu0 %8142
        %8144 = vrot.lane.b32.xlu0 %v7963, 96
        %v8145 = vpop.permute.xlu0 %8144
        %8146 = vrot.lane.b32.xlu0 %v7964, 96
        %v8147 = vpop.permute.xlu0 %8146
        %8148 = vrot.lane.b32.xlu0 %v7965, 96
        %v8149 = vpop.permute.xlu0 %8148
        %8150 = vrot.lane.b32.xlu0 %v7966, 96
        %v8151 = vpop.permute.xlu0 %8150
        %8152 = vrot.lane.b32.xlu0 %v7967, 96
        %v8153 = vpop.permute.xlu0 %8152
        %8154 = vrot.lane.b32.xlu0 %v7968, 96
        %v8155 = vpop.permute.xlu0 %8154
        %8156 = vrot.lane.b32.xlu0 %v7969, 96
        %v8157 = vpop.permute.xlu0 %8156
        %8158 = vrot.lane.b32.xlu0 %v7970, 96
        %v8159 = vpop.permute.xlu0 %8158
        %8160 = vrot.lane.b32.xlu0 %v7971, 96
        %v8161 = vpop.permute.xlu0 %8160
        %8162 = vrot.lane.b32.xlu0 %v7972, 96
        %v8163 = vpop.permute.xlu0 %8162
        %8164 = vrot.lane.b32.xlu0 %v7973, 96
        %v8165 = vpop.permute.xlu0 %8164
        %8230 = vst.msk [vmem:[#allocation3 + $0x4] sm:$0xf] %vm1941, %v8039
        %8231 = vst.msk [vmem:[#allocation3 + $0x10] sm:$0xf] %vm1941, %v8041
        %8232 = vst.msk [vmem:[#allocation3 + $0x1c] sm:$0xf] %vm1941, %v8043
        %8233 = vst.msk [vmem:[#allocation3 + $0x28] sm:$0xf] %vm1941, %v8045
        %8234 = vst.msk [vmem:[#allocation3 + $0x34] sm:$0xf] %vm1941, %v8047
        %8235 = vst.msk [vmem:[#allocation3 + $0x40] sm:$0xf] %vm1941, %v8049
        %8236 = vst.msk [vmem:[#allocation3 + $0x4c] sm:$0xf] %vm1941, %v8051
        %8237 = vst.msk [vmem:[#allocation3 + $0x58] sm:$0xf] %vm1941, %v8053
        %8238 = vst.msk [vmem:[#allocation3 + $0x64] sm:$0xf] %vm1941, %v8055
        %8239 = vst.msk [vmem:[#allocation3 + $0x70] sm:$0xf] %vm1941, %v8057
        %8240 = vst.msk [vmem:[#allocation3 + $0x7c] sm:$0xf] %vm1941, %v8059
        %8241 = vst.msk [vmem:[#allocation3 + $0x88] sm:$0xf] %vm1941, %v8061
        %8242 = vst.msk [vmem:[#allocation3 + $0x94] sm:$0xf] %vm1941, %v8063
        %8243 = vst.msk [vmem:[#allocation3 + $0xa0] sm:$0xf] %vm1941, %v8065
        %8244 = vst.msk [vmem:[#allocation3 + $0xac] sm:$0xf] %vm1941, %v8067
        %8245 = vst.msk [vmem:[#allocation3 + $0xb8] sm:$0xf] %vm1941, %v8069
        %8246 = vst.msk [vmem:[#allocation3 + $0xc4] sm:$0xf] %vm1941, %v8071
        %8247 = vst.msk [vmem:[#allocation3 + $0xd0] sm:$0xf] %vm1941, %v8073
        %8248 = vst.msk [vmem:[#allocation3 + $0xdc] sm:$0xf] %vm1941, %v8075
        %8249 = vst.msk [vmem:[#allocation3 + $0xe8] sm:$0xf] %vm1941, %v8077
        %8250 = vst.msk [vmem:[#allocation3 + $0xf4] sm:$0xf] %vm1941, %v8079
        %8251 = vst.msk [vmem:[#allocation3 + $0x100] sm:$0xf] %vm1941, %v8081
        %8252 = vst.msk [vmem:[#allocation3 + $0x10c] sm:$0xf] %vm1941, %v8083
        %8253 = vst.msk [vmem:[#allocation3 + $0x118] sm:$0xf] %vm1941, %v8085
        %8254 = vst.msk [vmem:[#allocation3 + $0x124] sm:$0xf] %vm1941, %v8087
        %8255 = vst.msk [vmem:[#allocation3 + $0x130] sm:$0xf] %vm1941, %v8089
        %8256 = vst.msk [vmem:[#allocation3 + $0x13c] sm:$0xf] %vm1941, %v8091
        %8257 = vst.msk [vmem:[#allocation3 + $0x148] sm:$0xf] %vm1941, %v8093
        %8258 = vst.msk [vmem:[#allocation3 + $0x154] sm:$0xf] %vm1941, %v8095
        %8259 = vst.msk [vmem:[#allocation3 + $0x160] sm:$0xf] %vm1941, %v8097
        %8260 = vst.msk [vmem:[#allocation3 + $0x16c] sm:$0xf] %vm1941, %v8099
        %8261 = vst.msk [vmem:[#allocation3 + $0x178] sm:$0xf] %vm1941, %v8101
        %8262 = vst.msk [vmem:[#allocation3 + $0x184] sm:$0xf] %vm1941, %v8103
        %8263 = vst.msk [vmem:[#allocation3 + $0x190] sm:$0xf] %vm1941, %v8105
        %8264 = vst.msk [vmem:[#allocation3 + $0x19c] sm:$0xf] %vm1941, %v8107
        %8265 = vst.msk [vmem:[#allocation3 + $0x1a8] sm:$0xf] %vm1941, %v8109
        %8266 = vst.msk [vmem:[#allocation3 + $0x1b4] sm:$0xf] %vm1941, %v8111
        %8267 = vst.msk [vmem:[#allocation3 + $0x1c0] sm:$0xf] %vm1941, %v8113
        %8268 = vst.msk [vmem:[#allocation3 + $0x1cc] sm:$0xf] %vm1941, %v8115
        %8269 = vst.msk [vmem:[#allocation3 + $0x1d8] sm:$0xf] %vm1941, %v8117
        %8270 = vst.msk [vmem:[#allocation3 + $0x1e4] sm:$0xf] %vm1941, %v8119
        %8271 = vst.msk [vmem:[#allocation3 + $0x1f0] sm:$0xf] %vm1941, %v8121
        %8272 = vst.msk [vmem:[#allocation3 + $0x1fc] sm:$0xf] %vm1941, %v8123
        %8273 = vst.msk [vmem:[#allocation3 + $0x208] sm:$0xf] %vm1941, %v8125
        %8274 = vst.msk [vmem:[#allocation3 + $0x214] sm:$0xf] %vm1941, %v8127
        %8275 = vst.msk [vmem:[#allocation3 + $0x220] sm:$0xf] %vm1941, %v8129
        %8276 = vst.msk [vmem:[#allocation3 + $0x22c] sm:$0xf] %vm1941, %v8131
        %8277 = vst.msk [vmem:[#allocation3 + $0x238] sm:$0xf] %vm1941, %v8133
        %8278 = vst.msk [vmem:[#allocation3 + $0x244] sm:$0xf] %vm1941, %v8135
        %8279 = vst.msk [vmem:[#allocation3 + $0x250] sm:$0xf] %vm1941, %v8137
        %8280 = vst.msk [vmem:[#allocation3 + $0x25c] sm:$0xf] %vm1941, %v8139
        %8281 = vst.msk [vmem:[#allocation3 + $0x268] sm:$0xf] %vm1941, %v8141
        %8282 = vst.msk [vmem:[#allocation3 + $0x274] sm:$0xf] %vm1941, %v8143
        %8283 = vst.msk [vmem:[#allocation3 + $0x280] sm:$0xf] %vm1941, %v8145
        %8284 = vst.msk [vmem:[#allocation3 + $0x28c] sm:$0xf] %vm1941, %v8147
        %8285 = vst.msk [vmem:[#allocation3 + $0x298] sm:$0xf] %vm1941, %v8149
        %8286 = vst.msk [vmem:[#allocation3 + $0x2a4] sm:$0xf] %vm1941, %v8151
        %8287 = vst.msk [vmem:[#allocation3 + $0x2b0] sm:$0xf] %vm1941, %v8153
        %8288 = vst.msk [vmem:[#allocation3 + $0x2bc] sm:$0xf] %vm1941, %v8155
        %8289 = vst.msk [vmem:[#allocation3 + $0x2c8] sm:$0xf] %vm1941, %v8157
        %8290 = vst.msk [vmem:[#allocation3 + $0x2d4] sm:$0xf] %vm1941, %v8159
        %8291 = vst.msk [vmem:[#allocation3 + $0x2e0] sm:$0xf] %vm1941, %v8161
        %8292 = vst.msk [vmem:[#allocation3 + $0x2ec] sm:$0xf] %vm1941, %v8163
        %8293 = vst.msk [vmem:[#allocation3 + $0x2f8] sm:$0xf] %vm1941, %v8165
        %v8294 = vld [vmem:[%s2646 + $0x2] sm:$0xff]
        %v8295 = vld [vmem:[%s2646 + $0xa] sm:$0xff]
        %v8296 = vld [vmem:[%s2646 + $0x1a] sm:$0xff]
        %v8297 = vld [vmem:[%s2646 + $0x22] sm:$0xff]
        %v8298 = vld [vmem:[%s2646 + $0x32] sm:$0xff]
        %v8299 = vld [vmem:[%s2646 + $0x3a] sm:$0xff]
        %v8300 = vld [vmem:[%s2646 + $0x4a] sm:$0xff]
        %v8301 = vld [vmem:[%s2646 + $0x52] sm:$0xff]
        %v8302 = vld [vmem:[%s2646 + $0x62] sm:$0xff]
        %v8303 = vld [vmem:[%s2646 + $0x6a] sm:$0xff]
        %v8304 = vld [vmem:[%s2646 + $0x7a] sm:$0xff]
        %v8305 = vld [vmem:[%s2646 + $0x82] sm:$0xff]
        %v8306 = vld [vmem:[%s2646 + $0x92] sm:$0xff]
        %v8307 = vld [vmem:[%s2646 + $0x9a] sm:$0xff]
        %v8308 = vld [vmem:[%s2646 + $0xaa] sm:$0xff]
        %v8309 = vld [vmem:[%s2646 + $0xb2] sm:$0xff]
        %v8310 = vld [vmem:[%s2646 + $0xc2] sm:$0xff]
        %v8311 = vld [vmem:[%s2646 + $0xca] sm:$0xff]
        %v8312 = vld [vmem:[%s2646 + $0xda] sm:$0xff]
        %v8313 = vld [vmem:[%s2646 + $0xe2] sm:$0xff]
        %v8314 = vld [vmem:[%s2646 + $0xf2] sm:$0xff]
        %v8315 = vld [vmem:[%s2646 + $0xfa] sm:$0xff]
        %v8316 = vld [vmem:[%s2646 + $0x10a] sm:$0xff]
        %v8317 = vld [vmem:[%s2646 + $0x112] sm:$0xff]
        %v8318 = vld [vmem:[%s2646 + $0x122] sm:$0xff]
        %v8319 = vld [vmem:[%s2646 + $0x12a] sm:$0xff]
        %v8320 = vld [vmem:[%s2646 + $0x13a] sm:$0xff]
        %v8321 = vld [vmem:[%s2646 + $0x142] sm:$0xff]
        %v8322 = vld [vmem:[%s2646 + $0x152] sm:$0xff]
        %v8323 = vld [vmem:[%s2646 + $0x15a] sm:$0xff]
        %v8324 = vld [vmem:[%s2646 + $0x16a] sm:$0xff]
        %v8325 = vld [vmem:[%s2646 + $0x172] sm:$0xff]
        %v8326 = vld [vmem:[%s2646 + $0x1b2] sm:$0xff]
        %v8327 = vld [vmem:[%s2646 + $0x1ba] sm:$0xff]
        %v8328 = vld [vmem:[%s2646 + $0x1ca] sm:$0xff]
        %v8329 = vld [vmem:[%s2646 + $0x1d2] sm:$0xff]
        %v8330 = vld [vmem:[%s2646 + $0x1e2] sm:$0xff]
        %v8331 = vld [vmem:[%s2646 + $0x1ea] sm:$0xff]
        %v8332 = vld [vmem:[%s2646 + $0x1fa] sm:$0xff]
        %v8333 = vld [vmem:[%s2646 + $0x202] sm:$0xff]
        %v8334 = vld [vmem:[%s2646 + $0x212] sm:$0xff]
        %v8335 = vld [vmem:[%s2646 + $0x21a] sm:$0xff]
        %v8336 = vld [vmem:[%s2646 + $0x22a] sm:$0xff]
        %v8337 = vld [vmem:[%s2646 + $0x232] sm:$0xff]
        %v8338 = vld [vmem:[%s2646 + $0x242] sm:$0xff]
        %v8339 = vld [vmem:[%s2646 + $0x24a] sm:$0xff]
        %v8340 = vld [vmem:[%s2646 + $0x25a] sm:$0xff]
        %v8341 = vld [vmem:[%s2646 + $0x262] sm:$0xff]
        %v8342 = vld [vmem:[%s2646 + $0x272] sm:$0xff]
        %v8343 = vld [vmem:[%s2646 + $0x27a] sm:$0xff]
        %v8344 = vld [vmem:[%s2646 + $0x28a] sm:$0xff]
        %v8345 = vld [vmem:[%s2646 + $0x292] sm:$0xff]
        %v8346 = vld [vmem:[%s2646 + $0x2a2] sm:$0xff]
        %v8347 = vld [vmem:[%s2646 + $0x2aa] sm:$0xff]
        %v8348 = vld [vmem:[%s2646 + $0x2ba] sm:$0xff]
        %v8349 = vld [vmem:[%s2646 + $0x2c2] sm:$0xff]
        %v8350 = vld [vmem:[%s2646 + $0x2d2] sm:$0xff]
        %v8351 = vld [vmem:[%s2646 + $0x2da] sm:$0xff]
        %v8352 = vld [vmem:[%s2646 + $0x2ea] sm:$0xff]
        %v8353 = vld [vmem:[%s2646 + $0x2f2] sm:$0xff]
        %v8354 = vld [vmem:[%s2646 + $0x302] sm:$0xff]
        %v8355 = vld [vmem:[%s2646 + $0x30a] sm:$0xff]
        %v8356 = vld [vmem:[%s2646 + $0x31a] sm:$0xff]
        %v8357 = vld [vmem:[%s2646 + $0x322] sm:$0xff]
        %v8358 = vpack.c.bf16 %v8294, %v8294
        %v8359 = vpack.c.bf16 %v8295, %v8295
        %v8360 = vpack.c.bf16 %v8296, %v8296
        %v8361 = vpack.c.bf16 %v8297, %v8297
        %v8362 = vpack.c.bf16 %v8298, %v8298
        %v8363 = vpack.c.bf16 %v8299, %v8299
        %v8364 = vpack.c.bf16 %v8300, %v8300
        %v8365 = vpack.c.bf16 %v8301, %v8301
        %v8366 = vpack.c.bf16 %v8302, %v8302
        %v8367 = vpack.c.bf16 %v8303, %v8303
        %v8368 = vpack.c.bf16 %v8304, %v8304
        %v8369 = vpack.c.bf16 %v8305, %v8305
        %v8370 = vpack.c.bf16 %v8306, %v8306
        %v8371 = vpack.c.bf16 %v8307, %v8307
        %v8372 = vpack.c.bf16 %v8308, %v8308
        %v8373 = vpack.c.bf16 %v8309, %v8309
        %v8374 = vpack.c.bf16 %v8310, %v8310
        %v8375 = vpack.c.bf16 %v8311, %v8311
        %v8376 = vpack.c.bf16 %v8312, %v8312
        %v8377 = vpack.c.bf16 %v8313, %v8313
        %v8378 = vpack.c.bf16 %v8314, %v8314
        %v8379 = vpack.c.bf16 %v8315, %v8315
        %v8380 = vpack.c.bf16 %v8316, %v8316
        %v8381 = vpack.c.bf16 %v8317, %v8317
        %v8382 = vpack.c.bf16 %v8318, %v8318
        %v8383 = vpack.c.bf16 %v8319, %v8319
        %v8384 = vpack.c.bf16 %v8320, %v8320
        %v8385 = vpack.c.bf16 %v8321, %v8321
        %v8386 = vpack.c.bf16 %v8322, %v8322
        %v8387 = vpack.c.bf16 %v8323, %v8323
        %v8388 = vpack.c.bf16 %v8324, %v8324
        %v8389 = vpack.c.bf16 %v8325, %v8325
        %v8390 = vpack.c.bf16 %v8326, %v8326
        %v8391 = vpack.c.bf16 %v8327, %v8327
        %v8392 = vpack.c.bf16 %v8328, %v8328
        %v8393 = vpack.c.bf16 %v8329, %v8329
        %v8394 = vpack.c.bf16 %v8330, %v8330
        %v8395 = vpack.c.bf16 %v8331, %v8331
        %v8396 = vpack.c.bf16 %v8332, %v8332
        %v8397 = vpack.c.bf16 %v8333, %v8333
        %v8398 = vpack.c.bf16 %v8334, %v8334
        %v8399 = vpack.c.bf16 %v8335, %v8335
        %v8400 = vpack.c.bf16 %v8336, %v8336
        %v8401 = vpack.c.bf16 %v8337, %v8337
        %v8402 = vpack.c.bf16 %v8338, %v8338
        %v8403 = vpack.c.bf16 %v8339, %v8339
        %v8404 = vpack.c.bf16 %v8340, %v8340
        %v8405 = vpack.c.bf16 %v8341, %v8341
        %v8406 = vpack.c.bf16 %v8342, %v8342
        %v8407 = vpack.c.bf16 %v8343, %v8343
        %v8408 = vpack.c.bf16 %v8344, %v8344
        %v8409 = vpack.c.bf16 %v8345, %v8345
        %v8410 = vpack.c.bf16 %v8346, %v8346
        %v8411 = vpack.c.bf16 %v8347, %v8347
        %v8412 = vpack.c.bf16 %v8348, %v8348
        %v8413 = vpack.c.bf16 %v8349, %v8349
        %v8414 = vpack.c.bf16 %v8350, %v8350
        %v8415 = vpack.c.bf16 %v8351, %v8351
        %v8416 = vpack.c.bf16 %v8352, %v8352
        %v8417 = vpack.c.bf16 %v8353, %v8353
        %v8418 = vpack.c.bf16 %v8354, %v8354
        %v8419 = vpack.c.bf16 %v8355, %v8355
        %v8420 = vpack.c.bf16 %v8356, %v8356
        %v8421 = vpack.c.bf16 %v8357, %v8357
        %8422 = vst.msk [vmem:[#allocation3 + $0x8] sm:$0xf] %vm594, %v8358
        %8423 = vst.msk [vmem:[#allocation3 + $0x14] sm:$0xf] %vm594, %v8359
        %8424 = vst.msk [vmem:[#allocation3 + $0x20] sm:$0xf] %vm594, %v8360
        %8425 = vst.msk [vmem:[#allocation3 + $0x2c] sm:$0xf] %vm594, %v8361
        %8426 = vst.msk [vmem:[#allocation3 + $0x38] sm:$0xf] %vm594, %v8362
        %8427 = vst.msk [vmem:[#allocation3 + $0x44] sm:$0xf] %vm594, %v8363
        %8428 = vst.msk [vmem:[#allocation3 + $0x50] sm:$0xf] %vm594, %v8364
        %8429 = vst.msk [vmem:[#allocation3 + $0x5c] sm:$0xf] %vm594, %v8365
        %8430 = vst.msk [vmem:[#allocation3 + $0x68] sm:$0xf] %vm594, %v8366
        %8431 = vst.msk [vmem:[#allocation3 + $0x74] sm:$0xf] %vm594, %v8367
        %8432 = vst.msk [vmem:[#allocation3 + $0x80] sm:$0xf] %vm594, %v8368
        %8433 = vst.msk [vmem:[#allocation3 + $0x8c] sm:$0xf] %vm594, %v8369
        %8434 = vst.msk [vmem:[#allocation3 + $0x98] sm:$0xf] %vm594, %v8370
        %8435 = vst.msk [vmem:[#allocation3 + $0xa4] sm:$0xf] %vm594, %v8371
        %8436 = vst.msk [vmem:[#allocation3 + $0xb0] sm:$0xf] %vm594, %v8372
        %8437 = vst.msk [vmem:[#allocation3 + $0xbc] sm:$0xf] %vm594, %v8373
        %8438 = vst.msk [vmem:[#allocation3 + $0xc8] sm:$0xf] %vm594, %v8374
        %8439 = vst.msk [vmem:[#allocation3 + $0xd4] sm:$0xf] %vm594, %v8375
        %8440 = vst.msk [vmem:[#allocation3 + $0xe0] sm:$0xf] %vm594, %v8376
        %8441 = vst.msk [vmem:[#allocation3 + $0xec] sm:$0xf] %vm594, %v8377
        %8442 = vst.msk [vmem:[#allocation3 + $0xf8] sm:$0xf] %vm594, %v8378
        %8443 = vst.msk [vmem:[#allocation3 + $0x104] sm:$0xf] %vm594, %v8379
        %8444 = vst.msk [vmem:[#allocation3 + $0x110] sm:$0xf] %vm594, %v8380
        %8445 = vst.msk [vmem:[#allocation3 + $0x11c] sm:$0xf] %vm594, %v8381
        %8446 = vst.msk [vmem:[#allocation3 + $0x128] sm:$0xf] %vm594, %v8382
        %8447 = vst.msk [vmem:[#allocation3 + $0x134] sm:$0xf] %vm594, %v8383
        %8448 = vst.msk [vmem:[#allocation3 + $0x140] sm:$0xf] %vm594, %v8384
        %8449 = vst.msk [vmem:[#allocation3 + $0x14c] sm:$0xf] %vm594, %v8385
        %8450 = vst.msk [vmem:[#allocation3 + $0x158] sm:$0xf] %vm594, %v8386
        %8451 = vst.msk [vmem:[#allocation3 + $0x164] sm:$0xf] %vm594, %v8387
        %8452 = vst.msk [vmem:[#allocation3 + $0x170] sm:$0xf] %vm594, %v8388
        %8453 = vst.msk [vmem:[#allocation3 + $0x17c] sm:$0xf] %vm594, %v8389
        %8454 = vst.msk [vmem:[#allocation3 + $0x188] sm:$0xf] %vm594, %v8390
        %8455 = vst.msk [vmem:[#allocation3 + $0x194] sm:$0xf] %vm594, %v8391
        %8456 = vst.msk [vmem:[#allocation3 + $0x1a0] sm:$0xf] %vm594, %v8392
        %8457 = vst.msk [vmem:[#allocation3 + $0x1ac] sm:$0xf] %vm594, %v8393
        %8458 = vst.msk [vmem:[#allocation3 + $0x1b8] sm:$0xf] %vm594, %v8394
        %8459 = vst.msk [vmem:[#allocation3 + $0x1c4] sm:$0xf] %vm594, %v8395
        %8460 = vst.msk [vmem:[#allocation3 + $0x1d0] sm:$0xf] %vm594, %v8396
        %8461 = vst.msk [vmem:[#allocation3 + $0x1dc] sm:$0xf] %vm594, %v8397
        %8462 = vst.msk [vmem:[#allocation3 + $0x1e8] sm:$0xf] %vm594, %v8398
        %8463 = vst.msk [vmem:[#allocation3 + $0x1f4] sm:$0xf] %vm594, %v8399
        %8464 = vst.msk [vmem:[#allocation3 + $0x200] sm:$0xf] %vm594, %v8400
        %8465 = vst.msk [vmem:[#allocation3 + $0x20c] sm:$0xf] %vm594, %v8401
        %8466 = vst.msk [vmem:[#allocation3 + $0x218] sm:$0xf] %vm594, %v8402
        %8467 = vst.msk [vmem:[#allocation3 + $0x224] sm:$0xf] %vm594, %v8403
        %8468 = vst.msk [vmem:[#allocation3 + $0x230] sm:$0xf] %vm594, %v8404
        %8469 = vst.msk [vmem:[#allocation3 + $0x23c] sm:$0xf] %vm594, %v8405
        %8470 = vst.msk [vmem:[#allocation3 + $0x248] sm:$0xf] %vm594, %v8406
        %8471 = vst.msk [vmem:[#allocation3 + $0x254] sm:$0xf] %vm594, %v8407
        %8472 = vst.msk [vmem:[#allocation3 + $0x260] sm:$0xf] %vm594, %v8408
        %8473 = vst.msk [vmem:[#allocation3 + $0x26c] sm:$0xf] %vm594, %v8409
        %8474 = vst.msk [vmem:[#allocation3 + $0x278] sm:$0xf] %vm594, %v8410
        %8475 = vst.msk [vmem:[#allocation3 + $0x284] sm:$0xf] %vm594, %v8411
        %8476 = vst.msk [vmem:[#allocation3 + $0x290] sm:$0xf] %vm594, %v8412
        %8477 = vst.msk [vmem:[#allocation3 + $0x29c] sm:$0xf] %vm594, %v8413
        %8478 = vst.msk [vmem:[#allocation3 + $0x2a8] sm:$0xf] %vm594, %v8414
        %8479 = vst.msk [vmem:[#allocation3 + $0x2b4] sm:$0xf] %vm594, %v8415
        %8480 = vst.msk [vmem:[#allocation3 + $0x2c0] sm:$0xf] %vm594, %v8416
        %8481 = vst.msk [vmem:[#allocation3 + $0x2cc] sm:$0xf] %vm594, %v8417
        %8482 = vst.msk [vmem:[#allocation3 + $0x2d8] sm:$0xf] %vm594, %v8418
        %8483 = vst.msk [vmem:[#allocation3 + $0x2e4] sm:$0xf] %vm594, %v8419
        %8484 = vst.msk [vmem:[#allocation3 + $0x2f0] sm:$0xf] %vm594, %v8420
        %8485 = vst.msk [vmem:[#allocation3 + $0x2fc] sm:$0xf] %vm594, %v8421
        %v8486 = vld [vmem:[#allocation3] sm:$0xff]
        %v8487 = vld [vmem:[#allocation3 + $0x8] sm:$0xf]
        %v8488 = vld [vmem:[#allocation3 + $0xc] sm:$0xff]
        %v8489 = vld [vmem:[#allocation3 + $0x14] sm:$0xf]
        %v8490 = vld [vmem:[#allocation3 + $0x18] sm:$0xff]
        %v8491 = vld [vmem:[#allocation3 + $0x20] sm:$0xf]
        %v8492 = vld [vmem:[#allocation3 + $0x24] sm:$0xff]
        %v8493 = vld [vmem:[#allocation3 + $0x2c] sm:$0xf]
        %v8494 = vld [vmem:[#allocation3 + $0x30] sm:$0xff]
        %v8495 = vld [vmem:[#allocation3 + $0x38] sm:$0xf]
        %v8496 = vld [vmem:[#allocation3 + $0x3c] sm:$0xff]
        %v8497 = vld [vmem:[#allocation3 + $0x44] sm:$0xf]
        %v8498 = vld [vmem:[#allocation3 + $0x48] sm:$0xff]
        %v8499 = vld [vmem:[#allocation3 + $0x50] sm:$0xf]
        %v8500 = vld [vmem:[#allocation3 + $0x54] sm:$0xff]
        %v8501 = vld [vmem:[#allocation3 + $0x5c] sm:$0xf]
        %v8502 = vld [vmem:[#allocation3 + $0x60] sm:$0xff]
        %v8503 = vld [vmem:[#allocation3 + $0x68] sm:$0xf]
        %v8504 = vld [vmem:[#allocation3 + $0x6c] sm:$0xff]
        %v8505 = vld [vmem:[#allocation3 + $0x74] sm:$0xf]
        %v8506 = vld [vmem:[#allocation3 + $0x78] sm:$0xff]
        %v8507 = vld [vmem:[#allocation3 + $0x80] sm:$0xf]
        %v8508 = vld [vmem:[#allocation3 + $0x84] sm:$0xff]
        %v8509 = vld [vmem:[#allocation3 + $0x8c] sm:$0xf]
        %v8510 = vld [vmem:[#allocation3 + $0x90] sm:$0xff]
        %v8511 = vld [vmem:[#allocation3 + $0x98] sm:$0xf]
        %v8512 = vld [vmem:[#allocation3 + $0x9c] sm:$0xff]
        %v8513 = vld [vmem:[#allocation3 + $0xa4] sm:$0xf]
        %v8514 = vld [vmem:[#allocation3 + $0xa8] sm:$0xff]
        %v8515 = vld [vmem:[#allocation3 + $0xb0] sm:$0xf]
        %v8516 = vld [vmem:[#allocation3 + $0xb4] sm:$0xff]
        %v8517 = vld [vmem:[#allocation3 + $0xbc] sm:$0xf]
        %v8518 = vld [vmem:[#allocation3 + $0xc0] sm:$0xff]
        %v8519 = vld [vmem:[#allocation3 + $0xc8] sm:$0xf]
        %v8520 = vld [vmem:[#allocation3 + $0xcc] sm:$0xff]
        %v8521 = vld [vmem:[#allocation3 + $0xd4] sm:$0xf]
        %v8522 = vld [vmem:[#allocation3 + $0xd8] sm:$0xff]
        %v8523 = vld [vmem:[#allocation3 + $0xe0] sm:$0xf]
        %v8524 = vld [vmem:[#allocation3 + $0xe4] sm:$0xff]
        %v8525 = vld [vmem:[#allocation3 + $0xec] sm:$0xf]
        %v8526 = vld [vmem:[#allocation3 + $0xf0] sm:$0xff]
        %v8527 = vld [vmem:[#allocation3 + $0xf8] sm:$0xf]
        %v8528 = vld [vmem:[#allocation3 + $0xfc] sm:$0xff]
        %v8529 = vld [vmem:[#allocation3 + $0x104] sm:$0xf]
        %v8530 = vld [vmem:[#allocation3 + $0x108] sm:$0xff]
        %v8531 = vld [vmem:[#allocation3 + $0x110] sm:$0xf]
        %v8532 = vld [vmem:[#allocation3 + $0x114] sm:$0xff]
        %v8533 = vld [vmem:[#allocation3 + $0x11c] sm:$0xf]
        %v8534 = vld [vmem:[#allocation3 + $0x120] sm:$0xff]
        %v8535 = vld [vmem:[#allocation3 + $0x128] sm:$0xf]
        %v8536 = vld [vmem:[#allocation3 + $0x12c] sm:$0xff]
        %v8537 = vld [vmem:[#allocation3 + $0x134] sm:$0xf]
        %v8538 = vld [vmem:[#allocation3 + $0x138] sm:$0xff]
        %v8539 = vld [vmem:[#allocation3 + $0x140] sm:$0xf]
        %v8540 = vld [vmem:[#allocation3 + $0x144] sm:$0xff]
        %v8541 = vld [vmem:[#allocation3 + $0x14c] sm:$0xf]
        %v8542 = vld [vmem:[#allocation3 + $0x150] sm:$0xff]
        %v8543 = vld [vmem:[#allocation3 + $0x158] sm:$0xf]
        %v8544 = vld [vmem:[#allocation3 + $0x15c] sm:$0xff]
        %v8545 = vld [vmem:[#allocation3 + $0x164] sm:$0xf]
        %v8546 = vld [vmem:[#allocation3 + $0x168] sm:$0xff]
        %v8547 = vld [vmem:[#allocation3 + $0x170] sm:$0xf]
        %v8548 = vld [vmem:[#allocation3 + $0x174] sm:$0xff]
        %v8549 = vld [vmem:[#allocation3 + $0x17c] sm:$0xf]
        %v8550 = vld [vmem:[#allocation3 + $0x180] sm:$0xff]
        %v8551 = vld [vmem:[#allocation3 + $0x188] sm:$0xf]
        %v8552 = vld [vmem:[#allocation3 + $0x18c] sm:$0xff]
        %v8553 = vld [vmem:[#allocation3 + $0x194] sm:$0xf]
        %v8554 = vld [vmem:[#allocation3 + $0x198] sm:$0xff]
        %v8555 = vld [vmem:[#allocation3 + $0x1a0] sm:$0xf]
        %v8556 = vld [vmem:[#allocation3 + $0x1a4] sm:$0xff]
        %v8557 = vld [vmem:[#allocation3 + $0x1ac] sm:$0xf]
        %v8558 = vld [vmem:[#allocation3 + $0x1b0] sm:$0xff]
        %v8559 = vld [vmem:[#allocation3 + $0x1b8] sm:$0xf]
        %v8560 = vld [vmem:[#allocation3 + $0x1bc] sm:$0xff]
        %v8561 = vld [vmem:[#allocation3 + $0x1c4] sm:$0xf]
        %v8562 = vld [vmem:[#allocation3 + $0x1c8] sm:$0xff]
        %v8563 = vld [vmem:[#allocation3 + $0x1d0] sm:$0xf]
        %v8564 = vld [vmem:[#allocation3 + $0x1d4] sm:$0xff]
        %v8565 = vld [vmem:[#allocation3 + $0x1dc] sm:$0xf]
        %v8566 = vld [vmem:[#allocation3 + $0x1e0] sm:$0xff]
        %v8567 = vld [vmem:[#allocation3 + $0x1e8] sm:$0xf]
        %v8568 = vld [vmem:[#allocation3 + $0x1ec] sm:$0xff]
        %v8569 = vld [vmem:[#allocation3 + $0x1f4] sm:$0xf]
        %v8570 = vld [vmem:[#allocation3 + $0x1f8] sm:$0xff]
        %v8571 = vld [vmem:[#allocation3 + $0x200] sm:$0xf]
        %v8572 = vld [vmem:[#allocation3 + $0x204] sm:$0xff]
        %v8573 = vld [vmem:[#allocation3 + $0x20c] sm:$0xf]
        %v8574 = vld [vmem:[#allocation3 + $0x210] sm:$0xff]
        %v8575 = vld [vmem:[#allocation3 + $0x218] sm:$0xf]
        %v8576 = vld [vmem:[#allocation3 + $0x21c] sm:$0xff]
        %v8577 = vld [vmem:[#allocation3 + $0x224] sm:$0xf]
        %v8578 = vld [vmem:[#allocation3 + $0x228] sm:$0xff]
        %v8579 = vld [vmem:[#allocation3 + $0x230] sm:$0xf]
        %v8580 = vld [vmem:[#allocation3 + $0x234] sm:$0xff]
        %v8581 = vld [vmem:[#allocation3 + $0x23c] sm:$0xf]
        %v8582 = vld [vmem:[#allocation3 + $0x240] sm:$0xff]
        %v8583 = vld [vmem:[#allocation3 + $0x248] sm:$0xf]
        %v8584 = vld [vmem:[#allocation3 + $0x24c] sm:$0xff]
        %v8585 = vld [vmem:[#allocation3 + $0x254] sm:$0xf]
        %v8586 = vld [vmem:[#allocation3 + $0x258] sm:$0xff]
        %v8587 = vld [vmem:[#allocation3 + $0x260] sm:$0xf]
        %v8588 = vld [vmem:[#allocation3 + $0x264] sm:$0xff]
        %v8589 = vld [vmem:[#allocation3 + $0x26c] sm:$0xf]
        %v8590 = vld [vmem:[#allocation3 + $0x270] sm:$0xff]
        %v8591 = vld [vmem:[#allocation3 + $0x278] sm:$0xf]
        %v8592 = vld [vmem:[#allocation3 + $0x27c] sm:$0xff]
        %v8593 = vld [vmem:[#allocation3 + $0x284] sm:$0xf]
        %v8594 = vld [vmem:[#allocation3 + $0x288] sm:$0xff]
        %v8595 = vld [vmem:[#allocation3 + $0x290] sm:$0xf]
        %v8596 = vld [vmem:[#allocation3 + $0x294] sm:$0xff]
        %v8597 = vld [vmem:[#allocation3 + $0x29c] sm:$0xf]
        %v8598 = vld [vmem:[#allocation3 + $0x2a0] sm:$0xff]
        %v8599 = vld [vmem:[#allocation3 + $0x2a8] sm:$0xf]
        %v8600 = vld [vmem:[#allocation3 + $0x2ac] sm:$0xff]
        %v8601 = vld [vmem:[#allocation3 + $0x2b4] sm:$0xf]
        %v8602 = vld [vmem:[#allocation3 + $0x2b8] sm:$0xff]
        %v8603 = vld [vmem:[#allocation3 + $0x2c0] sm:$0xf]
        %v8604 = vld [vmem:[#allocation3 + $0x2c4] sm:$0xff]
        %v8605 = vld [vmem:[#allocation3 + $0x2cc] sm:$0xf]
        %v8606 = vld [vmem:[#allocation3 + $0x2d0] sm:$0xff]
        %v8607 = vld [vmem:[#allocation3 + $0x2d8] sm:$0xf]
        %v8608 = vld [vmem:[#allocation3 + $0x2dc] sm:$0xff]
        %v8609 = vld [vmem:[#allocation3 + $0x2e4] sm:$0xf]
        %v8610 = vld [vmem:[#allocation3 + $0x2e8] sm:$0xff]
        %v8611 = vld [vmem:[#allocation3 + $0x2f0] sm:$0xf]
        %v8612 = vld [vmem:[#allocation3 + $0x2f4] sm:$0xff]
        %v8613 = vld [vmem:[#allocation3 + $0x2fc] sm:$0xf]
        %v8614 = vld [vmem:[%s3] sm:$0xf]
        %v8615 = vld [vmem:[%s3 + $0x4] sm:$0xf]
        %v8616 = vld [vmem:[%s3 + $0x8] sm:$0xf]
        %v8617 = vld [vmem:[%s3 + $0xc] sm:$0xf]
        %v8618 = vld [vmem:[%s3 + $0x10] sm:$0xf]
        %v8619 = vld [vmem:[%s3 + $0x14] sm:$0xf]
        %v8620 = vld [vmem:[%s3 + $0x18] sm:$0xf]
        %v8621 = vld [vmem:[%s3 + $0x1c] sm:$0xf]
        %v8622 = vld [vmem:[%s3 + $0x20] sm:$0xf]
        %v8623 = vld [vmem:[%s3 + $0x24] sm:$0xf]
        %v8624 = vld [vmem:[%s3 + $0x28] sm:$0xf]
        %v8625 = vld [vmem:[%s3 + $0x2c] sm:$0xf]
        %v8626 = vld [vmem:[%s3 + $0x30] sm:$0xf]
        %v8627 = vld [vmem:[%s3 + $0x34] sm:$0xf]
        %v8628 = vld [vmem:[%s3 + $0x38] sm:$0xf]
        %v8629 = vld [vmem:[%s3 + $0x3c] sm:$0xf]
        %v8630 = vld [vmem:[%s3 + $0x40] sm:$0xf]
        %v8631 = vld [vmem:[%s3 + $0x44] sm:$0xf]
        %v8632 = vld [vmem:[%s3 + $0x48] sm:$0xf]
        %v8633 = vld [vmem:[%s3 + $0x4c] sm:$0xf]
        %v8634 = vld [vmem:[%s3 + $0x50] sm:$0xf]
        %v8635 = vld [vmem:[%s3 + $0x54] sm:$0xf]
        %v8636 = vld [vmem:[%s3 + $0x58] sm:$0xf]
        %v8637 = vld [vmem:[%s3 + $0x5c] sm:$0xf]
        %v8638 = vld [vmem:[%s3 + $0x60] sm:$0xf]
        %v8639 = vld [vmem:[%s3 + $0x64] sm:$0xf]
        %v8640 = vld [vmem:[%s3 + $0x68] sm:$0xf]
        %v8641 = vld [vmem:[%s3 + $0x6c] sm:$0xf]
        %v8642 = vld [vmem:[%s3 + $0x70] sm:$0xf]
        %v8643 = vld [vmem:[%s3 + $0x74] sm:$0xf]
        %v8644 = vld [vmem:[%s3 + $0x78] sm:$0xf]
        %v8645 = vld [vmem:[%s3 + $0x7c] sm:$0xf]
        %v8646 = vld [vmem:[%s3 + $0x80] sm:$0xf]
        %v8647 = vld [vmem:[%s3 + $0x84] sm:$0xf]
        %v8648 = vld [vmem:[%s3 + $0x88] sm:$0xf]
        %v8649 = vld [vmem:[%s3 + $0x8c] sm:$0xf]
        %v8650 = vld [vmem:[%s4] sm:$0x1]
        %v8652 = vperm.slane %v8650, 0
        %v8782 = vunpack.c.l.b16 %v8486
        %v8783 = vunpack.c.h.b16 %v8486
        %v8784 = vunpack.c.l.b16 %v8487
        %v8785 = vunpack.c.l.b16 %v8488
        %v8786 = vunpack.c.h.b16 %v8488
        %v8787 = vunpack.c.l.b16 %v8489
        %v8788 = vunpack.c.l.b16 %v8490
        %v8789 = vunpack.c.h.b16 %v8490
        %v8790 = vunpack.c.l.b16 %v8491
        %v8791 = vunpack.c.l.b16 %v8492
        %v8792 = vunpack.c.h.b16 %v8492
        %v8793 = vunpack.c.l.b16 %v8493
        %v8794 = vunpack.c.l.b16 %v8494
        %v8795 = vunpack.c.h.b16 %v8494
        %v8796 = vunpack.c.l.b16 %v8495
        %v8797 = vunpack.c.l.b16 %v8496
        %v8798 = vunpack.c.h.b16 %v8496
        %v8799 = vunpack.c.l.b16 %v8497
        %v8800 = vunpack.c.l.b16 %v8498
        %v8801 = vunpack.c.h.b16 %v8498
        %v8802 = vunpack.c.l.b16 %v8499
        %v8803 = vunpack.c.l.b16 %v8500
        %v8804 = vunpack.c.h.b16 %v8500
        %v8805 = vunpack.c.l.b16 %v8501
        %v8806 = vunpack.c.l.b16 %v8502
        %v8807 = vunpack.c.h.b16 %v8502
        %v8808 = vunpack.c.l.b16 %v8503
        %v8809 = vunpack.c.l.b16 %v8504
        %v8810 = vunpack.c.h.b16 %v8504
        %v8811 = vunpack.c.l.b16 %v8505
        %v8812 = vunpack.c.l.b16 %v8506
        %v8813 = vunpack.c.h.b16 %v8506
        %v8814 = vunpack.c.l.b16 %v8507
        %v8815 = vunpack.c.l.b16 %v8508
        %v8816 = vunpack.c.h.b16 %v8508
        %v8817 = vunpack.c.l.b16 %v8509
        %v8818 = vunpack.c.l.b16 %v8510
        %v8819 = vunpack.c.h.b16 %v8510
        %v8820 = vunpack.c.l.b16 %v8511
        %v8821 = vunpack.c.l.b16 %v8512
        %v8822 = vunpack.c.h.b16 %v8512
        %v8823 = vunpack.c.l.b16 %v8513
        %v8824 = vunpack.c.l.b16 %v8514
        %v8825 = vunpack.c.h.b16 %v8514
        %v8826 = vunpack.c.l.b16 %v8515
        %v8827 = vunpack.c.l.b16 %v8516
        %v8828 = vunpack.c.h.b16 %v8516
        %v8829 = vunpack.c.l.b16 %v8517
        %v8830 = vunpack.c.l.b16 %v8518
        %v8831 = vunpack.c.h.b16 %v8518
        %v8832 = vunpack.c.l.b16 %v8519
        %v8833 = vunpack.c.l.b16 %v8520
        %v8834 = vunpack.c.h.b16 %v8520
        %v8835 = vunpack.c.l.b16 %v8521
        %v8836 = vunpack.c.l.b16 %v8522
        %v8837 = vunpack.c.h.b16 %v8522
        %v8838 = vunpack.c.l.b16 %v8523
        %v8839 = vunpack.c.l.b16 %v8524
        %v8840 = vunpack.c.h.b16 %v8524
        %v8841 = vunpack.c.l.b16 %v8525
        %v8842 = vunpack.c.l.b16 %v8526
        %v8843 = vunpack.c.h.b16 %v8526
        %v8844 = vunpack.c.l.b16 %v8527
        %v8845 = vunpack.c.l.b16 %v8528
        %v8846 = vunpack.c.h.b16 %v8528
        %v8847 = vunpack.c.l.b16 %v8529
        %v8848 = vunpack.c.l.b16 %v8530
        %v8849 = vunpack.c.h.b16 %v8530
        %v8850 = vunpack.c.l.b16 %v8531
        %v8851 = vunpack.c.l.b16 %v8532
        %v8852 = vunpack.c.h.b16 %v8532
        %v8853 = vunpack.c.l.b16 %v8533
        %v8854 = vunpack.c.l.b16 %v8534
        %v8855 = vunpack.c.h.b16 %v8534
        %v8856 = vunpack.c.l.b16 %v8535
        %v8857 = vunpack.c.l.b16 %v8536
        %v8858 = vunpack.c.h.b16 %v8536
        %v8859 = vunpack.c.l.b16 %v8537
        %v8860 = vunpack.c.l.b16 %v8538
        %v8861 = vunpack.c.h.b16 %v8538
        %v8862 = vunpack.c.l.b16 %v8539
        %v8863 = vunpack.c.l.b16 %v8540
        %v8864 = vunpack.c.h.b16 %v8540
        %v8865 = vunpack.c.l.b16 %v8541
        %v8866 = vunpack.c.l.b16 %v8542
        %v8867 = vunpack.c.h.b16 %v8542
        %v8868 = vunpack.c.l.b16 %v8543
        %v8869 = vunpack.c.l.b16 %v8544
        %v8870 = vunpack.c.h.b16 %v8544
        %v8871 = vunpack.c.l.b16 %v8545
        %v8872 = vunpack.c.l.b16 %v8546
        %v8873 = vunpack.c.h.b16 %v8546
        %v8874 = vunpack.c.l.b16 %v8547
        %v8875 = vunpack.c.l.b16 %v8548
        %v8876 = vunpack.c.h.b16 %v8548
        %v8877 = vunpack.c.l.b16 %v8549
        %v8878 = vunpack.c.l.b16 %v8550
        %v8879 = vunpack.c.h.b16 %v8550
        %v8880 = vunpack.c.l.b16 %v8551
        %v8881 = vunpack.c.l.b16 %v8552
        %v8882 = vunpack.c.h.b16 %v8552
        %v8883 = vunpack.c.l.b16 %v8553
        %v8884 = vunpack.c.l.b16 %v8554
        %v8885 = vunpack.c.h.b16 %v8554
        %v8886 = vunpack.c.l.b16 %v8555
        %v8887 = vunpack.c.l.b16 %v8556
        %v8888 = vunpack.c.h.b16 %v8556
        %v8889 = vunpack.c.l.b16 %v8557
        %v8890 = vunpack.c.l.b16 %v8558
        %v8891 = vunpack.c.h.b16 %v8558
        %v8892 = vunpack.c.l.b16 %v8559
        %v8893 = vunpack.c.l.b16 %v8560
        %v8894 = vunpack.c.h.b16 %v8560
        %v8895 = vunpack.c.l.b16 %v8561
        %v8896 = vunpack.c.l.b16 %v8562
        %v8897 = vunpack.c.h.b16 %v8562
        %v8898 = vunpack.c.l.b16 %v8563
        %v8899 = vunpack.c.l.b16 %v8564
        %v8900 = vunpack.c.h.b16 %v8564
        %v8901 = vunpack.c.l.b16 %v8565
        %v8902 = vunpack.c.l.b16 %v8566
        %v8903 = vunpack.c.h.b16 %v8566
        %v8904 = vunpack.c.l.b16 %v8567
        %v8905 = vunpack.c.l.b16 %v8568
        %v8906 = vunpack.c.h.b16 %v8568
        %v8907 = vunpack.c.l.b16 %v8569
        %v8908 = vunpack.c.l.b16 %v8570
        %v8909 = vunpack.c.h.b16 %v8570
        %v8910 = vunpack.c.l.b16 %v8571
        %v8911 = vunpack.c.l.b16 %v8572
        %v8912 = vunpack.c.h.b16 %v8572
        %v8913 = vunpack.c.l.b16 %v8573
        %v8914 = vunpack.c.l.b16 %v8574
        %v8915 = vunpack.c.h.b16 %v8574
        %v8916 = vunpack.c.l.b16 %v8575
        %v8917 = vunpack.c.l.b16 %v8576
        %v8918 = vunpack.c.h.b16 %v8576
        %v8919 = vunpack.c.l.b16 %v8577
        %v8920 = vunpack.c.l.b16 %v8578
        %v8921 = vunpack.c.h.b16 %v8578
        %v8922 = vunpack.c.l.b16 %v8579
        %v8923 = vunpack.c.l.b16 %v8580
        %v8924 = vunpack.c.h.b16 %v8580
        %v8925 = vunpack.c.l.b16 %v8581
        %v8926 = vunpack.c.l.b16 %v8582
        %v8927 = vunpack.c.h.b16 %v8582
        %v8928 = vunpack.c.l.b16 %v8583
        %v8929 = vunpack.c.l.b16 %v8584
        %v8930 = vunpack.c.h.b16 %v8584
        %v8931 = vunpack.c.l.b16 %v8585
        %v8932 = vunpack.c.l.b16 %v8586
        %v8933 = vunpack.c.h.b16 %v8586
        %v8934 = vunpack.c.l.b16 %v8587
        %v8935 = vunpack.c.l.b16 %v8588
        %v8936 = vunpack.c.h.b16 %v8588
        %v8937 = vunpack.c.l.b16 %v8589
        %v8938 = vunpack.c.l.b16 %v8590
        %v8939 = vunpack.c.h.b16 %v8590
        %v8940 = vunpack.c.l.b16 %v8591
        %v8941 = vunpack.c.l.b16 %v8592
        %v8942 = vunpack.c.h.b16 %v8592
        %v8943 = vunpack.c.l.b16 %v8593
        %v8944 = vunpack.c.l.b16 %v8594
        %v8945 = vunpack.c.h.b16 %v8594
        %v8946 = vunpack.c.l.b16 %v8595
        %v8947 = vunpack.c.l.b16 %v8596
        %v8948 = vunpack.c.h.b16 %v8596
        %v8949 = vunpack.c.l.b16 %v8597
        %v8950 = vunpack.c.l.b16 %v8598
        %v8951 = vunpack.c.h.b16 %v8598
        %v8952 = vunpack.c.l.b16 %v8599
        %v8953 = vunpack.c.l.b16 %v8600
        %v8954 = vunpack.c.h.b16 %v8600
        %v8955 = vunpack.c.l.b16 %v8601
        %v8956 = vunpack.c.l.b16 %v8602
        %v8957 = vunpack.c.h.b16 %v8602
        %v8958 = vunpack.c.l.b16 %v8603
        %v8959 = vunpack.c.l.b16 %v8604
        %v8960 = vunpack.c.h.b16 %v8604
        %v8961 = vunpack.c.l.b16 %v8605
        %v8962 = vunpack.c.l.b16 %v8606
        %v8963 = vunpack.c.h.b16 %v8606
        %v8964 = vunpack.c.l.b16 %v8607
        %v8965 = vunpack.c.l.b16 %v8608
        %v8966 = vunpack.c.h.b16 %v8608
        %v8967 = vunpack.c.l.b16 %v8609
        %v8968 = vunpack.c.l.b16 %v8610
        %v8969 = vunpack.c.h.b16 %v8610
        %v8970 = vunpack.c.l.b16 %v8611
        %v8971 = vunpack.c.l.b16 %v8612
        %v8972 = vunpack.c.h.b16 %v8612
        %v8973 = vunpack.c.l.b16 %v8613
        %v8974 = vpack.c.b16 %v8785, %v8782
        %v8975 = vpack.c.b16 %v8786, %v8783
        %v8976 = vpack.c.b16 %v8787, %v8784
        %v8977 = vpack.c.b16 %v8791, %v8788
        %v8978 = vpack.c.b16 %v8792, %v8789
        %v8979 = vpack.c.b16 %v8793, %v8790
        %v8980 = vpack.c.b16 %v8797, %v8794
        %v8981 = vpack.c.b16 %v8798, %v8795
        %v8982 = vpack.c.b16 %v8799, %v8796
        %v8983 = vpack.c.b16 %v8803, %v8800
        %v8984 = vpack.c.b16 %v8804, %v8801
        %v8985 = vpack.c.b16 %v8805, %v8802
        %v8986 = vpack.c.b16 %v8809, %v8806
        %v8987 = vpack.c.b16 %v8810, %v8807
        %v8988 = vpack.c.b16 %v8811, %v8808
        %v8989 = vpack.c.b16 %v8815, %v8812
        %v8990 = vpack.c.b16 %v8816, %v8813
        %v8991 = vpack.c.b16 %v8817, %v8814
        %v8992 = vpack.c.b16 %v8821, %v8818
        %v8993 = vpack.c.b16 %v8822, %v8819
        %v8994 = vpack.c.b16 %v8823, %v8820
        %v8995 = vpack.c.b16 %v8827, %v8824
        %v8996 = vpack.c.b16 %v8828, %v8825
        %v8997 = vpack.c.b16 %v8829, %v8826
        %v8998 = vpack.c.b16 %v8833, %v8830
        %v8999 = vpack.c.b16 %v8834, %v8831
        %v9000 = vpack.c.b16 %v8835, %v8832
        %v9001 = vpack.c.b16 %v8839, %v8836
        %v9002 = vpack.c.b16 %v8840, %v8837
        %v9003 = vpack.c.b16 %v8841, %v8838
        %v9004 = vpack.c.b16 %v8845, %v8842
        %v9005 = vpack.c.b16 %v8846, %v8843
        %v9006 = vpack.c.b16 %v8847, %v8844
        %v9007 = vpack.c.b16 %v8851, %v8848
        %v9008 = vpack.c.b16 %v8852, %v8849
        %v9009 = vpack.c.b16 %v8853, %v8850
        %v9010 = vpack.c.b16 %v8857, %v8854
        %v9011 = vpack.c.b16 %v8858, %v8855
        %v9012 = vpack.c.b16 %v8859, %v8856
        %v9013 = vpack.c.b16 %v8863, %v8860
        %v9014 = vpack.c.b16 %v8864, %v8861
        %v9015 = vpack.c.b16 %v8865, %v8862
        %v9016 = vpack.c.b16 %v8869, %v8866
        %v9017 = vpack.c.b16 %v8870, %v8867
        %v9018 = vpack.c.b16 %v8871, %v8868
        %v9019 = vpack.c.b16 %v8875, %v8872
        %v9020 = vpack.c.b16 %v8876, %v8873
        %v9021 = vpack.c.b16 %v8877, %v8874
        %v9022 = vpack.c.b16 %v8881, %v8878
        %v9023 = vpack.c.b16 %v8882, %v8879
        %v9024 = vpack.c.b16 %v8883, %v8880
        %v9025 = vpack.c.b16 %v8887, %v8884
        %v9026 = vpack.c.b16 %v8888, %v8885
        %v9027 = vpack.c.b16 %v8889, %v8886
        %v9028 = vpack.c.b16 %v8893, %v8890
        %v9029 = vpack.c.b16 %v8894, %v8891
        %v9030 = vpack.c.b16 %v8895, %v8892
        %v9031 = vpack.c.b16 %v8899, %v8896
        %v9032 = vpack.c.b16 %v8900, %v8897
        %v9033 = vpack.c.b16 %v8901, %v8898
        %v9034 = vpack.c.b16 %v8905, %v8902
        %v9035 = vpack.c.b16 %v8906, %v8903
        %v9036 = vpack.c.b16 %v8907, %v8904
        %v9037 = vpack.c.b16 %v8911, %v8908
        %v9038 = vpack.c.b16 %v8912, %v8909
        %v9039 = vpack.c.b16 %v8913, %v8910
        %v9040 = vpack.c.b16 %v8917, %v8914
        %v9041 = vpack.c.b16 %v8918, %v8915
        %v9042 = vpack.c.b16 %v8919, %v8916
        %v9043 = vpack.c.b16 %v8923, %v8920
        %v9044 = vpack.c.b16 %v8924, %v8921
        %v9045 = vpack.c.b16 %v8925, %v8922
        %v9046 = vpack.c.b16 %v8929, %v8926
        %v9047 = vpack.c.b16 %v8930, %v8927
        %v9048 = vpack.c.b16 %v8931, %v8928
        %v9049 = vpack.c.b16 %v8935, %v8932
        %v9050 = vpack.c.b16 %v8936, %v8933
        %v9051 = vpack.c.b16 %v8937, %v8934
        %v9052 = vpack.c.b16 %v8941, %v8938
        %v9053 = vpack.c.b16 %v8942, %v8939
        %v9054 = vpack.c.b16 %v8943, %v8940
        %v9055 = vpack.c.b16 %v8947, %v8944
        %v9056 = vpack.c.b16 %v8948, %v8945
        %v9057 = vpack.c.b16 %v8949, %v8946
        %v9058 = vpack.c.b16 %v8953, %v8950
        %v9059 = vpack.c.b16 %v8954, %v8951
        %v9060 = vpack.c.b16 %v8955, %v8952
        %v9061 = vpack.c.b16 %v8959, %v8956
        %v9062 = vpack.c.b16 %v8960, %v8957
        %v9063 = vpack.c.b16 %v8961, %v8958
        %v9064 = vpack.c.b16 %v8965, %v8962
        %v9065 = vpack.c.b16 %v8966, %v8963
        %v9066 = vpack.c.b16 %v8967, %v8964
        %v9067 = vpack.c.b16 %v8971, %v8968
        %v9068 = vpack.c.b16 %v8972, %v8969
        %v9069 = vpack.c.b16 %v8973, %v8970
        %v9170 = vunpack.c.l.b16 %v8614
        %v9171 = vunpack.c.l.b16 %v8615
        %v9172 = vunpack.c.l.b16 %v8616
        %v9173 = vunpack.c.l.b16 %v8617
        %v9174 = vunpack.c.l.b16 %v8618
        %v9175 = vunpack.c.l.b16 %v8619
        %v9176 = vunpack.c.l.b16 %v8620
        %v9177 = vunpack.c.l.b16 %v8621
        %v9178 = vunpack.c.l.b16 %v8622
        %v9179 = vunpack.c.l.b16 %v8623
        %v9180 = vunpack.c.l.b16 %v8624
        %v9181 = vunpack.c.l.b16 %v8625
        %v9182 = vunpack.c.l.b16 %v8626
        %v9183 = vunpack.c.l.b16 %v8627
        %v9184 = vunpack.c.l.b16 %v8628
        %v9185 = vunpack.c.l.b16 %v8629
        %v9186 = vunpack.c.l.b16 %v8630
        %v9187 = vunpack.c.l.b16 %v8631
        %v9188 = vunpack.c.l.b16 %v8632
        %v9189 = vunpack.c.l.b16 %v8633
        %v9190 = vunpack.c.l.b16 %v8634
        %v9191 = vunpack.c.l.b16 %v8635
        %v9192 = vunpack.c.l.b16 %v8636
        %v9193 = vunpack.c.l.b16 %v8637
        %v9194 = vunpack.c.l.b16 %v8638
        %v9195 = vunpack.c.l.b16 %v8639
        %v9196 = vunpack.c.l.b16 %v8640
        %v9197 = vunpack.c.l.b16 %v8641
        %v9198 = vunpack.c.l.b16 %v8642
        %v9199 = vunpack.c.l.b16 %v8643
        %v9200 = vunpack.c.l.b16 %v8644
        %v9201 = vunpack.c.l.b16 %v8645
        %v9202 = vunpack.c.l.b16 %v8646
        %v9203 = vunpack.c.l.b16 %v8647
        %v9204 = vunpack.c.l.b16 %v8648
        %v9205 = vunpack.c.l.b16 %v8649
        %v9206 = vpack.c.b16 %v9171, %v9170
        %v9207 = vpack.c.b16 %v9173, %v9172
        %v9208 = vpack.c.b16 %v9175, %v9174
        %v9209 = vpack.c.b16 %v9177, %v9176
        %v9210 = vpack.c.b16 %v9179, %v9178
        %v9211 = vpack.c.b16 %v9181, %v9180
        %v9212 = vpack.c.b16 %v9183, %v9182
        %v9213 = vpack.c.b16 %v9185, %v9184
        %v9214 = vpack.c.b16 %v9187, %v9186
        %v9215 = vpack.c.b16 %v9189, %v9188
        %v9216 = vpack.c.b16 %v9191, %v9190
        %v9217 = vpack.c.b16 %v9193, %v9192
        %v9218 = vpack.c.b16 %v9195, %v9194
        %v9219 = vpack.c.b16 %v9197, %v9196
        %v9220 = vpack.c.b16 %v9199, %v9198
        %v9221 = vpack.c.b16 %v9201, %v9200
        %v9222 = vpack.c.b16 %v9203, %v9202
        %v9223 = vpack.c.b16 %v9205, %v9204
        %v9243 = vsel %vm249, %v8976, 0
        %v9246 = vsel %vm249, %v8979, 0
        %v9249 = vsel %vm249, %v8982, 0
        %v9252 = vsel %vm249, %v8985, 0
        %v9255 = vsel %vm249, %v8988, 0
        %v9258 = vsel %vm249, %v8991, 0
        %v9261 = vsel %vm249, %v8994, 0
        %v9264 = vsel %vm249, %v8997, 0
        %v9267 = vsel %vm249, %v9000, 0
        %v9270 = vsel %vm249, %v9003, 0
        %v9273 = vsel %vm249, %v9006, 0
        %v9276 = vsel %vm249, %v9009, 0
        %v9279 = vsel %vm249, %v9012, 0
        %v9282 = vsel %vm249, %v9015, 0
        %v9285 = vsel %vm249, %v9018, 0
        %v9288 = vsel %vm249, %v9021, 0
        %v9291 = vsel %vm249, %v9024, 0
        %v9294 = vsel %vm249, %v9027, 0
        %v9297 = vsel %vm249, %v9030, 0
        %v9300 = vsel %vm249, %v9033, 0
        %v9303 = vsel %vm249, %v9036, 0
        %v9306 = vsel %vm249, %v9039, 0
        %v9309 = vsel %vm249, %v9042, 0
        %v9312 = vsel %vm249, %v9045, 0
        %v9315 = vsel %vm249, %v9048, 0
        %v9318 = vsel %vm249, %v9051, 0
        %v9321 = vsel %vm249, %v9054, 0
        %v9324 = vsel %vm249, %v9057, 0
        %v9327 = vsel %vm249, %v9060, 0
        %v9330 = vsel %vm249, %v9063, 0
        %v9333 = vsel %vm249, %v9066, 0
        %v9336 = vsel %vm249, %v9069, 0
        %9338 = vmatpush.bf16.msra.mxu0 %v9213
        %9339 = vmatpush.bf16.msra.mxu0 %v9212
        %9340 = vmatpush.bf16.msra.mxu0 %v9211
        %9341 = vmatpush.bf16.msra.mxu0 %v9210
        %9342 = vmatpush.bf16.msra.mxu0 %v9209
        %9343 = vmatpush.bf16.msra.mxu0 %v9208
        %9344 = vmatpush.bf16.msra.mxu0 %v9207
        %9345 = vmatpush.bf16.msra.mxu0 %v9206
        %9346 = vmatmul.bf16.gmra.mxu0 %v8974
        %v9347 = vpop.f32.mrf.mxu0
        %v9348 = vadd.f32 %v8652, %v9347
        %v9349 = vpop.f32.mrf.mxu0
        %v9350 = vadd.f32 %v8652, %v9349
        %9351 = vmatmul.bf16.gmra.mxu0 %v8977
        %v9352 = vpop.f32.mrf.mxu0
        %v9353 = vadd.f32 %v8652, %v9352
        %v9354 = vpop.f32.mrf.mxu0
        %v9355 = vadd.f32 %v8652, %v9354
        %9356 = vmatmul.bf16.gmra.mxu0 %v8980
        %v9357 = vpop.f32.mrf.mxu0
        %v9358 = vadd.f32 %v8652, %v9357
        %v9359 = vpop.f32.mrf.mxu0
        %v9360 = vadd.f32 %v8652, %v9359
        %9361 = vmatmul.bf16.gmra.mxu0 %v8983
        %v9362 = vpop.f32.mrf.mxu0
        %v9363 = vadd.f32 %v8652, %v9362
        %v9364 = vpop.f32.mrf.mxu0
        %v9365 = vadd.f32 %v8652, %v9364
        %9366 = vmatmul.bf16.gmra.mxu0 %v8986
        %v9367 = vpop.f32.mrf.mxu0
        %v9368 = vadd.f32 %v8652, %v9367
        %v9369 = vpop.f32.mrf.mxu0
        %v9370 = vadd.f32 %v8652, %v9369
        %9371 = vmatmul.bf16.gmra.mxu0 %v8989
        %v9372 = vpop.f32.mrf.mxu0
        %v9373 = vadd.f32 %v8652, %v9372
        %v9374 = vpop.f32.mrf.mxu0
        %v9375 = vadd.f32 %v8652, %v9374
        %9376 = vmatmul.bf16.gmra.mxu0 %v8992
        %v9377 = vpop.f32.mrf.mxu0
        %v9378 = vadd.f32 %v8652, %v9377
        %v9379 = vpop.f32.mrf.mxu0
        %v9380 = vadd.f32 %v8652, %v9379
        %9381 = vmatmul.bf16.gmra.mxu0 %v8995
        %v9382 = vpop.f32.mrf.mxu0
        %v9383 = vadd.f32 %v8652, %v9382
        %v9384 = vpop.f32.mrf.mxu0
        %v9385 = vadd.f32 %v8652, %v9384
        %9386 = vmatmul.bf16.gmra.mxu0 %v8998
        %v9387 = vpop.f32.mrf.mxu0
        %v9388 = vadd.f32 %v8652, %v9387
        %v9389 = vpop.f32.mrf.mxu0
        %v9390 = vadd.f32 %v8652, %v9389
        %9391 = vmatmul.bf16.gmra.mxu0 %v9001
        %v9392 = vpop.f32.mrf.mxu0
        %v9393 = vadd.f32 %v8652, %v9392
        %v9394 = vpop.f32.mrf.mxu0
        %v9395 = vadd.f32 %v8652, %v9394
        %9396 = vmatmul.bf16.gmra.mxu0 %v9004
        %v9397 = vpop.f32.mrf.mxu0
        %v9398 = vadd.f32 %v8652, %v9397
        %v9399 = vpop.f32.mrf.mxu0
        %v9400 = vadd.f32 %v8652, %v9399
        %9401 = vmatmul.bf16.gmra.mxu0 %v9007
        %v9402 = vpop.f32.mrf.mxu0
        %v9403 = vadd.f32 %v8652, %v9402
        %v9404 = vpop.f32.mrf.mxu0
        %v9405 = vadd.f32 %v8652, %v9404
        %9406 = vmatmul.bf16.gmra.mxu0 %v9010
        %v9407 = vpop.f32.mrf.mxu0
        %v9408 = vadd.f32 %v8652, %v9407
        %v9409 = vpop.f32.mrf.mxu0
        %v9410 = vadd.f32 %v8652, %v9409
        %9411 = vmatmul.bf16.gmra.mxu0 %v9013
        %v9412 = vpop.f32.mrf.mxu0
        %v9413 = vadd.f32 %v8652, %v9412
        %v9414 = vpop.f32.mrf.mxu0
        %v9415 = vadd.f32 %v8652, %v9414
        %9416 = vmatmul.bf16.gmra.mxu0 %v9016
        %v9417 = vpop.f32.mrf.mxu0
        %v9418 = vadd.f32 %v8652, %v9417
        %v9419 = vpop.f32.mrf.mxu0
        %v9420 = vadd.f32 %v8652, %v9419
        %9421 = vmatmul.bf16.gmra.mxu0 %v9019
        %v9422 = vpop.f32.mrf.mxu0
        %v9423 = vadd.f32 %v8652, %v9422
        %v9424 = vpop.f32.mrf.mxu0
        %v9425 = vadd.f32 %v8652, %v9424
        %9426 = vmatmul.bf16.gmra.mxu0 %v9022
        %v9427 = vpop.f32.mrf.mxu0
        %v9428 = vadd.f32 %v8652, %v9427
        %v9429 = vpop.f32.mrf.mxu0
        %v9430 = vadd.f32 %v8652, %v9429
        %9431 = vmatmul.bf16.gmra.mxu0 %v9025
        %v9432 = vpop.f32.mrf.mxu0
        %v9433 = vadd.f32 %v8652, %v9432
        %v9434 = vpop.f32.mrf.mxu0
        %v9435 = vadd.f32 %v8652, %v9434
        %9436 = vmatmul.bf16.gmra.mxu0 %v9028
        %v9437 = vpop.f32.mrf.mxu0
        %v9438 = vadd.f32 %v8652, %v9437
        %v9439 = vpop.f32.mrf.mxu0
        %v9440 = vadd.f32 %v8652, %v9439
        %9441 = vmatmul.bf16.gmra.mxu0 %v9031
        %v9442 = vpop.f32.mrf.mxu0
        %v9443 = vadd.f32 %v8652, %v9442
        %v9444 = vpop.f32.mrf.mxu0
        %v9445 = vadd.f32 %v8652, %v9444
        %9446 = vmatmul.bf16.gmra.mxu0 %v9034
        %v9447 = vpop.f32.mrf.mxu0
        %v9448 = vadd.f32 %v8652, %v9447
        %v9449 = vpop.f32.mrf.mxu0
        %v9450 = vadd.f32 %v8652, %v9449
        %9451 = vmatmul.bf16.gmra.mxu0 %v9037
        %v9452 = vpop.f32.mrf.mxu0
        %v9453 = vadd.f32 %v8652, %v9452
        %v9454 = vpop.f32.mrf.mxu0
        %v9455 = vadd.f32 %v8652, %v9454
        %9456 = vmatmul.bf16.gmra.mxu0 %v9040
        %v9457 = vpop.f32.mrf.mxu0
        %v9458 = vadd.f32 %v8652, %v9457
        %v9459 = vpop.f32.mrf.mxu0
        %v9460 = vadd.f32 %v8652, %v9459
        %9461 = vmatmul.bf16.gmra.mxu0 %v9043
        %v9462 = vpop.f32.mrf.mxu0
        %v9463 = vadd.f32 %v8652, %v9462
        %v9464 = vpop.f32.mrf.mxu0
        %v9465 = vadd.f32 %v8652, %v9464
        %9466 = vmatmul.bf16.gmra.mxu0 %v9046
        %v9467 = vpop.f32.mrf.mxu0
        %v9468 = vadd.f32 %v8652, %v9467
        %v9469 = vpop.f32.mrf.mxu0
        %v9470 = vadd.f32 %v8652, %v9469
        %9471 = vmatmul.bf16.gmra.mxu0 %v9049
        %v9472 = vpop.f32.mrf.mxu0
        %v9473 = vadd.f32 %v8652, %v9472
        %v9474 = vpop.f32.mrf.mxu0
        %v9475 = vadd.f32 %v8652, %v9474
        %9476 = vmatmul.bf16.gmra.mxu0 %v9052
        %v9477 = vpop.f32.mrf.mxu0
        %v9478 = vadd.f32 %v8652, %v9477
        %v9479 = vpop.f32.mrf.mxu0
        %v9480 = vadd.f32 %v8652, %v9479
        %9481 = vmatmul.bf16.gmra.mxu0 %v9055
        %v9482 = vpop.f32.mrf.mxu0
        %v9483 = vadd.f32 %v8652, %v9482
        %v9484 = vpop.f32.mrf.mxu0
        %v9485 = vadd.f32 %v8652, %v9484
        %9486 = vmatmul.bf16.gmra.mxu0 %v9058
        %v9487 = vpop.f32.mrf.mxu0
        %v9488 = vadd.f32 %v8652, %v9487
        %v9489 = vpop.f32.mrf.mxu0
        %v9490 = vadd.f32 %v8652, %v9489
        %9491 = vmatmul.bf16.gmra.mxu0 %v9061
        %v9492 = vpop.f32.mrf.mxu0
        %v9493 = vadd.f32 %v8652, %v9492
        %v9494 = vpop.f32.mrf.mxu0
        %v9495 = vadd.f32 %v8652, %v9494
        %9496 = vmatmul.bf16.gmra.mxu0 %v9064
        %v9497 = vpop.f32.mrf.mxu0
        %v9498 = vadd.f32 %v8652, %v9497
        %v9499 = vpop.f32.mrf.mxu0
        %v9500 = vadd.f32 %v8652, %v9499
        %9501 = vmatmul.bf16.gmra.mxu0 %v9067
        %v9502 = vpop.f32.mrf.mxu0
        %v9503 = vadd.f32 %v8652, %v9502
        %v9504 = vpop.f32.mrf.mxu0
        %v9505 = vadd.f32 %v8652, %v9504
        %9506 = vdwg.mxu0
        %9507 = vmatpush.bf16.msra.mxu0 %v9221
        %9508 = vmatpush.bf16.msra.mxu0 %v9220
        %9509 = vmatpush.bf16.msra.mxu0 %v9219
        %9510 = vmatpush.bf16.msra.mxu0 %v9218
        %9511 = vmatpush.bf16.msra.mxu0 %v9217
        %9512 = vmatpush.bf16.msra.mxu0 %v9216
        %9513 = vmatpush.bf16.msra.mxu0 %v9215
        %9514 = vmatpush.bf16.msra.mxu0 %v9214
        %9515 = vmatmul.bf16.gmra.mxu0 %v8975
        %v9516 = vpop.f32.mrf.mxu0
        %v9517 = vadd.f32 %v9348, %v9516
        %v9518 = vpop.f32.mrf.mxu0
        %v9519 = vadd.f32 %v9350, %v9518
        %9520 = vmatmul.bf16.gmra.mxu0 %v8978
        %v9521 = vpop.f32.mrf.mxu0
        %v9522 = vadd.f32 %v9353, %v9521
        %v9523 = vpop.f32.mrf.mxu0
        %v9524 = vadd.f32 %v9355, %v9523
        %9525 = vmatmul.bf16.gmra.mxu0 %v8981
        %v9526 = vpop.f32.mrf.mxu0
        %v9527 = vadd.f32 %v9358, %v9526
        %v9528 = vpop.f32.mrf.mxu0
        %v9529 = vadd.f32 %v9360, %v9528
        %9530 = vmatmul.bf16.gmra.mxu0 %v8984
        %v9531 = vpop.f32.mrf.mxu0
        %v9532 = vadd.f32 %v9363, %v9531
        %v9533 = vpop.f32.mrf.mxu0
        %v9534 = vadd.f32 %v9365, %v9533
        %9535 = vmatmul.bf16.gmra.mxu0 %v8987
        %v9536 = vpop.f32.mrf.mxu0
        %v9537 = vadd.f32 %v9368, %v9536
        %v9538 = vpop.f32.mrf.mxu0
        %v9539 = vadd.f32 %v9370, %v9538
        %9540 = vmatmul.bf16.gmra.mxu0 %v8990
        %v9541 = vpop.f32.mrf.mxu0
        %v9542 = vadd.f32 %v9373, %v9541
        %v9543 = vpop.f32.mrf.mxu0
        %v9544 = vadd.f32 %v9375, %v9543
        %9545 = vmatmul.bf16.gmra.mxu0 %v8993
        %v9546 = vpop.f32.mrf.mxu0
        %v9547 = vadd.f32 %v9378, %v9546
        %v9548 = vpop.f32.mrf.mxu0
        %v9549 = vadd.f32 %v9380, %v9548
        %9550 = vmatmul.bf16.gmra.mxu0 %v8996
        %v9551 = vpop.f32.mrf.mxu0
        %v9552 = vadd.f32 %v9383, %v9551
        %v9553 = vpop.f32.mrf.mxu0
        %v9554 = vadd.f32 %v9385, %v9553
        %9555 = vmatmul.bf16.gmra.mxu0 %v8999
        %v9556 = vpop.f32.mrf.mxu0
        %v9557 = vadd.f32 %v9388, %v9556
        %v9558 = vpop.f32.mrf.mxu0
        %v9559 = vadd.f32 %v9390, %v9558
        %9560 = vmatmul.bf16.gmra.mxu0 %v9002
        %v9561 = vpop.f32.mrf.mxu0
        %v9562 = vadd.f32 %v9393, %v9561
        %v9563 = vpop.f32.mrf.mxu0
        %v9564 = vadd.f32 %v9395, %v9563
        %9565 = vmatmul.bf16.gmra.mxu0 %v9005
        %v9566 = vpop.f32.mrf.mxu0
        %v9567 = vadd.f32 %v9398, %v9566
        %v9568 = vpop.f32.mrf.mxu0
        %v9569 = vadd.f32 %v9400, %v9568
        %9570 = vmatmul.bf16.gmra.mxu0 %v9008
        %v9571 = vpop.f32.mrf.mxu0
        %v9572 = vadd.f32 %v9403, %v9571
        %v9573 = vpop.f32.mrf.mxu0
        %v9574 = vadd.f32 %v9405, %v9573
        %9575 = vmatmul.bf16.gmra.mxu0 %v9011
        %v9576 = vpop.f32.mrf.mxu0
        %v9577 = vadd.f32 %v9408, %v9576
        %v9578 = vpop.f32.mrf.mxu0
        %v9579 = vadd.f32 %v9410, %v9578
        %9580 = vmatmul.bf16.gmra.mxu0 %v9014
        %v9581 = vpop.f32.mrf.mxu0
        %v9582 = vadd.f32 %v9413, %v9581
        %v9583 = vpop.f32.mrf.mxu0
        %v9584 = vadd.f32 %v9415, %v9583
        %9585 = vmatmul.bf16.gmra.mxu0 %v9017
        %v9586 = vpop.f32.mrf.mxu0
        %v9587 = vadd.f32 %v9418, %v9586
        %v9588 = vpop.f32.mrf.mxu0
        %v9589 = vadd.f32 %v9420, %v9588
        %9590 = vmatmul.bf16.gmra.mxu0 %v9020
        %v9591 = vpop.f32.mrf.mxu0
        %v9592 = vadd.f32 %v9423, %v9591
        %v9593 = vpop.f32.mrf.mxu0
        %v9594 = vadd.f32 %v9425, %v9593
        %9595 = vmatmul.bf16.gmra.mxu0 %v9023
        %v9596 = vpop.f32.mrf.mxu0
        %v9597 = vadd.f32 %v9428, %v9596
        %v9598 = vpop.f32.mrf.mxu0
        %v9599 = vadd.f32 %v9430, %v9598
        %9600 = vmatmul.bf16.gmra.mxu0 %v9026
        %v9601 = vpop.f32.mrf.mxu0
        %v9602 = vadd.f32 %v9433, %v9601
        %v9603 = vpop.f32.mrf.mxu0
        %v9604 = vadd.f32 %v9435, %v9603
        %9605 = vmatmul.bf16.gmra.mxu0 %v9029
        %v9606 = vpop.f32.mrf.mxu0
        %v9607 = vadd.f32 %v9438, %v9606
        %v9608 = vpop.f32.mrf.mxu0
        %v9609 = vadd.f32 %v9440, %v9608
        %9610 = vmatmul.bf16.gmra.mxu0 %v9032
        %v9611 = vpop.f32.mrf.mxu0
        %v9612 = vadd.f32 %v9443, %v9611
        %v9613 = vpop.f32.mrf.mxu0
        %v9614 = vadd.f32 %v9445, %v9613
        %9615 = vmatmul.bf16.gmra.mxu0 %v9035
        %v9616 = vpop.f32.mrf.mxu0
        %v9617 = vadd.f32 %v9448, %v9616
        %v9618 = vpop.f32.mrf.mxu0
        %v9619 = vadd.f32 %v9450, %v9618
        %9620 = vmatmul.bf16.gmra.mxu0 %v9038
        %v9621 = vpop.f32.mrf.mxu0
        %v9622 = vadd.f32 %v9453, %v9621
        %v9623 = vpop.f32.mrf.mxu0
        %v9624 = vadd.f32 %v9455, %v9623
        %9625 = vmatmul.bf16.gmra.mxu0 %v9041
        %v9626 = vpop.f32.mrf.mxu0
        %v9627 = vadd.f32 %v9458, %v9626
        %v9628 = vpop.f32.mrf.mxu0
        %v9629 = vadd.f32 %v9460, %v9628
        %9630 = vmatmul.bf16.gmra.mxu0 %v9044
        %v9631 = vpop.f32.mrf.mxu0
        %v9632 = vadd.f32 %v9463, %v9631
        %v9633 = vpop.f32.mrf.mxu0
        %v9634 = vadd.f32 %v9465, %v9633
        %9635 = vmatmul.bf16.gmra.mxu0 %v9047
        %v9636 = vpop.f32.mrf.mxu0
        %v9637 = vadd.f32 %v9468, %v9636
        %v9638 = vpop.f32.mrf.mxu0
        %v9639 = vadd.f32 %v9470, %v9638
        %9640 = vmatmul.bf16.gmra.mxu0 %v9050
        %v9641 = vpop.f32.mrf.mxu0
        %v9642 = vadd.f32 %v9473, %v9641
        %v9643 = vpop.f32.mrf.mxu0
        %v9644 = vadd.f32 %v9475, %v9643
        %9645 = vmatmul.bf16.gmra.mxu0 %v9053
        %v9646 = vpop.f32.mrf.mxu0
        %v9647 = vadd.f32 %v9478, %v9646
        %v9648 = vpop.f32.mrf.mxu0
        %v9649 = vadd.f32 %v9480, %v9648
        %9650 = vmatmul.bf16.gmra.mxu0 %v9056
        %v9651 = vpop.f32.mrf.mxu0
        %v9652 = vadd.f32 %v9483, %v9651
        %v9653 = vpop.f32.mrf.mxu0
        %v9654 = vadd.f32 %v9485, %v9653
        %9655 = vmatmul.bf16.gmra.mxu0 %v9059
        %v9656 = vpop.f32.mrf.mxu0
        %v9657 = vadd.f32 %v9488, %v9656
        %v9658 = vpop.f32.mrf.mxu0
        %v9659 = vadd.f32 %v9490, %v9658
        %9660 = vmatmul.bf16.gmra.mxu0 %v9062
        %v9661 = vpop.f32.mrf.mxu0
        %v9662 = vadd.f32 %v9493, %v9661
        %v9663 = vpop.f32.mrf.mxu0
        %v9664 = vadd.f32 %v9495, %v9663
        %9665 = vmatmul.bf16.gmra.mxu0 %v9065
        %v9666 = vpop.f32.mrf.mxu0
        %v9667 = vadd.f32 %v9498, %v9666
        %v9668 = vpop.f32.mrf.mxu0
        %v9669 = vadd.f32 %v9500, %v9668
        %9670 = vmatmul.bf16.gmra.mxu0 %v9068
        %v9671 = vpop.f32.mrf.mxu0
        %v9672 = vadd.f32 %v9503, %v9671
        %v9673 = vpop.f32.mrf.mxu0
        %v9674 = vadd.f32 %v9505, %v9673
        %9675 = vdwg.mxu0
        %9676 = vmatpush.bf16.msra.mxu0 0
        %9677 = vmatpush.bf16.msra.mxu0 0
        %9678 = vmatpush.bf16.msra.mxu0 0
        %9679 = vmatpush.bf16.msra.mxu0 0
        %9680 = vmatpush.bf16.msra.mxu0 0
        %9681 = vmatpush.bf16.msra.mxu0 0
        %9682 = vmatpush.bf16.msra.mxu0 %v9223
        %9683 = vmatpush.bf16.msra.mxu0 %v9222
        %9684 = vmatmul.bf16.gmra.mxu0 %v9243
        %v9685 = vpop.f32.mrf.mxu0
        %v9686 = vadd.f32 %v9517, %v9685
        %v9687 = vpop.f32.mrf.mxu0
        %v9688 = vadd.f32 %v9519, %v9687
        %9689 = vmatmul.bf16.gmra.mxu0 %v9246
        %v9690 = vpop.f32.mrf.mxu0
        %v9691 = vadd.f32 %v9522, %v9690
        %v9692 = vpop.f32.mrf.mxu0
        %v9693 = vadd.f32 %v9524, %v9692
        %9694 = vmatmul.bf16.gmra.mxu0 %v9249
        %v9695 = vpop.f32.mrf.mxu0
        %v9696 = vadd.f32 %v9527, %v9695
        %v9697 = vpop.f32.mrf.mxu0
        %v9698 = vadd.f32 %v9529, %v9697
        %9699 = vmatmul.bf16.gmra.mxu0 %v9252
        %v9700 = vpop.f32.mrf.mxu0
        %v9701 = vadd.f32 %v9532, %v9700
        %v9702 = vpop.f32.mrf.mxu0
        %v9703 = vadd.f32 %v9534, %v9702
        %9704 = vmatmul.bf16.gmra.mxu0 %v9255
        %v9705 = vpop.f32.mrf.mxu0
        %v9706 = vadd.f32 %v9537, %v9705
        %v9707 = vpop.f32.mrf.mxu0
        %v9708 = vadd.f32 %v9539, %v9707
        %9709 = vmatmul.bf16.gmra.mxu0 %v9258
        %v9710 = vpop.f32.mrf.mxu0
        %v9711 = vadd.f32 %v9542, %v9710
        %v9712 = vpop.f32.mrf.mxu0
        %v9713 = vadd.f32 %v9544, %v9712
        %9714 = vmatmul.bf16.gmra.mxu0 %v9261
        %v9715 = vpop.f32.mrf.mxu0
        %v9716 = vadd.f32 %v9547, %v9715
        %v9717 = vpop.f32.mrf.mxu0
        %v9718 = vadd.f32 %v9549, %v9717
        %9719 = vmatmul.bf16.gmra.mxu0 %v9264
        %v9720 = vpop.f32.mrf.mxu0
        %v9721 = vadd.f32 %v9552, %v9720
        %v9722 = vpop.f32.mrf.mxu0
        %v9723 = vadd.f32 %v9554, %v9722
        %9724 = vmatmul.bf16.gmra.mxu0 %v9267
        %v9725 = vpop.f32.mrf.mxu0
        %v9726 = vadd.f32 %v9557, %v9725
        %v9727 = vpop.f32.mrf.mxu0
        %v9728 = vadd.f32 %v9559, %v9727
        %9729 = vmatmul.bf16.gmra.mxu0 %v9270
        %v9730 = vpop.f32.mrf.mxu0
        %v9731 = vadd.f32 %v9562, %v9730
        %v9732 = vpop.f32.mrf.mxu0
        %v9733 = vadd.f32 %v9564, %v9732
        %9734 = vmatmul.bf16.gmra.mxu0 %v9273
        %v9735 = vpop.f32.mrf.mxu0
        %v9736 = vadd.f32 %v9567, %v9735
        %v9737 = vpop.f32.mrf.mxu0
        %v9738 = vadd.f32 %v9569, %v9737
        %9739 = vmatmul.bf16.gmra.mxu0 %v9276
        %v9740 = vpop.f32.mrf.mxu0
        %v9741 = vadd.f32 %v9572, %v9740
        %v9742 = vpop.f32.mrf.mxu0
        %v9743 = vadd.f32 %v9574, %v9742
        %9744 = vmatmul.bf16.gmra.mxu0 %v9279
        %v9745 = vpop.f32.mrf.mxu0
        %v9746 = vadd.f32 %v9577, %v9745
        %v9747 = vpop.f32.mrf.mxu0
        %v9748 = vadd.f32 %v9579, %v9747
        %9749 = vmatmul.bf16.gmra.mxu0 %v9282
        %v9750 = vpop.f32.mrf.mxu0
        %v9751 = vadd.f32 %v9582, %v9750
        %v9752 = vpop.f32.mrf.mxu0
        %v9753 = vadd.f32 %v9584, %v9752
        %9754 = vmatmul.bf16.gmra.mxu0 %v9285
        %v9755 = vpop.f32.mrf.mxu0
        %v9756 = vadd.f32 %v9587, %v9755
        %v9757 = vpop.f32.mrf.mxu0
        %v9758 = vadd.f32 %v9589, %v9757
        %9759 = vmatmul.bf16.gmra.mxu0 %v9288
        %v9760 = vpop.f32.mrf.mxu0
        %v9761 = vadd.f32 %v9592, %v9760
        %v9762 = vpop.f32.mrf.mxu0
        %v9763 = vadd.f32 %v9594, %v9762
        %9764 = vmatmul.bf16.gmra.mxu0 %v9291
        %v9765 = vpop.f32.mrf.mxu0
        %v9766 = vadd.f32 %v9597, %v9765
        %v9767 = vpop.f32.mrf.mxu0
        %v9768 = vadd.f32 %v9599, %v9767
        %9769 = vmatmul.bf16.gmra.mxu0 %v9294
        %v9770 = vpop.f32.mrf.mxu0
        %v9771 = vadd.f32 %v9602, %v9770
        %v9772 = vpop.f32.mrf.mxu0
        %v9773 = vadd.f32 %v9604, %v9772
        %9774 = vmatmul.bf16.gmra.mxu0 %v9297
        %v9775 = vpop.f32.mrf.mxu0
        %v9776 = vadd.f32 %v9607, %v9775
        %v9777 = vpop.f32.mrf.mxu0
        %v9778 = vadd.f32 %v9609, %v9777
        %9779 = vmatmul.bf16.gmra.mxu0 %v9300
        %v9780 = vpop.f32.mrf.mxu0
        %v9781 = vadd.f32 %v9612, %v9780
        %v9782 = vpop.f32.mrf.mxu0
        %v9783 = vadd.f32 %v9614, %v9782
        %9784 = vmatmul.bf16.gmra.mxu0 %v9303
        %v9785 = vpop.f32.mrf.mxu0
        %v9786 = vadd.f32 %v9617, %v9785
        %v9787 = vpop.f32.mrf.mxu0
        %v9788 = vadd.f32 %v9619, %v9787
        %9789 = vmatmul.bf16.gmra.mxu0 %v9306
        %v9790 = vpop.f32.mrf.mxu0
        %v9791 = vadd.f32 %v9622, %v9790
        %v9792 = vpop.f32.mrf.mxu0
        %v9793 = vadd.f32 %v9624, %v9792
        %9794 = vmatmul.bf16.gmra.mxu0 %v9309
        %v9795 = vpop.f32.mrf.mxu0
        %v9796 = vadd.f32 %v9627, %v9795
        %v9797 = vpop.f32.mrf.mxu0
        %v9798 = vadd.f32 %v9629, %v9797
        %9799 = vmatmul.bf16.gmra.mxu0 %v9312
        %v9800 = vpop.f32.mrf.mxu0
        %v9801 = vadd.f32 %v9632, %v9800
        %v9802 = vpop.f32.mrf.mxu0
        %v9803 = vadd.f32 %v9634, %v9802
        %9804 = vmatmul.bf16.gmra.mxu0 %v9315
        %v9805 = vpop.f32.mrf.mxu0
        %v9806 = vadd.f32 %v9637, %v9805
        %v9807 = vpop.f32.mrf.mxu0
        %v9808 = vadd.f32 %v9639, %v9807
        %9809 = vmatmul.bf16.gmra.mxu0 %v9318
        %v9810 = vpop.f32.mrf.mxu0
        %v9811 = vadd.f32 %v9642, %v9810
        %v9812 = vpop.f32.mrf.mxu0
        %v9813 = vadd.f32 %v9644, %v9812
        %9814 = vmatmul.bf16.gmra.mxu0 %v9321
        %v9815 = vpop.f32.mrf.mxu0
        %v9816 = vadd.f32 %v9647, %v9815
        %v9817 = vpop.f32.mrf.mxu0
        %v9818 = vadd.f32 %v9649, %v9817
        %9819 = vmatmul.bf16.gmra.mxu0 %v9324
        %v9820 = vpop.f32.mrf.mxu0
        %v9821 = vadd.f32 %v9652, %v9820
        %v9822 = vpop.f32.mrf.mxu0
        %v9823 = vadd.f32 %v9654, %v9822
        %9824 = vmatmul.bf16.gmra.mxu0 %v9327
        %v9825 = vpop.f32.mrf.mxu0
        %v9826 = vadd.f32 %v9657, %v9825
        %v9827 = vpop.f32.mrf.mxu0
        %v9828 = vadd.f32 %v9659, %v9827
        %9829 = vmatmul.bf16.gmra.mxu0 %v9330
        %v9830 = vpop.f32.mrf.mxu0
        %v9831 = vadd.f32 %v9662, %v9830
        %v9832 = vpop.f32.mrf.mxu0
        %v9833 = vadd.f32 %v9664, %v9832
        %9834 = vmatmul.bf16.gmra.mxu0 %v9333
        %v9835 = vpop.f32.mrf.mxu0
        %v9836 = vadd.f32 %v9667, %v9835
        %v9837 = vpop.f32.mrf.mxu0
        %v9838 = vadd.f32 %v9669, %v9837
        %9839 = vmatmul.bf16.gmra.mxu0 %v9336
        %v9840 = vpop.f32.mrf.mxu0
        %v9841 = vadd.f32 %v9672, %v9840
        %v9842 = vpop.f32.mrf.mxu0
        %v9843 = vadd.f32 %v9674, %v9842
        %9844 = vdwg.mxu0
        %v9845 = vld [vmem:[%s218] sm:$0xff]
        %v9846 = vld [vmem:[%s218 + $0x8] sm:$0xff]
        %v9847 = vld [vmem:[%s218 + $0x10] sm:$0xff]
        %v9848 = vld [vmem:[%s218 + $0x18] sm:$0xff]
        %v9849 = vld [vmem:[%s218 + $0x20] sm:$0xff]
        %v9850 = vld [vmem:[%s218 + $0x28] sm:$0xff]
        %v9851 = vld [vmem:[%s218 + $0x30] sm:$0xff]
        %v9852 = vld [vmem:[%s218 + $0x38] sm:$0xff]
        %v9853 = vld [vmem:[%s218 + $0x40] sm:$0xff]
        %v9854 = vld [vmem:[%s218 + $0x48] sm:$0xff]
        %v9855 = vld [vmem:[%s218 + $0x50] sm:$0xff]
        %v9856 = vld [vmem:[%s218 + $0x58] sm:$0xff]
        %v9857 = vld [vmem:[%s218 + $0x60] sm:$0xff]
        %v9858 = vld [vmem:[%s218 + $0x68] sm:$0xff]
        %v9859 = vld [vmem:[%s218 + $0x70] sm:$0xff]
        %v9860 = vld [vmem:[%s218 + $0x78] sm:$0xff]
        %v9861 = vld [vmem:[%s218 + $0x80] sm:$0xff]
        %v9862 = vld [vmem:[%s218 + $0x88] sm:$0xff]
        %v9863 = vld [vmem:[%s218 + $0x90] sm:$0xff]
        %v9864 = vld [vmem:[%s218 + $0x98] sm:$0xff]
        %v9865 = vld [vmem:[%s218 + $0xa0] sm:$0xff]
        %v9866 = vld [vmem:[%s218 + $0xa8] sm:$0xff]
        %v9867 = vld [vmem:[%s218 + $0xb0] sm:$0xff]
        %v9868 = vld [vmem:[%s218 + $0xb8] sm:$0xff]
        %v9869 = vld [vmem:[%s218 + $0xc0] sm:$0xff]
        %v9870 = vld [vmem:[%s218 + $0xc8] sm:$0xff]
        %v9871 = vld [vmem:[%s218 + $0xd0] sm:$0xff]
        %v9872 = vld [vmem:[%s218 + $0xd8] sm:$0xff]
        %v9873 = vld [vmem:[%s218 + $0xe0] sm:$0xff]
        %v9874 = vld [vmem:[%s218 + $0xe8] sm:$0xff]
        %v9875 = vld [vmem:[%s218 + $0xf0] sm:$0xff]
        %v9876 = vld [vmem:[%s218 + $0xf8] sm:$0xff]
        %v9877 = vld [vmem:[%s218 + $0x100] sm:$0xff]
        %v9878 = vld [vmem:[%s218 + $0x108] sm:$0xff]
        %v9879 = vld [vmem:[%s218 + $0x110] sm:$0xff]
        %v9880 = vld [vmem:[%s218 + $0x118] sm:$0xff]
        %v9881 = vld [vmem:[%s218 + $0x120] sm:$0xff]
        %v9882 = vld [vmem:[%s218 + $0x128] sm:$0xff]
        %v9883 = vld [vmem:[%s218 + $0x130] sm:$0xff]
        %v9884 = vld [vmem:[%s218 + $0x138] sm:$0xff]
        %v9885 = vld [vmem:[%s218 + $0x140] sm:$0xff]
        %v9886 = vld [vmem:[%s218 + $0x148] sm:$0xff]
        %v9887 = vld [vmem:[%s218 + $0x150] sm:$0xff]
        %v9888 = vld [vmem:[%s218 + $0x158] sm:$0xff]
        %v9889 = vld [vmem:[%s218 + $0x160] sm:$0xff]
        %v9890 = vld [vmem:[%s218 + $0x168] sm:$0xff]
        %v9891 = vld [vmem:[%s218 + $0x170] sm:$0xff]
        %v9892 = vld [vmem:[%s218 + $0x178] sm:$0xff]
        %v9893 = vld [vmem:[%s218 + $0x180] sm:$0xff]
        %v9894 = vld [vmem:[%s218 + $0x188] sm:$0xff]
        %v9895 = vld [vmem:[%s218 + $0x190] sm:$0xff]
        %v9896 = vld [vmem:[%s218 + $0x198] sm:$0xff]
        %v9897 = vld [vmem:[%s218 + $0x1a0] sm:$0xff]
        %v9898 = vld [vmem:[%s218 + $0x1a8] sm:$0xff]
        %v9899 = vld [vmem:[%s218 + $0x1b0] sm:$0xff]
        %v9900 = vld [vmem:[%s218 + $0x1b8] sm:$0xff]
        %v9901 = vld [vmem:[%s218 + $0x1c0] sm:$0xff]
        %v9902 = vld [vmem:[%s218 + $0x1c8] sm:$0xff]
        %v9903 = vld [vmem:[%s218 + $0x1d0] sm:$0xff]
        %v9904 = vld [vmem:[%s218 + $0x1d8] sm:$0xff]
        %v9905 = vld [vmem:[%s218 + $0x1e0] sm:$0xff]
        %v9906 = vld [vmem:[%s218 + $0x1e8] sm:$0xff]
        %v9907 = vld [vmem:[%s218 + $0x1f0] sm:$0xff]
        %v9908 = vld [vmem:[%s218 + $0x1f8] sm:$0xff]
        %v9909 = vadd.f32 %v9686, %v9845
        %v9910 = vadd.f32 %v9688, %v9846
        %v9911 = vadd.f32 %v9691, %v9847
        %v9912 = vadd.f32 %v9693, %v9848
        %v9913 = vadd.f32 %v9696, %v9849
        %v9914 = vadd.f32 %v9698, %v9850
        %v9915 = vadd.f32 %v9701, %v9851
        %v9916 = vadd.f32 %v9703, %v9852
        %v9917 = vadd.f32 %v9706, %v9853
        %v9918 = vadd.f32 %v9708, %v9854
        %v9919 = vadd.f32 %v9711, %v9855
        %v9920 = vadd.f32 %v9713, %v9856
        %v9921 = vadd.f32 %v9716, %v9857
        %v9922 = vadd.f32 %v9718, %v9858
        %v9923 = vadd.f32 %v9721, %v9859
        %v9924 = vadd.f32 %v9723, %v9860
        %v9925 = vadd.f32 %v9726, %v9861
        %v9926 = vadd.f32 %v9728, %v9862
        %v9927 = vadd.f32 %v9731, %v9863
        %v9928 = vadd.f32 %v9733, %v9864
        %v9929 = vadd.f32 %v9736, %v9865
        %v9930 = vadd.f32 %v9738, %v9866
        %v9931 = vadd.f32 %v9741, %v9867
        %v9932 = vadd.f32 %v9743, %v9868
        %v9933 = vadd.f32 %v9746, %v9869
        %v9934 = vadd.f32 %v9748, %v9870
        %v9935 = vadd.f32 %v9751, %v9871
        %v9936 = vadd.f32 %v9753, %v9872
        %v9937 = vadd.f32 %v9756, %v9873
        %v9938 = vadd.f32 %v9758, %v9874
        %v9939 = vadd.f32 %v9761, %v9875
        %v9940 = vadd.f32 %v9763, %v9876
        %v9941 = vadd.f32 %v9766, %v9877
        %v9942 = vadd.f32 %v9768, %v9878
        %v9943 = vadd.f32 %v9771, %v9879
        %v9944 = vadd.f32 %v9773, %v9880
        %v9945 = vadd.f32 %v9776, %v9881
        %v9946 = vadd.f32 %v9778, %v9882
        %v9947 = vadd.f32 %v9781, %v9883
        %v9948 = vadd.f32 %v9783, %v9884
        %v9949 = vadd.f32 %v9786, %v9885
        %v9950 = vadd.f32 %v9788, %v9886
        %v9951 = vadd.f32 %v9791, %v9887
        %v9952 = vadd.f32 %v9793, %v9888
        %v9953 = vadd.f32 %v9796, %v9889
        %v9954 = vadd.f32 %v9798, %v9890
        %v9955 = vadd.f32 %v9801, %v9891
        %v9956 = vadd.f32 %v9803, %v9892
        %v9957 = vadd.f32 %v9806, %v9893
        %v9958 = vadd.f32 %v9808, %v9894
        %v9959 = vadd.f32 %v9811, %v9895
        %v9960 = vadd.f32 %v9813, %v9896
        %v9961 = vadd.f32 %v9816, %v9897
        %v9962 = vadd.f32 %v9818, %v9898
        %v9963 = vadd.f32 %v9821, %v9899
        %v9964 = vadd.f32 %v9823, %v9900
        %v9965 = vadd.f32 %v9826, %v9901
        %v9966 = vadd.f32 %v9828, %v9902
        %v9967 = vadd.f32 %v9831, %v9903
        %v9968 = vadd.f32 %v9833, %v9904
        %v9969 = vadd.f32 %v9836, %v9905
        %v9970 = vadd.f32 %v9838, %v9906
        %v9971 = vadd.f32 %v9841, %v9907
        %v9972 = vadd.f32 %v9843, %v9908
        %v9973 = vmax.f32 %v9909, 0.0
        %v9974 = vmax.f32 %v9910, 0.0
        %v9975 = vmax.f32 %v9911, 0.0
        %v9976 = vmax.f32 %v9912, 0.0
        %v9977 = vmax.f32 %v9913, 0.0
        %v9978 = vmax.f32 %v9914, 0.0
        %v9979 = vmax.f32 %v9915, 0.0
        %v9980 = vmax.f32 %v9916, 0.0
        %v9981 = vmax.f32 %v9917, 0.0
        %v9982 = vmax.f32 %v9918, 0.0
        %v9983 = vmax.f32 %v9919, 0.0
        %v9984 = vmax.f32 %v9920, 0.0
        %v9985 = vmax.f32 %v9921, 0.0
        %v9986 = vmax.f32 %v9922, 0.0
        %v9987 = vmax.f32 %v9923, 0.0
        %v9988 = vmax.f32 %v9924, 0.0
        %v9989 = vmax.f32 %v9925, 0.0
        %v9990 = vmax.f32 %v9926, 0.0
        %v9991 = vmax.f32 %v9927, 0.0
        %v9992 = vmax.f32 %v9928, 0.0
        %v9993 = vmax.f32 %v9929, 0.0
        %v9994 = vmax.f32 %v9930, 0.0
        %v9995 = vmax.f32 %v9931, 0.0
        %v9996 = vmax.f32 %v9932, 0.0
        %v9997 = vmax.f32 %v9933, 0.0
        %v9998 = vmax.f32 %v9934, 0.0
        %v9999 = vmax.f32 %v9935, 0.0
        %v10000 = vmax.f32 %v9936, 0.0
        %v10001 = vmax.f32 %v9937, 0.0
        %v10002 = vmax.f32 %v9938, 0.0
        %v10003 = vmax.f32 %v9939, 0.0
        %v10004 = vmax.f32 %v9940, 0.0
        %v10005 = vmax.f32 %v9941, 0.0
        %v10006 = vmax.f32 %v9942, 0.0
        %v10007 = vmax.f32 %v9943, 0.0
        %v10008 = vmax.f32 %v9944, 0.0
        %v10009 = vmax.f32 %v9945, 0.0
        %v10010 = vmax.f32 %v9946, 0.0
        %v10011 = vmax.f32 %v9947, 0.0
        %v10012 = vmax.f32 %v9948, 0.0
        %v10013 = vmax.f32 %v9949, 0.0
        %v10014 = vmax.f32 %v9950, 0.0
        %v10015 = vmax.f32 %v9951, 0.0
        %v10016 = vmax.f32 %v9952, 0.0
        %v10017 = vmax.f32 %v9953, 0.0
        %v10018 = vmax.f32 %v9954, 0.0
        %v10019 = vmax.f32 %v9955, 0.0
        %v10020 = vmax.f32 %v9956, 0.0
        %v10021 = vmax.f32 %v9957, 0.0
        %v10022 = vmax.f32 %v9958, 0.0
        %v10023 = vmax.f32 %v9959, 0.0
        %v10024 = vmax.f32 %v9960, 0.0
        %v10025 = vmax.f32 %v9961, 0.0
        %v10026 = vmax.f32 %v9962, 0.0
        %v10027 = vmax.f32 %v9963, 0.0
        %v10028 = vmax.f32 %v9964, 0.0
        %v10029 = vmax.f32 %v9965, 0.0
        %v10030 = vmax.f32 %v9966, 0.0
        %v10031 = vmax.f32 %v9967, 0.0
        %v10032 = vmax.f32 %v9968, 0.0
        %v10033 = vmax.f32 %v9969, 0.0
        %v10034 = vmax.f32 %v9970, 0.0
        %v10035 = vmax.f32 %v9971, 0.0
        %v10036 = vmax.f32 %v9972, 0.0
        %10037 = vst.msk [vmem:[%s245] sm:$0xff] %vm249, %v9973
        %10038 = vst.msk [vmem:[%s245 + $0x8] sm:$0xff] %vm249, %v9974
        %10039 = vst.msk [vmem:[%s245 + $0x10] sm:$0xff] %vm249, %v9975
        %10040 = vst.msk [vmem:[%s245 + $0x18] sm:$0xff] %vm249, %v9976
        %10041 = vst.msk [vmem:[%s245 + $0x20] sm:$0xff] %vm249, %v9977
        %10042 = vst.msk [vmem:[%s245 + $0x28] sm:$0xff] %vm249, %v9978
        %10043 = vst.msk [vmem:[%s245 + $0x30] sm:$0xff] %vm249, %v9979
        %10044 = vst.msk [vmem:[%s245 + $0x38] sm:$0xff] %vm249, %v9980
        %10045 = vst.msk [vmem:[%s245 + $0x40] sm:$0xff] %vm249, %v9981
        %10046 = vst.msk [vmem:[%s245 + $0x48] sm:$0xff] %vm249, %v9982
        %10047 = vst.msk [vmem:[%s245 + $0x50] sm:$0xff] %vm249, %v9983
        %10048 = vst.msk [vmem:[%s245 + $0x58] sm:$0xff] %vm249, %v9984
        %10049 = vst.msk [vmem:[%s245 + $0x60] sm:$0xff] %vm249, %v9985
        %10050 = vst.msk [vmem:[%s245 + $0x68] sm:$0xff] %vm249, %v9986
        %10051 = vst.msk [vmem:[%s245 + $0x70] sm:$0xff] %vm249, %v9987
        %10052 = vst.msk [vmem:[%s245 + $0x78] sm:$0xff] %vm249, %v9988
        %10053 = vst.msk [vmem:[%s245 + $0x80] sm:$0xff] %vm249, %v9989
        %10054 = vst.msk [vmem:[%s245 + $0x88] sm:$0xff] %vm249, %v9990
        %10055 = vst.msk [vmem:[%s245 + $0x90] sm:$0xff] %vm249, %v9991
        %10056 = vst.msk [vmem:[%s245 + $0x98] sm:$0xff] %vm249, %v9992
        %10057 = vst.msk [vmem:[%s245 + $0xa0] sm:$0xff] %vm249, %v9993
        %10058 = vst.msk [vmem:[%s245 + $0xa8] sm:$0xff] %vm249, %v9994
        %10059 = vst.msk [vmem:[%s245 + $0xb0] sm:$0xff] %vm249, %v9995
        %10060 = vst.msk [vmem:[%s245 + $0xb8] sm:$0xff] %vm249, %v9996
        %10061 = vst.msk [vmem:[%s245 + $0xc0] sm:$0xff] %vm249, %v9997
        %10062 = vst.msk [vmem:[%s245 + $0xc8] sm:$0xff] %vm249, %v9998
        %10063 = vst.msk [vmem:[%s245 + $0xd0] sm:$0xff] %vm249, %v9999
        %10064 = vst.msk [vmem:[%s245 + $0xd8] sm:$0xff] %vm249, %v10000
        %10065 = vst.msk [vmem:[%s245 + $0xe0] sm:$0xff] %vm249, %v10001
        %10066 = vst.msk [vmem:[%s245 + $0xe8] sm:$0xff] %vm249, %v10002
        %10067 = vst.msk [vmem:[%s245 + $0xf0] sm:$0xff] %vm249, %v10003
        %10068 = vst.msk [vmem:[%s245 + $0xf8] sm:$0xff] %vm249, %v10004
        %10069 = vst.msk [vmem:[%s245 + $0x100] sm:$0xff] %vm249, %v10005
        %10070 = vst.msk [vmem:[%s245 + $0x108] sm:$0xff] %vm249, %v10006
        %10071 = vst.msk [vmem:[%s245 + $0x110] sm:$0xff] %vm249, %v10007
        %10072 = vst.msk [vmem:[%s245 + $0x118] sm:$0xff] %vm249, %v10008
        %10073 = vst.msk [vmem:[%s245 + $0x120] sm:$0xff] %vm249, %v10009
        %10074 = vst.msk [vmem:[%s245 + $0x128] sm:$0xff] %vm249, %v10010
        %10075 = vst.msk [vmem:[%s245 + $0x130] sm:$0xff] %vm249, %v10011
        %10076 = vst.msk [vmem:[%s245 + $0x138] sm:$0xff] %vm249, %v10012
        %10077 = vst.msk [vmem:[%s245 + $0x140] sm:$0xff] %vm249, %v10013
        %10078 = vst.msk [vmem:[%s245 + $0x148] sm:$0xff] %vm249, %v10014
        %10079 = vst.msk [vmem:[%s245 + $0x150] sm:$0xff] %vm249, %v10015
        %10080 = vst.msk [vmem:[%s245 + $0x158] sm:$0xff] %vm249, %v10016
        %10081 = vst.msk [vmem:[%s245 + $0x160] sm:$0xff] %vm249, %v10017
        %10082 = vst.msk [vmem:[%s245 + $0x168] sm:$0xff] %vm249, %v10018
        %10083 = vst.msk [vmem:[%s245 + $0x170] sm:$0xff] %vm249, %v10019
        %10084 = vst.msk [vmem:[%s245 + $0x178] sm:$0xff] %vm249, %v10020
        %10085 = vst.msk [vmem:[%s245 + $0x180] sm:$0xff] %vm249, %v10021
        %10086 = vst.msk [vmem:[%s245 + $0x188] sm:$0xff] %vm249, %v10022
        %10087 = vst.msk [vmem:[%s245 + $0x190] sm:$0xff] %vm249, %v10023
        %10088 = vst.msk [vmem:[%s245 + $0x198] sm:$0xff] %vm249, %v10024
        %10089 = vst.msk [vmem:[%s245 + $0x1a0] sm:$0xff] %vm249, %v10025
        %10090 = vst.msk [vmem:[%s245 + $0x1a8] sm:$0xff] %vm249, %v10026
        %10091 = vst.msk [vmem:[%s245 + $0x1b0] sm:$0xff] %vm249, %v10027
        %10092 = vst.msk [vmem:[%s245 + $0x1b8] sm:$0xff] %vm249, %v10028
        %10093 = vst.msk [vmem:[%s245 + $0x1c0] sm:$0xff] %vm249, %v10029
        %10094 = vst.msk [vmem:[%s245 + $0x1c8] sm:$0xff] %vm249, %v10030
        %10095 = vst.msk [vmem:[%s245 + $0x1d0] sm:$0xff] %vm249, %v10031
        %10096 = vst.msk [vmem:[%s245 + $0x1d8] sm:$0xff] %vm249, %v10032
        %10097 = vst.msk [vmem:[%s245 + $0x1e0] sm:$0xff] %vm249, %v10033
        %10098 = vst.msk [vmem:[%s245 + $0x1e8] sm:$0xff] %vm249, %v10034
        %10099 = vst.msk [vmem:[%s245 + $0x1f0] sm:$0xff] %vm249, %v10035
        %10100 = vst.msk [vmem:[%s245 + $0x1f8] sm:$0xff] %vm249, %v10036
        %s10101 = sand.u32 %s140, 1
        %s10102 = scalar_lea.sflag [#allocation6], %s10101
        %s10103 = sand.u32 %s140, 1
        %s10104 = smul.addr %s10103, 512
        %s10105 = scalar_lea.vmem [#allocation7], %s10104
        // Predicated region
        $region45: #{basic_block_forward.1} parent=39 // pred_check
          %p10106 = pneg %p150
        $region46: #{basic_block_forward.1} parent=39 // pred_check_branch
          %10108 = sbr.rel (%p10106) target = $region48
        $region47: #{basic_block_forward.1} parent=39 // pred_region
          %s10109 = smul.u32 2, %s22
          %10111 = vsyncadd %s10102, 0
          %s10112 = smul.addr %s10109, 32
          %s10113 = smul.addr %s10112, 8
          %s10114 = scalar_lea.hbm %s5, %s10113
          %s10115 = sshll.u32 %s10105, 4
          %s10116 = int_to_ptr.vmem [resolvable:$true] %s10115
          %s10117 = sshll.u32 %s10114, 4
          %s10118 = int_to_ptr.hbm [resolvable:$true] %s10117
          %10123 = dma.vmem_to_hbm [thread:$0]  %s10116, 8192, %s10118, %s10102, 128, 128, 8
        $region48: #{basic_block_forward.1} parent=39 // pred_fallthru
          _
      $region40: #{basic_block_forward.1} parent=5 // pred_fallthru
        _
      %p10124 = scmp.le.s32.totalorder 2, %s17
      // Predicated region
      $region49: #{basic_block_forward.1} parent=5 // pred_check
        %p10125 = pneg %p10124
      $region50: #{basic_block_forward.1} parent=5 // pred_check_branch
        %10127 = sbr.rel (%p10125) target = $region52
      $region51: #{basic_block_forward.1} parent=5 // pred_region
        %s10128 = ssub.s32 %s17, 2
        // Predicated region
        $region53: #{basic_block_forward.1} parent=51 // pred_check
          %p10129 = pneg %p156
        $region54: #{basic_block_forward.1} parent=51 // pred_check_branch
          %10131 = sbr.rel (%p10129) target = $region56
        $region55: #{basic_block_forward.1} parent=51 // pred_region
          %s10132 = sand.u32 %s141, 1
          %s10133 = scalar_lea.sflag [#allocation6], %s10132
          %s10134 = sand.u32 %s141, 1
          %s10135 = smul.addr %s10134, 512
          %s10136 = scalar_lea.vmem [#allocation7], %s10135
          %10138 = dma.done %s10133, 8192
        $region56: #{basic_block_forward.1} parent=51 // pred_fallthru
          _
      $region52: #{basic_block_forward.1} parent=5 // pred_fallthru
        _
    $region6: #{basic_block_forward.1} parent=1 // loop_footer
      %s21 = sadd.s32 1, %s17
    $region7: #{basic_block_forward.1} parent=1 // loop_footer_branch
      %16 = sbr.rel target = $region3
    $region8: #{basic_block_forward.1} parent=1 // loop_exit
      _
    %10139 = vsyncpa [#allocation5], 1
    %s10140 = scalar_lea.sflag [#allocation5], 1
    %10141 = vsyncpa %s10140, 1
    %10142 = vsyncpa [#allocation6], 1
    %s10143 = scalar_lea.sflag [#allocation6], 1
    %10144 = vsyncpa %s10143, 1

</llo_original>
